<compile_context>
chip_gen: v7x
topology: tpu7x:2x2x1
jax: 0.10.0
libtpu: 0.0.40
codegen_flags: <defaults>
</compile_context>

<pallas_src>
import math

import jax
import jax.numpy as jnp
from jax import lax
from jax.experimental import pallas as pl
from jax.experimental.pallas import tpu as pltpu

# ---------------- small VisionMamba config ----------------
IMG_SIZE = 16
PATCH = 8
CHANNELS = 3
NUM_FRAMES = 4
TUBELET = 1                           # PatchEmbed Conv3d temporal kernel
EMBED_DIM = 32
DEPTH = 2
NUM_CLASSES = 10
D_STATE = 16
D_CONV = 4
EXPAND = 2
D_INNER = EXPAND * EMBED_DIM          # 64
DT_RANK = math.ceil(EMBED_DIM / 16)   # 2
RMS_EPS = 1e-5

HP = IMG_SIZE // PATCH                # 2
NUM_PATCHES = HP * HP                 # 4
T_FRAMES = NUM_FRAMES // TUBELET      # 4
SEQ_LEN = 1 + T_FRAMES * NUM_PATCHES  # 17
DPACK = 2 * D_INNER                   # 128: fwd || bwd packed on the lane axis
TN = T_FRAMES * NUM_PATCHES           # 16 patch tokens per batch element
CPP = CHANNELS * TUBELET * PATCH * PATCH  # 192


# ============================================================
# The fused whole-network kernel (one grid step = one batch element)
# ============================================================
def _videomamba_kernel(
    patches_ref, pw_ref, pb_ref, pos_ref, rev_ref,
    nw_ref, win_ref, convw_ref, convb_ref, wdt_ref, dtb_ref, wbct_ref,
    a_ref, dvec_ref, wout_ref,
    nf_ref, hw_ref, hb_ref,
    out_ref,
    xpad_scr, da_scr, g_scr, c_scr, y_scr):
  f32 = jnp.float32
  bf16 = jnp.bfloat16
  L, DI, N, K, D = SEQ_LEN, D_INNER, D_STATE, D_CONV, EMBED_DIM

  lane = lax.broadcasted_iota(jnp.int32, (N, DPACK), 1)
  fwd_half = lane < DI                                       # (N, DPACK) lane mask

  # ---- patch projection + cls/pos token assembly ----------------------------
  feat = jnp.dot(patches_ref[...].astype(bf16), pw_ref[...].astype(bf16),
                 preferred_element_type=f32) + pb_ref[...]   # (TN, D)
  tok = jnp.concatenate([pos_ref[0:1, :], feat + pos_ref[1:, :]], axis=0)  # (L, D)

  hidden = tok
  residual = jnp.zeros((L, D), f32)                          # first block: residual None
  rev = rev_ref[...]                                         # host-built (L, L) anti-identity

  for l in range(DEPTH):
    # ---- fused residual-add + RMSNorm (prenorm=True, residual_in_fp32) ----
    s = hidden + residual
    residual = s
    ms = jnp.mean(s * s, axis=-1, keepdims=True)
    xn = s * lax.rsqrt(ms + RMS_EPS) * nw_ref[l]

    # ---- in_proj: lane-dense (L, 2*D_INNER) = (L, 128) ----
    xz = jnp.dot(xn.astype(bf16), win_ref[l].astype(bf16),
                 preferred_element_type=f32)
    xd = xz[:, :DI]
    z = xz[:, DI:]

    # backward-direction input = time-reversed xd (exact f32 permutation matmul,
    # mask build hoisted to host; the output-side reversal is free via the
    # reversed y scatter below).
    xd_r = jnp.dot(rev, xd, preferred_element_type=f32)

    # ---- causal depthwise conv1d + SiLU, fwd || reversed-bwd on 128 lanes ----
    convw = convw_ref[l]                                     # (K, DPACK)
    xpad_scr[0:K - 1, :] = jnp.zeros((K - 1, DPACK), f32)
    xpad_scr[K - 1:, :DI] = xd
    xpad_scr[K - 1:, DI:] = xd_r
    acc = jnp.zeros((L, DPACK), f32)
    for k in range(K):                                       # static K = 4
      acc = acc + xpad_scr[k:k + L, :] * convw[k:k + 1, :]
    acc = acc + convb_ref[l]
    u = acc * jax.nn.sigmoid(acc)                            # SiLU, (L, 128)

    # ---- x_proj with dt_proj folded in ----
    u16 = u.astype(bf16)
    dt = jnp.dot(u16, wdt_ref[l].astype(bf16),
                 preferred_element_type=f32) + dtb_ref[l]
    dt = jnp.where(dt > 20.0, dt,
                   jnp.log1p(jnp.exp(jnp.minimum(dt, 20.0))))        # softplus
    du = dt * u
    dsk = u * dvec_ref[l]                                    # D-skip term (packed order)
    # B/C for both directions: (4N, L), d_state on sublanes, step on lanes.
    bct = lax.dot_general(wbct_ref[l].astype(bf16), u16,
                          (((1,), (1,)), ((), ())),
                          preferred_element_type=f32)
    b_f, c_f = bct[0:N, :], bct[N:2 * N, :]
    b_b, c_b = bct[2 * N:3 * N, :], bct[3 * N:4 * N, :]
    a_all = a_ref[l]                                         # (N, 128) = -(exp A_log).T packed

    # ---- hoisted scan pre-compute (independent per step -> pipelines freely):
    #      da[t] = exp(dt[t] * A),  g[t] = B[t] (x) (dt*u)[t],  c[t] = bcast(C[t])
    for t in range(L):
      blk = slice(t * N, (t + 1) * N)
      da_scr[blk, :] = jnp.exp(dt[t:t + 1, :] * a_all)
      bsel = jnp.where(fwd_half, b_f[:, t:t + 1], b_b[:, t:t + 1])
      g_scr[blk, :] = bsel * du[t:t + 1, :]
      c_scr[blk, :] = jnp.where(fwd_half, c_f[:, t:t + 1], c_b[:, t:t + 1])

    # ---- selective scan: only the packed (16,128) FMA is on the serial chain ----
    h = jnp.zeros((N, DPACK), f32)
    for t in range(L):                                       # L = 17, fully unrolled
      blk = slice(t * N, (t + 1) * N)
      h = da_scr[blk, :] * h + g_scr[blk, :]
      yrow = jnp.sum(h * c_scr[blk, :], axis=0, keepdims=True) + dsk[t:t + 1, :]
      # fwd half is time t; bwd half (reversed copy) is original time L-1-t,
      # so scattering it to row L-1-t un-reverses it for free.
      y_scr[t:t + 1, :DI] = yrow[:, :DI]
      y_scr[L - 1 - t:L - t, DI:] = yrow[:, DI:]

    # ---- combine directions, SiLU(z) gate, out_proj ----
    ys = y_scr[...]                                          # (L, 128), time-ordered halves
    yg = (ys[:, :DI] + ys[:, DI:]) * (z * jax.nn.sigmoid(z))
    hidden = jnp.dot(yg.astype(bf16), wout_ref[l].astype(bf16),
                     preferred_element_type=f32)             # (L, D)

  # ---- final fused add + RMSNorm (prenorm=False) on the cls token + head ----
  s0 = hidden[0:1, :] + residual[0:1, :]
  ms0 = jnp.mean(s0 * s0, axis=-1, keepdims=True)
  xn0 = s0 * lax.rsqrt(ms0 + RMS_EPS) * nf_ref[...]
  out_ref[...] = jnp.dot(xn0, hw_ref[...],
                         preferred_element_type=f32) + hb_ref[...]


def vision_mamba_forward(x, p):
  """x: (B, C, T, H, W) float32 -> logits (B, NUM_CLASSES)."""
  B = x.shape[0]
  # Patchify (Conv3d k=(1,P,P) stride=(1,P,P) == patch extraction + linear).
  xp = x.reshape(B, CHANNELS, T_FRAMES, HP, PATCH, HP, PATCH)
  patches = xp.transpose(0, 2, 3, 5, 1, 4, 6).reshape(B, TN, CPP).astype(jnp.float32)

  full = lambda nd: (lambda b: (0,) * nd)
  logits = pl.pallas_call(
      _videomamba_kernel,
      grid=(B,),
      in_specs=[
          pl.BlockSpec((None, TN, CPP), lambda b: (b, 0, 0)),       # patches
          pl.BlockSpec((CPP, EMBED_DIM), full(2)),                  # patch proj W
          pl.BlockSpec((1, EMBED_DIM), full(2)),                    # patch proj b
          pl.BlockSpec((SEQ_LEN, EMBED_DIM), full(2)),              # cls+pos+temporal
          pl.BlockSpec((SEQ_LEN, SEQ_LEN), full(2)),                # time-reversal matrix
          pl.BlockSpec((DEPTH, 1, EMBED_DIM), full(3)),             # norm weight
          pl.BlockSpec((DEPTH, EMBED_DIM, DPACK), full(3)),         # in_proj
          pl.BlockSpec((DEPTH, D_CONV, DPACK), full(3)),            # conv w (fwd|bwd)
          pl.BlockSpec((DEPTH, 1, DPACK), full(3)),                 # conv b
          pl.BlockSpec((DEPTH, DPACK, DPACK), full(3)),             # folded dt weight
          pl.BlockSpec((DEPTH, 1, DPACK), full(3)),                 # dt bias
          pl.BlockSpec((DEPTH, 4 * D_STATE, DPACK), full(3)),       # B/C weight (transposed)
          pl.BlockSpec((DEPTH, D_STATE, DPACK), full(3)),           # -(exp A_log).T packed
          pl.BlockSpec((DEPTH, 1, DPACK), full(3)),                 # D skip
          pl.BlockSpec((DEPTH, D_INNER, EMBED_DIM), full(3)),       # out_proj
          pl.BlockSpec((1, EMBED_DIM), full(2)),                    # final norm weight
          pl.BlockSpec((EMBED_DIM, NUM_CLASSES), full(2)),          # head W
          pl.BlockSpec((1, NUM_CLASSES), full(2)),                  # head b
      ],
      out_specs=pl.BlockSpec((None, 1, NUM_CLASSES), lambda b: (b, 0, 0)),
      out_shape=jax.ShapeDtypeStruct((B, 1, NUM_CLASSES), jnp.float32),
      scratch_shapes=[
          pltpu.VMEM((D_CONV - 1 + SEQ_LEN, DPACK), jnp.float32),   # padded conv input
          pltpu.VMEM((SEQ_LEN * D_STATE, DPACK), jnp.float32),      # exp(dt*A) blocks
          pltpu.VMEM((SEQ_LEN * D_STATE, DPACK), jnp.float32),      # B (x) dt*u blocks
          pltpu.VMEM((SEQ_LEN * D_STATE, DPACK), jnp.float32),      # broadcast-C blocks
          pltpu.VMEM((SEQ_LEN, DPACK), jnp.float32),                # per-step y rows
      ],
      compiler_params=pltpu.CompilerParams(dimension_semantics=("parallel",)),
  )(patches, p["patch_w"], p["patch_b"], p["pos_full"], p["rev"],
    p["norm_w"], p["in_proj_w"], p["conv_w"], p["conv_b"], p["wdt"],
    p["dt_bias"], p["wbct"], p["a_neg"], p["d_vec"], p["out_proj_w"],
    p["norm_f_w"], p["head_w"], p["head_b"])
  return logits.reshape(B, NUM_CLASSES)


# ============================================================
# Parameter construction (synthetic, deterministic) + packing
# ============================================================
def init_params(key):
  keys = iter(jax.random.split(key, 16 + DEPTH * 16))

  def nrm(shape, std=0.02):
    return (std * jax.random.normal(next(keys), shape)).astype(jnp.float32)

  def dir_params():
    dt = jnp.exp(jax.random.uniform(next(keys), (D_INNER,)) *
                 (math.log(0.1) - math.log(0.001)) + math.log(0.001))
    dt = jnp.maximum(dt, 1e-4)
    dt_bias = (dt + jnp.log(-jnp.expm1(-dt))).astype(jnp.float32)   # inv softplus
    A_log = jnp.log(jnp.broadcast_to(
        jnp.arange(1, D_STATE + 1, dtype=jnp.float32), (D_INNER, D_STATE)))
    return {
        "conv_w": nrm((D_CONV, D_INNER), std=0.1),     # torch (D,1,K) stored (K, D)
        "conv_b": jnp.zeros((D_INNER,), jnp.float32),
        "x_proj_w": nrm((D_INNER, DT_RANK + 2 * D_STATE)),
        "dt_proj_w": nrm((DT_RANK, D_INNER), std=DT_RANK ** -0.5),
        "dt_bias": dt_bias,
        "A_log": A_log,
        "D": jnp.ones((D_INNER,), jnp.float32),
    }

  def pack_layer(norm_w, in_proj_w, out_proj_w, fwd, bwd):
    """Fold dt_proj into x_proj, pack both bimamba directions on 128 lanes."""
    def fold(d):
      wdt = d["x_proj_w"][:, :DT_RANK] @ d["dt_proj_w"]             # (DI, DI)
      wb = d["x_proj_w"][:, DT_RANK:DT_RANK + D_STATE]              # (DI, N)
      wc = d["x_proj_w"][:, DT_RANK + D_STATE:]                     # (DI, N)
      a_neg = (-jnp.exp(d["A_log"])).T                              # (N, DI)
      return wdt, wb, wc, a_neg

    wdt_f, wb_f, wc_f, a_f = fold(fwd)
    wdt_b, wb_b, wc_b, a_b = fold(bwd)

    wdt = jnp.zeros((DPACK, DPACK), jnp.float32)
    wdt = wdt.at[:D_INNER, :D_INNER].set(wdt_f).at[D_INNER:, D_INNER:].set(wdt_b)

    wbc = jnp.zeros((DPACK, 4 * D_STATE), jnp.float32)
    wbc = (wbc.at[:D_INNER, 0:D_STATE].set(wb_f)
              .at[:D_INNER, D_STATE:2 * D_STATE].set(wc_f)
              .at[D_INNER:, 2 * D_STATE:3 * D_STATE].set(wb_b)
              .at[D_INNER:, 3 * D_STATE:].set(wc_b))

    return {
        "norm_w": norm_w.reshape(1, EMBED_DIM),
        "in_proj_w": in_proj_w,                                           # (D, 2*DI)
        "conv_w": jnp.concatenate([fwd["conv_w"], bwd["conv_w"]], axis=1),  # (K, 128)
        "conv_b": jnp.concatenate([fwd["conv_b"], bwd["conv_b"]]).reshape(1, DPACK),
        "wdt": wdt,                                                       # (128, 128)
        "dt_bias": jnp.concatenate([fwd["dt_bias"], bwd["dt_bias"]]).reshape(1, DPACK),
        "wbct": wbc.T,                                                    # (4N, 128)
        "a_neg": jnp.concatenate([a_f, a_b], axis=1),                     # (N, 128)
        "d_vec": jnp.concatenate([fwd["D"], bwd["D"]]).reshape(1, DPACK),
        "out_proj_w": out_proj_w,                                         # (DI, D)
    }

  # token-position embedding assembled on the host (parameter prep, not per-input):
  #   row 0            = cls_token + pos_embed[0]
  #   row 1 + t*N + n  = pos_embed[1+n] + temporal_pos[t]
  cls_token = jnp.zeros((1, EMBED_DIM), jnp.float32)
  pos_embed = nrm((NUM_PATCHES + 1, EMBED_DIM))
  temporal_pos = jnp.zeros((T_FRAMES, EMBED_DIM), jnp.float32)
  grid_pos = (temporal_pos[:, None, :] + pos_embed[None, 1:, :]).reshape(TN, EMBED_DIM)
  pos_full = jnp.concatenate([cls_token + pos_embed[:1, :], grid_pos], axis=0)

  rev = jnp.flip(jnp.eye(SEQ_LEN, dtype=jnp.float32), axis=0)       # time reversal

  layers = []
  for _ in range(DEPTH):
    layers.append(pack_layer(
        jnp.ones((EMBED_DIM,), jnp.float32),
        nrm((EMBED_DIM, 2 * D_INNER)),
        nrm((D_INNER, EMBED_DIM)) / math.sqrt(DEPTH),
        dir_params(), dir_params()))
  stacked = {k: jnp.stack([lp[k] for lp in layers], axis=0) for k in layers[0]}

  p = {
      "patch_w": nrm((CPP, EMBED_DIM)),
      "patch_b": jnp.zeros((1, EMBED_DIM), jnp.float32),
      "pos_full": pos_full,
      "rev": rev,
      "norm_f_w": jnp.ones((1, EMBED_DIM), jnp.float32),
      "head_w": nrm((EMBED_DIM, NUM_CLASSES)),
      "head_b": jnp.zeros((1, NUM_CLASSES), jnp.float32),
  }
  p.update(stacked)
  return p


if __name__ == "__main__":
  key = jax.random.PRNGKey(0)
  pkey, xkey = jax.random.split(key)
  params = init_params(pkey)
  x = jax.random.normal(xkey, (2, CHANNELS, NUM_FRAMES, IMG_SIZE, IMG_SIZE),
                        jnp.float32)
  fwd = jax.jit(vision_mamba_forward)
  out = jax.block_until_ready(fwd(x, params))
  assert out.shape == (2, NUM_CLASSES), out.shape
  assert bool(jnp.all(jnp.isfinite(out)))
  print("KERNEL_OK")
</pallas_src>

<mosaic_0001>
module attributes {stable_mosaic.version = 11 : i64} {
  func.func @_videomamba_kernel(%arg0: i32, %arg1: memref<1x16x192xf32, #tpu.memory_space<vmem>>, %arg2: memref<192x32xf32, #tpu.memory_space<vmem>>, %arg3: memref<1x32xf32, #tpu.memory_space<vmem>>, %arg4: memref<17x32xf32, #tpu.memory_space<vmem>>, %arg5: memref<17x17xf32, #tpu.memory_space<vmem>>, %arg6: memref<2x1x32xf32, #tpu.memory_space<vmem>>, %arg7: memref<2x32x128xf32, #tpu.memory_space<vmem>>, %arg8: memref<2x4x128xf32, #tpu.memory_space<vmem>>, %arg9: memref<2x1x128xf32, #tpu.memory_space<vmem>>, %arg10: memref<2x128x128xf32, #tpu.memory_space<vmem>>, %arg11: memref<2x1x128xf32, #tpu.memory_space<vmem>>, %arg12: memref<2x64x128xf32, #tpu.memory_space<vmem>>, %arg13: memref<2x16x128xf32, #tpu.memory_space<vmem>>, %arg14: memref<2x1x128xf32, #tpu.memory_space<vmem>>, %arg15: memref<2x64x32xf32, #tpu.memory_space<vmem>>, %arg16: memref<1x32xf32, #tpu.memory_space<vmem>>, %arg17: memref<32x10xf32, #tpu.memory_space<vmem>>, %arg18: memref<1x10xf32, #tpu.memory_space<vmem>>, %arg19: memref<1x1x10xf32, #tpu.memory_space<vmem>>, %arg20: memref<20x128xf32, #tpu.memory_space<vmem>>, %arg21: memref<272x128xf32, #tpu.memory_space<vmem>>, %arg22: memref<272x128xf32, #tpu.memory_space<vmem>>, %arg23: memref<272x128xf32, #tpu.memory_space<vmem>>, %arg24: memref<17x128xf32, #tpu.memory_space<vmem>>) attributes {dimension_semantics = [#tpu.dimension_semantics<parallel>], iteration_bounds = array<i64: 2>, scalar_prefetch = 0 : i64, scratch_operands = 5 : i64, tpu.core_type = #tpu.core_type<tc>, window_params = [{transform_indices = @transform_0, window_bounds = array<i64: 1, 16, 192>}, {pipeline_mode = #tpu.pipeline_mode<synchronous>, transform_indices = @transform_1, window_bounds = array<i64: 192, 32>}, {pipeline_mode = #tpu.pipeline_mode<synchronous>, transform_indices = @transform_2, window_bounds = array<i64: 1, 32>}, {pipeline_mode = #tpu.pipeline_mode<synchronous>, transform_indices = @transform_3, window_bounds = array<i64: 17, 32>}, {pipeline_mode = #tpu.pipeline_mode<synchronous>, transform_indices = @transform_4, window_bounds = array<i64: 17, 17>}, {pipeline_mode = #tpu.pipeline_mode<synchronous>, transform_indices = @transform_5, window_bounds = array<i64: 2, 1, 32>}, {pipeline_mode = #tpu.pipeline_mode<synchronous>, transform_indices = @transform_6, window_bounds = array<i64: 2, 32, 128>}, {pipeline_mode = #tpu.pipeline_mode<synchronous>, transform_indices = @transform_7, window_bounds = array<i64: 2, 4, 128>}, {pipeline_mode = #tpu.pipeline_mode<synchronous>, transform_indices = @transform_8, window_bounds = array<i64: 2, 1, 128>}, {pipeline_mode = #tpu.pipeline_mode<synchronous>, transform_indices = @transform_9, window_bounds = array<i64: 2, 128, 128>}, {pipeline_mode = #tpu.pipeline_mode<synchronous>, transform_indices = @transform_10, window_bounds = array<i64: 2, 1, 128>}, {pipeline_mode = #tpu.pipeline_mode<synchronous>, transform_indices = @transform_11, window_bounds = array<i64: 2, 64, 128>}, {pipeline_mode = #tpu.pipeline_mode<synchronous>, transform_indices = @transform_12, window_bounds = array<i64: 2, 16, 128>}, {pipeline_mode = #tpu.pipeline_mode<synchronous>, transform_indices = @transform_13, window_bounds = array<i64: 2, 1, 128>}, {pipeline_mode = #tpu.pipeline_mode<synchronous>, transform_indices = @transform_14, window_bounds = array<i64: 2, 64, 32>}, {pipeline_mode = #tpu.pipeline_mode<synchronous>, transform_indices = @transform_15, window_bounds = array<i64: 1, 32>}, {pipeline_mode = #tpu.pipeline_mode<synchronous>, transform_indices = @transform_16, window_bounds = array<i64: 32, 10>}, {pipeline_mode = #tpu.pipeline_mode<synchronous>, transform_indices = @transform_17, window_bounds = array<i64: 1, 10>}, {transform_indices = @transform_18, window_bounds = array<i64: 1, 1, 10>}]} {
    %0 = tpu.iota {dimensions = array<i32: 1>} : vector<16x128xi32>
    %c64_i32 = arith.constant 64 : i32
    %1 = vector.broadcast %c64_i32 : i32 to vector<16x128xi32>
    %2 = arith.cmpi slt, %0, %1 : vector<16x128xi32>
    %c0 = arith.constant 0 : index
    %c0_0 = arith.constant 0 : index
    %c0_1 = arith.constant 0 : index
    %3 = vector.load %arg1[%c0, %c0_0, %c0_1] : memref<1x16x192xf32, #tpu.memory_space<vmem>>, vector<1x16x192xf32>
    %4 = vector.shape_cast %3 : vector<1x16x192xf32> to vector<16x192xf32>
    %5 = arith.truncf %4 : vector<16x192xf32> to vector<16x192xbf16>
    %c0_2 = arith.constant 0 : index
    %c0_3 = arith.constant 0 : index
    %6 = vector.load %arg2[%c0_2, %c0_3] : memref<192x32xf32, #tpu.memory_space<vmem>>, vector<192x32xf32>
    %7 = arith.truncf %6 : vector<192x32xf32> to vector<192x32xbf16>
    %cst = arith.constant dense<0.000000e+00> : vector<16x32xf32>
    %8 = tpu.matmul %5, %7, %cst {dimension_numbers = #tpu.dot_dimension_numbers<[1], [0], [0], [1], [0, 0, 1, 1], [], []>} : vector<16x192xbf16>, vector<192x32xbf16>, vector<16x32xf32> -> vector<16x32xf32>
    %c0_4 = arith.constant 0 : index
    %c0_5 = arith.constant 0 : index
    %9 = vector.load %arg3[%c0_4, %c0_5] : memref<1x32xf32, #tpu.memory_space<vmem>>, vector<1x32xf32>
    %10 = vector.broadcast %9 : vector<1x32xf32> to vector<16x32xf32>
    %11 = arith.addf %8, %10 : vector<16x32xf32>
    %c0_6 = arith.constant 0 : index
    %c0_7 = arith.constant 0 : index
    %12 = vector.load %arg4[%c0_6, %c0_7] : memref<17x32xf32, #tpu.memory_space<vmem>>, vector<1x32xf32>
    %c1 = arith.constant 1 : index
    %c0_8 = arith.constant 0 : index
    %13 = vector.load %arg4[%c1, %c0_8] : memref<17x32xf32, #tpu.memory_space<vmem>>, vector<16x32xf32>
    %14 = arith.addf %11, %13 : vector<16x32xf32>
    %15 = tpu.concatenate %12, %14 in 0 : vector<1x32xf32>, vector<16x32xf32> -> vector<17x32xf32>
    %cst_9 = arith.constant 0.000000e+00 : f32
    %16 = vector.broadcast %cst_9 : f32 to vector<17x32xf32>
    %c0_10 = arith.constant 0 : index
    %c0_11 = arith.constant 0 : index
    %17 = vector.load %arg5[%c0_10, %c0_11] : memref<17x17xf32, #tpu.memory_space<vmem>>, vector<17x17xf32>
    %18 = arith.addf %15, %16 : vector<17x32xf32>
    %19 = arith.mulf %18, %18 : vector<17x32xf32>
    %cst_12 = arith.constant dense<0.000000e+00> : vector<17xf32>
    %20 = vector.multi_reduction <add>, %19, %cst_12 [1] : vector<17x32xf32> to vector<17xf32>
    %21 = vector.shape_cast %20 : vector<17xf32> to vector<17x1xf32>
    %cst_13 = arith.constant 3.200000e+01 : f32
    %22 = vector.broadcast %cst_13 : f32 to vector<17x1xf32>
    %23 = arith.divf %21, %22 : vector<17x1xf32>
    %cst_14 = arith.constant 9.99999974E-6 : f32
    %24 = vector.broadcast %cst_14 : f32 to vector<17x1xf32>
    %25 = arith.addf %23, %24 : vector<17x1xf32>
    %26 = math.rsqrt %25 : vector<17x1xf32>
    %27 = vector.broadcast %26 : vector<17x1xf32> to vector<17x32xf32>
    %28 = arith.mulf %18, %27 : vector<17x32xf32>
    %c0_15 = arith.constant 0 : index
    %c0_16 = arith.constant 0 : index
    %c0_17 = arith.constant 0 : index
    %29 = vector.load %arg6[%c0_15, %c0_16, %c0_17] : memref<2x1x32xf32, #tpu.memory_space<vmem>>, vector<1x1x32xf32>
    %30 = vector.shape_cast %29 : vector<1x1x32xf32> to vector<1x32xf32>
    %31 = vector.broadcast %30 : vector<1x32xf32> to vector<17x32xf32>
    %32 = arith.mulf %28, %31 : vector<17x32xf32>
    %33 = arith.truncf %32 : vector<17x32xf32> to vector<17x32xbf16>
    %c0_18 = arith.constant 0 : index
    %c0_19 = arith.constant 0 : index
    %c0_20 = arith.constant 0 : index
    %34 = vector.load %arg7[%c0_18, %c0_19, %c0_20] : memref<2x32x128xf32, #tpu.memory_space<vmem>>, vector<1x32x128xf32>
    %35 = vector.shape_cast %34 : vector<1x32x128xf32> to vector<32x128xf32>
    %36 = arith.truncf %35 : vector<32x128xf32> to vector<32x128xbf16>
    %cst_21 = arith.constant dense<0.000000e+00> : vector<17x128xf32>
    %37 = tpu.matmul %33, %36, %cst_21 {dimension_numbers = #tpu.dot_dimension_numbers<[1], [0], [0], [1], [0, 0, 1, 1], [], []>} : vector<17x32xbf16>, vector<32x128xbf16>, vector<17x128xf32> -> vector<17x128xf32>
    %38 = vector.extract_strided_slice %37 {offsets = [0, 0], sizes = [17, 64], strides = [1, 1]} : vector<17x128xf32> to vector<17x64xf32>
    %39 = vector.extract_strided_slice %37 {offsets = [0, 64], sizes = [17, 64], strides = [1, 1]} : vector<17x128xf32> to vector<17x64xf32>
    %cst_22 = arith.constant dense<0.000000e+00> : vector<17x64xf32>
    %40 = tpu.matmul %17, %38, %cst_22 {dimension_numbers = #tpu.dot_dimension_numbers<[1], [0], [0], [1], [0, 0, 1, 1], [], []>} : vector<17x17xf32>, vector<17x64xf32>, vector<17x64xf32> -> vector<17x64xf32>
    %c0_23 = arith.constant 0 : index
    %c0_24 = arith.constant 0 : index
    %c0_25 = arith.constant 0 : index
    %41 = vector.load %arg8[%c0_23, %c0_24, %c0_25] : memref<2x4x128xf32, #tpu.memory_space<vmem>>, vector<1x4x128xf32>
    %42 = vector.shape_cast %41 : vector<1x4x128xf32> to vector<4x128xf32>
    %cst_26 = arith.constant 0.000000e+00 : f32
    %43 = vector.broadcast %cst_26 : f32 to vector<3x128xf32>
    %c0_27 = arith.constant 0 : index
    %c0_28 = arith.constant 0 : index
    %44 = vector.load %arg20[%c0_27, %c0_28] : memref<20x128xf32, #tpu.memory_space<vmem>>, vector<3x128xf32>
    tpu.vector_store %arg20[%c0_27, %c0_28], %43 {strides = array<i32>} : memref<20x128xf32, #tpu.memory_space<vmem>>, vector<3x128xf32>,
    %c3 = arith.constant 3 : index
    %c0_29 = arith.constant 0 : index
    %45 = vector.load %arg20[%c3, %c0_29] : memref<20x128xf32, #tpu.memory_space<vmem>>, vector<17x64xf32>
    tpu.vector_store %arg20[%c3, %c0_29], %38 {strides = array<i32>} : memref<20x128xf32, #tpu.memory_space<vmem>>, vector<17x64xf32>,
    %c3_30 = arith.constant 3 : index
    %c64 = arith.constant 64 : index
    %46 = vector.load %arg20[%c3_30, %c64] : memref<20x128xf32, #tpu.memory_space<vmem>>, vector<17x64xf32>
    tpu.vector_store %arg20[%c3_30, %c64], %40 {strides = array<i32>} : memref<20x128xf32, #tpu.memory_space<vmem>>, vector<17x64xf32>,
    %cst_31 = arith.constant 0.000000e+00 : f32
    %47 = vector.broadcast %cst_31 : f32 to vector<17x128xf32>
    %c0_32 = arith.constant 0 : index
    %c0_33 = arith.constant 0 : index
    %48 = vector.load %arg20[%c0_32, %c0_33] : memref<20x128xf32, #tpu.memory_space<vmem>>, vector<17x128xf32>
    %49 = vector.extract_strided_slice %42 {offsets = [0, 0], sizes = [1, 128], strides = [1, 1]} : vector<4x128xf32> to vector<1x128xf32>
    %50 = vector.broadcast %49 : vector<1x128xf32> to vector<17x128xf32>
    %51 = arith.mulf %48, %50 : vector<17x128xf32>
    %52 = arith.addf %47, %51 : vector<17x128xf32>
    %c1_34 = arith.constant 1 : index
    %c0_35 = arith.constant 0 : index
    %53 = vector.load %arg20[%c1_34, %c0_35] : memref<20x128xf32, #tpu.memory_space<vmem>>, vector<17x128xf32>
    %54 = vector.extract_strided_slice %42 {offsets = [1, 0], sizes = [1, 128], strides = [1, 1]} : vector<4x128xf32> to vector<1x128xf32>
    %55 = vector.broadcast %54 : vector<1x128xf32> to vector<17x128xf32>
    %56 = arith.mulf %53, %55 : vector<17x128xf32>
    %57 = arith.addf %52, %56 : vector<17x128xf32>
    %c2 = arith.constant 2 : index
    %c0_36 = arith.constant 0 : index
    %58 = vector.load %arg20[%c2, %c0_36] : memref<20x128xf32, #tpu.memory_space<vmem>>, vector<17x128xf32>
    %59 = vector.extract_strided_slice %42 {offsets = [2, 0], sizes = [1, 128], strides = [1, 1]} : vector<4x128xf32> to vector<1x128xf32>
    %60 = vector.broadcast %59 : vector<1x128xf32> to vector<17x128xf32>
    %61 = arith.mulf %58, %60 : vector<17x128xf32>
    %62 = arith.addf %57, %61 : vector<17x128xf32>
    %c3_37 = arith.constant 3 : index
    %c0_38 = arith.constant 0 : index
    %63 = vector.load %arg20[%c3_37, %c0_38] : memref<20x128xf32, #tpu.memory_space<vmem>>, vector<17x128xf32>
    %64 = vector.extract_strided_slice %42 {offsets = [3, 0], sizes = [1, 128], strides = [1, 1]} : vector<4x128xf32> to vector<1x128xf32>
    %65 = vector.broadcast %64 : vector<1x128xf32> to vector<17x128xf32>
    %66 = arith.mulf %63, %65 : vector<17x128xf32>
    %67 = arith.addf %62, %66 : vector<17x128xf32>
    %c0_39 = arith.constant 0 : index
    %c0_40 = arith.constant 0 : index
    %c0_41 = arith.constant 0 : index
    %68 = vector.load %arg9[%c0_39, %c0_40, %c0_41] : memref<2x1x128xf32, #tpu.memory_space<vmem>>, vector<1x1x128xf32>
    %69 = vector.shape_cast %68 : vector<1x1x128xf32> to vector<1x128xf32>
    %70 = vector.broadcast %69 : vector<1x128xf32> to vector<17x128xf32>
    %71 = arith.addf %67, %70 : vector<17x128xf32>
    %72 = arith.negf %71 : vector<17x128xf32>
    %73 = math.exp %72 : vector<17x128xf32>
    %cst_42 = arith.constant 1.000000e+00 : f32
    %74 = vector.broadcast %cst_42 : f32 to vector<17x128xf32>
    %75 = arith.addf %74, %73 : vector<17x128xf32>
    %76 = arith.divf %74, %75 : vector<17x128xf32>
    %77 = arith.mulf %71, %76 : vector<17x128xf32>
    %78 = arith.truncf %77 : vector<17x128xf32> to vector<17x128xbf16>
    %c0_43 = arith.constant 0 : index
    %c0_44 = arith.constant 0 : index
    %c0_45 = arith.constant 0 : index
    %79 = vector.load %arg10[%c0_43, %c0_44, %c0_45] : memref<2x128x128xf32, #tpu.memory_space<vmem>>, vector<1x128x128xf32>
    %80 = vector.shape_cast %79 : vector<1x128x128xf32> to vector<128x128xf32>
    %81 = arith.truncf %80 : vector<128x128xf32> to vector<128x128xbf16>
    %cst_46 = arith.constant dense<0.000000e+00> : vector<17x128xf32>
    %82 = tpu.matmul %78, %81, %cst_46 {dimension_numbers = #tpu.dot_dimension_numbers<[1], [0], [0], [1], [0, 0, 1, 1], [], []>} : vector<17x128xbf16>, vector<128x128xbf16>, vector<17x128xf32> -> vector<17x128xf32>
    %c0_47 = arith.constant 0 : index
    %c0_48 = arith.constant 0 : index
    %c0_49 = arith.constant 0 : index
    %83 = vector.load %arg11[%c0_47, %c0_48, %c0_49] : memref<2x1x128xf32, #tpu.memory_space<vmem>>, vector<1x1x128xf32>
    %84 = vector.shape_cast %83 : vector<1x1x128xf32> to vector<1x128xf32>
    %85 = vector.broadcast %84 : vector<1x128xf32> to vector<17x128xf32>
    %86 = arith.addf %82, %85 : vector<17x128xf32>
    %cst_50 = arith.constant 2.000000e+01 : f32
    %87 = vector.broadcast %cst_50 : f32 to vector<17x128xf32>
    %88 = arith.cmpf ogt, %86, %87 : vector<17x128xf32>
    %cst_51 = arith.constant 2.000000e+01 : f32
    %89 = vector.broadcast %cst_51 : f32 to vector<17x128xf32>
    %90 = arith.minimumf %86, %89 : vector<17x128xf32>
    %91 = math.exp %90 : vector<17x128xf32>
    %92 = math.log1p %91 : vector<17x128xf32>
    %93 = arith.select %88, %86, %92 : vector<17x128xi1>, vector<17x128xf32>
    %94 = arith.mulf %93, %77 : vector<17x128xf32>
    %c0_52 = arith.constant 0 : index
    %c0_53 = arith.constant 0 : index
    %c0_54 = arith.constant 0 : index
    %95 = vector.load %arg14[%c0_52, %c0_53, %c0_54] : memref<2x1x128xf32, #tpu.memory_space<vmem>>, vector<1x1x128xf32>
    %96 = vector.shape_cast %95 : vector<1x1x128xf32> to vector<1x128xf32>
    %97 = vector.broadcast %96 : vector<1x128xf32> to vector<17x128xf32>
    %98 = arith.mulf %77, %97 : vector<17x128xf32>
    %c0_55 = arith.constant 0 : index
    %c0_56 = arith.constant 0 : index
    %c0_57 = arith.constant 0 : index
    %99 = vector.load %arg12[%c0_55, %c0_56, %c0_57] : memref<2x64x128xf32, #tpu.memory_space<vmem>>, vector<1x64x128xf32>
    %100 = vector.shape_cast %99 : vector<1x64x128xf32> to vector<64x128xf32>
    %101 = arith.truncf %100 : vector<64x128xf32> to vector<64x128xbf16>
    %cst_58 = arith.constant dense<0.000000e+00> : vector<64x17xf32>
    %102 = tpu.matmul %101, %78, %cst_58 {dimension_numbers = #tpu.dot_dimension_numbers<[1], [1], [0], [0], [0, 0, 1, 0], [], []>} : vector<64x128xbf16>, vector<17x128xbf16>, vector<64x17xf32> -> vector<64x17xf32>
    %103 = vector.extract_strided_slice %102 {offsets = [0, 0], sizes = [16, 17], strides = [1, 1]} : vector<64x17xf32> to vector<16x17xf32>
    %104 = vector.extract_strided_slice %102 {offsets = [16, 0], sizes = [16, 17], strides = [1, 1]} : vector<64x17xf32> to vector<16x17xf32>
    %105 = vector.extract_strided_slice %102 {offsets = [32, 0], sizes = [16, 17], strides = [1, 1]} : vector<64x17xf32> to vector<16x17xf32>
    %106 = vector.extract_strided_slice %102 {offsets = [48, 0], sizes = [16, 17], strides = [1, 1]} : vector<64x17xf32> to vector<16x17xf32>
    %c0_59 = arith.constant 0 : index
    %c0_60 = arith.constant 0 : index
    %c0_61 = arith.constant 0 : index
    %107 = vector.load %arg13[%c0_59, %c0_60, %c0_61] : memref<2x16x128xf32, #tpu.memory_space<vmem>>, vector<1x16x128xf32>
    %108 = vector.shape_cast %107 : vector<1x16x128xf32> to vector<16x128xf32>
    %109 = vector.extract_strided_slice %93 {offsets = [0, 0], sizes = [1, 128], strides = [1, 1]} : vector<17x128xf32> to vector<1x128xf32>
    %110 = vector.broadcast %109 : vector<1x128xf32> to vector<16x128xf32>
    %111 = arith.mulf %110, %108 : vector<16x128xf32>
    %112 = math.exp %111 : vector<16x128xf32>
    %c0_62 = arith.constant 0 : index
    %c0_63 = arith.constant 0 : index
    %113 = vector.load %arg21[%c0_62, %c0_63] : memref<272x128xf32, #tpu.memory_space<vmem>>, vector<16x128xf32>
    tpu.vector_store %arg21[%c0_62, %c0_63], %112 {strides = array<i32>} : memref<272x128xf32, #tpu.memory_space<vmem>>, vector<16x128xf32>,
    %114 = vector.extract_strided_slice %103 {offsets = [0, 0], sizes = [16, 1], strides = [1, 1]} : vector<16x17xf32> to vector<16x1xf32>
    %115 = vector.extract_strided_slice %105 {offsets = [0, 0], sizes = [16, 1], strides = [1, 1]} : vector<16x17xf32> to vector<16x1xf32>
    %116 = vector.shape_cast %114 : vector<16x1xf32> to vector<16x1xf32>
    %117 = vector.broadcast %116 : vector<16x1xf32> to vector<16x128xf32>
    %118 = vector.shape_cast %115 : vector<16x1xf32> to vector<16x1xf32>
    %119 = vector.broadcast %118 : vector<16x1xf32> to vector<16x128xf32>
    %120 = arith.select %2, %117, %119 : vector<16x128xi1>, vector<16x128xf32>
    %121 = vector.extract_strided_slice %94 {offsets = [0, 0], sizes = [1, 128], strides = [1, 1]} : vector<17x128xf32> to vector<1x128xf32>
    %122 = vector.broadcast %121 : vector<1x128xf32> to vector<16x128xf32>
    %123 = arith.mulf %120, %122 : vector<16x128xf32>
    %c0_64 = arith.constant 0 : index
    %c0_65 = arith.constant 0 : index
    %124 = vector.load %arg22[%c0_64, %c0_65] : memref<272x128xf32, #tpu.memory_space<vmem>>, vector<16x128xf32>
    tpu.vector_store %arg22[%c0_64, %c0_65], %123 {strides = array<i32>} : memref<272x128xf32, #tpu.memory_space<vmem>>, vector<16x128xf32>,
    %125 = vector.extract_strided_slice %104 {offsets = [0, 0], sizes = [16, 1], strides = [1, 1]} : vector<16x17xf32> to vector<16x1xf32>
    %126 = vector.extract_strided_slice %106 {offsets = [0, 0], sizes = [16, 1], strides = [1, 1]} : vector<16x17xf32> to vector<16x1xf32>
    %127 = vector.shape_cast %125 : vector<16x1xf32> to vector<16x1xf32>
    %128 = vector.broadcast %127 : vector<16x1xf32> to vector<16x128xf32>
    %129 = vector.shape_cast %126 : vector<16x1xf32> to vector<16x1xf32>
    %130 = vector.broadcast %129 : vector<16x1xf32> to vector<16x128xf32>
    %131 = arith.select %2, %128, %130 : vector<16x128xi1>, vector<16x128xf32>
    %c0_66 = arith.constant 0 : index
    %c0_67 = arith.constant 0 : index
    %132 = vector.load %arg23[%c0_66, %c0_67] : memref<272x128xf32, #tpu.memory_space<vmem>>, vector<16x128xf32>
    tpu.vector_store %arg23[%c0_66, %c0_67], %131 {strides = array<i32>} : memref<272x128xf32, #tpu.memory_space<vmem>>, vector<16x128xf32>,
    %133 = vector.extract_strided_slice %93 {offsets = [1, 0], sizes = [1, 128], strides = [1, 1]} : vector<17x128xf32> to vector<1x128xf32>
    %134 = vector.broadcast %133 : vector<1x128xf32> to vector<16x128xf32>
    %135 = arith.mulf %134, %108 : vector<16x128xf32>
    %136 = math.exp %135 : vector<16x128xf32>
    %c16 = arith.constant 16 : index
    %c0_68 = arith.constant 0 : index
    %137 = vector.load %arg21[%c16, %c0_68] : memref<272x128xf32, #tpu.memory_space<vmem>>, vector<16x128xf32>
    tpu.vector_store %arg21[%c16, %c0_68], %136 {strides = array<i32>} : memref<272x128xf32, #tpu.memory_space<vmem>>, vector<16x128xf32>,
    %138 = vector.extract_strided_slice %103 {offsets = [0, 1], sizes = [16, 1], strides = [1, 1]} : vector<16x17xf32> to vector<16x1xf32>
    %139 = vector.extract_strided_slice %105 {offsets = [0, 1], sizes = [16, 1], strides = [1, 1]} : vector<16x17xf32> to vector<16x1xf32>
    %140 = vector.shape_cast %138 : vector<16x1xf32> to vector<16x1xf32>
    %141 = vector.broadcast %140 : vector<16x1xf32> to vector<16x128xf32>
    %142 = vector.shape_cast %139 : vector<16x1xf32> to vector<16x1xf32>
    %143 = vector.broadcast %142 : vector<16x1xf32> to vector<16x128xf32>
    %144 = arith.select %2, %141, %143 : vector<16x128xi1>, vector<16x128xf32>
    %145 = vector.extract_strided_slice %94 {offsets = [1, 0], sizes = [1, 128], strides = [1, 1]} : vector<17x128xf32> to vector<1x128xf32>
    %146 = vector.broadcast %145 : vector<1x128xf32> to vector<16x128xf32>
    %147 = arith.mulf %144, %146 : vector<16x128xf32>
    %c16_69 = arith.constant 16 : index
    %c0_70 = arith.constant 0 : index
    %148 = vector.load %arg22[%c16_69, %c0_70] : memref<272x128xf32, #tpu.memory_space<vmem>>, vector<16x128xf32>
    tpu.vector_store %arg22[%c16_69, %c0_70], %147 {strides = array<i32>} : memref<272x128xf32, #tpu.memory_space<vmem>>, vector<16x128xf32>,
    %149 = vector.extract_strided_slice %104 {offsets = [0, 1], sizes = [16, 1], strides = [1, 1]} : vector<16x17xf32> to vector<16x1xf32>
    %150 = vector.extract_strided_slice %106 {offsets = [0, 1], sizes = [16, 1], strides = [1, 1]} : vector<16x17xf32> to vector<16x1xf32>
    %151 = vector.shape_cast %149 : vector<16x1xf32> to vector<16x1xf32>
    %152 = vector.broadcast %151 : vector<16x1xf32> to vector<16x128xf32>
    %153 = vector.shape_cast %150 : vector<16x1xf32> to vector<16x1xf32>
    %154 = vector.broadcast %153 : vector<16x1xf32> to vector<16x128xf32>
    %155 = arith.select %2, %152, %154 : vector<16x128xi1>, vector<16x128xf32>
    %c16_71 = arith.constant 16 : index
    %c0_72 = arith.constant 0 : index
    %156 = vector.load %arg23[%c16_71, %c0_72] : memref<272x128xf32, #tpu.memory_space<vmem>>, vector<16x128xf32>
    tpu.vector_store %arg23[%c16_71, %c0_72], %155 {strides = array<i32>} : memref<272x128xf32, #tpu.memory_space<vmem>>, vector<16x128xf32>,
    %157 = vector.extract_strided_slice %93 {offsets = [2, 0], sizes = [1, 128], strides = [1, 1]} : vector<17x128xf32> to vector<1x128xf32>
    %158 = vector.broadcast %157 : vector<1x128xf32> to vector<16x128xf32>
    %159 = arith.mulf %158, %108 : vector<16x128xf32>
    %160 = math.exp %159 : vector<16x128xf32>
    %c32 = arith.constant 32 : index
    %c0_73 = arith.constant 0 : index
    %161 = vector.load %arg21[%c32, %c0_73] : memref<272x128xf32, #tpu.memory_space<vmem>>, vector<16x128xf32>
    tpu.vector_store %arg21[%c32, %c0_73], %160 {strides = array<i32>} : memref<272x128xf32, #tpu.memory_space<vmem>>, vector<16x128xf32>,
    %162 = vector.extract_strided_slice %103 {offsets = [0, 2], sizes = [16, 1], strides = [1, 1]} : vector<16x17xf32> to vector<16x1xf32>
    %163 = vector.extract_strided_slice %105 {offsets = [0, 2], sizes = [16, 1], strides = [1, 1]} : vector<16x17xf32> to vector<16x1xf32>
    %164 = vector.shape_cast %162 : vector<16x1xf32> to vector<16x1xf32>
    %165 = vector.broadcast %164 : vector<16x1xf32> to vector<16x128xf32>
    %166 = vector.shape_cast %163 : vector<16x1xf32> to vector<16x1xf32>
    %167 = vector.broadcast %166 : vector<16x1xf32> to vector<16x128xf32>
    %168 = arith.select %2, %165, %167 : vector<16x128xi1>, vector<16x128xf32>
    %169 = vector.extract_strided_slice %94 {offsets = [2, 0], sizes = [1, 128], strides = [1, 1]} : vector<17x128xf32> to vector<1x128xf32>
    %170 = vector.broadcast %169 : vector<1x128xf32> to vector<16x128xf32>
    %171 = arith.mulf %168, %170 : vector<16x128xf32>
    %c32_74 = arith.constant 32 : index
    %c0_75 = arith.constant 0 : index
    %172 = vector.load %arg22[%c32_74, %c0_75] : memref<272x128xf32, #tpu.memory_space<vmem>>, vector<16x128xf32>
    tpu.vector_store %arg22[%c32_74, %c0_75], %171 {strides = array<i32>} : memref<272x128xf32, #tpu.memory_space<vmem>>, vector<16x128xf32>,
    %173 = vector.extract_strided_slice %104 {offsets = [0, 2], sizes = [16, 1], strides = [1, 1]} : vector<16x17xf32> to vector<16x1xf32>
    %174 = vector.extract_strided_slice %106 {offsets = [0, 2], sizes = [16, 1], strides = [1, 1]} : vector<16x17xf32> to vector<16x1xf32>
    %175 = vector.shape_cast %173 : vector<16x1xf32> to vector<16x1xf32>
    %176 = vector.broadcast %175 : vector<16x1xf32> to vector<16x128xf32>
    %177 = vector.shape_cast %174 : vector<16x1xf32> to vector<16x1xf32>
    %178 = vector.broadcast %177 : vector<16x1xf32> to vector<16x128xf32>
    %179 = arith.select %2, %176, %178 : vector<16x128xi1>, vector<16x128xf32>
    %c32_76 = arith.constant 32 : index
    %c0_77 = arith.constant 0 : index
    %180 = vector.load %arg23[%c32_76, %c0_77] : memref<272x128xf32, #tpu.memory_space<vmem>>, vector<16x128xf32>
    tpu.vector_store %arg23[%c32_76, %c0_77], %179 {strides = array<i32>} : memref<272x128xf32, #tpu.memory_space<vmem>>, vector<16x128xf32>,
    %181 = vector.extract_strided_slice %93 {offsets = [3, 0], sizes = [1, 128], strides = [1, 1]} : vector<17x128xf32> to vector<1x128xf32>
    %182 = vector.broadcast %181 : vector<1x128xf32> to vector<16x128xf32>
    %183 = arith.mulf %182, %108 : vector<16x128xf32>
    %184 = math.exp %183 : vector<16x128xf32>
    %c48 = arith.constant 48 : index
    %c0_78 = arith.constant 0 : index
    %185 = vector.load %arg21[%c48, %c0_78] : memref<272x128xf32, #tpu.memory_space<vmem>>, vector<16x128xf32>
    tpu.vector_store %arg21[%c48, %c0_78], %184 {strides = array<i32>} : memref<272x128xf32, #tpu.memory_space<vmem>>, vector<16x128xf32>,
    %186 = vector.extract_strided_slice %103 {offsets = [0, 3], sizes = [16, 1], strides = [1, 1]} : vector<16x17xf32> to vector<16x1xf32>
    %187 = vector.extract_strided_slice %105 {offsets = [0, 3], sizes = [16, 1], strides = [1, 1]} : vector<16x17xf32> to vector<16x1xf32>
    %188 = vector.shape_cast %186 : vector<16x1xf32> to vector<16x1xf32>
    %189 = vector.broadcast %188 : vector<16x1xf32> to vector<16x128xf32>
    %190 = vector.shape_cast %187 : vector<16x1xf32> to vector<16x1xf32>
    %191 = vector.broadcast %190 : vector<16x1xf32> to vector<16x128xf32>
    %192 = arith.select %2, %189, %191 : vector<16x128xi1>, vector<16x128xf32>
    %193 = vector.extract_strided_slice %94 {offsets = [3, 0], sizes = [1, 128], strides = [1, 1]} : vector<17x128xf32> to vector<1x128xf32>
    %194 = vector.broadcast %193 : vector<1x128xf32> to vector<16x128xf32>
    %195 = arith.mulf %192, %194 : vector<16x128xf32>
    %c48_79 = arith.constant 48 : index
    %c0_80 = arith.constant 0 : index
    %196 = vector.load %arg22[%c48_79, %c0_80] : memref<272x128xf32, #tpu.memory_space<vmem>>, vector<16x128xf32>
    tpu.vector_store %arg22[%c48_79, %c0_80], %195 {strides = array<i32>} : memref<272x128xf32, #tpu.memory_space<vmem>>, vector<16x128xf32>,
    %197 = vector.extract_strided_slice %104 {offsets = [0, 3], sizes = [16, 1], strides = [1, 1]} : vector<16x17xf32> to vector<16x1xf32>
    %198 = vector.extract_strided_slice %106 {offsets = [0, 3], sizes = [16, 1], strides = [1, 1]} : vector<16x17xf32> to vector<16x1xf32>
    %199 = vector.shape_cast %197 : vector<16x1xf32> to vector<16x1xf32>
    %200 = vector.broadcast %199 : vector<16x1xf32> to vector<16x128xf32>
    %201 = vector.shape_cast %198 : vector<16x1xf32> to vector<16x1xf32>
    %202 = vector.broadcast %201 : vector<16x1xf32> to vector<16x128xf32>
    %203 = arith.select %2, %200, %202 : vector<16x128xi1>, vector<16x128xf32>
    %c48_81 = arith.constant 48 : index
    %c0_82 = arith.constant 0 : index
    %204 = vector.load %arg23[%c48_81, %c0_82] : memref<272x128xf32, #tpu.memory_space<vmem>>, vector<16x128xf32>
    tpu.vector_store %arg23[%c48_81, %c0_82], %203 {strides = array<i32>} : memref<272x128xf32, #tpu.memory_space<vmem>>, vector<16x128xf32>,
    %205 = vector.extract_strided_slice %93 {offsets = [4, 0], sizes = [1, 128], strides = [1, 1]} : vector<17x128xf32> to vector<1x128xf32>
    %206 = vector.broadcast %205 : vector<1x128xf32> to vector<16x128xf32>
    %207 = arith.mulf %206, %108 : vector<16x128xf32>
    %208 = math.exp %207 : vector<16x128xf32>
    %c64_83 = arith.constant 64 : index
    %c0_84 = arith.constant 0 : index
    %209 = vector.load %arg21[%c64_83, %c0_84] : memref<272x128xf32, #tpu.memory_space<vmem>>, vector<16x128xf32>
    tpu.vector_store %arg21[%c64_83, %c0_84], %208 {strides = array<i32>} : memref<272x128xf32, #tpu.memory_space<vmem>>, vector<16x128xf32>,
    %210 = vector.extract_strided_slice %103 {offsets = [0, 4], sizes = [16, 1], strides = [1, 1]} : vector<16x17xf32> to vector<16x1xf32>
    %211 = vector.extract_strided_slice %105 {offsets = [0, 4], sizes = [16, 1], strides = [1, 1]} : vector<16x17xf32> to vector<16x1xf32>
    %212 = vector.shape_cast %210 : vector<16x1xf32> to vector<16x1xf32>
    %213 = vector.broadcast %212 : vector<16x1xf32> to vector<16x128xf32>
    %214 = vector.shape_cast %211 : vector<16x1xf32> to vector<16x1xf32>
    %215 = vector.broadcast %214 : vector<16x1xf32> to vector<16x128xf32>
    %216 = arith.select %2, %213, %215 : vector<16x128xi1>, vector<16x128xf32>
    %217 = vector.extract_strided_slice %94 {offsets = [4, 0], sizes = [1, 128], strides = [1, 1]} : vector<17x128xf32> to vector<1x128xf32>
    %218 = vector.broadcast %217 : vector<1x128xf32> to vector<16x128xf32>
    %219 = arith.mulf %216, %218 : vector<16x128xf32>
    %c64_85 = arith.constant 64 : index
    %c0_86 = arith.constant 0 : index
    %220 = vector.load %arg22[%c64_85, %c0_86] : memref<272x128xf32, #tpu.memory_space<vmem>>, vector<16x128xf32>
    tpu.vector_store %arg22[%c64_85, %c0_86], %219 {strides = array<i32>} : memref<272x128xf32, #tpu.memory_space<vmem>>, vector<16x128xf32>,
    %221 = vector.extract_strided_slice %104 {offsets = [0, 4], sizes = [16, 1], strides = [1, 1]} : vector<16x17xf32> to vector<16x1xf32>
    %222 = vector.extract_strided_slice %106 {offsets = [0, 4], sizes = [16, 1], strides = [1, 1]} : vector<16x17xf32> to vector<16x1xf32>
    %223 = vector.shape_cast %221 : vector<16x1xf32> to vector<16x1xf32>
    %224 = vector.broadcast %223 : vector<16x1xf32> to vector<16x128xf32>
    %225 = vector.shape_cast %222 : vector<16x1xf32> to vector<16x1xf32>
    %226 = vector.broadcast %225 : vector<16x1xf32> to vector<16x128xf32>
    %227 = arith.select %2, %224, %226 : vector<16x128xi1>, vector<16x128xf32>
    %c64_87 = arith.constant 64 : index
    %c0_88 = arith.constant 0 : index
    %228 = vector.load %arg23[%c64_87, %c0_88] : memref<272x128xf32, #tpu.memory_space<vmem>>, vector<16x128xf32>
    tpu.vector_store %arg23[%c64_87, %c0_88], %227 {strides = array<i32>} : memref<272x128xf32, #tpu.memory_space<vmem>>, vector<16x128xf32>,
    %229 = vector.extract_strided_slice %93 {offsets = [5, 0], sizes = [1, 128], strides = [1, 1]} : vector<17x128xf32> to vector<1x128xf32>
    %230 = vector.broadcast %229 : vector<1x128xf32> to vector<16x128xf32>
    %231 = arith.mulf %230, %108 : vector<16x128xf32>
    %232 = math.exp %231 : vector<16x128xf32>
    %c80 = arith.constant 80 : index
    %c0_89 = arith.constant 0 : index
    %233 = vector.load %arg21[%c80, %c0_89] : memref<272x128xf32, #tpu.memory_space<vmem>>, vector<16x128xf32>
    tpu.vector_store %arg21[%c80, %c0_89], %232 {strides = array<i32>} : memref<272x128xf32, #tpu.memory_space<vmem>>, vector<16x128xf32>,
    %234 = vector.extract_strided_slice %103 {offsets = [0, 5], sizes = [16, 1], strides = [1, 1]} : vector<16x17xf32> to vector<16x1xf32>
    %235 = vector.extract_strided_slice %105 {offsets = [0, 5], sizes = [16, 1], strides = [1, 1]} : vector<16x17xf32> to vector<16x1xf32>
    %236 = vector.shape_cast %234 : vector<16x1xf32> to vector<16x1xf32>
    %237 = vector.broadcast %236 : vector<16x1xf32> to vector<16x128xf32>
    %238 = vector.shape_cast %235 : vector<16x1xf32> to vector<16x1xf32>
    %239 = vector.broadcast %238 : vector<16x1xf32> to vector<16x128xf32>
    %240 = arith.select %2, %237, %239 : vector<16x128xi1>, vector<16x128xf32>
    %241 = vector.extract_strided_slice %94 {offsets = [5, 0], sizes = [1, 128], strides = [1, 1]} : vector<17x128xf32> to vector<1x128xf32>
    %242 = vector.broadcast %241 : vector<1x128xf32> to vector<16x128xf32>
    %243 = arith.mulf %240, %242 : vector<16x128xf32>
    %c80_90 = arith.constant 80 : index
    %c0_91 = arith.constant 0 : index
    %244 = vector.load %arg22[%c80_90, %c0_91] : memref<272x128xf32, #tpu.memory_space<vmem>>, vector<16x128xf32>
    tpu.vector_store %arg22[%c80_90, %c0_91], %243 {strides = array<i32>} : memref<272x128xf32, #tpu.memory_space<vmem>>, vector<16x128xf32>,
    %245 = vector.extract_strided_slice %104 {offsets = [0, 5], sizes = [16, 1], strides = [1, 1]} : vector<16x17xf32> to vector<16x1xf32>
    %246 = vector.extract_strided_slice %106 {offsets = [0, 5], sizes = [16, 1], strides = [1, 1]} : vector<16x17xf32> to vector<16x1xf32>
    %247 = vector.shape_cast %245 : vector<16x1xf32> to vector<16x1xf32>
    %248 = vector.broadcast %247 : vector<16x1xf32> to vector<16x128xf32>
    %249 = vector.shape_cast %246 : vector<16x1xf32> to vector<16x1xf32>
    %250 = vector.broadcast %249 : vector<16x1xf32> to vector<16x128xf32>
    %251 = arith.select %2, %248, %250 : vector<16x128xi1>, vector<16x128xf32>
    %c80_92 = arith.constant 80 : index
    %c0_93 = arith.constant 0 : index
    %252 = vector.load %arg23[%c80_92, %c0_93] : memref<272x128xf32, #tpu.memory_space<vmem>>, vector<16x128xf32>
    tpu.vector_store %arg23[%c80_92, %c0_93], %251 {strides = array<i32>} : memref<272x128xf32, #tpu.memory_space<vmem>>, vector<16x128xf32>,
    %253 = vector.extract_strided_slice %93 {offsets = [6, 0], sizes = [1, 128], strides = [1, 1]} : vector<17x128xf32> to vector<1x128xf32>
    %254 = vector.broadcast %253 : vector<1x128xf32> to vector<16x128xf32>
    %255 = arith.mulf %254, %108 : vector<16x128xf32>
    %256 = math.exp %255 : vector<16x128xf32>
    %c96 = arith.constant 96 : index
    %c0_94 = arith.constant 0 : index
    %257 = vector.load %arg21[%c96, %c0_94] : memref<272x128xf32, #tpu.memory_space<vmem>>, vector<16x128xf32>
    tpu.vector_store %arg21[%c96, %c0_94], %256 {strides = array<i32>} : memref<272x128xf32, #tpu.memory_space<vmem>>, vector<16x128xf32>,
    %258 = vector.extract_strided_slice %103 {offsets = [0, 6], sizes = [16, 1], strides = [1, 1]} : vector<16x17xf32> to vector<16x1xf32>
    %259 = vector.extract_strided_slice %105 {offsets = [0, 6], sizes = [16, 1], strides = [1, 1]} : vector<16x17xf32> to vector<16x1xf32>
    %260 = vector.shape_cast %258 : vector<16x1xf32> to vector<16x1xf32>
    %261 = vector.broadcast %260 : vector<16x1xf32> to vector<16x128xf32>
    %262 = vector.shape_cast %259 : vector<16x1xf32> to vector<16x1xf32>
    %263 = vector.broadcast %262 : vector<16x1xf32> to vector<16x128xf32>
    %264 = arith.select %2, %261, %263 : vector<16x128xi1>, vector<16x128xf32>
    %265 = vector.extract_strided_slice %94 {offsets = [6, 0], sizes = [1, 128], strides = [1, 1]} : vector<17x128xf32> to vector<1x128xf32>
    %266 = vector.broadcast %265 : vector<1x128xf32> to vector<16x128xf32>
    %267 = arith.mulf %264, %266 : vector<16x128xf32>
    %c96_95 = arith.constant 96 : index
    %c0_96 = arith.constant 0 : index
    %268 = vector.load %arg22[%c96_95, %c0_96] : memref<272x128xf32, #tpu.memory_space<vmem>>, vector<16x128xf32>
    tpu.vector_store %arg22[%c96_95, %c0_96], %267 {strides = array<i32>} : memref<272x128xf32, #tpu.memory_space<vmem>>, vector<16x128xf32>,
    %269 = vector.extract_strided_slice %104 {offsets = [0, 6], sizes = [16, 1], strides = [1, 1]} : vector<16x17xf32> to vector<16x1xf32>
    %270 = vector.extract_strided_slice %106 {offsets = [0, 6], sizes = [16, 1], strides = [1, 1]} : vector<16x17xf32> to vector<16x1xf32>
    %271 = vector.shape_cast %269 : vector<16x1xf32> to vector<16x1xf32>
    %272 = vector.broadcast %271 : vector<16x1xf32> to vector<16x128xf32>
    %273 = vector.shape_cast %270 : vector<16x1xf32> to vector<16x1xf32>
    %274 = vector.broadcast %273 : vector<16x1xf32> to vector<16x128xf32>
    %275 = arith.select %2, %272, %274 : vector<16x128xi1>, vector<16x128xf32>
    %c96_97 = arith.constant 96 : index
    %c0_98 = arith.constant 0 : index
    %276 = vector.load %arg23[%c96_97, %c0_98] : memref<272x128xf32, #tpu.memory_space<vmem>>, vector<16x128xf32>
    tpu.vector_store %arg23[%c96_97, %c0_98], %275 {strides = array<i32>} : memref<272x128xf32, #tpu.memory_space<vmem>>, vector<16x128xf32>,
    %277 = vector.extract_strided_slice %93 {offsets = [7, 0], sizes = [1, 128], strides = [1, 1]} : vector<17x128xf32> to vector<1x128xf32>
    %278 = vector.broadcast %277 : vector<1x128xf32> to vector<16x128xf32>
    %279 = arith.mulf %278, %108 : vector<16x128xf32>
    %280 = math.exp %279 : vector<16x128xf32>
    %c112 = arith.constant 112 : index
    %c0_99 = arith.constant 0 : index
    %281 = vector.load %arg21[%c112, %c0_99] : memref<272x128xf32, #tpu.memory_space<vmem>>, vector<16x128xf32>
    tpu.vector_store %arg21[%c112, %c0_99], %280 {strides = array<i32>} : memref<272x128xf32, #tpu.memory_space<vmem>>, vector<16x128xf32>,
    %282 = vector.extract_strided_slice %103 {offsets = [0, 7], sizes = [16, 1], strides = [1, 1]} : vector<16x17xf32> to vector<16x1xf32>
    %283 = vector.extract_strided_slice %105 {offsets = [0, 7], sizes = [16, 1], strides = [1, 1]} : vector<16x17xf32> to vector<16x1xf32>
    %284 = vector.shape_cast %282 : vector<16x1xf32> to vector<16x1xf32>
    %285 = vector.broadcast %284 : vector<16x1xf32> to vector<16x128xf32>
    %286 = vector.shape_cast %283 : vector<16x1xf32> to vector<16x1xf32>
    %287 = vector.broadcast %286 : vector<16x1xf32> to vector<16x128xf32>
    %288 = arith.select %2, %285, %287 : vector<16x128xi1>, vector<16x128xf32>
    %289 = vector.extract_strided_slice %94 {offsets = [7, 0], sizes = [1, 128], strides = [1, 1]} : vector<17x128xf32> to vector<1x128xf32>
    %290 = vector.broadcast %289 : vector<1x128xf32> to vector<16x128xf32>
    %291 = arith.mulf %288, %290 : vector<16x128xf32>
    %c112_100 = arith.constant 112 : index
    %c0_101 = arith.constant 0 : index
    %292 = vector.load %arg22[%c112_100, %c0_101] : memref<272x128xf32, #tpu.memory_space<vmem>>, vector<16x128xf32>
    tpu.vector_store %arg22[%c112_100, %c0_101], %291 {strides = array<i32>} : memref<272x128xf32, #tpu.memory_space<vmem>>, vector<16x128xf32>,
    %293 = vector.extract_strided_slice %104 {offsets = [0, 7], sizes = [16, 1], strides = [1, 1]} : vector<16x17xf32> to vector<16x1xf32>
    %294 = vector.extract_strided_slice %106 {offsets = [0, 7], sizes = [16, 1], strides = [1, 1]} : vector<16x17xf32> to vector<16x1xf32>
    %295 = vector.shape_cast %293 : vector<16x1xf32> to vector<16x1xf32>
    %296 = vector.broadcast %295 : vector<16x1xf32> to vector<16x128xf32>
    %297 = vector.shape_cast %294 : vector<16x1xf32> to vector<16x1xf32>
    %298 = vector.broadcast %297 : vector<16x1xf32> to vector<16x128xf32>
    %299 = arith.select %2, %296, %298 : vector<16x128xi1>, vector<16x128xf32>
    %c112_102 = arith.constant 112 : index
    %c0_103 = arith.constant 0 : index
    %300 = vector.load %arg23[%c112_102, %c0_103] : memref<272x128xf32, #tpu.memory_space<vmem>>, vector<16x128xf32>
    tpu.vector_store %arg23[%c112_102, %c0_103], %299 {strides = array<i32>} : memref<272x128xf32, #tpu.memory_space<vmem>>, vector<16x128xf32>,
    %301 = vector.extract_strided_slice %93 {offsets = [8, 0], sizes = [1, 128], strides = [1, 1]} : vector<17x128xf32> to vector<1x128xf32>
    %302 = vector.broadcast %301 : vector<1x128xf32> to vector<16x128xf32>
    %303 = arith.mulf %302, %108 : vector<16x128xf32>
    %304 = math.exp %303 : vector<16x128xf32>
    %c128 = arith.constant 128 : index
    %c0_104 = arith.constant 0 : index
    %305 = vector.load %arg21[%c128, %c0_104] : memref<272x128xf32, #tpu.memory_space<vmem>>, vector<16x128xf32>
    tpu.vector_store %arg21[%c128, %c0_104], %304 {strides = array<i32>} : memref<272x128xf32, #tpu.memory_space<vmem>>, vector<16x128xf32>,
    %306 = vector.extract_strided_slice %103 {offsets = [0, 8], sizes = [16, 1], strides = [1, 1]} : vector<16x17xf32> to vector<16x1xf32>
    %307 = vector.extract_strided_slice %105 {offsets = [0, 8], sizes = [16, 1], strides = [1, 1]} : vector<16x17xf32> to vector<16x1xf32>
    %308 = vector.shape_cast %306 : vector<16x1xf32> to vector<16x1xf32>
    %309 = vector.broadcast %308 : vector<16x1xf32> to vector<16x128xf32>
    %310 = vector.shape_cast %307 : vector<16x1xf32> to vector<16x1xf32>
    %311 = vector.broadcast %310 : vector<16x1xf32> to vector<16x128xf32>
    %312 = arith.select %2, %309, %311 : vector<16x128xi1>, vector<16x128xf32>
    %313 = vector.extract_strided_slice %94 {offsets = [8, 0], sizes = [1, 128], strides = [1, 1]} : vector<17x128xf32> to vector<1x128xf32>
    %314 = vector.broadcast %313 : vector<1x128xf32> to vector<16x128xf32>
    %315 = arith.mulf %312, %314 : vector<16x128xf32>
    %c128_105 = arith.constant 128 : index
    %c0_106 = arith.constant 0 : index
    %316 = vector.load %arg22[%c128_105, %c0_106] : memref<272x128xf32, #tpu.memory_space<vmem>>, vector<16x128xf32>
    tpu.vector_store %arg22[%c128_105, %c0_106], %315 {strides = array<i32>} : memref<272x128xf32, #tpu.memory_space<vmem>>, vector<16x128xf32>,
    %317 = vector.extract_strided_slice %104 {offsets = [0, 8], sizes = [16, 1], strides = [1, 1]} : vector<16x17xf32> to vector<16x1xf32>
    %318 = vector.extract_strided_slice %106 {offsets = [0, 8], sizes = [16, 1], strides = [1, 1]} : vector<16x17xf32> to vector<16x1xf32>
    %319 = vector.shape_cast %317 : vector<16x1xf32> to vector<16x1xf32>
    %320 = vector.broadcast %319 : vector<16x1xf32> to vector<16x128xf32>
    %321 = vector.shape_cast %318 : vector<16x1xf32> to vector<16x1xf32>
    %322 = vector.broadcast %321 : vector<16x1xf32> to vector<16x128xf32>
    %323 = arith.select %2, %320, %322 : vector<16x128xi1>, vector<16x128xf32>
    %c128_107 = arith.constant 128 : index
    %c0_108 = arith.constant 0 : index
    %324 = vector.load %arg23[%c128_107, %c0_108] : memref<272x128xf32, #tpu.memory_space<vmem>>, vector<16x128xf32>
    tpu.vector_store %arg23[%c128_107, %c0_108], %323 {strides = array<i32>} : memref<272x128xf32, #tpu.memory_space<vmem>>, vector<16x128xf32>,
    %325 = vector.extract_strided_slice %93 {offsets = [9, 0], sizes = [1, 128], strides = [1, 1]} : vector<17x128xf32> to vector<1x128xf32>
    %326 = vector.broadcast %325 : vector<1x128xf32> to vector<16x128xf32>
    %327 = arith.mulf %326, %108 : vector<16x128xf32>
    %328 = math.exp %327 : vector<16x128xf32>
    %c144 = arith.constant 144 : index
    %c0_109 = arith.constant 0 : index
    %329 = vector.load %arg21[%c144, %c0_109] : memref<272x128xf32, #tpu.memory_space<vmem>>, vector<16x128xf32>
    tpu.vector_store %arg21[%c144, %c0_109], %328 {strides = array<i32>} : memref<272x128xf32, #tpu.memory_space<vmem>>, vector<16x128xf32>,
    %330 = vector.extract_strided_slice %103 {offsets = [0, 9], sizes = [16, 1], strides = [1, 1]} : vector<16x17xf32> to vector<16x1xf32>
    %331 = vector.extract_strided_slice %105 {offsets = [0, 9], sizes = [16, 1], strides = [1, 1]} : vector<16x17xf32> to vector<16x1xf32>
    %332 = vector.shape_cast %330 : vector<16x1xf32> to vector<16x1xf32>
    %333 = vector.broadcast %332 : vector<16x1xf32> to vector<16x128xf32>
    %334 = vector.shape_cast %331 : vector<16x1xf32> to vector<16x1xf32>
    %335 = vector.broadcast %334 : vector<16x1xf32> to vector<16x128xf32>
    %336 = arith.select %2, %333, %335 : vector<16x128xi1>, vector<16x128xf32>
    %337 = vector.extract_strided_slice %94 {offsets = [9, 0], sizes = [1, 128], strides = [1, 1]} : vector<17x128xf32> to vector<1x128xf32>
    %338 = vector.broadcast %337 : vector<1x128xf32> to vector<16x128xf32>
    %339 = arith.mulf %336, %338 : vector<16x128xf32>
    %c144_110 = arith.constant 144 : index
    %c0_111 = arith.constant 0 : index
    %340 = vector.load %arg22[%c144_110, %c0_111] : memref<272x128xf32, #tpu.memory_space<vmem>>, vector<16x128xf32>
    tpu.vector_store %arg22[%c144_110, %c0_111], %339 {strides = array<i32>} : memref<272x128xf32, #tpu.memory_space<vmem>>, vector<16x128xf32>,
    %341 = vector.extract_strided_slice %104 {offsets = [0, 9], sizes = [16, 1], strides = [1, 1]} : vector<16x17xf32> to vector<16x1xf32>
    %342 = vector.extract_strided_slice %106 {offsets = [0, 9], sizes = [16, 1], strides = [1, 1]} : vector<16x17xf32> to vector<16x1xf32>
    %343 = vector.shape_cast %341 : vector<16x1xf32> to vector<16x1xf32>
    %344 = vector.broadcast %343 : vector<16x1xf32> to vector<16x128xf32>
    %345 = vector.shape_cast %342 : vector<16x1xf32> to vector<16x1xf32>
    %346 = vector.broadcast %345 : vector<16x1xf32> to vector<16x128xf32>
    %347 = arith.select %2, %344, %346 : vector<16x128xi1>, vector<16x128xf32>
    %c144_112 = arith.constant 144 : index
    %c0_113 = arith.constant 0 : index
    %348 = vector.load %arg23[%c144_112, %c0_113] : memref<272x128xf32, #tpu.memory_space<vmem>>, vector<16x128xf32>
    tpu.vector_store %arg23[%c144_112, %c0_113], %347 {strides = array<i32>} : memref<272x128xf32, #tpu.memory_space<vmem>>, vector<16x128xf32>,
    %349 = vector.extract_strided_slice %93 {offsets = [10, 0], sizes = [1, 128], strides = [1, 1]} : vector<17x128xf32> to vector<1x128xf32>
    %350 = vector.broadcast %349 : vector<1x128xf32> to vector<16x128xf32>
    %351 = arith.mulf %350, %108 : vector<16x128xf32>
    %352 = math.exp %351 : vector<16x128xf32>
    %c160 = arith.constant 160 : index
    %c0_114 = arith.constant 0 : index
    %353 = vector.load %arg21[%c160, %c0_114] : memref<272x128xf32, #tpu.memory_space<vmem>>, vector<16x128xf32>
    tpu.vector_store %arg21[%c160, %c0_114], %352 {strides = array<i32>} : memref<272x128xf32, #tpu.memory_space<vmem>>, vector<16x128xf32>,
    %354 = vector.extract_strided_slice %103 {offsets = [0, 10], sizes = [16, 1], strides = [1, 1]} : vector<16x17xf32> to vector<16x1xf32>
    %355 = vector.extract_strided_slice %105 {offsets = [0, 10], sizes = [16, 1], strides = [1, 1]} : vector<16x17xf32> to vector<16x1xf32>
    %356 = vector.shape_cast %354 : vector<16x1xf32> to vector<16x1xf32>
    %357 = vector.broadcast %356 : vector<16x1xf32> to vector<16x128xf32>
    %358 = vector.shape_cast %355 : vector<16x1xf32> to vector<16x1xf32>
    %359 = vector.broadcast %358 : vector<16x1xf32> to vector<16x128xf32>
    %360 = arith.select %2, %357, %359 : vector<16x128xi1>, vector<16x128xf32>
    %361 = vector.extract_strided_slice %94 {offsets = [10, 0], sizes = [1, 128], strides = [1, 1]} : vector<17x128xf32> to vector<1x128xf32>
    %362 = vector.broadcast %361 : vector<1x128xf32> to vector<16x128xf32>
    %363 = arith.mulf %360, %362 : vector<16x128xf32>
    %c160_115 = arith.constant 160 : index
    %c0_116 = arith.constant 0 : index
    %364 = vector.load %arg22[%c160_115, %c0_116] : memref<272x128xf32, #tpu.memory_space<vmem>>, vector<16x128xf32>
    tpu.vector_store %arg22[%c160_115, %c0_116], %363 {strides = array<i32>} : memref<272x128xf32, #tpu.memory_space<vmem>>, vector<16x128xf32>,
    %365 = vector.extract_strided_slice %104 {offsets = [0, 10], sizes = [16, 1], strides = [1, 1]} : vector<16x17xf32> to vector<16x1xf32>
    %366 = vector.extract_strided_slice %106 {offsets = [0, 10], sizes = [16, 1], strides = [1, 1]} : vector<16x17xf32> to vector<16x1xf32>
    %367 = vector.shape_cast %365 : vector<16x1xf32> to vector<16x1xf32>
    %368 = vector.broadcast %367 : vector<16x1xf32> to vector<16x128xf32>
    %369 = vector.shape_cast %366 : vector<16x1xf32> to vector<16x1xf32>
    %370 = vector.broadcast %369 : vector<16x1xf32> to vector<16x128xf32>
    %371 = arith.select %2, %368, %370 : vector<16x128xi1>, vector<16x128xf32>
    %c160_117 = arith.constant 160 : index
    %c0_118 = arith.constant 0 : index
    %372 = vector.load %arg23[%c160_117, %c0_118] : memref<272x128xf32, #tpu.memory_space<vmem>>, vector<16x128xf32>
    tpu.vector_store %arg23[%c160_117, %c0_118], %371 {strides = array<i32>} : memref<272x128xf32, #tpu.memory_space<vmem>>, vector<16x128xf32>,
    %373 = vector.extract_strided_slice %93 {offsets = [11, 0], sizes = [1, 128], strides = [1, 1]} : vector<17x128xf32> to vector<1x128xf32>
    %374 = vector.broadcast %373 : vector<1x128xf32> to vector<16x128xf32>
    %375 = arith.mulf %374, %108 : vector<16x128xf32>
    %376 = math.exp %375 : vector<16x128xf32>
    %c176 = arith.constant 176 : index
    %c0_119 = arith.constant 0 : index
    %377 = vector.load %arg21[%c176, %c0_119] : memref<272x128xf32, #tpu.memory_space<vmem>>, vector<16x128xf32>
    tpu.vector_store %arg21[%c176, %c0_119], %376 {strides = array<i32>} : memref<272x128xf32, #tpu.memory_space<vmem>>, vector<16x128xf32>,
    %378 = vector.extract_strided_slice %103 {offsets = [0, 11], sizes = [16, 1], strides = [1, 1]} : vector<16x17xf32> to vector<16x1xf32>
    %379 = vector.extract_strided_slice %105 {offsets = [0, 11], sizes = [16, 1], strides = [1, 1]} : vector<16x17xf32> to vector<16x1xf32>
    %380 = vector.shape_cast %378 : vector<16x1xf32> to vector<16x1xf32>
    %381 = vector.broadcast %380 : vector<16x1xf32> to vector<16x128xf32>
    %382 = vector.shape_cast %379 : vector<16x1xf32> to vector<16x1xf32>
    %383 = vector.broadcast %382 : vector<16x1xf32> to vector<16x128xf32>
    %384 = arith.select %2, %381, %383 : vector<16x128xi1>, vector<16x128xf32>
    %385 = vector.extract_strided_slice %94 {offsets = [11, 0], sizes = [1, 128], strides = [1, 1]} : vector<17x128xf32> to vector<1x128xf32>
    %386 = vector.broadcast %385 : vector<1x128xf32> to vector<16x128xf32>
    %387 = arith.mulf %384, %386 : vector<16x128xf32>
    %c176_120 = arith.constant 176 : index
    %c0_121 = arith.constant 0 : index
    %388 = vector.load %arg22[%c176_120, %c0_121] : memref<272x128xf32, #tpu.memory_space<vmem>>, vector<16x128xf32>
    tpu.vector_store %arg22[%c176_120, %c0_121], %387 {strides = array<i32>} : memref<272x128xf32, #tpu.memory_space<vmem>>, vector<16x128xf32>,
    %389 = vector.extract_strided_slice %104 {offsets = [0, 11], sizes = [16, 1], strides = [1, 1]} : vector<16x17xf32> to vector<16x1xf32>
    %390 = vector.extract_strided_slice %106 {offsets = [0, 11], sizes = [16, 1], strides = [1, 1]} : vector<16x17xf32> to vector<16x1xf32>
    %391 = vector.shape_cast %389 : vector<16x1xf32> to vector<16x1xf32>
    %392 = vector.broadcast %391 : vector<16x1xf32> to vector<16x128xf32>
    %393 = vector.shape_cast %390 : vector<16x1xf32> to vector<16x1xf32>
    %394 = vector.broadcast %393 : vector<16x1xf32> to vector<16x128xf32>
    %395 = arith.select %2, %392, %394 : vector<16x128xi1>, vector<16x128xf32>
    %c176_122 = arith.constant 176 : index
    %c0_123 = arith.constant 0 : index
    %396 = vector.load %arg23[%c176_122, %c0_123] : memref<272x128xf32, #tpu.memory_space<vmem>>, vector<16x128xf32>
    tpu.vector_store %arg23[%c176_122, %c0_123], %395 {strides = array<i32>} : memref<272x128xf32, #tpu.memory_space<vmem>>, vector<16x128xf32>,
    %397 = vector.extract_strided_slice %93 {offsets = [12, 0], sizes = [1, 128], strides = [1, 1]} : vector<17x128xf32> to vector<1x128xf32>
    %398 = vector.broadcast %397 : vector<1x128xf32> to vector<16x128xf32>
    %399 = arith.mulf %398, %108 : vector<16x128xf32>
    %400 = math.exp %399 : vector<16x128xf32>
    %c192 = arith.constant 192 : index
    %c0_124 = arith.constant 0 : index
    %401 = vector.load %arg21[%c192, %c0_124] : memref<272x128xf32, #tpu.memory_space<vmem>>, vector<16x128xf32>
    tpu.vector_store %arg21[%c192, %c0_124], %400 {strides = array<i32>} : memref<272x128xf32, #tpu.memory_space<vmem>>, vector<16x128xf32>,
    %402 = vector.extract_strided_slice %103 {offsets = [0, 12], sizes = [16, 1], strides = [1, 1]} : vector<16x17xf32> to vector<16x1xf32>
    %403 = vector.extract_strided_slice %105 {offsets = [0, 12], sizes = [16, 1], strides = [1, 1]} : vector<16x17xf32> to vector<16x1xf32>
    %404 = vector.shape_cast %402 : vector<16x1xf32> to vector<16x1xf32>
    %405 = vector.broadcast %404 : vector<16x1xf32> to vector<16x128xf32>
    %406 = vector.shape_cast %403 : vector<16x1xf32> to vector<16x1xf32>
    %407 = vector.broadcast %406 : vector<16x1xf32> to vector<16x128xf32>
    %408 = arith.select %2, %405, %407 : vector<16x128xi1>, vector<16x128xf32>
    %409 = vector.extract_strided_slice %94 {offsets = [12, 0], sizes = [1, 128], strides = [1, 1]} : vector<17x128xf32> to vector<1x128xf32>
    %410 = vector.broadcast %409 : vector<1x128xf32> to vector<16x128xf32>
    %411 = arith.mulf %408, %410 : vector<16x128xf32>
    %c192_125 = arith.constant 192 : index
    %c0_126 = arith.constant 0 : index
    %412 = vector.load %arg22[%c192_125, %c0_126] : memref<272x128xf32, #tpu.memory_space<vmem>>, vector<16x128xf32>
    tpu.vector_store %arg22[%c192_125, %c0_126], %411 {strides = array<i32>} : memref<272x128xf32, #tpu.memory_space<vmem>>, vector<16x128xf32>,
    %413 = vector.extract_strided_slice %104 {offsets = [0, 12], sizes = [16, 1], strides = [1, 1]} : vector<16x17xf32> to vector<16x1xf32>
    %414 = vector.extract_strided_slice %106 {offsets = [0, 12], sizes = [16, 1], strides = [1, 1]} : vector<16x17xf32> to vector<16x1xf32>
    %415 = vector.shape_cast %413 : vector<16x1xf32> to vector<16x1xf32>
    %416 = vector.broadcast %415 : vector<16x1xf32> to vector<16x128xf32>
    %417 = vector.shape_cast %414 : vector<16x1xf32> to vector<16x1xf32>
    %418 = vector.broadcast %417 : vector<16x1xf32> to vector<16x128xf32>
    %419 = arith.select %2, %416, %418 : vector<16x128xi1>, vector<16x128xf32>
    %c192_127 = arith.constant 192 : index
    %c0_128 = arith.constant 0 : index
    %420 = vector.load %arg23[%c192_127, %c0_128] : memref<272x128xf32, #tpu.memory_space<vmem>>, vector<16x128xf32>
    tpu.vector_store %arg23[%c192_127, %c0_128], %419 {strides = array<i32>} : memref<272x128xf32, #tpu.memory_space<vmem>>, vector<16x128xf32>,
    %421 = vector.extract_strided_slice %93 {offsets = [13, 0], sizes = [1, 128], strides = [1, 1]} : vector<17x128xf32> to vector<1x128xf32>
    %422 = vector.broadcast %421 : vector<1x128xf32> to vector<16x128xf32>
    %423 = arith.mulf %422, %108 : vector<16x128xf32>
    %424 = math.exp %423 : vector<16x128xf32>
    %c208 = arith.constant 208 : index
    %c0_129 = arith.constant 0 : index
    %425 = vector.load %arg21[%c208, %c0_129] : memref<272x128xf32, #tpu.memory_space<vmem>>, vector<16x128xf32>
    tpu.vector_store %arg21[%c208, %c0_129], %424 {strides = array<i32>} : memref<272x128xf32, #tpu.memory_space<vmem>>, vector<16x128xf32>,
    %426 = vector.extract_strided_slice %103 {offsets = [0, 13], sizes = [16, 1], strides = [1, 1]} : vector<16x17xf32> to vector<16x1xf32>
    %427 = vector.extract_strided_slice %105 {offsets = [0, 13], sizes = [16, 1], strides = [1, 1]} : vector<16x17xf32> to vector<16x1xf32>
    %428 = vector.shape_cast %426 : vector<16x1xf32> to vector<16x1xf32>
    %429 = vector.broadcast %428 : vector<16x1xf32> to vector<16x128xf32>
    %430 = vector.shape_cast %427 : vector<16x1xf32> to vector<16x1xf32>
    %431 = vector.broadcast %430 : vector<16x1xf32> to vector<16x128xf32>
    %432 = arith.select %2, %429, %431 : vector<16x128xi1>, vector<16x128xf32>
    %433 = vector.extract_strided_slice %94 {offsets = [13, 0], sizes = [1, 128], strides = [1, 1]} : vector<17x128xf32> to vector<1x128xf32>
    %434 = vector.broadcast %433 : vector<1x128xf32> to vector<16x128xf32>
    %435 = arith.mulf %432, %434 : vector<16x128xf32>
    %c208_130 = arith.constant 208 : index
    %c0_131 = arith.constant 0 : index
    %436 = vector.load %arg22[%c208_130, %c0_131] : memref<272x128xf32, #tpu.memory_space<vmem>>, vector<16x128xf32>
    tpu.vector_store %arg22[%c208_130, %c0_131], %435 {strides = array<i32>} : memref<272x128xf32, #tpu.memory_space<vmem>>, vector<16x128xf32>,
    %437 = vector.extract_strided_slice %104 {offsets = [0, 13], sizes = [16, 1], strides = [1, 1]} : vector<16x17xf32> to vector<16x1xf32>
    %438 = vector.extract_strided_slice %106 {offsets = [0, 13], sizes = [16, 1], strides = [1, 1]} : vector<16x17xf32> to vector<16x1xf32>
    %439 = vector.shape_cast %437 : vector<16x1xf32> to vector<16x1xf32>
    %440 = vector.broadcast %439 : vector<16x1xf32> to vector<16x128xf32>
    %441 = vector.shape_cast %438 : vector<16x1xf32> to vector<16x1xf32>
    %442 = vector.broadcast %441 : vector<16x1xf32> to vector<16x128xf32>
    %443 = arith.select %2, %440, %442 : vector<16x128xi1>, vector<16x128xf32>
    %c208_132 = arith.constant 208 : index
    %c0_133 = arith.constant 0 : index
    %444 = vector.load %arg23[%c208_132, %c0_133] : memref<272x128xf32, #tpu.memory_space<vmem>>, vector<16x128xf32>
    tpu.vector_store %arg23[%c208_132, %c0_133], %443 {strides = array<i32>} : memref<272x128xf32, #tpu.memory_space<vmem>>, vector<16x128xf32>,
    %445 = vector.extract_strided_slice %93 {offsets = [14, 0], sizes = [1, 128], strides = [1, 1]} : vector<17x128xf32> to vector<1x128xf32>
    %446 = vector.broadcast %445 : vector<1x128xf32> to vector<16x128xf32>
    %447 = arith.mulf %446, %108 : vector<16x128xf32>
    %448 = math.exp %447 : vector<16x128xf32>
    %c224 = arith.constant 224 : index
    %c0_134 = arith.constant 0 : index
    %449 = vector.load %arg21[%c224, %c0_134] : memref<272x128xf32, #tpu.memory_space<vmem>>, vector<16x128xf32>
    tpu.vector_store %arg21[%c224, %c0_134], %448 {strides = array<i32>} : memref<272x128xf32, #tpu.memory_space<vmem>>, vector<16x128xf32>,
    %450 = vector.extract_strided_slice %103 {offsets = [0, 14], sizes = [16, 1], strides = [1, 1]} : vector<16x17xf32> to vector<16x1xf32>
    %451 = vector.extract_strided_slice %105 {offsets = [0, 14], sizes = [16, 1], strides = [1, 1]} : vector<16x17xf32> to vector<16x1xf32>
    %452 = vector.shape_cast %450 : vector<16x1xf32> to vector<16x1xf32>
    %453 = vector.broadcast %452 : vector<16x1xf32> to vector<16x128xf32>
    %454 = vector.shape_cast %451 : vector<16x1xf32> to vector<16x1xf32>
    %455 = vector.broadcast %454 : vector<16x1xf32> to vector<16x128xf32>
    %456 = arith.select %2, %453, %455 : vector<16x128xi1>, vector<16x128xf32>
    %457 = vector.extract_strided_slice %94 {offsets = [14, 0], sizes = [1, 128], strides = [1, 1]} : vector<17x128xf32> to vector<1x128xf32>
    %458 = vector.broadcast %457 : vector<1x128xf32> to vector<16x128xf32>
    %459 = arith.mulf %456, %458 : vector<16x128xf32>
    %c224_135 = arith.constant 224 : index
    %c0_136 = arith.constant 0 : index
    %460 = vector.load %arg22[%c224_135, %c0_136] : memref<272x128xf32, #tpu.memory_space<vmem>>, vector<16x128xf32>
    tpu.vector_store %arg22[%c224_135, %c0_136], %459 {strides = array<i32>} : memref<272x128xf32, #tpu.memory_space<vmem>>, vector<16x128xf32>,
    %461 = vector.extract_strided_slice %104 {offsets = [0, 14], sizes = [16, 1], strides = [1, 1]} : vector<16x17xf32> to vector<16x1xf32>
    %462 = vector.extract_strided_slice %106 {offsets = [0, 14], sizes = [16, 1], strides = [1, 1]} : vector<16x17xf32> to vector<16x1xf32>
    %463 = vector.shape_cast %461 : vector<16x1xf32> to vector<16x1xf32>
    %464 = vector.broadcast %463 : vector<16x1xf32> to vector<16x128xf32>
    %465 = vector.shape_cast %462 : vector<16x1xf32> to vector<16x1xf32>
    %466 = vector.broadcast %465 : vector<16x1xf32> to vector<16x128xf32>
    %467 = arith.select %2, %464, %466 : vector<16x128xi1>, vector<16x128xf32>
    %c224_137 = arith.constant 224 : index
    %c0_138 = arith.constant 0 : index
    %468 = vector.load %arg23[%c224_137, %c0_138] : memref<272x128xf32, #tpu.memory_space<vmem>>, vector<16x128xf32>
    tpu.vector_store %arg23[%c224_137, %c0_138], %467 {strides = array<i32>} : memref<272x128xf32, #tpu.memory_space<vmem>>, vector<16x128xf32>,
    %469 = vector.extract_strided_slice %93 {offsets = [15, 0], sizes = [1, 128], strides = [1, 1]} : vector<17x128xf32> to vector<1x128xf32>
    %470 = vector.broadcast %469 : vector<1x128xf32> to vector<16x128xf32>
    %471 = arith.mulf %470, %108 : vector<16x128xf32>
    %472 = math.exp %471 : vector<16x128xf32>
    %c240 = arith.constant 240 : index
    %c0_139 = arith.constant 0 : index
    %473 = vector.load %arg21[%c240, %c0_139] : memref<272x128xf32, #tpu.memory_space<vmem>>, vector<16x128xf32>
    tpu.vector_store %arg21[%c240, %c0_139], %472 {strides = array<i32>} : memref<272x128xf32, #tpu.memory_space<vmem>>, vector<16x128xf32>,
    %474 = vector.extract_strided_slice %103 {offsets = [0, 15], sizes = [16, 1], strides = [1, 1]} : vector<16x17xf32> to vector<16x1xf32>
    %475 = vector.extract_strided_slice %105 {offsets = [0, 15], sizes = [16, 1], strides = [1, 1]} : vector<16x17xf32> to vector<16x1xf32>
    %476 = vector.shape_cast %474 : vector<16x1xf32> to vector<16x1xf32>
    %477 = vector.broadcast %476 : vector<16x1xf32> to vector<16x128xf32>
    %478 = vector.shape_cast %475 : vector<16x1xf32> to vector<16x1xf32>
    %479 = vector.broadcast %478 : vector<16x1xf32> to vector<16x128xf32>
    %480 = arith.select %2, %477, %479 : vector<16x128xi1>, vector<16x128xf32>
    %481 = vector.extract_strided_slice %94 {offsets = [15, 0], sizes = [1, 128], strides = [1, 1]} : vector<17x128xf32> to vector<1x128xf32>
    %482 = vector.broadcast %481 : vector<1x128xf32> to vector<16x128xf32>
    %483 = arith.mulf %480, %482 : vector<16x128xf32>
    %c240_140 = arith.constant 240 : index
    %c0_141 = arith.constant 0 : index
    %484 = vector.load %arg22[%c240_140, %c0_141] : memref<272x128xf32, #tpu.memory_space<vmem>>, vector<16x128xf32>
    tpu.vector_store %arg22[%c240_140, %c0_141], %483 {strides = array<i32>} : memref<272x128xf32, #tpu.memory_space<vmem>>, vector<16x128xf32>,
    %485 = vector.extract_strided_slice %104 {offsets = [0, 15], sizes = [16, 1], strides = [1, 1]} : vector<16x17xf32> to vector<16x1xf32>
    %486 = vector.extract_strided_slice %106 {offsets = [0, 15], sizes = [16, 1], strides = [1, 1]} : vector<16x17xf32> to vector<16x1xf32>
    %487 = vector.shape_cast %485 : vector<16x1xf32> to vector<16x1xf32>
    %488 = vector.broadcast %487 : vector<16x1xf32> to vector<16x128xf32>
    %489 = vector.shape_cast %486 : vector<16x1xf32> to vector<16x1xf32>
    %490 = vector.broadcast %489 : vector<16x1xf32> to vector<16x128xf32>
    %491 = arith.select %2, %488, %490 : vector<16x128xi1>, vector<16x128xf32>
    %c240_142 = arith.constant 240 : index
    %c0_143 = arith.constant 0 : index
    %492 = vector.load %arg23[%c240_142, %c0_143] : memref<272x128xf32, #tpu.memory_space<vmem>>, vector<16x128xf32>
    tpu.vector_store %arg23[%c240_142, %c0_143], %491 {strides = array<i32>} : memref<272x128xf32, #tpu.memory_space<vmem>>, vector<16x128xf32>,
    %493 = vector.extract_strided_slice %93 {offsets = [16, 0], sizes = [1, 128], strides = [1, 1]} : vector<17x128xf32> to vector<1x128xf32>
    %494 = vector.broadcast %493 : vector<1x128xf32> to vector<16x128xf32>
    %495 = arith.mulf %494, %108 : vector<16x128xf32>
    %496 = math.exp %495 : vector<16x128xf32>
    %c256 = arith.constant 256 : index
    %c0_144 = arith.constant 0 : index
    %497 = vector.load %arg21[%c256, %c0_144] : memref<272x128xf32, #tpu.memory_space<vmem>>, vector<16x128xf32>
    tpu.vector_store %arg21[%c256, %c0_144], %496 {strides = array<i32>} : memref<272x128xf32, #tpu.memory_space<vmem>>, vector<16x128xf32>,
    %498 = vector.extract_strided_slice %103 {offsets = [0, 16], sizes = [16, 1], strides = [1, 1]} : vector<16x17xf32> to vector<16x1xf32>
    %499 = vector.extract_strided_slice %105 {offsets = [0, 16], sizes = [16, 1], strides = [1, 1]} : vector<16x17xf32> to vector<16x1xf32>
    %500 = vector.shape_cast %498 : vector<16x1xf32> to vector<16x1xf32>
    %501 = vector.broadcast %500 : vector<16x1xf32> to vector<16x128xf32>
    %502 = vector.shape_cast %499 : vector<16x1xf32> to vector<16x1xf32>
    %503 = vector.broadcast %502 : vector<16x1xf32> to vector<16x128xf32>
    %504 = arith.select %2, %501, %503 : vector<16x128xi1>, vector<16x128xf32>
    %505 = vector.extract_strided_slice %94 {offsets = [16, 0], sizes = [1, 128], strides = [1, 1]} : vector<17x128xf32> to vector<1x128xf32>
    %506 = vector.broadcast %505 : vector<1x128xf32> to vector<16x128xf32>
    %507 = arith.mulf %504, %506 : vector<16x128xf32>
    %c256_145 = arith.constant 256 : index
    %c0_146 = arith.constant 0 : index
    %508 = vector.load %arg22[%c256_145, %c0_146] : memref<272x128xf32, #tpu.memory_space<vmem>>, vector<16x128xf32>
    tpu.vector_store %arg22[%c256_145, %c0_146], %507 {strides = array<i32>} : memref<272x128xf32, #tpu.memory_space<vmem>>, vector<16x128xf32>,
    %509 = vector.extract_strided_slice %104 {offsets = [0, 16], sizes = [16, 1], strides = [1, 1]} : vector<16x17xf32> to vector<16x1xf32>
    %510 = vector.extract_strided_slice %106 {offsets = [0, 16], sizes = [16, 1], strides = [1, 1]} : vector<16x17xf32> to vector<16x1xf32>
    %511 = vector.shape_cast %509 : vector<16x1xf32> to vector<16x1xf32>
    %512 = vector.broadcast %511 : vector<16x1xf32> to vector<16x128xf32>
    %513 = vector.shape_cast %510 : vector<16x1xf32> to vector<16x1xf32>
    %514 = vector.broadcast %513 : vector<16x1xf32> to vector<16x128xf32>
    %515 = arith.select %2, %512, %514 : vector<16x128xi1>, vector<16x128xf32>
    %c256_147 = arith.constant 256 : index
    %c0_148 = arith.constant 0 : index
    %516 = vector.load %arg23[%c256_147, %c0_148] : memref<272x128xf32, #tpu.memory_space<vmem>>, vector<16x128xf32>
    tpu.vector_store %arg23[%c256_147, %c0_148], %515 {strides = array<i32>} : memref<272x128xf32, #tpu.memory_space<vmem>>, vector<16x128xf32>,
    %cst_149 = arith.constant 0.000000e+00 : f32
    %517 = vector.broadcast %cst_149 : f32 to vector<16x128xf32>
    %c0_150 = arith.constant 0 : index
    %c0_151 = arith.constant 0 : index
    %518 = vector.load %arg21[%c0_150, %c0_151] : memref<272x128xf32, #tpu.memory_space<vmem>>, vector<16x128xf32>
    %519 = arith.mulf %518, %517 : vector<16x128xf32>
    %c0_152 = arith.constant 0 : index
    %c0_153 = arith.constant 0 : index
    %520 = vector.load %arg22[%c0_152, %c0_153] : memref<272x128xf32, #tpu.memory_space<vmem>>, vector<16x128xf32>
    %521 = arith.addf %519, %520 : vector<16x128xf32>
    %c0_154 = arith.constant 0 : index
    %c0_155 = arith.constant 0 : index
    %522 = vector.load %arg23[%c0_154, %c0_155] : memref<272x128xf32, #tpu.memory_space<vmem>>, vector<16x128xf32>
    %523 = arith.mulf %521, %522 : vector<16x128xf32>
    %cst_156 = arith.constant dense<0.000000e+00> : vector<128xf32>
    %524 = vector.multi_reduction <add>, %523, %cst_156 [0] : vector<16x128xf32> to vector<128xf32>
    %525 = vector.shape_cast %524 : vector<128xf32> to vector<1x128xf32>
    %526 = vector.extract_strided_slice %98 {offsets = [0, 0], sizes = [1, 128], strides = [1, 1]} : vector<17x128xf32> to vector<1x128xf32>
    %527 = arith.addf %525, %526 : vector<1x128xf32>
    %528 = vector.extract_strided_slice %527 {offsets = [0, 0], sizes = [1, 64], strides = [1, 1]} : vector<1x128xf32> to vector<1x64xf32>
    %c0_157 = arith.constant 0 : index
    %c0_158 = arith.constant 0 : index
    %529 = vector.load %arg24[%c0_157, %c0_158] : memref<17x128xf32, #tpu.memory_space<vmem>>, vector<1x64xf32>
    tpu.vector_store %arg24[%c0_157, %c0_158], %528 {strides = array<i32>} : memref<17x128xf32, #tpu.memory_space<vmem>>, vector<1x64xf32>,
    %530 = vector.extract_strided_slice %527 {offsets = [0, 64], sizes = [1, 64], strides = [1, 1]} : vector<1x128xf32> to vector<1x64xf32>
    %c16_159 = arith.constant 16 : index
    %c64_160 = arith.constant 64 : index
    %531 = vector.load %arg24[%c16_159, %c64_160] : memref<17x128xf32, #tpu.memory_space<vmem>>, vector<1x64xf32>
    tpu.vector_store %arg24[%c16_159, %c64_160], %530 {strides = array<i32>} : memref<17x128xf32, #tpu.memory_space<vmem>>, vector<1x64xf32>,
    %c16_161 = arith.constant 16 : index
    %c0_162 = arith.constant 0 : index
    %532 = vector.load %arg21[%c16_161, %c0_162] : memref<272x128xf32, #tpu.memory_space<vmem>>, vector<16x128xf32>
    %533 = arith.mulf %532, %521 : vector<16x128xf32>
    %c16_163 = arith.constant 16 : index
    %c0_164 = arith.constant 0 : index
    %534 = vector.load %arg22[%c16_163, %c0_164] : memref<272x128xf32, #tpu.memory_space<vmem>>, vector<16x128xf32>
    %535 = arith.addf %533, %534 : vector<16x128xf32>
    %c16_165 = arith.constant 16 : index
    %c0_166 = arith.constant 0 : index
    %536 = vector.load %arg23[%c16_165, %c0_166] : memref<272x128xf32, #tpu.memory_space<vmem>>, vector<16x128xf32>
    %537 = arith.mulf %535, %536 : vector<16x128xf32>
    %cst_167 = arith.constant dense<0.000000e+00> : vector<128xf32>
    %538 = vector.multi_reduction <add>, %537, %cst_167 [0] : vector<16x128xf32> to vector<128xf32>
    %539 = vector.shape_cast %538 : vector<128xf32> to vector<1x128xf32>
    %540 = vector.extract_strided_slice %98 {offsets = [1, 0], sizes = [1, 128], strides = [1, 1]} : vector<17x128xf32> to vector<1x128xf32>
    %541 = arith.addf %539, %540 : vector<1x128xf32>
    %542 = vector.extract_strided_slice %541 {offsets = [0, 0], sizes = [1, 64], strides = [1, 1]} : vector<1x128xf32> to vector<1x64xf32>
    %c1_168 = arith.constant 1 : index
    %c0_169 = arith.constant 0 : index
    %543 = vector.load %arg24[%c1_168, %c0_169] : memref<17x128xf32, #tpu.memory_space<vmem>>, vector<1x64xf32>
    tpu.vector_store %arg24[%c1_168, %c0_169], %542 {strides = array<i32>} : memref<17x128xf32, #tpu.memory_space<vmem>>, vector<1x64xf32>,
    %544 = vector.extract_strided_slice %541 {offsets = [0, 64], sizes = [1, 64], strides = [1, 1]} : vector<1x128xf32> to vector<1x64xf32>
    %c15 = arith.constant 15 : index
    %c64_170 = arith.constant 64 : index
    %545 = vector.load %arg24[%c15, %c64_170] : memref<17x128xf32, #tpu.memory_space<vmem>>, vector<1x64xf32>
    tpu.vector_store %arg24[%c15, %c64_170], %544 {strides = array<i32>} : memref<17x128xf32, #tpu.memory_space<vmem>>, vector<1x64xf32>,
    %c32_171 = arith.constant 32 : index
    %c0_172 = arith.constant 0 : index
    %546 = vector.load %arg21[%c32_171, %c0_172] : memref<272x128xf32, #tpu.memory_space<vmem>>, vector<16x128xf32>
    %547 = arith.mulf %546, %535 : vector<16x128xf32>
    %c32_173 = arith.constant 32 : index
    %c0_174 = arith.constant 0 : index
    %548 = vector.load %arg22[%c32_173, %c0_174] : memref<272x128xf32, #tpu.memory_space<vmem>>, vector<16x128xf32>
    %549 = arith.addf %547, %548 : vector<16x128xf32>
    %c32_175 = arith.constant 32 : index
    %c0_176 = arith.constant 0 : index
    %550 = vector.load %arg23[%c32_175, %c0_176] : memref<272x128xf32, #tpu.memory_space<vmem>>, vector<16x128xf32>
    %551 = arith.mulf %549, %550 : vector<16x128xf32>
    %cst_177 = arith.constant dense<0.000000e+00> : vector<128xf32>
    %552 = vector.multi_reduction <add>, %551, %cst_177 [0] : vector<16x128xf32> to vector<128xf32>
    %553 = vector.shape_cast %552 : vector<128xf32> to vector<1x128xf32>
    %554 = vector.extract_strided_slice %98 {offsets = [2, 0], sizes = [1, 128], strides = [1, 1]} : vector<17x128xf32> to vector<1x128xf32>
    %555 = arith.addf %553, %554 : vector<1x128xf32>
    %556 = vector.extract_strided_slice %555 {offsets = [0, 0], sizes = [1, 64], strides = [1, 1]} : vector<1x128xf32> to vector<1x64xf32>
    %c2_178 = arith.constant 2 : index
    %c0_179 = arith.constant 0 : index
    %557 = vector.load %arg24[%c2_178, %c0_179] : memref<17x128xf32, #tpu.memory_space<vmem>>, vector<1x64xf32>
    tpu.vector_store %arg24[%c2_178, %c0_179], %556 {strides = array<i32>} : memref<17x128xf32, #tpu.memory_space<vmem>>, vector<1x64xf32>,
    %558 = vector.extract_strided_slice %555 {offsets = [0, 64], sizes = [1, 64], strides = [1, 1]} : vector<1x128xf32> to vector<1x64xf32>
    %c14 = arith.constant 14 : index
    %c64_180 = arith.constant 64 : index
    %559 = vector.load %arg24[%c14, %c64_180] : memref<17x128xf32, #tpu.memory_space<vmem>>, vector<1x64xf32>
    tpu.vector_store %arg24[%c14, %c64_180], %558 {strides = array<i32>} : memref<17x128xf32, #tpu.memory_space<vmem>>, vector<1x64xf32>,
    %c48_181 = arith.constant 48 : index
    %c0_182 = arith.constant 0 : index
    %560 = vector.load %arg21[%c48_181, %c0_182] : memref<272x128xf32, #tpu.memory_space<vmem>>, vector<16x128xf32>
    %561 = arith.mulf %560, %549 : vector<16x128xf32>
    %c48_183 = arith.constant 48 : index
    %c0_184 = arith.constant 0 : index
    %562 = vector.load %arg22[%c48_183, %c0_184] : memref<272x128xf32, #tpu.memory_space<vmem>>, vector<16x128xf32>
    %563 = arith.addf %561, %562 : vector<16x128xf32>
    %c48_185 = arith.constant 48 : index
    %c0_186 = arith.constant 0 : index
    %564 = vector.load %arg23[%c48_185, %c0_186] : memref<272x128xf32, #tpu.memory_space<vmem>>, vector<16x128xf32>
    %565 = arith.mulf %563, %564 : vector<16x128xf32>
    %cst_187 = arith.constant dense<0.000000e+00> : vector<128xf32>
    %566 = vector.multi_reduction <add>, %565, %cst_187 [0] : vector<16x128xf32> to vector<128xf32>
    %567 = vector.shape_cast %566 : vector<128xf32> to vector<1x128xf32>
    %568 = vector.extract_strided_slice %98 {offsets = [3, 0], sizes = [1, 128], strides = [1, 1]} : vector<17x128xf32> to vector<1x128xf32>
    %569 = arith.addf %567, %568 : vector<1x128xf32>
    %570 = vector.extract_strided_slice %569 {offsets = [0, 0], sizes = [1, 64], strides = [1, 1]} : vector<1x128xf32> to vector<1x64xf32>
    %c3_188 = arith.constant 3 : index
    %c0_189 = arith.constant 0 : index
    %571 = vector.load %arg24[%c3_188, %c0_189] : memref<17x128xf32, #tpu.memory_space<vmem>>, vector<1x64xf32>
    tpu.vector_store %arg24[%c3_188, %c0_189], %570 {strides = array<i32>} : memref<17x128xf32, #tpu.memory_space<vmem>>, vector<1x64xf32>,
    %572 = vector.extract_strided_slice %569 {offsets = [0, 64], sizes = [1, 64], strides = [1, 1]} : vector<1x128xf32> to vector<1x64xf32>
    %c13 = arith.constant 13 : index
    %c64_190 = arith.constant 64 : index
    %573 = vector.load %arg24[%c13, %c64_190] : memref<17x128xf32, #tpu.memory_space<vmem>>, vector<1x64xf32>
    tpu.vector_store %arg24[%c13, %c64_190], %572 {strides = array<i32>} : memref<17x128xf32, #tpu.memory_space<vmem>>, vector<1x64xf32>,
    %c64_191 = arith.constant 64 : index
    %c0_192 = arith.constant 0 : index
    %574 = vector.load %arg21[%c64_191, %c0_192] : memref<272x128xf32, #tpu.memory_space<vmem>>, vector<16x128xf32>
    %575 = arith.mulf %574, %563 : vector<16x128xf32>
    %c64_193 = arith.constant 64 : index
    %c0_194 = arith.constant 0 : index
    %576 = vector.load %arg22[%c64_193, %c0_194] : memref<272x128xf32, #tpu.memory_space<vmem>>, vector<16x128xf32>
    %577 = arith.addf %575, %576 : vector<16x128xf32>
    %c64_195 = arith.constant 64 : index
    %c0_196 = arith.constant 0 : index
    %578 = vector.load %arg23[%c64_195, %c0_196] : memref<272x128xf32, #tpu.memory_space<vmem>>, vector<16x128xf32>
    %579 = arith.mulf %577, %578 : vector<16x128xf32>
    %cst_197 = arith.constant dense<0.000000e+00> : vector<128xf32>
    %580 = vector.multi_reduction <add>, %579, %cst_197 [0] : vector<16x128xf32> to vector<128xf32>
    %581 = vector.shape_cast %580 : vector<128xf32> to vector<1x128xf32>
    %582 = vector.extract_strided_slice %98 {offsets = [4, 0], sizes = [1, 128], strides = [1, 1]} : vector<17x128xf32> to vector<1x128xf32>
    %583 = arith.addf %581, %582 : vector<1x128xf32>
    %584 = vector.extract_strided_slice %583 {offsets = [0, 0], sizes = [1, 64], strides = [1, 1]} : vector<1x128xf32> to vector<1x64xf32>
    %c4 = arith.constant 4 : index
    %c0_198 = arith.constant 0 : index
    %585 = vector.load %arg24[%c4, %c0_198] : memref<17x128xf32, #tpu.memory_space<vmem>>, vector<1x64xf32>
    tpu.vector_store %arg24[%c4, %c0_198], %584 {strides = array<i32>} : memref<17x128xf32, #tpu.memory_space<vmem>>, vector<1x64xf32>,
    %586 = vector.extract_strided_slice %583 {offsets = [0, 64], sizes = [1, 64], strides = [1, 1]} : vector<1x128xf32> to vector<1x64xf32>
    %c12 = arith.constant 12 : index
    %c64_199 = arith.constant 64 : index
    %587 = vector.load %arg24[%c12, %c64_199] : memref<17x128xf32, #tpu.memory_space<vmem>>, vector<1x64xf32>
    tpu.vector_store %arg24[%c12, %c64_199], %586 {strides = array<i32>} : memref<17x128xf32, #tpu.memory_space<vmem>>, vector<1x64xf32>,
    %c80_200 = arith.constant 80 : index
    %c0_201 = arith.constant 0 : index
    %588 = vector.load %arg21[%c80_200, %c0_201] : memref<272x128xf32, #tpu.memory_space<vmem>>, vector<16x128xf32>
    %589 = arith.mulf %588, %577 : vector<16x128xf32>
    %c80_202 = arith.constant 80 : index
    %c0_203 = arith.constant 0 : index
    %590 = vector.load %arg22[%c80_202, %c0_203] : memref<272x128xf32, #tpu.memory_space<vmem>>, vector<16x128xf32>
    %591 = arith.addf %589, %590 : vector<16x128xf32>
    %c80_204 = arith.constant 80 : index
    %c0_205 = arith.constant 0 : index
    %592 = vector.load %arg23[%c80_204, %c0_205] : memref<272x128xf32, #tpu.memory_space<vmem>>, vector<16x128xf32>
    %593 = arith.mulf %591, %592 : vector<16x128xf32>
    %cst_206 = arith.constant dense<0.000000e+00> : vector<128xf32>
    %594 = vector.multi_reduction <add>, %593, %cst_206 [0] : vector<16x128xf32> to vector<128xf32>
    %595 = vector.shape_cast %594 : vector<128xf32> to vector<1x128xf32>
    %596 = vector.extract_strided_slice %98 {offsets = [5, 0], sizes = [1, 128], strides = [1, 1]} : vector<17x128xf32> to vector<1x128xf32>
    %597 = arith.addf %595, %596 : vector<1x128xf32>
    %598 = vector.extract_strided_slice %597 {offsets = [0, 0], sizes = [1, 64], strides = [1, 1]} : vector<1x128xf32> to vector<1x64xf32>
    %c5 = arith.constant 5 : index
    %c0_207 = arith.constant 0 : index
    %599 = vector.load %arg24[%c5, %c0_207] : memref<17x128xf32, #tpu.memory_space<vmem>>, vector<1x64xf32>
    tpu.vector_store %arg24[%c5, %c0_207], %598 {strides = array<i32>} : memref<17x128xf32, #tpu.memory_space<vmem>>, vector<1x64xf32>,
    %600 = vector.extract_strided_slice %597 {offsets = [0, 64], sizes = [1, 64], strides = [1, 1]} : vector<1x128xf32> to vector<1x64xf32>
    %c11 = arith.constant 11 : index
    %c64_208 = arith.constant 64 : index
    %601 = vector.load %arg24[%c11, %c64_208] : memref<17x128xf32, #tpu.memory_space<vmem>>, vector<1x64xf32>
    tpu.vector_store %arg24[%c11, %c64_208], %600 {strides = array<i32>} : memref<17x128xf32, #tpu.memory_space<vmem>>, vector<1x64xf32>,
    %c96_209 = arith.constant 96 : index
    %c0_210 = arith.constant 0 : index
    %602 = vector.load %arg21[%c96_209, %c0_210] : memref<272x128xf32, #tpu.memory_space<vmem>>, vector<16x128xf32>
    %603 = arith.mulf %602, %591 : vector<16x128xf32>
    %c96_211 = arith.constant 96 : index
    %c0_212 = arith.constant 0 : index
    %604 = vector.load %arg22[%c96_211, %c0_212] : memref<272x128xf32, #tpu.memory_space<vmem>>, vector<16x128xf32>
    %605 = arith.addf %603, %604 : vector<16x128xf32>
    %c96_213 = arith.constant 96 : index
    %c0_214 = arith.constant 0 : index
    %606 = vector.load %arg23[%c96_213, %c0_214] : memref<272x128xf32, #tpu.memory_space<vmem>>, vector<16x128xf32>
    %607 = arith.mulf %605, %606 : vector<16x128xf32>
    %cst_215 = arith.constant dense<0.000000e+00> : vector<128xf32>
    %608 = vector.multi_reduction <add>, %607, %cst_215 [0] : vector<16x128xf32> to vector<128xf32>
    %609 = vector.shape_cast %608 : vector<128xf32> to vector<1x128xf32>
    %610 = vector.extract_strided_slice %98 {offsets = [6, 0], sizes = [1, 128], strides = [1, 1]} : vector<17x128xf32> to vector<1x128xf32>
    %611 = arith.addf %609, %610 : vector<1x128xf32>
    %612 = vector.extract_strided_slice %611 {offsets = [0, 0], sizes = [1, 64], strides = [1, 1]} : vector<1x128xf32> to vector<1x64xf32>
    %c6 = arith.constant 6 : index
    %c0_216 = arith.constant 0 : index
    %613 = vector.load %arg24[%c6, %c0_216] : memref<17x128xf32, #tpu.memory_space<vmem>>, vector<1x64xf32>
    tpu.vector_store %arg24[%c6, %c0_216], %612 {strides = array<i32>} : memref<17x128xf32, #tpu.memory_space<vmem>>, vector<1x64xf32>,
    %614 = vector.extract_strided_slice %611 {offsets = [0, 64], sizes = [1, 64], strides = [1, 1]} : vector<1x128xf32> to vector<1x64xf32>
    %c10 = arith.constant 10 : index
    %c64_217 = arith.constant 64 : index
    %615 = vector.load %arg24[%c10, %c64_217] : memref<17x128xf32, #tpu.memory_space<vmem>>, vector<1x64xf32>
    tpu.vector_store %arg24[%c10, %c64_217], %614 {strides = array<i32>} : memref<17x128xf32, #tpu.memory_space<vmem>>, vector<1x64xf32>,
    %c112_218 = arith.constant 112 : index
    %c0_219 = arith.constant 0 : index
    %616 = vector.load %arg21[%c112_218, %c0_219] : memref<272x128xf32, #tpu.memory_space<vmem>>, vector<16x128xf32>
    %617 = arith.mulf %616, %605 : vector<16x128xf32>
    %c112_220 = arith.constant 112 : index
    %c0_221 = arith.constant 0 : index
    %618 = vector.load %arg22[%c112_220, %c0_221] : memref<272x128xf32, #tpu.memory_space<vmem>>, vector<16x128xf32>
    %619 = arith.addf %617, %618 : vector<16x128xf32>
    %c112_222 = arith.constant 112 : index
    %c0_223 = arith.constant 0 : index
    %620 = vector.load %arg23[%c112_222, %c0_223] : memref<272x128xf32, #tpu.memory_space<vmem>>, vector<16x128xf32>
    %621 = arith.mulf %619, %620 : vector<16x128xf32>
    %cst_224 = arith.constant dense<0.000000e+00> : vector<128xf32>
    %622 = vector.multi_reduction <add>, %621, %cst_224 [0] : vector<16x128xf32> to vector<128xf32>
    %623 = vector.shape_cast %622 : vector<128xf32> to vector<1x128xf32>
    %624 = vector.extract_strided_slice %98 {offsets = [7, 0], sizes = [1, 128], strides = [1, 1]} : vector<17x128xf32> to vector<1x128xf32>
    %625 = arith.addf %623, %624 : vector<1x128xf32>
    %626 = vector.extract_strided_slice %625 {offsets = [0, 0], sizes = [1, 64], strides = [1, 1]} : vector<1x128xf32> to vector<1x64xf32>
    %c7 = arith.constant 7 : index
    %c0_225 = arith.constant 0 : index
    %627 = vector.load %arg24[%c7, %c0_225] : memref<17x128xf32, #tpu.memory_space<vmem>>, vector<1x64xf32>
    tpu.vector_store %arg24[%c7, %c0_225], %626 {strides = array<i32>} : memref<17x128xf32, #tpu.memory_space<vmem>>, vector<1x64xf32>,
    %628 = vector.extract_strided_slice %625 {offsets = [0, 64], sizes = [1, 64], strides = [1, 1]} : vector<1x128xf32> to vector<1x64xf32>
    %c9 = arith.constant 9 : index
    %c64_226 = arith.constant 64 : index
    %629 = vector.load %arg24[%c9, %c64_226] : memref<17x128xf32, #tpu.memory_space<vmem>>, vector<1x64xf32>
    tpu.vector_store %arg24[%c9, %c64_226], %628 {strides = array<i32>} : memref<17x128xf32, #tpu.memory_space<vmem>>, vector<1x64xf32>,
    %c128_227 = arith.constant 128 : index
    %c0_228 = arith.constant 0 : index
    %630 = vector.load %arg21[%c128_227, %c0_228] : memref<272x128xf32, #tpu.memory_space<vmem>>, vector<16x128xf32>
    %631 = arith.mulf %630, %619 : vector<16x128xf32>
    %c128_229 = arith.constant 128 : index
    %c0_230 = arith.constant 0 : index
    %632 = vector.load %arg22[%c128_229, %c0_230] : memref<272x128xf32, #tpu.memory_space<vmem>>, vector<16x128xf32>
    %633 = arith.addf %631, %632 : vector<16x128xf32>
    %c128_231 = arith.constant 128 : index
    %c0_232 = arith.constant 0 : index
    %634 = vector.load %arg23[%c128_231, %c0_232] : memref<272x128xf32, #tpu.memory_space<vmem>>, vector<16x128xf32>
    %635 = arith.mulf %633, %634 : vector<16x128xf32>
    %cst_233 = arith.constant dense<0.000000e+00> : vector<128xf32>
    %636 = vector.multi_reduction <add>, %635, %cst_233 [0] : vector<16x128xf32> to vector<128xf32>
    %637 = vector.shape_cast %636 : vector<128xf32> to vector<1x128xf32>
    %638 = vector.extract_strided_slice %98 {offsets = [8, 0], sizes = [1, 128], strides = [1, 1]} : vector<17x128xf32> to vector<1x128xf32>
    %639 = arith.addf %637, %638 : vector<1x128xf32>
    %640 = vector.extract_strided_slice %639 {offsets = [0, 0], sizes = [1, 64], strides = [1, 1]} : vector<1x128xf32> to vector<1x64xf32>
    %c8 = arith.constant 8 : index
    %c0_234 = arith.constant 0 : index
    %641 = vector.load %arg24[%c8, %c0_234] : memref<17x128xf32, #tpu.memory_space<vmem>>, vector<1x64xf32>
    tpu.vector_store %arg24[%c8, %c0_234], %640 {strides = array<i32>} : memref<17x128xf32, #tpu.memory_space<vmem>>, vector<1x64xf32>,
    %642 = vector.extract_strided_slice %639 {offsets = [0, 64], sizes = [1, 64], strides = [1, 1]} : vector<1x128xf32> to vector<1x64xf32>
    %c8_235 = arith.constant 8 : index
    %c64_236 = arith.constant 64 : index
    %643 = vector.load %arg24[%c8_235, %c64_236] : memref<17x128xf32, #tpu.memory_space<vmem>>, vector<1x64xf32>
    tpu.vector_store %arg24[%c8_235, %c64_236], %642 {strides = array<i32>} : memref<17x128xf32, #tpu.memory_space<vmem>>, vector<1x64xf32>,
    %c144_237 = arith.constant 144 : index
    %c0_238 = arith.constant 0 : index
    %644 = vector.load %arg21[%c144_237, %c0_238] : memref<272x128xf32, #tpu.memory_space<vmem>>, vector<16x128xf32>
    %645 = arith.mulf %644, %633 : vector<16x128xf32>
    %c144_239 = arith.constant 144 : index
    %c0_240 = arith.constant 0 : index
    %646 = vector.load %arg22[%c144_239, %c0_240] : memref<272x128xf32, #tpu.memory_space<vmem>>, vector<16x128xf32>
    %647 = arith.addf %645, %646 : vector<16x128xf32>
    %c144_241 = arith.constant 144 : index
    %c0_242 = arith.constant 0 : index
    %648 = vector.load %arg23[%c144_241, %c0_242] : memref<272x128xf32, #tpu.memory_space<vmem>>, vector<16x128xf32>
    %649 = arith.mulf %647, %648 : vector<16x128xf32>
    %cst_243 = arith.constant dense<0.000000e+00> : vector<128xf32>
    %650 = vector.multi_reduction <add>, %649, %cst_243 [0] : vector<16x128xf32> to vector<128xf32>
    %651 = vector.shape_cast %650 : vector<128xf32> to vector<1x128xf32>
    %652 = vector.extract_strided_slice %98 {offsets = [9, 0], sizes = [1, 128], strides = [1, 1]} : vector<17x128xf32> to vector<1x128xf32>
    %653 = arith.addf %651, %652 : vector<1x128xf32>
    %654 = vector.extract_strided_slice %653 {offsets = [0, 0], sizes = [1, 64], strides = [1, 1]} : vector<1x128xf32> to vector<1x64xf32>
    %c9_244 = arith.constant 9 : index
    %c0_245 = arith.constant 0 : index
    %655 = vector.load %arg24[%c9_244, %c0_245] : memref<17x128xf32, #tpu.memory_space<vmem>>, vector<1x64xf32>
    tpu.vector_store %arg24[%c9_244, %c0_245], %654 {strides = array<i32>} : memref<17x128xf32, #tpu.memory_space<vmem>>, vector<1x64xf32>,
    %656 = vector.extract_strided_slice %653 {offsets = [0, 64], sizes = [1, 64], strides = [1, 1]} : vector<1x128xf32> to vector<1x64xf32>
    %c7_246 = arith.constant 7 : index
    %c64_247 = arith.constant 64 : index
    %657 = vector.load %arg24[%c7_246, %c64_247] : memref<17x128xf32, #tpu.memory_space<vmem>>, vector<1x64xf32>
    tpu.vector_store %arg24[%c7_246, %c64_247], %656 {strides = array<i32>} : memref<17x128xf32, #tpu.memory_space<vmem>>, vector<1x64xf32>,
    %c160_248 = arith.constant 160 : index
    %c0_249 = arith.constant 0 : index
    %658 = vector.load %arg21[%c160_248, %c0_249] : memref<272x128xf32, #tpu.memory_space<vmem>>, vector<16x128xf32>
    %659 = arith.mulf %658, %647 : vector<16x128xf32>
    %c160_250 = arith.constant 160 : index
    %c0_251 = arith.constant 0 : index
    %660 = vector.load %arg22[%c160_250, %c0_251] : memref<272x128xf32, #tpu.memory_space<vmem>>, vector<16x128xf32>
    %661 = arith.addf %659, %660 : vector<16x128xf32>
    %c160_252 = arith.constant 160 : index
    %c0_253 = arith.constant 0 : index
    %662 = vector.load %arg23[%c160_252, %c0_253] : memref<272x128xf32, #tpu.memory_space<vmem>>, vector<16x128xf32>
    %663 = arith.mulf %661, %662 : vector<16x128xf32>
    %cst_254 = arith.constant dense<0.000000e+00> : vector<128xf32>
    %664 = vector.multi_reduction <add>, %663, %cst_254 [0] : vector<16x128xf32> to vector<128xf32>
    %665 = vector.shape_cast %664 : vector<128xf32> to vector<1x128xf32>
    %666 = vector.extract_strided_slice %98 {offsets = [10, 0], sizes = [1, 128], strides = [1, 1]} : vector<17x128xf32> to vector<1x128xf32>
    %667 = arith.addf %665, %666 : vector<1x128xf32>
    %668 = vector.extract_strided_slice %667 {offsets = [0, 0], sizes = [1, 64], strides = [1, 1]} : vector<1x128xf32> to vector<1x64xf32>
    %c10_255 = arith.constant 10 : index
    %c0_256 = arith.constant 0 : index
    %669 = vector.load %arg24[%c10_255, %c0_256] : memref<17x128xf32, #tpu.memory_space<vmem>>, vector<1x64xf32>
    tpu.vector_store %arg24[%c10_255, %c0_256], %668 {strides = array<i32>} : memref<17x128xf32, #tpu.memory_space<vmem>>, vector<1x64xf32>,
    %670 = vector.extract_strided_slice %667 {offsets = [0, 64], sizes = [1, 64], strides = [1, 1]} : vector<1x128xf32> to vector<1x64xf32>
    %c6_257 = arith.constant 6 : index
    %c64_258 = arith.constant 64 : index
    %671 = vector.load %arg24[%c6_257, %c64_258] : memref<17x128xf32, #tpu.memory_space<vmem>>, vector<1x64xf32>
    tpu.vector_store %arg24[%c6_257, %c64_258], %670 {strides = array<i32>} : memref<17x128xf32, #tpu.memory_space<vmem>>, vector<1x64xf32>,
    %c176_259 = arith.constant 176 : index
    %c0_260 = arith.constant 0 : index
    %672 = vector.load %arg21[%c176_259, %c0_260] : memref<272x128xf32, #tpu.memory_space<vmem>>, vector<16x128xf32>
    %673 = arith.mulf %672, %661 : vector<16x128xf32>
    %c176_261 = arith.constant 176 : index
    %c0_262 = arith.constant 0 : index
    %674 = vector.load %arg22[%c176_261, %c0_262] : memref<272x128xf32, #tpu.memory_space<vmem>>, vector<16x128xf32>
    %675 = arith.addf %673, %674 : vector<16x128xf32>
    %c176_263 = arith.constant 176 : index
    %c0_264 = arith.constant 0 : index
    %676 = vector.load %arg23[%c176_263, %c0_264] : memref<272x128xf32, #tpu.memory_space<vmem>>, vector<16x128xf32>
    %677 = arith.mulf %675, %676 : vector<16x128xf32>
    %cst_265 = arith.constant dense<0.000000e+00> : vector<128xf32>
    %678 = vector.multi_reduction <add>, %677, %cst_265 [0] : vector<16x128xf32> to vector<128xf32>
    %679 = vector.shape_cast %678 : vector<128xf32> to vector<1x128xf32>
    %680 = vector.extract_strided_slice %98 {offsets = [11, 0], sizes = [1, 128], strides = [1, 1]} : vector<17x128xf32> to vector<1x128xf32>
    %681 = arith.addf %679, %680 : vector<1x128xf32>
    %682 = vector.extract_strided_slice %681 {offsets = [0, 0], sizes = [1, 64], strides = [1, 1]} : vector<1x128xf32> to vector<1x64xf32>
    %c11_266 = arith.constant 11 : index
    %c0_267 = arith.constant 0 : index
    %683 = vector.load %arg24[%c11_266, %c0_267] : memref<17x128xf32, #tpu.memory_space<vmem>>, vector<1x64xf32>
    tpu.vector_store %arg24[%c11_266, %c0_267], %682 {strides = array<i32>} : memref<17x128xf32, #tpu.memory_space<vmem>>, vector<1x64xf32>,
    %684 = vector.extract_strided_slice %681 {offsets = [0, 64], sizes = [1, 64], strides = [1, 1]} : vector<1x128xf32> to vector<1x64xf32>
    %c5_268 = arith.constant 5 : index
    %c64_269 = arith.constant 64 : index
    %685 = vector.load %arg24[%c5_268, %c64_269] : memref<17x128xf32, #tpu.memory_space<vmem>>, vector<1x64xf32>
    tpu.vector_store %arg24[%c5_268, %c64_269], %684 {strides = array<i32>} : memref<17x128xf32, #tpu.memory_space<vmem>>, vector<1x64xf32>,
    %c192_270 = arith.constant 192 : index
    %c0_271 = arith.constant 0 : index
    %686 = vector.load %arg21[%c192_270, %c0_271] : memref<272x128xf32, #tpu.memory_space<vmem>>, vector<16x128xf32>
    %687 = arith.mulf %686, %675 : vector<16x128xf32>
    %c192_272 = arith.constant 192 : index
    %c0_273 = arith.constant 0 : index
    %688 = vector.load %arg22[%c192_272, %c0_273] : memref<272x128xf32, #tpu.memory_space<vmem>>, vector<16x128xf32>
    %689 = arith.addf %687, %688 : vector<16x128xf32>
    %c192_274 = arith.constant 192 : index
    %c0_275 = arith.constant 0 : index
    %690 = vector.load %arg23[%c192_274, %c0_275] : memref<272x128xf32, #tpu.memory_space<vmem>>, vector<16x128xf32>
    %691 = arith.mulf %689, %690 : vector<16x128xf32>
    %cst_276 = arith.constant dense<0.000000e+00> : vector<128xf32>
    %692 = vector.multi_reduction <add>, %691, %cst_276 [0] : vector<16x128xf32> to vector<128xf32>
    %693 = vector.shape_cast %692 : vector<128xf32> to vector<1x128xf32>
    %694 = vector.extract_strided_slice %98 {offsets = [12, 0], sizes = [1, 128], strides = [1, 1]} : vector<17x128xf32> to vector<1x128xf32>
    %695 = arith.addf %693, %694 : vector<1x128xf32>
    %696 = vector.extract_strided_slice %695 {offsets = [0, 0], sizes = [1, 64], strides = [1, 1]} : vector<1x128xf32> to vector<1x64xf32>
    %c12_277 = arith.constant 12 : index
    %c0_278 = arith.constant 0 : index
    %697 = vector.load %arg24[%c12_277, %c0_278] : memref<17x128xf32, #tpu.memory_space<vmem>>, vector<1x64xf32>
    tpu.vector_store %arg24[%c12_277, %c0_278], %696 {strides = array<i32>} : memref<17x128xf32, #tpu.memory_space<vmem>>, vector<1x64xf32>,
    %698 = vector.extract_strided_slice %695 {offsets = [0, 64], sizes = [1, 64], strides = [1, 1]} : vector<1x128xf32> to vector<1x64xf32>
    %c4_279 = arith.constant 4 : index
    %c64_280 = arith.constant 64 : index
    %699 = vector.load %arg24[%c4_279, %c64_280] : memref<17x128xf32, #tpu.memory_space<vmem>>, vector<1x64xf32>
    tpu.vector_store %arg24[%c4_279, %c64_280], %698 {strides = array<i32>} : memref<17x128xf32, #tpu.memory_space<vmem>>, vector<1x64xf32>,
    %c208_281 = arith.constant 208 : index
    %c0_282 = arith.constant 0 : index
    %700 = vector.load %arg21[%c208_281, %c0_282] : memref<272x128xf32, #tpu.memory_space<vmem>>, vector<16x128xf32>
    %701 = arith.mulf %700, %689 : vector<16x128xf32>
    %c208_283 = arith.constant 208 : index
    %c0_284 = arith.constant 0 : index
    %702 = vector.load %arg22[%c208_283, %c0_284] : memref<272x128xf32, #tpu.memory_space<vmem>>, vector<16x128xf32>
    %703 = arith.addf %701, %702 : vector<16x128xf32>
    %c208_285 = arith.constant 208 : index
    %c0_286 = arith.constant 0 : index
    %704 = vector.load %arg23[%c208_285, %c0_286] : memref<272x128xf32, #tpu.memory_space<vmem>>, vector<16x128xf32>
    %705 = arith.mulf %703, %704 : vector<16x128xf32>
    %cst_287 = arith.constant dense<0.000000e+00> : vector<128xf32>
    %706 = vector.multi_reduction <add>, %705, %cst_287 [0] : vector<16x128xf32> to vector<128xf32>
    %707 = vector.shape_cast %706 : vector<128xf32> to vector<1x128xf32>
    %708 = vector.extract_strided_slice %98 {offsets = [13, 0], sizes = [1, 128], strides = [1, 1]} : vector<17x128xf32> to vector<1x128xf32>
    %709 = arith.addf %707, %708 : vector<1x128xf32>
    %710 = vector.extract_strided_slice %709 {offsets = [0, 0], sizes = [1, 64], strides = [1, 1]} : vector<1x128xf32> to vector<1x64xf32>
    %c13_288 = arith.constant 13 : index
    %c0_289 = arith.constant 0 : index
    %711 = vector.load %arg24[%c13_288, %c0_289] : memref<17x128xf32, #tpu.memory_space<vmem>>, vector<1x64xf32>
    tpu.vector_store %arg24[%c13_288, %c0_289], %710 {strides = array<i32>} : memref<17x128xf32, #tpu.memory_space<vmem>>, vector<1x64xf32>,
    %712 = vector.extract_strided_slice %709 {offsets = [0, 64], sizes = [1, 64], strides = [1, 1]} : vector<1x128xf32> to vector<1x64xf32>
    %c3_290 = arith.constant 3 : index
    %c64_291 = arith.constant 64 : index
    %713 = vector.load %arg24[%c3_290, %c64_291] : memref<17x128xf32, #tpu.memory_space<vmem>>, vector<1x64xf32>
    tpu.vector_store %arg24[%c3_290, %c64_291], %712 {strides = array<i32>} : memref<17x128xf32, #tpu.memory_space<vmem>>, vector<1x64xf32>,
    %c224_292 = arith.constant 224 : index
    %c0_293 = arith.constant 0 : index
    %714 = vector.load %arg21[%c224_292, %c0_293] : memref<272x128xf32, #tpu.memory_space<vmem>>, vector<16x128xf32>
    %715 = arith.mulf %714, %703 : vector<16x128xf32>
    %c224_294 = arith.constant 224 : index
    %c0_295 = arith.constant 0 : index
    %716 = vector.load %arg22[%c224_294, %c0_295] : memref<272x128xf32, #tpu.memory_space<vmem>>, vector<16x128xf32>
    %717 = arith.addf %715, %716 : vector<16x128xf32>
    %c224_296 = arith.constant 224 : index
    %c0_297 = arith.constant 0 : index
    %718 = vector.load %arg23[%c224_296, %c0_297] : memref<272x128xf32, #tpu.memory_space<vmem>>, vector<16x128xf32>
    %719 = arith.mulf %717, %718 : vector<16x128xf32>
    %cst_298 = arith.constant dense<0.000000e+00> : vector<128xf32>
    %720 = vector.multi_reduction <add>, %719, %cst_298 [0] : vector<16x128xf32> to vector<128xf32>
    %721 = vector.shape_cast %720 : vector<128xf32> to vector<1x128xf32>
    %722 = vector.extract_strided_slice %98 {offsets = [14, 0], sizes = [1, 128], strides = [1, 1]} : vector<17x128xf32> to vector<1x128xf32>
    %723 = arith.addf %721, %722 : vector<1x128xf32>
    %724 = vector.extract_strided_slice %723 {offsets = [0, 0], sizes = [1, 64], strides = [1, 1]} : vector<1x128xf32> to vector<1x64xf32>
    %c14_299 = arith.constant 14 : index
    %c0_300 = arith.constant 0 : index
    %725 = vector.load %arg24[%c14_299, %c0_300] : memref<17x128xf32, #tpu.memory_space<vmem>>, vector<1x64xf32>
    tpu.vector_store %arg24[%c14_299, %c0_300], %724 {strides = array<i32>} : memref<17x128xf32, #tpu.memory_space<vmem>>, vector<1x64xf32>,
    %726 = vector.extract_strided_slice %723 {offsets = [0, 64], sizes = [1, 64], strides = [1, 1]} : vector<1x128xf32> to vector<1x64xf32>
    %c2_301 = arith.constant 2 : index
    %c64_302 = arith.constant 64 : index
    %727 = vector.load %arg24[%c2_301, %c64_302] : memref<17x128xf32, #tpu.memory_space<vmem>>, vector<1x64xf32>
    tpu.vector_store %arg24[%c2_301, %c64_302], %726 {strides = array<i32>} : memref<17x128xf32, #tpu.memory_space<vmem>>, vector<1x64xf32>,
    %c240_303 = arith.constant 240 : index
    %c0_304 = arith.constant 0 : index
    %728 = vector.load %arg21[%c240_303, %c0_304] : memref<272x128xf32, #tpu.memory_space<vmem>>, vector<16x128xf32>
    %729 = arith.mulf %728, %717 : vector<16x128xf32>
    %c240_305 = arith.constant 240 : index
    %c0_306 = arith.constant 0 : index
    %730 = vector.load %arg22[%c240_305, %c0_306] : memref<272x128xf32, #tpu.memory_space<vmem>>, vector<16x128xf32>
    %731 = arith.addf %729, %730 : vector<16x128xf32>
    %c240_307 = arith.constant 240 : index
    %c0_308 = arith.constant 0 : index
    %732 = vector.load %arg23[%c240_307, %c0_308] : memref<272x128xf32, #tpu.memory_space<vmem>>, vector<16x128xf32>
    %733 = arith.mulf %731, %732 : vector<16x128xf32>
    %cst_309 = arith.constant dense<0.000000e+00> : vector<128xf32>
    %734 = vector.multi_reduction <add>, %733, %cst_309 [0] : vector<16x128xf32> to vector<128xf32>
    %735 = vector.shape_cast %734 : vector<128xf32> to vector<1x128xf32>
    %736 = vector.extract_strided_slice %98 {offsets = [15, 0], sizes = [1, 128], strides = [1, 1]} : vector<17x128xf32> to vector<1x128xf32>
    %737 = arith.addf %735, %736 : vector<1x128xf32>
    %738 = vector.extract_strided_slice %737 {offsets = [0, 0], sizes = [1, 64], strides = [1, 1]} : vector<1x128xf32> to vector<1x64xf32>
    %c15_310 = arith.constant 15 : index
    %c0_311 = arith.constant 0 : index
    %739 = vector.load %arg24[%c15_310, %c0_311] : memref<17x128xf32, #tpu.memory_space<vmem>>, vector<1x64xf32>
    tpu.vector_store %arg24[%c15_310, %c0_311], %738 {strides = array<i32>} : memref<17x128xf32, #tpu.memory_space<vmem>>, vector<1x64xf32>,
    %740 = vector.extract_strided_slice %737 {offsets = [0, 64], sizes = [1, 64], strides = [1, 1]} : vector<1x128xf32> to vector<1x64xf32>
    %c1_312 = arith.constant 1 : index
    %c64_313 = arith.constant 64 : index
    %741 = vector.load %arg24[%c1_312, %c64_313] : memref<17x128xf32, #tpu.memory_space<vmem>>, vector<1x64xf32>
    tpu.vector_store %arg24[%c1_312, %c64_313], %740 {strides = array<i32>} : memref<17x128xf32, #tpu.memory_space<vmem>>, vector<1x64xf32>,
    %c256_314 = arith.constant 256 : index
    %c0_315 = arith.constant 0 : index
    %742 = vector.load %arg21[%c256_314, %c0_315] : memref<272x128xf32, #tpu.memory_space<vmem>>, vector<16x128xf32>
    %743 = arith.mulf %742, %731 : vector<16x128xf32>
    %c256_316 = arith.constant 256 : index
    %c0_317 = arith.constant 0 : index
    %744 = vector.load %arg22[%c256_316, %c0_317] : memref<272x128xf32, #tpu.memory_space<vmem>>, vector<16x128xf32>
    %745 = arith.addf %743, %744 : vector<16x128xf32>
    %c256_318 = arith.constant 256 : index
    %c0_319 = arith.constant 0 : index
    %746 = vector.load %arg23[%c256_318, %c0_319] : memref<272x128xf32, #tpu.memory_space<vmem>>, vector<16x128xf32>
    %747 = arith.mulf %745, %746 : vector<16x128xf32>
    %cst_320 = arith.constant dense<0.000000e+00> : vector<128xf32>
    %748 = vector.multi_reduction <add>, %747, %cst_320 [0] : vector<16x128xf32> to vector<128xf32>
    %749 = vector.shape_cast %748 : vector<128xf32> to vector<1x128xf32>
    %750 = vector.extract_strided_slice %98 {offsets = [16, 0], sizes = [1, 128], strides = [1, 1]} : vector<17x128xf32> to vector<1x128xf32>
    %751 = arith.addf %749, %750 : vector<1x128xf32>
    %752 = vector.extract_strided_slice %751 {offsets = [0, 0], sizes = [1, 64], strides = [1, 1]} : vector<1x128xf32> to vector<1x64xf32>
    %c16_321 = arith.constant 16 : index
    %c0_322 = arith.constant 0 : index
    %753 = vector.load %arg24[%c16_321, %c0_322] : memref<17x128xf32, #tpu.memory_space<vmem>>, vector<1x64xf32>
    tpu.vector_store %arg24[%c16_321, %c0_322], %752 {strides = array<i32>} : memref<17x128xf32, #tpu.memory_space<vmem>>, vector<1x64xf32>,
    %754 = vector.extract_strided_slice %751 {offsets = [0, 64], sizes = [1, 64], strides = [1, 1]} : vector<1x128xf32> to vector<1x64xf32>
    %c0_323 = arith.constant 0 : index
    %c64_324 = arith.constant 64 : index
    %755 = vector.load %arg24[%c0_323, %c64_324] : memref<17x128xf32, #tpu.memory_space<vmem>>, vector<1x64xf32>
    tpu.vector_store %arg24[%c0_323, %c64_324], %754 {strides = array<i32>} : memref<17x128xf32, #tpu.memory_space<vmem>>, vector<1x64xf32>,
    %c0_325 = arith.constant 0 : index
    %c0_326 = arith.constant 0 : index
    %756 = vector.load %arg24[%c0_325, %c0_326] : memref<17x128xf32, #tpu.memory_space<vmem>>, vector<17x128xf32>
    %757 = vector.extract_strided_slice %756 {offsets = [0, 0], sizes = [17, 64], strides = [1, 1]} : vector<17x128xf32> to vector<17x64xf32>
    %758 = vector.extract_strided_slice %756 {offsets = [0, 64], sizes = [17, 64], strides = [1, 1]} : vector<17x128xf32> to vector<17x64xf32>
    %759 = arith.addf %757, %758 : vector<17x64xf32>
    %760 = arith.negf %39 : vector<17x64xf32>
    %761 = math.exp %760 : vector<17x64xf32>
    %cst_327 = arith.constant 1.000000e+00 : f32
    %762 = vector.broadcast %cst_327 : f32 to vector<17x64xf32>
    %763 = arith.addf %762, %761 : vector<17x64xf32>
    %764 = arith.divf %762, %763 : vector<17x64xf32>
    %765 = arith.mulf %39, %764 : vector<17x64xf32>
    %766 = arith.mulf %759, %765 : vector<17x64xf32>
    %767 = arith.truncf %766 : vector<17x64xf32> to vector<17x64xbf16>
    %c0_328 = arith.constant 0 : index
    %c0_329 = arith.constant 0 : index
    %c0_330 = arith.constant 0 : index
    %768 = vector.load %arg15[%c0_328, %c0_329, %c0_330] : memref<2x64x32xf32, #tpu.memory_space<vmem>>, vector<1x64x32xf32>
    %769 = vector.shape_cast %768 : vector<1x64x32xf32> to vector<64x32xf32>
    %770 = arith.truncf %769 : vector<64x32xf32> to vector<64x32xbf16>
    %cst_331 = arith.constant dense<0.000000e+00> : vector<17x32xf32>
    %771 = tpu.matmul %767, %770, %cst_331 {dimension_numbers = #tpu.dot_dimension_numbers<[1], [0], [0], [1], [0, 0, 1, 1], [], []>} : vector<17x64xbf16>, vector<64x32xbf16>, vector<17x32xf32> -> vector<17x32xf32>
    %772 = arith.addf %771, %18 : vector<17x32xf32>
    %773 = arith.mulf %772, %772 : vector<17x32xf32>
    %cst_332 = arith.constant dense<0.000000e+00> : vector<17xf32>
    %774 = vector.multi_reduction <add>, %773, %cst_332 [1] : vector<17x32xf32> to vector<17xf32>
    %775 = vector.shape_cast %774 : vector<17xf32> to vector<17x1xf32>
    %cst_333 = arith.constant 3.200000e+01 : f32
    %776 = vector.broadcast %cst_333 : f32 to vector<17x1xf32>
    %777 = arith.divf %775, %776 : vector<17x1xf32>
    %cst_334 = arith.constant 9.99999974E-6 : f32
    %778 = vector.broadcast %cst_334 : f32 to vector<17x1xf32>
    %779 = arith.addf %777, %778 : vector<17x1xf32>
    %780 = math.rsqrt %779 : vector<17x1xf32>
    %781 = vector.broadcast %780 : vector<17x1xf32> to vector<17x32xf32>
    %782 = arith.mulf %772, %781 : vector<17x32xf32>
    %c1_335 = arith.constant 1 : index
    %c0_336 = arith.constant 0 : index
    %c0_337 = arith.constant 0 : index
    %783 = vector.load %arg6[%c1_335, %c0_336, %c0_337] : memref<2x1x32xf32, #tpu.memory_space<vmem>>, vector<1x1x32xf32>
    %784 = vector.shape_cast %783 : vector<1x1x32xf32> to vector<1x32xf32>
    %785 = vector.broadcast %784 : vector<1x32xf32> to vector<17x32xf32>
    %786 = arith.mulf %782, %785 : vector<17x32xf32>
    %787 = arith.truncf %786 : vector<17x32xf32> to vector<17x32xbf16>
    %c1_338 = arith.constant 1 : index
    %c0_339 = arith.constant 0 : index
    %c0_340 = arith.constant 0 : index
    %788 = vector.load %arg7[%c1_338, %c0_339, %c0_340] : memref<2x32x128xf32, #tpu.memory_space<vmem>>, vector<1x32x128xf32>
    %789 = vector.shape_cast %788 : vector<1x32x128xf32> to vector<32x128xf32>
    %790 = arith.truncf %789 : vector<32x128xf32> to vector<32x128xbf16>
    %cst_341 = arith.constant dense<0.000000e+00> : vector<17x128xf32>
    %791 = tpu.matmul %787, %790, %cst_341 {dimension_numbers = #tpu.dot_dimension_numbers<[1], [0], [0], [1], [0, 0, 1, 1], [], []>} : vector<17x32xbf16>, vector<32x128xbf16>, vector<17x128xf32> -> vector<17x128xf32>
    %792 = vector.extract_strided_slice %791 {offsets = [0, 0], sizes = [17, 64], strides = [1, 1]} : vector<17x128xf32> to vector<17x64xf32>
    %793 = vector.extract_strided_slice %791 {offsets = [0, 64], sizes = [17, 64], strides = [1, 1]} : vector<17x128xf32> to vector<17x64xf32>
    %cst_342 = arith.constant dense<0.000000e+00> : vector<17x64xf32>
    %794 = tpu.matmul %17, %792, %cst_342 {dimension_numbers = #tpu.dot_dimension_numbers<[1], [0], [0], [1], [0, 0, 1, 1], [], []>} : vector<17x17xf32>, vector<17x64xf32>, vector<17x64xf32> -> vector<17x64xf32>
    %c1_343 = arith.constant 1 : index
    %c0_344 = arith.constant 0 : index
    %c0_345 = arith.constant 0 : index
    %795 = vector.load %arg8[%c1_343, %c0_344, %c0_345] : memref<2x4x128xf32, #tpu.memory_space<vmem>>, vector<1x4x128xf32>
    %796 = vector.shape_cast %795 : vector<1x4x128xf32> to vector<4x128xf32>
    %cst_346 = arith.constant 0.000000e+00 : f32
    %797 = vector.broadcast %cst_346 : f32 to vector<3x128xf32>
    %c0_347 = arith.constant 0 : index
    %c0_348 = arith.constant 0 : index
    %798 = vector.load %arg20[%c0_347, %c0_348] : memref<20x128xf32, #tpu.memory_space<vmem>>, vector<3x128xf32>
    tpu.vector_store %arg20[%c0_347, %c0_348], %797 {strides = array<i32>} : memref<20x128xf32, #tpu.memory_space<vmem>>, vector<3x128xf32>,
    %c3_349 = arith.constant 3 : index
    %c0_350 = arith.constant 0 : index
    %799 = vector.load %arg20[%c3_349, %c0_350] : memref<20x128xf32, #tpu.memory_space<vmem>>, vector<17x64xf32>
    tpu.vector_store %arg20[%c3_349, %c0_350], %792 {strides = array<i32>} : memref<20x128xf32, #tpu.memory_space<vmem>>, vector<17x64xf32>,
    %c3_351 = arith.constant 3 : index
    %c64_352 = arith.constant 64 : index
    %800 = vector.load %arg20[%c3_351, %c64_352] : memref<20x128xf32, #tpu.memory_space<vmem>>, vector<17x64xf32>
    tpu.vector_store %arg20[%c3_351, %c64_352], %794 {strides = array<i32>} : memref<20x128xf32, #tpu.memory_space<vmem>>, vector<17x64xf32>,
    %cst_353 = arith.constant 0.000000e+00 : f32
    %801 = vector.broadcast %cst_353 : f32 to vector<17x128xf32>
    %c0_354 = arith.constant 0 : index
    %c0_355 = arith.constant 0 : index
    %802 = vector.load %arg20[%c0_354, %c0_355] : memref<20x128xf32, #tpu.memory_space<vmem>>, vector<17x128xf32>
    %803 = vector.extract_strided_slice %796 {offsets = [0, 0], sizes = [1, 128], strides = [1, 1]} : vector<4x128xf32> to vector<1x128xf32>
    %804 = vector.broadcast %803 : vector<1x128xf32> to vector<17x128xf32>
    %805 = arith.mulf %802, %804 : vector<17x128xf32>
    %806 = arith.addf %801, %805 : vector<17x128xf32>
    %c1_356 = arith.constant 1 : index
    %c0_357 = arith.constant 0 : index
    %807 = vector.load %arg20[%c1_356, %c0_357] : memref<20x128xf32, #tpu.memory_space<vmem>>, vector<17x128xf32>
    %808 = vector.extract_strided_slice %796 {offsets = [1, 0], sizes = [1, 128], strides = [1, 1]} : vector<4x128xf32> to vector<1x128xf32>
    %809 = vector.broadcast %808 : vector<1x128xf32> to vector<17x128xf32>
    %810 = arith.mulf %807, %809 : vector<17x128xf32>
    %811 = arith.addf %806, %810 : vector<17x128xf32>
    %c2_358 = arith.constant 2 : index
    %c0_359 = arith.constant 0 : index
    %812 = vector.load %arg20[%c2_358, %c0_359] : memref<20x128xf32, #tpu.memory_space<vmem>>, vector<17x128xf32>
    %813 = vector.extract_strided_slice %796 {offsets = [2, 0], sizes = [1, 128], strides = [1, 1]} : vector<4x128xf32> to vector<1x128xf32>
    %814 = vector.broadcast %813 : vector<1x128xf32> to vector<17x128xf32>
    %815 = arith.mulf %812, %814 : vector<17x128xf32>
    %816 = arith.addf %811, %815 : vector<17x128xf32>
    %c3_360 = arith.constant 3 : index
    %c0_361 = arith.constant 0 : index
    %817 = vector.load %arg20[%c3_360, %c0_361] : memref<20x128xf32, #tpu.memory_space<vmem>>, vector<17x128xf32>
    %818 = vector.extract_strided_slice %796 {offsets = [3, 0], sizes = [1, 128], strides = [1, 1]} : vector<4x128xf32> to vector<1x128xf32>
    %819 = vector.broadcast %818 : vector<1x128xf32> to vector<17x128xf32>
    %820 = arith.mulf %817, %819 : vector<17x128xf32>
    %821 = arith.addf %816, %820 : vector<17x128xf32>
    %c1_362 = arith.constant 1 : index
    %c0_363 = arith.constant 0 : index
    %c0_364 = arith.constant 0 : index
    %822 = vector.load %arg9[%c1_362, %c0_363, %c0_364] : memref<2x1x128xf32, #tpu.memory_space<vmem>>, vector<1x1x128xf32>
    %823 = vector.shape_cast %822 : vector<1x1x128xf32> to vector<1x128xf32>
    %824 = vector.broadcast %823 : vector<1x128xf32> to vector<17x128xf32>
    %825 = arith.addf %821, %824 : vector<17x128xf32>
    %826 = arith.negf %825 : vector<17x128xf32>
    %827 = math.exp %826 : vector<17x128xf32>
    %cst_365 = arith.constant 1.000000e+00 : f32
    %828 = vector.broadcast %cst_365 : f32 to vector<17x128xf32>
    %829 = arith.addf %828, %827 : vector<17x128xf32>
    %830 = arith.divf %828, %829 : vector<17x128xf32>
    %831 = arith.mulf %825, %830 : vector<17x128xf32>
    %832 = arith.truncf %831 : vector<17x128xf32> to vector<17x128xbf16>
    %c1_366 = arith.constant 1 : index
    %c0_367 = arith.constant 0 : index
    %c0_368 = arith.constant 0 : index
    %833 = vector.load %arg10[%c1_366, %c0_367, %c0_368] : memref<2x128x128xf32, #tpu.memory_space<vmem>>, vector<1x128x128xf32>
    %834 = vector.shape_cast %833 : vector<1x128x128xf32> to vector<128x128xf32>
    %835 = arith.truncf %834 : vector<128x128xf32> to vector<128x128xbf16>
    %cst_369 = arith.constant dense<0.000000e+00> : vector<17x128xf32>
    %836 = tpu.matmul %832, %835, %cst_369 {dimension_numbers = #tpu.dot_dimension_numbers<[1], [0], [0], [1], [0, 0, 1, 1], [], []>} : vector<17x128xbf16>, vector<128x128xbf16>, vector<17x128xf32> -> vector<17x128xf32>
    %c1_370 = arith.constant 1 : index
    %c0_371 = arith.constant 0 : index
    %c0_372 = arith.constant 0 : index
    %837 = vector.load %arg11[%c1_370, %c0_371, %c0_372] : memref<2x1x128xf32, #tpu.memory_space<vmem>>, vector<1x1x128xf32>
    %838 = vector.shape_cast %837 : vector<1x1x128xf32> to vector<1x128xf32>
    %839 = vector.broadcast %838 : vector<1x128xf32> to vector<17x128xf32>
    %840 = arith.addf %836, %839 : vector<17x128xf32>
    %cst_373 = arith.constant 2.000000e+01 : f32
    %841 = vector.broadcast %cst_373 : f32 to vector<17x128xf32>
    %842 = arith.cmpf ogt, %840, %841 : vector<17x128xf32>
    %cst_374 = arith.constant 2.000000e+01 : f32
    %843 = vector.broadcast %cst_374 : f32 to vector<17x128xf32>
    %844 = arith.minimumf %840, %843 : vector<17x128xf32>
    %845 = math.exp %844 : vector<17x128xf32>
    %846 = math.log1p %845 : vector<17x128xf32>
    %847 = arith.select %842, %840, %846 : vector<17x128xi1>, vector<17x128xf32>
    %848 = arith.mulf %847, %831 : vector<17x128xf32>
    %c1_375 = arith.constant 1 : index
    %c0_376 = arith.constant 0 : index
    %c0_377 = arith.constant 0 : index
    %849 = vector.load %arg14[%c1_375, %c0_376, %c0_377] : memref<2x1x128xf32, #tpu.memory_space<vmem>>, vector<1x1x128xf32>
    %850 = vector.shape_cast %849 : vector<1x1x128xf32> to vector<1x128xf32>
    %851 = vector.broadcast %850 : vector<1x128xf32> to vector<17x128xf32>
    %852 = arith.mulf %831, %851 : vector<17x128xf32>
    %c1_378 = arith.constant 1 : index
    %c0_379 = arith.constant 0 : index
    %c0_380 = arith.constant 0 : index
    %853 = vector.load %arg12[%c1_378, %c0_379, %c0_380] : memref<2x64x128xf32, #tpu.memory_space<vmem>>, vector<1x64x128xf32>
    %854 = vector.shape_cast %853 : vector<1x64x128xf32> to vector<64x128xf32>
    %855 = arith.truncf %854 : vector<64x128xf32> to vector<64x128xbf16>
    %cst_381 = arith.constant dense<0.000000e+00> : vector<64x17xf32>
    %856 = tpu.matmul %855, %832, %cst_381 {dimension_numbers = #tpu.dot_dimension_numbers<[1], [1], [0], [0], [0, 0, 1, 0], [], []>} : vector<64x128xbf16>, vector<17x128xbf16>, vector<64x17xf32> -> vector<64x17xf32>
    %857 = vector.extract_strided_slice %856 {offsets = [0, 0], sizes = [16, 17], strides = [1, 1]} : vector<64x17xf32> to vector<16x17xf32>
    %858 = vector.extract_strided_slice %856 {offsets = [16, 0], sizes = [16, 17], strides = [1, 1]} : vector<64x17xf32> to vector<16x17xf32>
    %859 = vector.extract_strided_slice %856 {offsets = [32, 0], sizes = [16, 17], strides = [1, 1]} : vector<64x17xf32> to vector<16x17xf32>
    %860 = vector.extract_strided_slice %856 {offsets = [48, 0], sizes = [16, 17], strides = [1, 1]} : vector<64x17xf32> to vector<16x17xf32>
    %c1_382 = arith.constant 1 : index
    %c0_383 = arith.constant 0 : index
    %c0_384 = arith.constant 0 : index
    %861 = vector.load %arg13[%c1_382, %c0_383, %c0_384] : memref<2x16x128xf32, #tpu.memory_space<vmem>>, vector<1x16x128xf32>
    %862 = vector.shape_cast %861 : vector<1x16x128xf32> to vector<16x128xf32>
    %863 = vector.extract_strided_slice %847 {offsets = [0, 0], sizes = [1, 128], strides = [1, 1]} : vector<17x128xf32> to vector<1x128xf32>
    %864 = vector.broadcast %863 : vector<1x128xf32> to vector<16x128xf32>
    %865 = arith.mulf %864, %862 : vector<16x128xf32>
    %866 = math.exp %865 : vector<16x128xf32>
    %c0_385 = arith.constant 0 : index
    %c0_386 = arith.constant 0 : index
    %867 = vector.load %arg21[%c0_385, %c0_386] : memref<272x128xf32, #tpu.memory_space<vmem>>, vector<16x128xf32>
    tpu.vector_store %arg21[%c0_385, %c0_386], %866 {strides = array<i32>} : memref<272x128xf32, #tpu.memory_space<vmem>>, vector<16x128xf32>,
    %868 = vector.extract_strided_slice %857 {offsets = [0, 0], sizes = [16, 1], strides = [1, 1]} : vector<16x17xf32> to vector<16x1xf32>
    %869 = vector.extract_strided_slice %859 {offsets = [0, 0], sizes = [16, 1], strides = [1, 1]} : vector<16x17xf32> to vector<16x1xf32>
    %870 = vector.shape_cast %868 : vector<16x1xf32> to vector<16x1xf32>
    %871 = vector.broadcast %870 : vector<16x1xf32> to vector<16x128xf32>
    %872 = vector.shape_cast %869 : vector<16x1xf32> to vector<16x1xf32>
    %873 = vector.broadcast %872 : vector<16x1xf32> to vector<16x128xf32>
    %874 = arith.select %2, %871, %873 : vector<16x128xi1>, vector<16x128xf32>
    %875 = vector.extract_strided_slice %848 {offsets = [0, 0], sizes = [1, 128], strides = [1, 1]} : vector<17x128xf32> to vector<1x128xf32>
    %876 = vector.broadcast %875 : vector<1x128xf32> to vector<16x128xf32>
    %877 = arith.mulf %874, %876 : vector<16x128xf32>
    %c0_387 = arith.constant 0 : index
    %c0_388 = arith.constant 0 : index
    %878 = vector.load %arg22[%c0_387, %c0_388] : memref<272x128xf32, #tpu.memory_space<vmem>>, vector<16x128xf32>
    tpu.vector_store %arg22[%c0_387, %c0_388], %877 {strides = array<i32>} : memref<272x128xf32, #tpu.memory_space<vmem>>, vector<16x128xf32>,
    %879 = vector.extract_strided_slice %858 {offsets = [0, 0], sizes = [16, 1], strides = [1, 1]} : vector<16x17xf32> to vector<16x1xf32>
    %880 = vector.extract_strided_slice %860 {offsets = [0, 0], sizes = [16, 1], strides = [1, 1]} : vector<16x17xf32> to vector<16x1xf32>
    %881 = vector.shape_cast %879 : vector<16x1xf32> to vector<16x1xf32>
    %882 = vector.broadcast %881 : vector<16x1xf32> to vector<16x128xf32>
    %883 = vector.shape_cast %880 : vector<16x1xf32> to vector<16x1xf32>
    %884 = vector.broadcast %883 : vector<16x1xf32> to vector<16x128xf32>
    %885 = arith.select %2, %882, %884 : vector<16x128xi1>, vector<16x128xf32>
    %c0_389 = arith.constant 0 : index
    %c0_390 = arith.constant 0 : index
    %886 = vector.load %arg23[%c0_389, %c0_390] : memref<272x128xf32, #tpu.memory_space<vmem>>, vector<16x128xf32>
    tpu.vector_store %arg23[%c0_389, %c0_390], %885 {strides = array<i32>} : memref<272x128xf32, #tpu.memory_space<vmem>>, vector<16x128xf32>,
    %887 = vector.extract_strided_slice %847 {offsets = [1, 0], sizes = [1, 128], strides = [1, 1]} : vector<17x128xf32> to vector<1x128xf32>
    %888 = vector.broadcast %887 : vector<1x128xf32> to vector<16x128xf32>
    %889 = arith.mulf %888, %862 : vector<16x128xf32>
    %890 = math.exp %889 : vector<16x128xf32>
    %c16_391 = arith.constant 16 : index
    %c0_392 = arith.constant 0 : index
    %891 = vector.load %arg21[%c16_391, %c0_392] : memref<272x128xf32, #tpu.memory_space<vmem>>, vector<16x128xf32>
    tpu.vector_store %arg21[%c16_391, %c0_392], %890 {strides = array<i32>} : memref<272x128xf32, #tpu.memory_space<vmem>>, vector<16x128xf32>,
    %892 = vector.extract_strided_slice %857 {offsets = [0, 1], sizes = [16, 1], strides = [1, 1]} : vector<16x17xf32> to vector<16x1xf32>
    %893 = vector.extract_strided_slice %859 {offsets = [0, 1], sizes = [16, 1], strides = [1, 1]} : vector<16x17xf32> to vector<16x1xf32>
    %894 = vector.shape_cast %892 : vector<16x1xf32> to vector<16x1xf32>
    %895 = vector.broadcast %894 : vector<16x1xf32> to vector<16x128xf32>
    %896 = vector.shape_cast %893 : vector<16x1xf32> to vector<16x1xf32>
    %897 = vector.broadcast %896 : vector<16x1xf32> to vector<16x128xf32>
    %898 = arith.select %2, %895, %897 : vector<16x128xi1>, vector<16x128xf32>
    %899 = vector.extract_strided_slice %848 {offsets = [1, 0], sizes = [1, 128], strides = [1, 1]} : vector<17x128xf32> to vector<1x128xf32>
    %900 = vector.broadcast %899 : vector<1x128xf32> to vector<16x128xf32>
    %901 = arith.mulf %898, %900 : vector<16x128xf32>
    %c16_393 = arith.constant 16 : index
    %c0_394 = arith.constant 0 : index
    %902 = vector.load %arg22[%c16_393, %c0_394] : memref<272x128xf32, #tpu.memory_space<vmem>>, vector<16x128xf32>
    tpu.vector_store %arg22[%c16_393, %c0_394], %901 {strides = array<i32>} : memref<272x128xf32, #tpu.memory_space<vmem>>, vector<16x128xf32>,
    %903 = vector.extract_strided_slice %858 {offsets = [0, 1], sizes = [16, 1], strides = [1, 1]} : vector<16x17xf32> to vector<16x1xf32>
    %904 = vector.extract_strided_slice %860 {offsets = [0, 1], sizes = [16, 1], strides = [1, 1]} : vector<16x17xf32> to vector<16x1xf32>
    %905 = vector.shape_cast %903 : vector<16x1xf32> to vector<16x1xf32>
    %906 = vector.broadcast %905 : vector<16x1xf32> to vector<16x128xf32>
    %907 = vector.shape_cast %904 : vector<16x1xf32> to vector<16x1xf32>
    %908 = vector.broadcast %907 : vector<16x1xf32> to vector<16x128xf32>
    %909 = arith.select %2, %906, %908 : vector<16x128xi1>, vector<16x128xf32>
    %c16_395 = arith.constant 16 : index
    %c0_396 = arith.constant 0 : index
    %910 = vector.load %arg23[%c16_395, %c0_396] : memref<272x128xf32, #tpu.memory_space<vmem>>, vector<16x128xf32>
    tpu.vector_store %arg23[%c16_395, %c0_396], %909 {strides = array<i32>} : memref<272x128xf32, #tpu.memory_space<vmem>>, vector<16x128xf32>,
    %911 = vector.extract_strided_slice %847 {offsets = [2, 0], sizes = [1, 128], strides = [1, 1]} : vector<17x128xf32> to vector<1x128xf32>
    %912 = vector.broadcast %911 : vector<1x128xf32> to vector<16x128xf32>
    %913 = arith.mulf %912, %862 : vector<16x128xf32>
    %914 = math.exp %913 : vector<16x128xf32>
    %c32_397 = arith.constant 32 : index
    %c0_398 = arith.constant 0 : index
    %915 = vector.load %arg21[%c32_397, %c0_398] : memref<272x128xf32, #tpu.memory_space<vmem>>, vector<16x128xf32>
    tpu.vector_store %arg21[%c32_397, %c0_398], %914 {strides = array<i32>} : memref<272x128xf32, #tpu.memory_space<vmem>>, vector<16x128xf32>,
    %916 = vector.extract_strided_slice %857 {offsets = [0, 2], sizes = [16, 1], strides = [1, 1]} : vector<16x17xf32> to vector<16x1xf32>
    %917 = vector.extract_strided_slice %859 {offsets = [0, 2], sizes = [16, 1], strides = [1, 1]} : vector<16x17xf32> to vector<16x1xf32>
    %918 = vector.shape_cast %916 : vector<16x1xf32> to vector<16x1xf32>
    %919 = vector.broadcast %918 : vector<16x1xf32> to vector<16x128xf32>
    %920 = vector.shape_cast %917 : vector<16x1xf32> to vector<16x1xf32>
    %921 = vector.broadcast %920 : vector<16x1xf32> to vector<16x128xf32>
    %922 = arith.select %2, %919, %921 : vector<16x128xi1>, vector<16x128xf32>
    %923 = vector.extract_strided_slice %848 {offsets = [2, 0], sizes = [1, 128], strides = [1, 1]} : vector<17x128xf32> to vector<1x128xf32>
    %924 = vector.broadcast %923 : vector<1x128xf32> to vector<16x128xf32>
    %925 = arith.mulf %922, %924 : vector<16x128xf32>
    %c32_399 = arith.constant 32 : index
    %c0_400 = arith.constant 0 : index
    %926 = vector.load %arg22[%c32_399, %c0_400] : memref<272x128xf32, #tpu.memory_space<vmem>>, vector<16x128xf32>
    tpu.vector_store %arg22[%c32_399, %c0_400], %925 {strides = array<i32>} : memref<272x128xf32, #tpu.memory_space<vmem>>, vector<16x128xf32>,
    %927 = vector.extract_strided_slice %858 {offsets = [0, 2], sizes = [16, 1], strides = [1, 1]} : vector<16x17xf32> to vector<16x1xf32>
    %928 = vector.extract_strided_slice %860 {offsets = [0, 2], sizes = [16, 1], strides = [1, 1]} : vector<16x17xf32> to vector<16x1xf32>
    %929 = vector.shape_cast %927 : vector<16x1xf32> to vector<16x1xf32>
    %930 = vector.broadcast %929 : vector<16x1xf32> to vector<16x128xf32>
    %931 = vector.shape_cast %928 : vector<16x1xf32> to vector<16x1xf32>
    %932 = vector.broadcast %931 : vector<16x1xf32> to vector<16x128xf32>
    %933 = arith.select %2, %930, %932 : vector<16x128xi1>, vector<16x128xf32>
    %c32_401 = arith.constant 32 : index
    %c0_402 = arith.constant 0 : index
    %934 = vector.load %arg23[%c32_401, %c0_402] : memref<272x128xf32, #tpu.memory_space<vmem>>, vector<16x128xf32>
    tpu.vector_store %arg23[%c32_401, %c0_402], %933 {strides = array<i32>} : memref<272x128xf32, #tpu.memory_space<vmem>>, vector<16x128xf32>,
    %935 = vector.extract_strided_slice %847 {offsets = [3, 0], sizes = [1, 128], strides = [1, 1]} : vector<17x128xf32> to vector<1x128xf32>
    %936 = vector.broadcast %935 : vector<1x128xf32> to vector<16x128xf32>
    %937 = arith.mulf %936, %862 : vector<16x128xf32>
    %938 = math.exp %937 : vector<16x128xf32>
    %c48_403 = arith.constant 48 : index
    %c0_404 = arith.constant 0 : index
    %939 = vector.load %arg21[%c48_403, %c0_404] : memref<272x128xf32, #tpu.memory_space<vmem>>, vector<16x128xf32>
    tpu.vector_store %arg21[%c48_403, %c0_404], %938 {strides = array<i32>} : memref<272x128xf32, #tpu.memory_space<vmem>>, vector<16x128xf32>,
    %940 = vector.extract_strided_slice %857 {offsets = [0, 3], sizes = [16, 1], strides = [1, 1]} : vector<16x17xf32> to vector<16x1xf32>
    %941 = vector.extract_strided_slice %859 {offsets = [0, 3], sizes = [16, 1], strides = [1, 1]} : vector<16x17xf32> to vector<16x1xf32>
    %942 = vector.shape_cast %940 : vector<16x1xf32> to vector<16x1xf32>
    %943 = vector.broadcast %942 : vector<16x1xf32> to vector<16x128xf32>
    %944 = vector.shape_cast %941 : vector<16x1xf32> to vector<16x1xf32>
    %945 = vector.broadcast %944 : vector<16x1xf32> to vector<16x128xf32>
    %946 = arith.select %2, %943, %945 : vector<16x128xi1>, vector<16x128xf32>
    %947 = vector.extract_strided_slice %848 {offsets = [3, 0], sizes = [1, 128], strides = [1, 1]} : vector<17x128xf32> to vector<1x128xf32>
    %948 = vector.broadcast %947 : vector<1x128xf32> to vector<16x128xf32>
    %949 = arith.mulf %946, %948 : vector<16x128xf32>
    %c48_405 = arith.constant 48 : index
    %c0_406 = arith.constant 0 : index
    %950 = vector.load %arg22[%c48_405, %c0_406] : memref<272x128xf32, #tpu.memory_space<vmem>>, vector<16x128xf32>
    tpu.vector_store %arg22[%c48_405, %c0_406], %949 {strides = array<i32>} : memref<272x128xf32, #tpu.memory_space<vmem>>, vector<16x128xf32>,
    %951 = vector.extract_strided_slice %858 {offsets = [0, 3], sizes = [16, 1], strides = [1, 1]} : vector<16x17xf32> to vector<16x1xf32>
    %952 = vector.extract_strided_slice %860 {offsets = [0, 3], sizes = [16, 1], strides = [1, 1]} : vector<16x17xf32> to vector<16x1xf32>
    %953 = vector.shape_cast %951 : vector<16x1xf32> to vector<16x1xf32>
    %954 = vector.broadcast %953 : vector<16x1xf32> to vector<16x128xf32>
    %955 = vector.shape_cast %952 : vector<16x1xf32> to vector<16x1xf32>
    %956 = vector.broadcast %955 : vector<16x1xf32> to vector<16x128xf32>
    %957 = arith.select %2, %954, %956 : vector<16x128xi1>, vector<16x128xf32>
    %c48_407 = arith.constant 48 : index
    %c0_408 = arith.constant 0 : index
    %958 = vector.load %arg23[%c48_407, %c0_408] : memref<272x128xf32, #tpu.memory_space<vmem>>, vector<16x128xf32>
    tpu.vector_store %arg23[%c48_407, %c0_408], %957 {strides = array<i32>} : memref<272x128xf32, #tpu.memory_space<vmem>>, vector<16x128xf32>,
    %959 = vector.extract_strided_slice %847 {offsets = [4, 0], sizes = [1, 128], strides = [1, 1]} : vector<17x128xf32> to vector<1x128xf32>
    %960 = vector.broadcast %959 : vector<1x128xf32> to vector<16x128xf32>
    %961 = arith.mulf %960, %862 : vector<16x128xf32>
    %962 = math.exp %961 : vector<16x128xf32>
    %c64_409 = arith.constant 64 : index
    %c0_410 = arith.constant 0 : index
    %963 = vector.load %arg21[%c64_409, %c0_410] : memref<272x128xf32, #tpu.memory_space<vmem>>, vector<16x128xf32>
    tpu.vector_store %arg21[%c64_409, %c0_410], %962 {strides = array<i32>} : memref<272x128xf32, #tpu.memory_space<vmem>>, vector<16x128xf32>,
    %964 = vector.extract_strided_slice %857 {offsets = [0, 4], sizes = [16, 1], strides = [1, 1]} : vector<16x17xf32> to vector<16x1xf32>
    %965 = vector.extract_strided_slice %859 {offsets = [0, 4], sizes = [16, 1], strides = [1, 1]} : vector<16x17xf32> to vector<16x1xf32>
    %966 = vector.shape_cast %964 : vector<16x1xf32> to vector<16x1xf32>
    %967 = vector.broadcast %966 : vector<16x1xf32> to vector<16x128xf32>
    %968 = vector.shape_cast %965 : vector<16x1xf32> to vector<16x1xf32>
    %969 = vector.broadcast %968 : vector<16x1xf32> to vector<16x128xf32>
    %970 = arith.select %2, %967, %969 : vector<16x128xi1>, vector<16x128xf32>
    %971 = vector.extract_strided_slice %848 {offsets = [4, 0], sizes = [1, 128], strides = [1, 1]} : vector<17x128xf32> to vector<1x128xf32>
    %972 = vector.broadcast %971 : vector<1x128xf32> to vector<16x128xf32>
    %973 = arith.mulf %970, %972 : vector<16x128xf32>
    %c64_411 = arith.constant 64 : index
    %c0_412 = arith.constant 0 : index
    %974 = vector.load %arg22[%c64_411, %c0_412] : memref<272x128xf32, #tpu.memory_space<vmem>>, vector<16x128xf32>
    tpu.vector_store %arg22[%c64_411, %c0_412], %973 {strides = array<i32>} : memref<272x128xf32, #tpu.memory_space<vmem>>, vector<16x128xf32>,
    %975 = vector.extract_strided_slice %858 {offsets = [0, 4], sizes = [16, 1], strides = [1, 1]} : vector<16x17xf32> to vector<16x1xf32>
    %976 = vector.extract_strided_slice %860 {offsets = [0, 4], sizes = [16, 1], strides = [1, 1]} : vector<16x17xf32> to vector<16x1xf32>
    %977 = vector.shape_cast %975 : vector<16x1xf32> to vector<16x1xf32>
    %978 = vector.broadcast %977 : vector<16x1xf32> to vector<16x128xf32>
    %979 = vector.shape_cast %976 : vector<16x1xf32> to vector<16x1xf32>
    %980 = vector.broadcast %979 : vector<16x1xf32> to vector<16x128xf32>
    %981 = arith.select %2, %978, %980 : vector<16x128xi1>, vector<16x128xf32>
    %c64_413 = arith.constant 64 : index
    %c0_414 = arith.constant 0 : index
    %982 = vector.load %arg23[%c64_413, %c0_414] : memref<272x128xf32, #tpu.memory_space<vmem>>, vector<16x128xf32>
    tpu.vector_store %arg23[%c64_413, %c0_414], %981 {strides = array<i32>} : memref<272x128xf32, #tpu.memory_space<vmem>>, vector<16x128xf32>,
    %983 = vector.extract_strided_slice %847 {offsets = [5, 0], sizes = [1, 128], strides = [1, 1]} : vector<17x128xf32> to vector<1x128xf32>
    %984 = vector.broadcast %983 : vector<1x128xf32> to vector<16x128xf32>
    %985 = arith.mulf %984, %862 : vector<16x128xf32>
    %986 = math.exp %985 : vector<16x128xf32>
    %c80_415 = arith.constant 80 : index
    %c0_416 = arith.constant 0 : index
    %987 = vector.load %arg21[%c80_415, %c0_416] : memref<272x128xf32, #tpu.memory_space<vmem>>, vector<16x128xf32>
    tpu.vector_store %arg21[%c80_415, %c0_416], %986 {strides = array<i32>} : memref<272x128xf32, #tpu.memory_space<vmem>>, vector<16x128xf32>,
    %988 = vector.extract_strided_slice %857 {offsets = [0, 5], sizes = [16, 1], strides = [1, 1]} : vector<16x17xf32> to vector<16x1xf32>
    %989 = vector.extract_strided_slice %859 {offsets = [0, 5], sizes = [16, 1], strides = [1, 1]} : vector<16x17xf32> to vector<16x1xf32>
    %990 = vector.shape_cast %988 : vector<16x1xf32> to vector<16x1xf32>
    %991 = vector.broadcast %990 : vector<16x1xf32> to vector<16x128xf32>
    %992 = vector.shape_cast %989 : vector<16x1xf32> to vector<16x1xf32>
    %993 = vector.broadcast %992 : vector<16x1xf32> to vector<16x128xf32>
    %994 = arith.select %2, %991, %993 : vector<16x128xi1>, vector<16x128xf32>
    %995 = vector.extract_strided_slice %848 {offsets = [5, 0], sizes = [1, 128], strides = [1, 1]} : vector<17x128xf32> to vector<1x128xf32>
    %996 = vector.broadcast %995 : vector<1x128xf32> to vector<16x128xf32>
    %997 = arith.mulf %994, %996 : vector<16x128xf32>
    %c80_417 = arith.constant 80 : index
    %c0_418 = arith.constant 0 : index
    %998 = vector.load %arg22[%c80_417, %c0_418] : memref<272x128xf32, #tpu.memory_space<vmem>>, vector<16x128xf32>
    tpu.vector_store %arg22[%c80_417, %c0_418], %997 {strides = array<i32>} : memref<272x128xf32, #tpu.memory_space<vmem>>, vector<16x128xf32>,
    %999 = vector.extract_strided_slice %858 {offsets = [0, 5], sizes = [16, 1], strides = [1, 1]} : vector<16x17xf32> to vector<16x1xf32>
    %1000 = vector.extract_strided_slice %860 {offsets = [0, 5], sizes = [16, 1], strides = [1, 1]} : vector<16x17xf32> to vector<16x1xf32>
    %1001 = vector.shape_cast %999 : vector<16x1xf32> to vector<16x1xf32>
    %1002 = vector.broadcast %1001 : vector<16x1xf32> to vector<16x128xf32>
    %1003 = vector.shape_cast %1000 : vector<16x1xf32> to vector<16x1xf32>
    %1004 = vector.broadcast %1003 : vector<16x1xf32> to vector<16x128xf32>
    %1005 = arith.select %2, %1002, %1004 : vector<16x128xi1>, vector<16x128xf32>
    %c80_419 = arith.constant 80 : index
    %c0_420 = arith.constant 0 : index
    %1006 = vector.load %arg23[%c80_419, %c0_420] : memref<272x128xf32, #tpu.memory_space<vmem>>, vector<16x128xf32>
    tpu.vector_store %arg23[%c80_419, %c0_420], %1005 {strides = array<i32>} : memref<272x128xf32, #tpu.memory_space<vmem>>, vector<16x128xf32>,
    %1007 = vector.extract_strided_slice %847 {offsets = [6, 0], sizes = [1, 128], strides = [1, 1]} : vector<17x128xf32> to vector<1x128xf32>
    %1008 = vector.broadcast %1007 : vector<1x128xf32> to vector<16x128xf32>
    %1009 = arith.mulf %1008, %862 : vector<16x128xf32>
    %1010 = math.exp %1009 : vector<16x128xf32>
    %c96_421 = arith.constant 96 : index
    %c0_422 = arith.constant 0 : index
    %1011 = vector.load %arg21[%c96_421, %c0_422] : memref<272x128xf32, #tpu.memory_space<vmem>>, vector<16x128xf32>
    tpu.vector_store %arg21[%c96_421, %c0_422], %1010 {strides = array<i32>} : memref<272x128xf32, #tpu.memory_space<vmem>>, vector<16x128xf32>,
    %1012 = vector.extract_strided_slice %857 {offsets = [0, 6], sizes = [16, 1], strides = [1, 1]} : vector<16x17xf32> to vector<16x1xf32>
    %1013 = vector.extract_strided_slice %859 {offsets = [0, 6], sizes = [16, 1], strides = [1, 1]} : vector<16x17xf32> to vector<16x1xf32>
    %1014 = vector.shape_cast %1012 : vector<16x1xf32> to vector<16x1xf32>
    %1015 = vector.broadcast %1014 : vector<16x1xf32> to vector<16x128xf32>
    %1016 = vector.shape_cast %1013 : vector<16x1xf32> to vector<16x1xf32>
    %1017 = vector.broadcast %1016 : vector<16x1xf32> to vector<16x128xf32>
    %1018 = arith.select %2, %1015, %1017 : vector<16x128xi1>, vector<16x128xf32>
    %1019 = vector.extract_strided_slice %848 {offsets = [6, 0], sizes = [1, 128], strides = [1, 1]} : vector<17x128xf32> to vector<1x128xf32>
    %1020 = vector.broadcast %1019 : vector<1x128xf32> to vector<16x128xf32>
    %1021 = arith.mulf %1018, %1020 : vector<16x128xf32>
    %c96_423 = arith.constant 96 : index
    %c0_424 = arith.constant 0 : index
    %1022 = vector.load %arg22[%c96_423, %c0_424] : memref<272x128xf32, #tpu.memory_space<vmem>>, vector<16x128xf32>
    tpu.vector_store %arg22[%c96_423, %c0_424], %1021 {strides = array<i32>} : memref<272x128xf32, #tpu.memory_space<vmem>>, vector<16x128xf32>,
    %1023 = vector.extract_strided_slice %858 {offsets = [0, 6], sizes = [16, 1], strides = [1, 1]} : vector<16x17xf32> to vector<16x1xf32>
    %1024 = vector.extract_strided_slice %860 {offsets = [0, 6], sizes = [16, 1], strides = [1, 1]} : vector<16x17xf32> to vector<16x1xf32>
    %1025 = vector.shape_cast %1023 : vector<16x1xf32> to vector<16x1xf32>
    %1026 = vector.broadcast %1025 : vector<16x1xf32> to vector<16x128xf32>
    %1027 = vector.shape_cast %1024 : vector<16x1xf32> to vector<16x1xf32>
    %1028 = vector.broadcast %1027 : vector<16x1xf32> to vector<16x128xf32>
    %1029 = arith.select %2, %1026, %1028 : vector<16x128xi1>, vector<16x128xf32>
    %c96_425 = arith.constant 96 : index
    %c0_426 = arith.constant 0 : index
    %1030 = vector.load %arg23[%c96_425, %c0_426] : memref<272x128xf32, #tpu.memory_space<vmem>>, vector<16x128xf32>
    tpu.vector_store %arg23[%c96_425, %c0_426], %1029 {strides = array<i32>} : memref<272x128xf32, #tpu.memory_space<vmem>>, vector<16x128xf32>,
    %1031 = vector.extract_strided_slice %847 {offsets = [7, 0], sizes = [1, 128], strides = [1, 1]} : vector<17x128xf32> to vector<1x128xf32>
    %1032 = vector.broadcast %1031 : vector<1x128xf32> to vector<16x128xf32>
    %1033 = arith.mulf %1032, %862 : vector<16x128xf32>
    %1034 = math.exp %1033 : vector<16x128xf32>
    %c112_427 = arith.constant 112 : index
    %c0_428 = arith.constant 0 : index
    %1035 = vector.load %arg21[%c112_427, %c0_428] : memref<272x128xf32, #tpu.memory_space<vmem>>, vector<16x128xf32>
    tpu.vector_store %arg21[%c112_427, %c0_428], %1034 {strides = array<i32>} : memref<272x128xf32, #tpu.memory_space<vmem>>, vector<16x128xf32>,
    %1036 = vector.extract_strided_slice %857 {offsets = [0, 7], sizes = [16, 1], strides = [1, 1]} : vector<16x17xf32> to vector<16x1xf32>
    %1037 = vector.extract_strided_slice %859 {offsets = [0, 7], sizes = [16, 1], strides = [1, 1]} : vector<16x17xf32> to vector<16x1xf32>
    %1038 = vector.shape_cast %1036 : vector<16x1xf32> to vector<16x1xf32>
    %1039 = vector.broadcast %1038 : vector<16x1xf32> to vector<16x128xf32>
    %1040 = vector.shape_cast %1037 : vector<16x1xf32> to vector<16x1xf32>
    %1041 = vector.broadcast %1040 : vector<16x1xf32> to vector<16x128xf32>
    %1042 = arith.select %2, %1039, %1041 : vector<16x128xi1>, vector<16x128xf32>
    %1043 = vector.extract_strided_slice %848 {offsets = [7, 0], sizes = [1, 128], strides = [1, 1]} : vector<17x128xf32> to vector<1x128xf32>
    %1044 = vector.broadcast %1043 : vector<1x128xf32> to vector<16x128xf32>
    %1045 = arith.mulf %1042, %1044 : vector<16x128xf32>
    %c112_429 = arith.constant 112 : index
    %c0_430 = arith.constant 0 : index
    %1046 = vector.load %arg22[%c112_429, %c0_430] : memref<272x128xf32, #tpu.memory_space<vmem>>, vector<16x128xf32>
    tpu.vector_store %arg22[%c112_429, %c0_430], %1045 {strides = array<i32>} : memref<272x128xf32, #tpu.memory_space<vmem>>, vector<16x128xf32>,
    %1047 = vector.extract_strided_slice %858 {offsets = [0, 7], sizes = [16, 1], strides = [1, 1]} : vector<16x17xf32> to vector<16x1xf32>
    %1048 = vector.extract_strided_slice %860 {offsets = [0, 7], sizes = [16, 1], strides = [1, 1]} : vector<16x17xf32> to vector<16x1xf32>
    %1049 = vector.shape_cast %1047 : vector<16x1xf32> to vector<16x1xf32>
    %1050 = vector.broadcast %1049 : vector<16x1xf32> to vector<16x128xf32>
    %1051 = vector.shape_cast %1048 : vector<16x1xf32> to vector<16x1xf32>
    %1052 = vector.broadcast %1051 : vector<16x1xf32> to vector<16x128xf32>
    %1053 = arith.select %2, %1050, %1052 : vector<16x128xi1>, vector<16x128xf32>
    %c112_431 = arith.constant 112 : index
    %c0_432 = arith.constant 0 : index
    %1054 = vector.load %arg23[%c112_431, %c0_432] : memref<272x128xf32, #tpu.memory_space<vmem>>, vector<16x128xf32>
    tpu.vector_store %arg23[%c112_431, %c0_432], %1053 {strides = array<i32>} : memref<272x128xf32, #tpu.memory_space<vmem>>, vector<16x128xf32>,
    %1055 = vector.extract_strided_slice %847 {offsets = [8, 0], sizes = [1, 128], strides = [1, 1]} : vector<17x128xf32> to vector<1x128xf32>
    %1056 = vector.broadcast %1055 : vector<1x128xf32> to vector<16x128xf32>
    %1057 = arith.mulf %1056, %862 : vector<16x128xf32>
    %1058 = math.exp %1057 : vector<16x128xf32>
    %c128_433 = arith.constant 128 : index
    %c0_434 = arith.constant 0 : index
    %1059 = vector.load %arg21[%c128_433, %c0_434] : memref<272x128xf32, #tpu.memory_space<vmem>>, vector<16x128xf32>
    tpu.vector_store %arg21[%c128_433, %c0_434], %1058 {strides = array<i32>} : memref<272x128xf32, #tpu.memory_space<vmem>>, vector<16x128xf32>,
    %1060 = vector.extract_strided_slice %857 {offsets = [0, 8], sizes = [16, 1], strides = [1, 1]} : vector<16x17xf32> to vector<16x1xf32>
    %1061 = vector.extract_strided_slice %859 {offsets = [0, 8], sizes = [16, 1], strides = [1, 1]} : vector<16x17xf32> to vector<16x1xf32>
    %1062 = vector.shape_cast %1060 : vector<16x1xf32> to vector<16x1xf32>
    %1063 = vector.broadcast %1062 : vector<16x1xf32> to vector<16x128xf32>
    %1064 = vector.shape_cast %1061 : vector<16x1xf32> to vector<16x1xf32>
    %1065 = vector.broadcast %1064 : vector<16x1xf32> to vector<16x128xf32>
    %1066 = arith.select %2, %1063, %1065 : vector<16x128xi1>, vector<16x128xf32>
    %1067 = vector.extract_strided_slice %848 {offsets = [8, 0], sizes = [1, 128], strides = [1, 1]} : vector<17x128xf32> to vector<1x128xf32>
    %1068 = vector.broadcast %1067 : vector<1x128xf32> to vector<16x128xf32>
    %1069 = arith.mulf %1066, %1068 : vector<16x128xf32>
    %c128_435 = arith.constant 128 : index
    %c0_436 = arith.constant 0 : index
    %1070 = vector.load %arg22[%c128_435, %c0_436] : memref<272x128xf32, #tpu.memory_space<vmem>>, vector<16x128xf32>
    tpu.vector_store %arg22[%c128_435, %c0_436], %1069 {strides = array<i32>} : memref<272x128xf32, #tpu.memory_space<vmem>>, vector<16x128xf32>,
    %1071 = vector.extract_strided_slice %858 {offsets = [0, 8], sizes = [16, 1], strides = [1, 1]} : vector<16x17xf32> to vector<16x1xf32>
    %1072 = vector.extract_strided_slice %860 {offsets = [0, 8], sizes = [16, 1], strides = [1, 1]} : vector<16x17xf32> to vector<16x1xf32>
    %1073 = vector.shape_cast %1071 : vector<16x1xf32> to vector<16x1xf32>
    %1074 = vector.broadcast %1073 : vector<16x1xf32> to vector<16x128xf32>
    %1075 = vector.shape_cast %1072 : vector<16x1xf32> to vector<16x1xf32>
    %1076 = vector.broadcast %1075 : vector<16x1xf32> to vector<16x128xf32>
    %1077 = arith.select %2, %1074, %1076 : vector<16x128xi1>, vector<16x128xf32>
    %c128_437 = arith.constant 128 : index
    %c0_438 = arith.constant 0 : index
    %1078 = vector.load %arg23[%c128_437, %c0_438] : memref<272x128xf32, #tpu.memory_space<vmem>>, vector<16x128xf32>
    tpu.vector_store %arg23[%c128_437, %c0_438], %1077 {strides = array<i32>} : memref<272x128xf32, #tpu.memory_space<vmem>>, vector<16x128xf32>,
    %1079 = vector.extract_strided_slice %847 {offsets = [9, 0], sizes = [1, 128], strides = [1, 1]} : vector<17x128xf32> to vector<1x128xf32>
    %1080 = vector.broadcast %1079 : vector<1x128xf32> to vector<16x128xf32>
    %1081 = arith.mulf %1080, %862 : vector<16x128xf32>
    %1082 = math.exp %1081 : vector<16x128xf32>
    %c144_439 = arith.constant 144 : index
    %c0_440 = arith.constant 0 : index
    %1083 = vector.load %arg21[%c144_439, %c0_440] : memref<272x128xf32, #tpu.memory_space<vmem>>, vector<16x128xf32>
    tpu.vector_store %arg21[%c144_439, %c0_440], %1082 {strides = array<i32>} : memref<272x128xf32, #tpu.memory_space<vmem>>, vector<16x128xf32>,
    %1084 = vector.extract_strided_slice %857 {offsets = [0, 9], sizes = [16, 1], strides = [1, 1]} : vector<16x17xf32> to vector<16x1xf32>
    %1085 = vector.extract_strided_slice %859 {offsets = [0, 9], sizes = [16, 1], strides = [1, 1]} : vector<16x17xf32> to vector<16x1xf32>
    %1086 = vector.shape_cast %1084 : vector<16x1xf32> to vector<16x1xf32>
    %1087 = vector.broadcast %1086 : vector<16x1xf32> to vector<16x128xf32>
    %1088 = vector.shape_cast %1085 : vector<16x1xf32> to vector<16x1xf32>
    %1089 = vector.broadcast %1088 : vector<16x1xf32> to vector<16x128xf32>
    %1090 = arith.select %2, %1087, %1089 : vector<16x128xi1>, vector<16x128xf32>
    %1091 = vector.extract_strided_slice %848 {offsets = [9, 0], sizes = [1, 128], strides = [1, 1]} : vector<17x128xf32> to vector<1x128xf32>
    %1092 = vector.broadcast %1091 : vector<1x128xf32> to vector<16x128xf32>
    %1093 = arith.mulf %1090, %1092 : vector<16x128xf32>
    %c144_441 = arith.constant 144 : index
    %c0_442 = arith.constant 0 : index
    %1094 = vector.load %arg22[%c144_441, %c0_442] : memref<272x128xf32, #tpu.memory_space<vmem>>, vector<16x128xf32>
    tpu.vector_store %arg22[%c144_441, %c0_442], %1093 {strides = array<i32>} : memref<272x128xf32, #tpu.memory_space<vmem>>, vector<16x128xf32>,
    %1095 = vector.extract_strided_slice %858 {offsets = [0, 9], sizes = [16, 1], strides = [1, 1]} : vector<16x17xf32> to vector<16x1xf32>
    %1096 = vector.extract_strided_slice %860 {offsets = [0, 9], sizes = [16, 1], strides = [1, 1]} : vector<16x17xf32> to vector<16x1xf32>
    %1097 = vector.shape_cast %1095 : vector<16x1xf32> to vector<16x1xf32>
    %1098 = vector.broadcast %1097 : vector<16x1xf32> to vector<16x128xf32>
    %1099 = vector.shape_cast %1096 : vector<16x1xf32> to vector<16x1xf32>
    %1100 = vector.broadcast %1099 : vector<16x1xf32> to vector<16x128xf32>
    %1101 = arith.select %2, %1098, %1100 : vector<16x128xi1>, vector<16x128xf32>
    %c144_443 = arith.constant 144 : index
    %c0_444 = arith.constant 0 : index
    %1102 = vector.load %arg23[%c144_443, %c0_444] : memref<272x128xf32, #tpu.memory_space<vmem>>, vector<16x128xf32>
    tpu.vector_store %arg23[%c144_443, %c0_444], %1101 {strides = array<i32>} : memref<272x128xf32, #tpu.memory_space<vmem>>, vector<16x128xf32>,
    %1103 = vector.extract_strided_slice %847 {offsets = [10, 0], sizes = [1, 128], strides = [1, 1]} : vector<17x128xf32> to vector<1x128xf32>
    %1104 = vector.broadcast %1103 : vector<1x128xf32> to vector<16x128xf32>
    %1105 = arith.mulf %1104, %862 : vector<16x128xf32>
    %1106 = math.exp %1105 : vector<16x128xf32>
    %c160_445 = arith.constant 160 : index
    %c0_446 = arith.constant 0 : index
    %1107 = vector.load %arg21[%c160_445, %c0_446] : memref<272x128xf32, #tpu.memory_space<vmem>>, vector<16x128xf32>
    tpu.vector_store %arg21[%c160_445, %c0_446], %1106 {strides = array<i32>} : memref<272x128xf32, #tpu.memory_space<vmem>>, vector<16x128xf32>,
    %1108 = vector.extract_strided_slice %857 {offsets = [0, 10], sizes = [16, 1], strides = [1, 1]} : vector<16x17xf32> to vector<16x1xf32>
    %1109 = vector.extract_strided_slice %859 {offsets = [0, 10], sizes = [16, 1], strides = [1, 1]} : vector<16x17xf32> to vector<16x1xf32>
    %1110 = vector.shape_cast %1108 : vector<16x1xf32> to vector<16x1xf32>
    %1111 = vector.broadcast %1110 : vector<16x1xf32> to vector<16x128xf32>
    %1112 = vector.shape_cast %1109 : vector<16x1xf32> to vector<16x1xf32>
    %1113 = vector.broadcast %1112 : vector<16x1xf32> to vector<16x128xf32>
    %1114 = arith.select %2, %1111, %1113 : vector<16x128xi1>, vector<16x128xf32>
    %1115 = vector.extract_strided_slice %848 {offsets = [10, 0], sizes = [1, 128], strides = [1, 1]} : vector<17x128xf32> to vector<1x128xf32>
    %1116 = vector.broadcast %1115 : vector<1x128xf32> to vector<16x128xf32>
    %1117 = arith.mulf %1114, %1116 : vector<16x128xf32>
    %c160_447 = arith.constant 160 : index
    %c0_448 = arith.constant 0 : index
    %1118 = vector.load %arg22[%c160_447, %c0_448] : memref<272x128xf32, #tpu.memory_space<vmem>>, vector<16x128xf32>
    tpu.vector_store %arg22[%c160_447, %c0_448], %1117 {strides = array<i32>} : memref<272x128xf32, #tpu.memory_space<vmem>>, vector<16x128xf32>,
    %1119 = vector.extract_strided_slice %858 {offsets = [0, 10], sizes = [16, 1], strides = [1, 1]} : vector<16x17xf32> to vector<16x1xf32>
    %1120 = vector.extract_strided_slice %860 {offsets = [0, 10], sizes = [16, 1], strides = [1, 1]} : vector<16x17xf32> to vector<16x1xf32>
    %1121 = vector.shape_cast %1119 : vector<16x1xf32> to vector<16x1xf32>
    %1122 = vector.broadcast %1121 : vector<16x1xf32> to vector<16x128xf32>
    %1123 = vector.shape_cast %1120 : vector<16x1xf32> to vector<16x1xf32>
    %1124 = vector.broadcast %1123 : vector<16x1xf32> to vector<16x128xf32>
    %1125 = arith.select %2, %1122, %1124 : vector<16x128xi1>, vector<16x128xf32>
    %c160_449 = arith.constant 160 : index
    %c0_450 = arith.constant 0 : index
    %1126 = vector.load %arg23[%c160_449, %c0_450] : memref<272x128xf32, #tpu.memory_space<vmem>>, vector<16x128xf32>
    tpu.vector_store %arg23[%c160_449, %c0_450], %1125 {strides = array<i32>} : memref<272x128xf32, #tpu.memory_space<vmem>>, vector<16x128xf32>,
    %1127 = vector.extract_strided_slice %847 {offsets = [11, 0], sizes = [1, 128], strides = [1, 1]} : vector<17x128xf32> to vector<1x128xf32>
    %1128 = vector.broadcast %1127 : vector<1x128xf32> to vector<16x128xf32>
    %1129 = arith.mulf %1128, %862 : vector<16x128xf32>
    %1130 = math.exp %1129 : vector<16x128xf32>
    %c176_451 = arith.constant 176 : index
    %c0_452 = arith.constant 0 : index
    %1131 = vector.load %arg21[%c176_451, %c0_452] : memref<272x128xf32, #tpu.memory_space<vmem>>, vector<16x128xf32>
    tpu.vector_store %arg21[%c176_451, %c0_452], %1130 {strides = array<i32>} : memref<272x128xf32, #tpu.memory_space<vmem>>, vector<16x128xf32>,
    %1132 = vector.extract_strided_slice %857 {offsets = [0, 11], sizes = [16, 1], strides = [1, 1]} : vector<16x17xf32> to vector<16x1xf32>
    %1133 = vector.extract_strided_slice %859 {offsets = [0, 11], sizes = [16, 1], strides = [1, 1]} : vector<16x17xf32> to vector<16x1xf32>
    %1134 = vector.shape_cast %1132 : vector<16x1xf32> to vector<16x1xf32>
    %1135 = vector.broadcast %1134 : vector<16x1xf32> to vector<16x128xf32>
    %1136 = vector.shape_cast %1133 : vector<16x1xf32> to vector<16x1xf32>
    %1137 = vector.broadcast %1136 : vector<16x1xf32> to vector<16x128xf32>
    %1138 = arith.select %2, %1135, %1137 : vector<16x128xi1>, vector<16x128xf32>
    %1139 = vector.extract_strided_slice %848 {offsets = [11, 0], sizes = [1, 128], strides = [1, 1]} : vector<17x128xf32> to vector<1x128xf32>
    %1140 = vector.broadcast %1139 : vector<1x128xf32> to vector<16x128xf32>
    %1141 = arith.mulf %1138, %1140 : vector<16x128xf32>
    %c176_453 = arith.constant 176 : index
    %c0_454 = arith.constant 0 : index
    %1142 = vector.load %arg22[%c176_453, %c0_454] : memref<272x128xf32, #tpu.memory_space<vmem>>, vector<16x128xf32>
    tpu.vector_store %arg22[%c176_453, %c0_454], %1141 {strides = array<i32>} : memref<272x128xf32, #tpu.memory_space<vmem>>, vector<16x128xf32>,
    %1143 = vector.extract_strided_slice %858 {offsets = [0, 11], sizes = [16, 1], strides = [1, 1]} : vector<16x17xf32> to vector<16x1xf32>
    %1144 = vector.extract_strided_slice %860 {offsets = [0, 11], sizes = [16, 1], strides = [1, 1]} : vector<16x17xf32> to vector<16x1xf32>
    %1145 = vector.shape_cast %1143 : vector<16x1xf32> to vector<16x1xf32>
    %1146 = vector.broadcast %1145 : vector<16x1xf32> to vector<16x128xf32>
    %1147 = vector.shape_cast %1144 : vector<16x1xf32> to vector<16x1xf32>
    %1148 = vector.broadcast %1147 : vector<16x1xf32> to vector<16x128xf32>
    %1149 = arith.select %2, %1146, %1148 : vector<16x128xi1>, vector<16x128xf32>
    %c176_455 = arith.constant 176 : index
    %c0_456 = arith.constant 0 : index
    %1150 = vector.load %arg23[%c176_455, %c0_456] : memref<272x128xf32, #tpu.memory_space<vmem>>, vector<16x128xf32>
    tpu.vector_store %arg23[%c176_455, %c0_456], %1149 {strides = array<i32>} : memref<272x128xf32, #tpu.memory_space<vmem>>, vector<16x128xf32>,
    %1151 = vector.extract_strided_slice %847 {offsets = [12, 0], sizes = [1, 128], strides = [1, 1]} : vector<17x128xf32> to vector<1x128xf32>
    %1152 = vector.broadcast %1151 : vector<1x128xf32> to vector<16x128xf32>
    %1153 = arith.mulf %1152, %862 : vector<16x128xf32>
    %1154 = math.exp %1153 : vector<16x128xf32>
    %c192_457 = arith.constant 192 : index
    %c0_458 = arith.constant 0 : index
    %1155 = vector.load %arg21[%c192_457, %c0_458] : memref<272x128xf32, #tpu.memory_space<vmem>>, vector<16x128xf32>
    tpu.vector_store %arg21[%c192_457, %c0_458], %1154 {strides = array<i32>} : memref<272x128xf32, #tpu.memory_space<vmem>>, vector<16x128xf32>,
    %1156 = vector.extract_strided_slice %857 {offsets = [0, 12], sizes = [16, 1], strides = [1, 1]} : vector<16x17xf32> to vector<16x1xf32>
    %1157 = vector.extract_strided_slice %859 {offsets = [0, 12], sizes = [16, 1], strides = [1, 1]} : vector<16x17xf32> to vector<16x1xf32>
    %1158 = vector.shape_cast %1156 : vector<16x1xf32> to vector<16x1xf32>
    %1159 = vector.broadcast %1158 : vector<16x1xf32> to vector<16x128xf32>
    %1160 = vector.shape_cast %1157 : vector<16x1xf32> to vector<16x1xf32>
    %1161 = vector.broadcast %1160 : vector<16x1xf32> to vector<16x128xf32>
    %1162 = arith.select %2, %1159, %1161 : vector<16x128xi1>, vector<16x128xf32>
    %1163 = vector.extract_strided_slice %848 {offsets = [12, 0], sizes = [1, 128], strides = [1, 1]} : vector<17x128xf32> to vector<1x128xf32>
    %1164 = vector.broadcast %1163 : vector<1x128xf32> to vector<16x128xf32>
    %1165 = arith.mulf %1162, %1164 : vector<16x128xf32>
    %c192_459 = arith.constant 192 : index
    %c0_460 = arith.constant 0 : index
    %1166 = vector.load %arg22[%c192_459, %c0_460] : memref<272x128xf32, #tpu.memory_space<vmem>>, vector<16x128xf32>
    tpu.vector_store %arg22[%c192_459, %c0_460], %1165 {strides = array<i32>} : memref<272x128xf32, #tpu.memory_space<vmem>>, vector<16x128xf32>,
    %1167 = vector.extract_strided_slice %858 {offsets = [0, 12], sizes = [16, 1], strides = [1, 1]} : vector<16x17xf32> to vector<16x1xf32>
    %1168 = vector.extract_strided_slice %860 {offsets = [0, 12], sizes = [16, 1], strides = [1, 1]} : vector<16x17xf32> to vector<16x1xf32>
    %1169 = vector.shape_cast %1167 : vector<16x1xf32> to vector<16x1xf32>
    %1170 = vector.broadcast %1169 : vector<16x1xf32> to vector<16x128xf32>
    %1171 = vector.shape_cast %1168 : vector<16x1xf32> to vector<16x1xf32>
    %1172 = vector.broadcast %1171 : vector<16x1xf32> to vector<16x128xf32>
    %1173 = arith.select %2, %1170, %1172 : vector<16x128xi1>, vector<16x128xf32>
    %c192_461 = arith.constant 192 : index
    %c0_462 = arith.constant 0 : index
    %1174 = vector.load %arg23[%c192_461, %c0_462] : memref<272x128xf32, #tpu.memory_space<vmem>>, vector<16x128xf32>
    tpu.vector_store %arg23[%c192_461, %c0_462], %1173 {strides = array<i32>} : memref<272x128xf32, #tpu.memory_space<vmem>>, vector<16x128xf32>,
    %1175 = vector.extract_strided_slice %847 {offsets = [13, 0], sizes = [1, 128], strides = [1, 1]} : vector<17x128xf32> to vector<1x128xf32>
    %1176 = vector.broadcast %1175 : vector<1x128xf32> to vector<16x128xf32>
    %1177 = arith.mulf %1176, %862 : vector<16x128xf32>
    %1178 = math.exp %1177 : vector<16x128xf32>
    %c208_463 = arith.constant 208 : index
    %c0_464 = arith.constant 0 : index
    %1179 = vector.load %arg21[%c208_463, %c0_464] : memref<272x128xf32, #tpu.memory_space<vmem>>, vector<16x128xf32>
    tpu.vector_store %arg21[%c208_463, %c0_464], %1178 {strides = array<i32>} : memref<272x128xf32, #tpu.memory_space<vmem>>, vector<16x128xf32>,
    %1180 = vector.extract_strided_slice %857 {offsets = [0, 13], sizes = [16, 1], strides = [1, 1]} : vector<16x17xf32> to vector<16x1xf32>
    %1181 = vector.extract_strided_slice %859 {offsets = [0, 13], sizes = [16, 1], strides = [1, 1]} : vector<16x17xf32> to vector<16x1xf32>
    %1182 = vector.shape_cast %1180 : vector<16x1xf32> to vector<16x1xf32>
    %1183 = vector.broadcast %1182 : vector<16x1xf32> to vector<16x128xf32>
    %1184 = vector.shape_cast %1181 : vector<16x1xf32> to vector<16x1xf32>
    %1185 = vector.broadcast %1184 : vector<16x1xf32> to vector<16x128xf32>
    %1186 = arith.select %2, %1183, %1185 : vector<16x128xi1>, vector<16x128xf32>
    %1187 = vector.extract_strided_slice %848 {offsets = [13, 0], sizes = [1, 128], strides = [1, 1]} : vector<17x128xf32> to vector<1x128xf32>
    %1188 = vector.broadcast %1187 : vector<1x128xf32> to vector<16x128xf32>
    %1189 = arith.mulf %1186, %1188 : vector<16x128xf32>
    %c208_465 = arith.constant 208 : index
    %c0_466 = arith.constant 0 : index
    %1190 = vector.load %arg22[%c208_465, %c0_466] : memref<272x128xf32, #tpu.memory_space<vmem>>, vector<16x128xf32>
    tpu.vector_store %arg22[%c208_465, %c0_466], %1189 {strides = array<i32>} : memref<272x128xf32, #tpu.memory_space<vmem>>, vector<16x128xf32>,
    %1191 = vector.extract_strided_slice %858 {offsets = [0, 13], sizes = [16, 1], strides = [1, 1]} : vector<16x17xf32> to vector<16x1xf32>
    %1192 = vector.extract_strided_slice %860 {offsets = [0, 13], sizes = [16, 1], strides = [1, 1]} : vector<16x17xf32> to vector<16x1xf32>
    %1193 = vector.shape_cast %1191 : vector<16x1xf32> to vector<16x1xf32>
    %1194 = vector.broadcast %1193 : vector<16x1xf32> to vector<16x128xf32>
    %1195 = vector.shape_cast %1192 : vector<16x1xf32> to vector<16x1xf32>
    %1196 = vector.broadcast %1195 : vector<16x1xf32> to vector<16x128xf32>
    %1197 = arith.select %2, %1194, %1196 : vector<16x128xi1>, vector<16x128xf32>
    %c208_467 = arith.constant 208 : index
    %c0_468 = arith.constant 0 : index
    %1198 = vector.load %arg23[%c208_467, %c0_468] : memref<272x128xf32, #tpu.memory_space<vmem>>, vector<16x128xf32>
    tpu.vector_store %arg23[%c208_467, %c0_468], %1197 {strides = array<i32>} : memref<272x128xf32, #tpu.memory_space<vmem>>, vector<16x128xf32>,
    %1199 = vector.extract_strided_slice %847 {offsets = [14, 0], sizes = [1, 128], strides = [1, 1]} : vector<17x128xf32> to vector<1x128xf32>
    %1200 = vector.broadcast %1199 : vector<1x128xf32> to vector<16x128xf32>
    %1201 = arith.mulf %1200, %862 : vector<16x128xf32>
    %1202 = math.exp %1201 : vector<16x128xf32>
    %c224_469 = arith.constant 224 : index
    %c0_470 = arith.constant 0 : index
    %1203 = vector.load %arg21[%c224_469, %c0_470] : memref<272x128xf32, #tpu.memory_space<vmem>>, vector<16x128xf32>
    tpu.vector_store %arg21[%c224_469, %c0_470], %1202 {strides = array<i32>} : memref<272x128xf32, #tpu.memory_space<vmem>>, vector<16x128xf32>,
    %1204 = vector.extract_strided_slice %857 {offsets = [0, 14], sizes = [16, 1], strides = [1, 1]} : vector<16x17xf32> to vector<16x1xf32>
    %1205 = vector.extract_strided_slice %859 {offsets = [0, 14], sizes = [16, 1], strides = [1, 1]} : vector<16x17xf32> to vector<16x1xf32>
    %1206 = vector.shape_cast %1204 : vector<16x1xf32> to vector<16x1xf32>
    %1207 = vector.broadcast %1206 : vector<16x1xf32> to vector<16x128xf32>
    %1208 = vector.shape_cast %1205 : vector<16x1xf32> to vector<16x1xf32>
    %1209 = vector.broadcast %1208 : vector<16x1xf32> to vector<16x128xf32>
    %1210 = arith.select %2, %1207, %1209 : vector<16x128xi1>, vector<16x128xf32>
    %1211 = vector.extract_strided_slice %848 {offsets = [14, 0], sizes = [1, 128], strides = [1, 1]} : vector<17x128xf32> to vector<1x128xf32>
    %1212 = vector.broadcast %1211 : vector<1x128xf32> to vector<16x128xf32>
    %1213 = arith.mulf %1210, %1212 : vector<16x128xf32>
    %c224_471 = arith.constant 224 : index
    %c0_472 = arith.constant 0 : index
    %1214 = vector.load %arg22[%c224_471, %c0_472] : memref<272x128xf32, #tpu.memory_space<vmem>>, vector<16x128xf32>
    tpu.vector_store %arg22[%c224_471, %c0_472], %1213 {strides = array<i32>} : memref<272x128xf32, #tpu.memory_space<vmem>>, vector<16x128xf32>,
    %1215 = vector.extract_strided_slice %858 {offsets = [0, 14], sizes = [16, 1], strides = [1, 1]} : vector<16x17xf32> to vector<16x1xf32>
    %1216 = vector.extract_strided_slice %860 {offsets = [0, 14], sizes = [16, 1], strides = [1, 1]} : vector<16x17xf32> to vector<16x1xf32>
    %1217 = vector.shape_cast %1215 : vector<16x1xf32> to vector<16x1xf32>
    %1218 = vector.broadcast %1217 : vector<16x1xf32> to vector<16x128xf32>
    %1219 = vector.shape_cast %1216 : vector<16x1xf32> to vector<16x1xf32>
    %1220 = vector.broadcast %1219 : vector<16x1xf32> to vector<16x128xf32>
    %1221 = arith.select %2, %1218, %1220 : vector<16x128xi1>, vector<16x128xf32>
    %c224_473 = arith.constant 224 : index
    %c0_474 = arith.constant 0 : index
    %1222 = vector.load %arg23[%c224_473, %c0_474] : memref<272x128xf32, #tpu.memory_space<vmem>>, vector<16x128xf32>
    tpu.vector_store %arg23[%c224_473, %c0_474], %1221 {strides = array<i32>} : memref<272x128xf32, #tpu.memory_space<vmem>>, vector<16x128xf32>,
    %1223 = vector.extract_strided_slice %847 {offsets = [15, 0], sizes = [1, 128], strides = [1, 1]} : vector<17x128xf32> to vector<1x128xf32>
    %1224 = vector.broadcast %1223 : vector<1x128xf32> to vector<16x128xf32>
    %1225 = arith.mulf %1224, %862 : vector<16x128xf32>
    %1226 = math.exp %1225 : vector<16x128xf32>
    %c240_475 = arith.constant 240 : index
    %c0_476 = arith.constant 0 : index
    %1227 = vector.load %arg21[%c240_475, %c0_476] : memref<272x128xf32, #tpu.memory_space<vmem>>, vector<16x128xf32>
    tpu.vector_store %arg21[%c240_475, %c0_476], %1226 {strides = array<i32>} : memref<272x128xf32, #tpu.memory_space<vmem>>, vector<16x128xf32>,
    %1228 = vector.extract_strided_slice %857 {offsets = [0, 15], sizes = [16, 1], strides = [1, 1]} : vector<16x17xf32> to vector<16x1xf32>
    %1229 = vector.extract_strided_slice %859 {offsets = [0, 15], sizes = [16, 1], strides = [1, 1]} : vector<16x17xf32> to vector<16x1xf32>
    %1230 = vector.shape_cast %1228 : vector<16x1xf32> to vector<16x1xf32>
    %1231 = vector.broadcast %1230 : vector<16x1xf32> to vector<16x128xf32>
    %1232 = vector.shape_cast %1229 : vector<16x1xf32> to vector<16x1xf32>
    %1233 = vector.broadcast %1232 : vector<16x1xf32> to vector<16x128xf32>
    %1234 = arith.select %2, %1231, %1233 : vector<16x128xi1>, vector<16x128xf32>
    %1235 = vector.extract_strided_slice %848 {offsets = [15, 0], sizes = [1, 128], strides = [1, 1]} : vector<17x128xf32> to vector<1x128xf32>
    %1236 = vector.broadcast %1235 : vector<1x128xf32> to vector<16x128xf32>
    %1237 = arith.mulf %1234, %1236 : vector<16x128xf32>
    %c240_477 = arith.constant 240 : index
    %c0_478 = arith.constant 0 : index
    %1238 = vector.load %arg22[%c240_477, %c0_478] : memref<272x128xf32, #tpu.memory_space<vmem>>, vector<16x128xf32>
    tpu.vector_store %arg22[%c240_477, %c0_478], %1237 {strides = array<i32>} : memref<272x128xf32, #tpu.memory_space<vmem>>, vector<16x128xf32>,
    %1239 = vector.extract_strided_slice %858 {offsets = [0, 15], sizes = [16, 1], strides = [1, 1]} : vector<16x17xf32> to vector<16x1xf32>
    %1240 = vector.extract_strided_slice %860 {offsets = [0, 15], sizes = [16, 1], strides = [1, 1]} : vector<16x17xf32> to vector<16x1xf32>
    %1241 = vector.shape_cast %1239 : vector<16x1xf32> to vector<16x1xf32>
    %1242 = vector.broadcast %1241 : vector<16x1xf32> to vector<16x128xf32>
    %1243 = vector.shape_cast %1240 : vector<16x1xf32> to vector<16x1xf32>
    %1244 = vector.broadcast %1243 : vector<16x1xf32> to vector<16x128xf32>
    %1245 = arith.select %2, %1242, %1244 : vector<16x128xi1>, vector<16x128xf32>
    %c240_479 = arith.constant 240 : index
    %c0_480 = arith.constant 0 : index
    %1246 = vector.load %arg23[%c240_479, %c0_480] : memref<272x128xf32, #tpu.memory_space<vmem>>, vector<16x128xf32>
    tpu.vector_store %arg23[%c240_479, %c0_480], %1245 {strides = array<i32>} : memref<272x128xf32, #tpu.memory_space<vmem>>, vector<16x128xf32>,
    %1247 = vector.extract_strided_slice %847 {offsets = [16, 0], sizes = [1, 128], strides = [1, 1]} : vector<17x128xf32> to vector<1x128xf32>
    %1248 = vector.broadcast %1247 : vector<1x128xf32> to vector<16x128xf32>
    %1249 = arith.mulf %1248, %862 : vector<16x128xf32>
    %1250 = math.exp %1249 : vector<16x128xf32>
    %c256_481 = arith.constant 256 : index
    %c0_482 = arith.constant 0 : index
    %1251 = vector.load %arg21[%c256_481, %c0_482] : memref<272x128xf32, #tpu.memory_space<vmem>>, vector<16x128xf32>
    tpu.vector_store %arg21[%c256_481, %c0_482], %1250 {strides = array<i32>} : memref<272x128xf32, #tpu.memory_space<vmem>>, vector<16x128xf32>,
    %1252 = vector.extract_strided_slice %857 {offsets = [0, 16], sizes = [16, 1], strides = [1, 1]} : vector<16x17xf32> to vector<16x1xf32>
    %1253 = vector.extract_strided_slice %859 {offsets = [0, 16], sizes = [16, 1], strides = [1, 1]} : vector<16x17xf32> to vector<16x1xf32>
    %1254 = vector.shape_cast %1252 : vector<16x1xf32> to vector<16x1xf32>
    %1255 = vector.broadcast %1254 : vector<16x1xf32> to vector<16x128xf32>
    %1256 = vector.shape_cast %1253 : vector<16x1xf32> to vector<16x1xf32>
    %1257 = vector.broadcast %1256 : vector<16x1xf32> to vector<16x128xf32>
    %1258 = arith.select %2, %1255, %1257 : vector<16x128xi1>, vector<16x128xf32>
    %1259 = vector.extract_strided_slice %848 {offsets = [16, 0], sizes = [1, 128], strides = [1, 1]} : vector<17x128xf32> to vector<1x128xf32>
    %1260 = vector.broadcast %1259 : vector<1x128xf32> to vector<16x128xf32>
    %1261 = arith.mulf %1258, %1260 : vector<16x128xf32>
    %c256_483 = arith.constant 256 : index
    %c0_484 = arith.constant 0 : index
    %1262 = vector.load %arg22[%c256_483, %c0_484] : memref<272x128xf32, #tpu.memory_space<vmem>>, vector<16x128xf32>
    tpu.vector_store %arg22[%c256_483, %c0_484], %1261 {strides = array<i32>} : memref<272x128xf32, #tpu.memory_space<vmem>>, vector<16x128xf32>,
    %1263 = vector.extract_strided_slice %858 {offsets = [0, 16], sizes = [16, 1], strides = [1, 1]} : vector<16x17xf32> to vector<16x1xf32>
    %1264 = vector.extract_strided_slice %860 {offsets = [0, 16], sizes = [16, 1], strides = [1, 1]} : vector<16x17xf32> to vector<16x1xf32>
    %1265 = vector.shape_cast %1263 : vector<16x1xf32> to vector<16x1xf32>
    %1266 = vector.broadcast %1265 : vector<16x1xf32> to vector<16x128xf32>
    %1267 = vector.shape_cast %1264 : vector<16x1xf32> to vector<16x1xf32>
    %1268 = vector.broadcast %1267 : vector<16x1xf32> to vector<16x128xf32>
    %1269 = arith.select %2, %1266, %1268 : vector<16x128xi1>, vector<16x128xf32>
    %c256_485 = arith.constant 256 : index
    %c0_486 = arith.constant 0 : index
    %1270 = vector.load %arg23[%c256_485, %c0_486] : memref<272x128xf32, #tpu.memory_space<vmem>>, vector<16x128xf32>
    tpu.vector_store %arg23[%c256_485, %c0_486], %1269 {strides = array<i32>} : memref<272x128xf32, #tpu.memory_space<vmem>>, vector<16x128xf32>,
    %cst_487 = arith.constant 0.000000e+00 : f32
    %1271 = vector.broadcast %cst_487 : f32 to vector<16x128xf32>
    %c0_488 = arith.constant 0 : index
    %c0_489 = arith.constant 0 : index
    %1272 = vector.load %arg21[%c0_488, %c0_489] : memref<272x128xf32, #tpu.memory_space<vmem>>, vector<16x128xf32>
    %1273 = arith.mulf %1272, %1271 : vector<16x128xf32>
    %c0_490 = arith.constant 0 : index
    %c0_491 = arith.constant 0 : index
    %1274 = vector.load %arg22[%c0_490, %c0_491] : memref<272x128xf32, #tpu.memory_space<vmem>>, vector<16x128xf32>
    %1275 = arith.addf %1273, %1274 : vector<16x128xf32>
    %c0_492 = arith.constant 0 : index
    %c0_493 = arith.constant 0 : index
    %1276 = vector.load %arg23[%c0_492, %c0_493] : memref<272x128xf32, #tpu.memory_space<vmem>>, vector<16x128xf32>
    %1277 = arith.mulf %1275, %1276 : vector<16x128xf32>
    %cst_494 = arith.constant dense<0.000000e+00> : vector<128xf32>
    %1278 = vector.multi_reduction <add>, %1277, %cst_494 [0] : vector<16x128xf32> to vector<128xf32>
    %1279 = vector.shape_cast %1278 : vector<128xf32> to vector<1x128xf32>
    %1280 = vector.extract_strided_slice %852 {offsets = [0, 0], sizes = [1, 128], strides = [1, 1]} : vector<17x128xf32> to vector<1x128xf32>
    %1281 = arith.addf %1279, %1280 : vector<1x128xf32>
    %1282 = vector.extract_strided_slice %1281 {offsets = [0, 0], sizes = [1, 64], strides = [1, 1]} : vector<1x128xf32> to vector<1x64xf32>
    %c0_495 = arith.constant 0 : index
    %c0_496 = arith.constant 0 : index
    %1283 = vector.load %arg24[%c0_495, %c0_496] : memref<17x128xf32, #tpu.memory_space<vmem>>, vector<1x64xf32>
    tpu.vector_store %arg24[%c0_495, %c0_496], %1282 {strides = array<i32>} : memref<17x128xf32, #tpu.memory_space<vmem>>, vector<1x64xf32>,
    %1284 = vector.extract_strided_slice %1281 {offsets = [0, 64], sizes = [1, 64], strides = [1, 1]} : vector<1x128xf32> to vector<1x64xf32>
    %c16_497 = arith.constant 16 : index
    %c64_498 = arith.constant 64 : index
    %1285 = vector.load %arg24[%c16_497, %c64_498] : memref<17x128xf32, #tpu.memory_space<vmem>>, vector<1x64xf32>
    tpu.vector_store %arg24[%c16_497, %c64_498], %1284 {strides = array<i32>} : memref<17x128xf32, #tpu.memory_space<vmem>>, vector<1x64xf32>,
    %c16_499 = arith.constant 16 : index
    %c0_500 = arith.constant 0 : index
    %1286 = vector.load %arg21[%c16_499, %c0_500] : memref<272x128xf32, #tpu.memory_space<vmem>>, vector<16x128xf32>
    %1287 = arith.mulf %1286, %1275 : vector<16x128xf32>
    %c16_501 = arith.constant 16 : index
    %c0_502 = arith.constant 0 : index
    %1288 = vector.load %arg22[%c16_501, %c0_502] : memref<272x128xf32, #tpu.memory_space<vmem>>, vector<16x128xf32>
    %1289 = arith.addf %1287, %1288 : vector<16x128xf32>
    %c16_503 = arith.constant 16 : index
    %c0_504 = arith.constant 0 : index
    %1290 = vector.load %arg23[%c16_503, %c0_504] : memref<272x128xf32, #tpu.memory_space<vmem>>, vector<16x128xf32>
    %1291 = arith.mulf %1289, %1290 : vector<16x128xf32>
    %cst_505 = arith.constant dense<0.000000e+00> : vector<128xf32>
    %1292 = vector.multi_reduction <add>, %1291, %cst_505 [0] : vector<16x128xf32> to vector<128xf32>
    %1293 = vector.shape_cast %1292 : vector<128xf32> to vector<1x128xf32>
    %1294 = vector.extract_strided_slice %852 {offsets = [1, 0], sizes = [1, 128], strides = [1, 1]} : vector<17x128xf32> to vector<1x128xf32>
    %1295 = arith.addf %1293, %1294 : vector<1x128xf32>
    %1296 = vector.extract_strided_slice %1295 {offsets = [0, 0], sizes = [1, 64], strides = [1, 1]} : vector<1x128xf32> to vector<1x64xf32>
    %c1_506 = arith.constant 1 : index
    %c0_507 = arith.constant 0 : index
    %1297 = vector.load %arg24[%c1_506, %c0_507] : memref<17x128xf32, #tpu.memory_space<vmem>>, vector<1x64xf32>
    tpu.vector_store %arg24[%c1_506, %c0_507], %1296 {strides = array<i32>} : memref<17x128xf32, #tpu.memory_space<vmem>>, vector<1x64xf32>,
    %1298 = vector.extract_strided_slice %1295 {offsets = [0, 64], sizes = [1, 64], strides = [1, 1]} : vector<1x128xf32> to vector<1x64xf32>
    %c15_508 = arith.constant 15 : index
    %c64_509 = arith.constant 64 : index
    %1299 = vector.load %arg24[%c15_508, %c64_509] : memref<17x128xf32, #tpu.memory_space<vmem>>, vector<1x64xf32>
    tpu.vector_store %arg24[%c15_508, %c64_509], %1298 {strides = array<i32>} : memref<17x128xf32, #tpu.memory_space<vmem>>, vector<1x64xf32>,
    %c32_510 = arith.constant 32 : index
    %c0_511 = arith.constant 0 : index
    %1300 = vector.load %arg21[%c32_510, %c0_511] : memref<272x128xf32, #tpu.memory_space<vmem>>, vector<16x128xf32>
    %1301 = arith.mulf %1300, %1289 : vector<16x128xf32>
    %c32_512 = arith.constant 32 : index
    %c0_513 = arith.constant 0 : index
    %1302 = vector.load %arg22[%c32_512, %c0_513] : memref<272x128xf32, #tpu.memory_space<vmem>>, vector<16x128xf32>
    %1303 = arith.addf %1301, %1302 : vector<16x128xf32>
    %c32_514 = arith.constant 32 : index
    %c0_515 = arith.constant 0 : index
    %1304 = vector.load %arg23[%c32_514, %c0_515] : memref<272x128xf32, #tpu.memory_space<vmem>>, vector<16x128xf32>
    %1305 = arith.mulf %1303, %1304 : vector<16x128xf32>
    %cst_516 = arith.constant dense<0.000000e+00> : vector<128xf32>
    %1306 = vector.multi_reduction <add>, %1305, %cst_516 [0] : vector<16x128xf32> to vector<128xf32>
    %1307 = vector.shape_cast %1306 : vector<128xf32> to vector<1x128xf32>
    %1308 = vector.extract_strided_slice %852 {offsets = [2, 0], sizes = [1, 128], strides = [1, 1]} : vector<17x128xf32> to vector<1x128xf32>
    %1309 = arith.addf %1307, %1308 : vector<1x128xf32>
    %1310 = vector.extract_strided_slice %1309 {offsets = [0, 0], sizes = [1, 64], strides = [1, 1]} : vector<1x128xf32> to vector<1x64xf32>
    %c2_517 = arith.constant 2 : index
    %c0_518 = arith.constant 0 : index
    %1311 = vector.load %arg24[%c2_517, %c0_518] : memref<17x128xf32, #tpu.memory_space<vmem>>, vector<1x64xf32>
    tpu.vector_store %arg24[%c2_517, %c0_518], %1310 {strides = array<i32>} : memref<17x128xf32, #tpu.memory_space<vmem>>, vector<1x64xf32>,
    %1312 = vector.extract_strided_slice %1309 {offsets = [0, 64], sizes = [1, 64], strides = [1, 1]} : vector<1x128xf32> to vector<1x64xf32>
    %c14_519 = arith.constant 14 : index
    %c64_520 = arith.constant 64 : index
    %1313 = vector.load %arg24[%c14_519, %c64_520] : memref<17x128xf32, #tpu.memory_space<vmem>>, vector<1x64xf32>
    tpu.vector_store %arg24[%c14_519, %c64_520], %1312 {strides = array<i32>} : memref<17x128xf32, #tpu.memory_space<vmem>>, vector<1x64xf32>,
    %c48_521 = arith.constant 48 : index
    %c0_522 = arith.constant 0 : index
    %1314 = vector.load %arg21[%c48_521, %c0_522] : memref<272x128xf32, #tpu.memory_space<vmem>>, vector<16x128xf32>
    %1315 = arith.mulf %1314, %1303 : vector<16x128xf32>
    %c48_523 = arith.constant 48 : index
    %c0_524 = arith.constant 0 : index
    %1316 = vector.load %arg22[%c48_523, %c0_524] : memref<272x128xf32, #tpu.memory_space<vmem>>, vector<16x128xf32>
    %1317 = arith.addf %1315, %1316 : vector<16x128xf32>
    %c48_525 = arith.constant 48 : index
    %c0_526 = arith.constant 0 : index
    %1318 = vector.load %arg23[%c48_525, %c0_526] : memref<272x128xf32, #tpu.memory_space<vmem>>, vector<16x128xf32>
    %1319 = arith.mulf %1317, %1318 : vector<16x128xf32>
    %cst_527 = arith.constant dense<0.000000e+00> : vector<128xf32>
    %1320 = vector.multi_reduction <add>, %1319, %cst_527 [0] : vector<16x128xf32> to vector<128xf32>
    %1321 = vector.shape_cast %1320 : vector<128xf32> to vector<1x128xf32>
    %1322 = vector.extract_strided_slice %852 {offsets = [3, 0], sizes = [1, 128], strides = [1, 1]} : vector<17x128xf32> to vector<1x128xf32>
    %1323 = arith.addf %1321, %1322 : vector<1x128xf32>
    %1324 = vector.extract_strided_slice %1323 {offsets = [0, 0], sizes = [1, 64], strides = [1, 1]} : vector<1x128xf32> to vector<1x64xf32>
    %c3_528 = arith.constant 3 : index
    %c0_529 = arith.constant 0 : index
    %1325 = vector.load %arg24[%c3_528, %c0_529] : memref<17x128xf32, #tpu.memory_space<vmem>>, vector<1x64xf32>
    tpu.vector_store %arg24[%c3_528, %c0_529], %1324 {strides = array<i32>} : memref<17x128xf32, #tpu.memory_space<vmem>>, vector<1x64xf32>,
    %1326 = vector.extract_strided_slice %1323 {offsets = [0, 64], sizes = [1, 64], strides = [1, 1]} : vector<1x128xf32> to vector<1x64xf32>
    %c13_530 = arith.constant 13 : index
    %c64_531 = arith.constant 64 : index
    %1327 = vector.load %arg24[%c13_530, %c64_531] : memref<17x128xf32, #tpu.memory_space<vmem>>, vector<1x64xf32>
    tpu.vector_store %arg24[%c13_530, %c64_531], %1326 {strides = array<i32>} : memref<17x128xf32, #tpu.memory_space<vmem>>, vector<1x64xf32>,
    %c64_532 = arith.constant 64 : index
    %c0_533 = arith.constant 0 : index
    %1328 = vector.load %arg21[%c64_532, %c0_533] : memref<272x128xf32, #tpu.memory_space<vmem>>, vector<16x128xf32>
    %1329 = arith.mulf %1328, %1317 : vector<16x128xf32>
    %c64_534 = arith.constant 64 : index
    %c0_535 = arith.constant 0 : index
    %1330 = vector.load %arg22[%c64_534, %c0_535] : memref<272x128xf32, #tpu.memory_space<vmem>>, vector<16x128xf32>
    %1331 = arith.addf %1329, %1330 : vector<16x128xf32>
    %c64_536 = arith.constant 64 : index
    %c0_537 = arith.constant 0 : index
    %1332 = vector.load %arg23[%c64_536, %c0_537] : memref<272x128xf32, #tpu.memory_space<vmem>>, vector<16x128xf32>
    %1333 = arith.mulf %1331, %1332 : vector<16x128xf32>
    %cst_538 = arith.constant dense<0.000000e+00> : vector<128xf32>
    %1334 = vector.multi_reduction <add>, %1333, %cst_538 [0] : vector<16x128xf32> to vector<128xf32>
    %1335 = vector.shape_cast %1334 : vector<128xf32> to vector<1x128xf32>
    %1336 = vector.extract_strided_slice %852 {offsets = [4, 0], sizes = [1, 128], strides = [1, 1]} : vector<17x128xf32> to vector<1x128xf32>
    %1337 = arith.addf %1335, %1336 : vector<1x128xf32>
    %1338 = vector.extract_strided_slice %1337 {offsets = [0, 0], sizes = [1, 64], strides = [1, 1]} : vector<1x128xf32> to vector<1x64xf32>
    %c4_539 = arith.constant 4 : index
    %c0_540 = arith.constant 0 : index
    %1339 = vector.load %arg24[%c4_539, %c0_540] : memref<17x128xf32, #tpu.memory_space<vmem>>, vector<1x64xf32>
    tpu.vector_store %arg24[%c4_539, %c0_540], %1338 {strides = array<i32>} : memref<17x128xf32, #tpu.memory_space<vmem>>, vector<1x64xf32>,
    %1340 = vector.extract_strided_slice %1337 {offsets = [0, 64], sizes = [1, 64], strides = [1, 1]} : vector<1x128xf32> to vector<1x64xf32>
    %c12_541 = arith.constant 12 : index
    %c64_542 = arith.constant 64 : index
    %1341 = vector.load %arg24[%c12_541, %c64_542] : memref<17x128xf32, #tpu.memory_space<vmem>>, vector<1x64xf32>
    tpu.vector_store %arg24[%c12_541, %c64_542], %1340 {strides = array<i32>} : memref<17x128xf32, #tpu.memory_space<vmem>>, vector<1x64xf32>,
    %c80_543 = arith.constant 80 : index
    %c0_544 = arith.constant 0 : index
    %1342 = vector.load %arg21[%c80_543, %c0_544] : memref<272x128xf32, #tpu.memory_space<vmem>>, vector<16x128xf32>
    %1343 = arith.mulf %1342, %1331 : vector<16x128xf32>
    %c80_545 = arith.constant 80 : index
    %c0_546 = arith.constant 0 : index
    %1344 = vector.load %arg22[%c80_545, %c0_546] : memref<272x128xf32, #tpu.memory_space<vmem>>, vector<16x128xf32>
    %1345 = arith.addf %1343, %1344 : vector<16x128xf32>
    %c80_547 = arith.constant 80 : index
    %c0_548 = arith.constant 0 : index
    %1346 = vector.load %arg23[%c80_547, %c0_548] : memref<272x128xf32, #tpu.memory_space<vmem>>, vector<16x128xf32>
    %1347 = arith.mulf %1345, %1346 : vector<16x128xf32>
    %cst_549 = arith.constant dense<0.000000e+00> : vector<128xf32>
    %1348 = vector.multi_reduction <add>, %1347, %cst_549 [0] : vector<16x128xf32> to vector<128xf32>
    %1349 = vector.shape_cast %1348 : vector<128xf32> to vector<1x128xf32>
    %1350 = vector.extract_strided_slice %852 {offsets = [5, 0], sizes = [1, 128], strides = [1, 1]} : vector<17x128xf32> to vector<1x128xf32>
    %1351 = arith.addf %1349, %1350 : vector<1x128xf32>
    %1352 = vector.extract_strided_slice %1351 {offsets = [0, 0], sizes = [1, 64], strides = [1, 1]} : vector<1x128xf32> to vector<1x64xf32>
    %c5_550 = arith.constant 5 : index
    %c0_551 = arith.constant 0 : index
    %1353 = vector.load %arg24[%c5_550, %c0_551] : memref<17x128xf32, #tpu.memory_space<vmem>>, vector<1x64xf32>
    tpu.vector_store %arg24[%c5_550, %c0_551], %1352 {strides = array<i32>} : memref<17x128xf32, #tpu.memory_space<vmem>>, vector<1x64xf32>,
    %1354 = vector.extract_strided_slice %1351 {offsets = [0, 64], sizes = [1, 64], strides = [1, 1]} : vector<1x128xf32> to vector<1x64xf32>
    %c11_552 = arith.constant 11 : index
    %c64_553 = arith.constant 64 : index
    %1355 = vector.load %arg24[%c11_552, %c64_553] : memref<17x128xf32, #tpu.memory_space<vmem>>, vector<1x64xf32>
    tpu.vector_store %arg24[%c11_552, %c64_553], %1354 {strides = array<i32>} : memref<17x128xf32, #tpu.memory_space<vmem>>, vector<1x64xf32>,
    %c96_554 = arith.constant 96 : index
    %c0_555 = arith.constant 0 : index
    %1356 = vector.load %arg21[%c96_554, %c0_555] : memref<272x128xf32, #tpu.memory_space<vmem>>, vector<16x128xf32>
    %1357 = arith.mulf %1356, %1345 : vector<16x128xf32>
    %c96_556 = arith.constant 96 : index
    %c0_557 = arith.constant 0 : index
    %1358 = vector.load %arg22[%c96_556, %c0_557] : memref<272x128xf32, #tpu.memory_space<vmem>>, vector<16x128xf32>
    %1359 = arith.addf %1357, %1358 : vector<16x128xf32>
    %c96_558 = arith.constant 96 : index
    %c0_559 = arith.constant 0 : index
    %1360 = vector.load %arg23[%c96_558, %c0_559] : memref<272x128xf32, #tpu.memory_space<vmem>>, vector<16x128xf32>
    %1361 = arith.mulf %1359, %1360 : vector<16x128xf32>
    %cst_560 = arith.constant dense<0.000000e+00> : vector<128xf32>
    %1362 = vector.multi_reduction <add>, %1361, %cst_560 [0] : vector<16x128xf32> to vector<128xf32>
    %1363 = vector.shape_cast %1362 : vector<128xf32> to vector<1x128xf32>
    %1364 = vector.extract_strided_slice %852 {offsets = [6, 0], sizes = [1, 128], strides = [1, 1]} : vector<17x128xf32> to vector<1x128xf32>
    %1365 = arith.addf %1363, %1364 : vector<1x128xf32>
    %1366 = vector.extract_strided_slice %1365 {offsets = [0, 0], sizes = [1, 64], strides = [1, 1]} : vector<1x128xf32> to vector<1x64xf32>
    %c6_561 = arith.constant 6 : index
    %c0_562 = arith.constant 0 : index
    %1367 = vector.load %arg24[%c6_561, %c0_562] : memref<17x128xf32, #tpu.memory_space<vmem>>, vector<1x64xf32>
    tpu.vector_store %arg24[%c6_561, %c0_562], %1366 {strides = array<i32>} : memref<17x128xf32, #tpu.memory_space<vmem>>, vector<1x64xf32>,
    %1368 = vector.extract_strided_slice %1365 {offsets = [0, 64], sizes = [1, 64], strides = [1, 1]} : vector<1x128xf32> to vector<1x64xf32>
    %c10_563 = arith.constant 10 : index
    %c64_564 = arith.constant 64 : index
    %1369 = vector.load %arg24[%c10_563, %c64_564] : memref<17x128xf32, #tpu.memory_space<vmem>>, vector<1x64xf32>
    tpu.vector_store %arg24[%c10_563, %c64_564], %1368 {strides = array<i32>} : memref<17x128xf32, #tpu.memory_space<vmem>>, vector<1x64xf32>,
    %c112_565 = arith.constant 112 : index
    %c0_566 = arith.constant 0 : index
    %1370 = vector.load %arg21[%c112_565, %c0_566] : memref<272x128xf32, #tpu.memory_space<vmem>>, vector<16x128xf32>
    %1371 = arith.mulf %1370, %1359 : vector<16x128xf32>
    %c112_567 = arith.constant 112 : index
    %c0_568 = arith.constant 0 : index
    %1372 = vector.load %arg22[%c112_567, %c0_568] : memref<272x128xf32, #tpu.memory_space<vmem>>, vector<16x128xf32>
    %1373 = arith.addf %1371, %1372 : vector<16x128xf32>
    %c112_569 = arith.constant 112 : index
    %c0_570 = arith.constant 0 : index
    %1374 = vector.load %arg23[%c112_569, %c0_570] : memref<272x128xf32, #tpu.memory_space<vmem>>, vector<16x128xf32>
    %1375 = arith.mulf %1373, %1374 : vector<16x128xf32>
    %cst_571 = arith.constant dense<0.000000e+00> : vector<128xf32>
    %1376 = vector.multi_reduction <add>, %1375, %cst_571 [0] : vector<16x128xf32> to vector<128xf32>
    %1377 = vector.shape_cast %1376 : vector<128xf32> to vector<1x128xf32>
    %1378 = vector.extract_strided_slice %852 {offsets = [7, 0], sizes = [1, 128], strides = [1, 1]} : vector<17x128xf32> to vector<1x128xf32>
    %1379 = arith.addf %1377, %1378 : vector<1x128xf32>
    %1380 = vector.extract_strided_slice %1379 {offsets = [0, 0], sizes = [1, 64], strides = [1, 1]} : vector<1x128xf32> to vector<1x64xf32>
    %c7_572 = arith.constant 7 : index
    %c0_573 = arith.constant 0 : index
    %1381 = vector.load %arg24[%c7_572, %c0_573] : memref<17x128xf32, #tpu.memory_space<vmem>>, vector<1x64xf32>
    tpu.vector_store %arg24[%c7_572, %c0_573], %1380 {strides = array<i32>} : memref<17x128xf32, #tpu.memory_space<vmem>>, vector<1x64xf32>,
    %1382 = vector.extract_strided_slice %1379 {offsets = [0, 64], sizes = [1, 64], strides = [1, 1]} : vector<1x128xf32> to vector<1x64xf32>
    %c9_574 = arith.constant 9 : index
    %c64_575 = arith.constant 64 : index
    %1383 = vector.load %arg24[%c9_574, %c64_575] : memref<17x128xf32, #tpu.memory_space<vmem>>, vector<1x64xf32>
    tpu.vector_store %arg24[%c9_574, %c64_575], %1382 {strides = array<i32>} : memref<17x128xf32, #tpu.memory_space<vmem>>, vector<1x64xf32>,
    %c128_576 = arith.constant 128 : index
    %c0_577 = arith.constant 0 : index
    %1384 = vector.load %arg21[%c128_576, %c0_577] : memref<272x128xf32, #tpu.memory_space<vmem>>, vector<16x128xf32>
    %1385 = arith.mulf %1384, %1373 : vector<16x128xf32>
    %c128_578 = arith.constant 128 : index
    %c0_579 = arith.constant 0 : index
    %1386 = vector.load %arg22[%c128_578, %c0_579] : memref<272x128xf32, #tpu.memory_space<vmem>>, vector<16x128xf32>
    %1387 = arith.addf %1385, %1386 : vector<16x128xf32>
    %c128_580 = arith.constant 128 : index
    %c0_581 = arith.constant 0 : index
    %1388 = vector.load %arg23[%c128_580, %c0_581] : memref<272x128xf32, #tpu.memory_space<vmem>>, vector<16x128xf32>
    %1389 = arith.mulf %1387, %1388 : vector<16x128xf32>
    %cst_582 = arith.constant dense<0.000000e+00> : vector<128xf32>
    %1390 = vector.multi_reduction <add>, %1389, %cst_582 [0] : vector<16x128xf32> to vector<128xf32>
    %1391 = vector.shape_cast %1390 : vector<128xf32> to vector<1x128xf32>
    %1392 = vector.extract_strided_slice %852 {offsets = [8, 0], sizes = [1, 128], strides = [1, 1]} : vector<17x128xf32> to vector<1x128xf32>
    %1393 = arith.addf %1391, %1392 : vector<1x128xf32>
    %1394 = vector.extract_strided_slice %1393 {offsets = [0, 0], sizes = [1, 64], strides = [1, 1]} : vector<1x128xf32> to vector<1x64xf32>
    %c8_583 = arith.constant 8 : index
    %c0_584 = arith.constant 0 : index
    %1395 = vector.load %arg24[%c8_583, %c0_584] : memref<17x128xf32, #tpu.memory_space<vmem>>, vector<1x64xf32>
    tpu.vector_store %arg24[%c8_583, %c0_584], %1394 {strides = array<i32>} : memref<17x128xf32, #tpu.memory_space<vmem>>, vector<1x64xf32>,
    %1396 = vector.extract_strided_slice %1393 {offsets = [0, 64], sizes = [1, 64], strides = [1, 1]} : vector<1x128xf32> to vector<1x64xf32>
    %c8_585 = arith.constant 8 : index
    %c64_586 = arith.constant 64 : index
    %1397 = vector.load %arg24[%c8_585, %c64_586] : memref<17x128xf32, #tpu.memory_space<vmem>>, vector<1x64xf32>
    tpu.vector_store %arg24[%c8_585, %c64_586], %1396 {strides = array<i32>} : memref<17x128xf32, #tpu.memory_space<vmem>>, vector<1x64xf32>,
    %c144_587 = arith.constant 144 : index
    %c0_588 = arith.constant 0 : index
    %1398 = vector.load %arg21[%c144_587, %c0_588] : memref<272x128xf32, #tpu.memory_space<vmem>>, vector<16x128xf32>
    %1399 = arith.mulf %1398, %1387 : vector<16x128xf32>
    %c144_589 = arith.constant 144 : index
    %c0_590 = arith.constant 0 : index
    %1400 = vector.load %arg22[%c144_589, %c0_590] : memref<272x128xf32, #tpu.memory_space<vmem>>, vector<16x128xf32>
    %1401 = arith.addf %1399, %1400 : vector<16x128xf32>
    %c144_591 = arith.constant 144 : index
    %c0_592 = arith.constant 0 : index
    %1402 = vector.load %arg23[%c144_591, %c0_592] : memref<272x128xf32, #tpu.memory_space<vmem>>, vector<16x128xf32>
    %1403 = arith.mulf %1401, %1402 : vector<16x128xf32>
    %cst_593 = arith.constant dense<0.000000e+00> : vector<128xf32>
    %1404 = vector.multi_reduction <add>, %1403, %cst_593 [0] : vector<16x128xf32> to vector<128xf32>
    %1405 = vector.shape_cast %1404 : vector<128xf32> to vector<1x128xf32>
    %1406 = vector.extract_strided_slice %852 {offsets = [9, 0], sizes = [1, 128], strides = [1, 1]} : vector<17x128xf32> to vector<1x128xf32>
    %1407 = arith.addf %1405, %1406 : vector<1x128xf32>
    %1408 = vector.extract_strided_slice %1407 {offsets = [0, 0], sizes = [1, 64], strides = [1, 1]} : vector<1x128xf32> to vector<1x64xf32>
    %c9_594 = arith.constant 9 : index
    %c0_595 = arith.constant 0 : index
    %1409 = vector.load %arg24[%c9_594, %c0_595] : memref<17x128xf32, #tpu.memory_space<vmem>>, vector<1x64xf32>
    tpu.vector_store %arg24[%c9_594, %c0_595], %1408 {strides = array<i32>} : memref<17x128xf32, #tpu.memory_space<vmem>>, vector<1x64xf32>,
    %1410 = vector.extract_strided_slice %1407 {offsets = [0, 64], sizes = [1, 64], strides = [1, 1]} : vector<1x128xf32> to vector<1x64xf32>
    %c7_596 = arith.constant 7 : index
    %c64_597 = arith.constant 64 : index
    %1411 = vector.load %arg24[%c7_596, %c64_597] : memref<17x128xf32, #tpu.memory_space<vmem>>, vector<1x64xf32>
    tpu.vector_store %arg24[%c7_596, %c64_597], %1410 {strides = array<i32>} : memref<17x128xf32, #tpu.memory_space<vmem>>, vector<1x64xf32>,
    %c160_598 = arith.constant 160 : index
    %c0_599 = arith.constant 0 : index
    %1412 = vector.load %arg21[%c160_598, %c0_599] : memref<272x128xf32, #tpu.memory_space<vmem>>, vector<16x128xf32>
    %1413 = arith.mulf %1412, %1401 : vector<16x128xf32>
    %c160_600 = arith.constant 160 : index
    %c0_601 = arith.constant 0 : index
    %1414 = vector.load %arg22[%c160_600, %c0_601] : memref<272x128xf32, #tpu.memory_space<vmem>>, vector<16x128xf32>
    %1415 = arith.addf %1413, %1414 : vector<16x128xf32>
    %c160_602 = arith.constant 160 : index
    %c0_603 = arith.constant 0 : index
    %1416 = vector.load %arg23[%c160_602, %c0_603] : memref<272x128xf32, #tpu.memory_space<vmem>>, vector<16x128xf32>
    %1417 = arith.mulf %1415, %1416 : vector<16x128xf32>
    %cst_604 = arith.constant dense<0.000000e+00> : vector<128xf32>
    %1418 = vector.multi_reduction <add>, %1417, %cst_604 [0] : vector<16x128xf32> to vector<128xf32>
    %1419 = vector.shape_cast %1418 : vector<128xf32> to vector<1x128xf32>
    %1420 = vector.extract_strided_slice %852 {offsets = [10, 0], sizes = [1, 128], strides = [1, 1]} : vector<17x128xf32> to vector<1x128xf32>
    %1421 = arith.addf %1419, %1420 : vector<1x128xf32>
    %1422 = vector.extract_strided_slice %1421 {offsets = [0, 0], sizes = [1, 64], strides = [1, 1]} : vector<1x128xf32> to vector<1x64xf32>
    %c10_605 = arith.constant 10 : index
    %c0_606 = arith.constant 0 : index
    %1423 = vector.load %arg24[%c10_605, %c0_606] : memref<17x128xf32, #tpu.memory_space<vmem>>, vector<1x64xf32>
    tpu.vector_store %arg24[%c10_605, %c0_606], %1422 {strides = array<i32>} : memref<17x128xf32, #tpu.memory_space<vmem>>, vector<1x64xf32>,
    %1424 = vector.extract_strided_slice %1421 {offsets = [0, 64], sizes = [1, 64], strides = [1, 1]} : vector<1x128xf32> to vector<1x64xf32>
    %c6_607 = arith.constant 6 : index
    %c64_608 = arith.constant 64 : index
    %1425 = vector.load %arg24[%c6_607, %c64_608] : memref<17x128xf32, #tpu.memory_space<vmem>>, vector<1x64xf32>
    tpu.vector_store %arg24[%c6_607, %c64_608], %1424 {strides = array<i32>} : memref<17x128xf32, #tpu.memory_space<vmem>>, vector<1x64xf32>,
    %c176_609 = arith.constant 176 : index
    %c0_610 = arith.constant 0 : index
    %1426 = vector.load %arg21[%c176_609, %c0_610] : memref<272x128xf32, #tpu.memory_space<vmem>>, vector<16x128xf32>
    %1427 = arith.mulf %1426, %1415 : vector<16x128xf32>
    %c176_611 = arith.constant 176 : index
    %c0_612 = arith.constant 0 : index
    %1428 = vector.load %arg22[%c176_611, %c0_612] : memref<272x128xf32, #tpu.memory_space<vmem>>, vector<16x128xf32>
    %1429 = arith.addf %1427, %1428 : vector<16x128xf32>
    %c176_613 = arith.constant 176 : index
    %c0_614 = arith.constant 0 : index
    %1430 = vector.load %arg23[%c176_613, %c0_614] : memref<272x128xf32, #tpu.memory_space<vmem>>, vector<16x128xf32>
    %1431 = arith.mulf %1429, %1430 : vector<16x128xf32>
    %cst_615 = arith.constant dense<0.000000e+00> : vector<128xf32>
    %1432 = vector.multi_reduction <add>, %1431, %cst_615 [0] : vector<16x128xf32> to vector<128xf32>
    %1433 = vector.shape_cast %1432 : vector<128xf32> to vector<1x128xf32>
    %1434 = vector.extract_strided_slice %852 {offsets = [11, 0], sizes = [1, 128], strides = [1, 1]} : vector<17x128xf32> to vector<1x128xf32>
    %1435 = arith.addf %1433, %1434 : vector<1x128xf32>
    %1436 = vector.extract_strided_slice %1435 {offsets = [0, 0], sizes = [1, 64], strides = [1, 1]} : vector<1x128xf32> to vector<1x64xf32>
    %c11_616 = arith.constant 11 : index
    %c0_617 = arith.constant 0 : index
    %1437 = vector.load %arg24[%c11_616, %c0_617] : memref<17x128xf32, #tpu.memory_space<vmem>>, vector<1x64xf32>
    tpu.vector_store %arg24[%c11_616, %c0_617], %1436 {strides = array<i32>} : memref<17x128xf32, #tpu.memory_space<vmem>>, vector<1x64xf32>,
    %1438 = vector.extract_strided_slice %1435 {offsets = [0, 64], sizes = [1, 64], strides = [1, 1]} : vector<1x128xf32> to vector<1x64xf32>
    %c5_618 = arith.constant 5 : index
    %c64_619 = arith.constant 64 : index
    %1439 = vector.load %arg24[%c5_618, %c64_619] : memref<17x128xf32, #tpu.memory_space<vmem>>, vector<1x64xf32>
    tpu.vector_store %arg24[%c5_618, %c64_619], %1438 {strides = array<i32>} : memref<17x128xf32, #tpu.memory_space<vmem>>, vector<1x64xf32>,
    %c192_620 = arith.constant 192 : index
    %c0_621 = arith.constant 0 : index
    %1440 = vector.load %arg21[%c192_620, %c0_621] : memref<272x128xf32, #tpu.memory_space<vmem>>, vector<16x128xf32>
    %1441 = arith.mulf %1440, %1429 : vector<16x128xf32>
    %c192_622 = arith.constant 192 : index
    %c0_623 = arith.constant 0 : index
    %1442 = vector.load %arg22[%c192_622, %c0_623] : memref<272x128xf32, #tpu.memory_space<vmem>>, vector<16x128xf32>
    %1443 = arith.addf %1441, %1442 : vector<16x128xf32>
    %c192_624 = arith.constant 192 : index
    %c0_625 = arith.constant 0 : index
    %1444 = vector.load %arg23[%c192_624, %c0_625] : memref<272x128xf32, #tpu.memory_space<vmem>>, vector<16x128xf32>
    %1445 = arith.mulf %1443, %1444 : vector<16x128xf32>
    %cst_626 = arith.constant dense<0.000000e+00> : vector<128xf32>
    %1446 = vector.multi_reduction <add>, %1445, %cst_626 [0] : vector<16x128xf32> to vector<128xf32>
    %1447 = vector.shape_cast %1446 : vector<128xf32> to vector<1x128xf32>
    %1448 = vector.extract_strided_slice %852 {offsets = [12, 0], sizes = [1, 128], strides = [1, 1]} : vector<17x128xf32> to vector<1x128xf32>
    %1449 = arith.addf %1447, %1448 : vector<1x128xf32>
    %1450 = vector.extract_strided_slice %1449 {offsets = [0, 0], sizes = [1, 64], strides = [1, 1]} : vector<1x128xf32> to vector<1x64xf32>
    %c12_627 = arith.constant 12 : index
    %c0_628 = arith.constant 0 : index
    %1451 = vector.load %arg24[%c12_627, %c0_628] : memref<17x128xf32, #tpu.memory_space<vmem>>, vector<1x64xf32>
    tpu.vector_store %arg24[%c12_627, %c0_628], %1450 {strides = array<i32>} : memref<17x128xf32, #tpu.memory_space<vmem>>, vector<1x64xf32>,
    %1452 = vector.extract_strided_slice %1449 {offsets = [0, 64], sizes = [1, 64], strides = [1, 1]} : vector<1x128xf32> to vector<1x64xf32>
    %c4_629 = arith.constant 4 : index
    %c64_630 = arith.constant 64 : index
    %1453 = vector.load %arg24[%c4_629, %c64_630] : memref<17x128xf32, #tpu.memory_space<vmem>>, vector<1x64xf32>
    tpu.vector_store %arg24[%c4_629, %c64_630], %1452 {strides = array<i32>} : memref<17x128xf32, #tpu.memory_space<vmem>>, vector<1x64xf32>,
    %c208_631 = arith.constant 208 : index
    %c0_632 = arith.constant 0 : index
    %1454 = vector.load %arg21[%c208_631, %c0_632] : memref<272x128xf32, #tpu.memory_space<vmem>>, vector<16x128xf32>
    %1455 = arith.mulf %1454, %1443 : vector<16x128xf32>
    %c208_633 = arith.constant 208 : index
    %c0_634 = arith.constant 0 : index
    %1456 = vector.load %arg22[%c208_633, %c0_634] : memref<272x128xf32, #tpu.memory_space<vmem>>, vector<16x128xf32>
    %1457 = arith.addf %1455, %1456 : vector<16x128xf32>
    %c208_635 = arith.constant 208 : index
    %c0_636 = arith.constant 0 : index
    %1458 = vector.load %arg23[%c208_635, %c0_636] : memref<272x128xf32, #tpu.memory_space<vmem>>, vector<16x128xf32>
    %1459 = arith.mulf %1457, %1458 : vector<16x128xf32>
    %cst_637 = arith.constant dense<0.000000e+00> : vector<128xf32>
    %1460 = vector.multi_reduction <add>, %1459, %cst_637 [0] : vector<16x128xf32> to vector<128xf32>
    %1461 = vector.shape_cast %1460 : vector<128xf32> to vector<1x128xf32>
    %1462 = vector.extract_strided_slice %852 {offsets = [13, 0], sizes = [1, 128], strides = [1, 1]} : vector<17x128xf32> to vector<1x128xf32>
    %1463 = arith.addf %1461, %1462 : vector<1x128xf32>
    %1464 = vector.extract_strided_slice %1463 {offsets = [0, 0], sizes = [1, 64], strides = [1, 1]} : vector<1x128xf32> to vector<1x64xf32>
    %c13_638 = arith.constant 13 : index
    %c0_639 = arith.constant 0 : index
    %1465 = vector.load %arg24[%c13_638, %c0_639] : memref<17x128xf32, #tpu.memory_space<vmem>>, vector<1x64xf32>
    tpu.vector_store %arg24[%c13_638, %c0_639], %1464 {strides = array<i32>} : memref<17x128xf32, #tpu.memory_space<vmem>>, vector<1x64xf32>,
    %1466 = vector.extract_strided_slice %1463 {offsets = [0, 64], sizes = [1, 64], strides = [1, 1]} : vector<1x128xf32> to vector<1x64xf32>
    %c3_640 = arith.constant 3 : index
    %c64_641 = arith.constant 64 : index
    %1467 = vector.load %arg24[%c3_640, %c64_641] : memref<17x128xf32, #tpu.memory_space<vmem>>, vector<1x64xf32>
    tpu.vector_store %arg24[%c3_640, %c64_641], %1466 {strides = array<i32>} : memref<17x128xf32, #tpu.memory_space<vmem>>, vector<1x64xf32>,
    %c224_642 = arith.constant 224 : index
    %c0_643 = arith.constant 0 : index
    %1468 = vector.load %arg21[%c224_642, %c0_643] : memref<272x128xf32, #tpu.memory_space<vmem>>, vector<16x128xf32>
    %1469 = arith.mulf %1468, %1457 : vector<16x128xf32>
    %c224_644 = arith.constant 224 : index
    %c0_645 = arith.constant 0 : index
    %1470 = vector.load %arg22[%c224_644, %c0_645] : memref<272x128xf32, #tpu.memory_space<vmem>>, vector<16x128xf32>
    %1471 = arith.addf %1469, %1470 : vector<16x128xf32>
    %c224_646 = arith.constant 224 : index
    %c0_647 = arith.constant 0 : index
    %1472 = vector.load %arg23[%c224_646, %c0_647] : memref<272x128xf32, #tpu.memory_space<vmem>>, vector<16x128xf32>
    %1473 = arith.mulf %1471, %1472 : vector<16x128xf32>
    %cst_648 = arith.constant dense<0.000000e+00> : vector<128xf32>
    %1474 = vector.multi_reduction <add>, %1473, %cst_648 [0] : vector<16x128xf32> to vector<128xf32>
    %1475 = vector.shape_cast %1474 : vector<128xf32> to vector<1x128xf32>
    %1476 = vector.extract_strided_slice %852 {offsets = [14, 0], sizes = [1, 128], strides = [1, 1]} : vector<17x128xf32> to vector<1x128xf32>
    %1477 = arith.addf %1475, %1476 : vector<1x128xf32>
    %1478 = vector.extract_strided_slice %1477 {offsets = [0, 0], sizes = [1, 64], strides = [1, 1]} : vector<1x128xf32> to vector<1x64xf32>
    %c14_649 = arith.constant 14 : index
    %c0_650 = arith.constant 0 : index
    %1479 = vector.load %arg24[%c14_649, %c0_650] : memref<17x128xf32, #tpu.memory_space<vmem>>, vector<1x64xf32>
    tpu.vector_store %arg24[%c14_649, %c0_650], %1478 {strides = array<i32>} : memref<17x128xf32, #tpu.memory_space<vmem>>, vector<1x64xf32>,
    %1480 = vector.extract_strided_slice %1477 {offsets = [0, 64], sizes = [1, 64], strides = [1, 1]} : vector<1x128xf32> to vector<1x64xf32>
    %c2_651 = arith.constant 2 : index
    %c64_652 = arith.constant 64 : index
    %1481 = vector.load %arg24[%c2_651, %c64_652] : memref<17x128xf32, #tpu.memory_space<vmem>>, vector<1x64xf32>
    tpu.vector_store %arg24[%c2_651, %c64_652], %1480 {strides = array<i32>} : memref<17x128xf32, #tpu.memory_space<vmem>>, vector<1x64xf32>,
    %c240_653 = arith.constant 240 : index
    %c0_654 = arith.constant 0 : index
    %1482 = vector.load %arg21[%c240_653, %c0_654] : memref<272x128xf32, #tpu.memory_space<vmem>>, vector<16x128xf32>
    %1483 = arith.mulf %1482, %1471 : vector<16x128xf32>
    %c240_655 = arith.constant 240 : index
    %c0_656 = arith.constant 0 : index
    %1484 = vector.load %arg22[%c240_655, %c0_656] : memref<272x128xf32, #tpu.memory_space<vmem>>, vector<16x128xf32>
    %1485 = arith.addf %1483, %1484 : vector<16x128xf32>
    %c240_657 = arith.constant 240 : index
    %c0_658 = arith.constant 0 : index
    %1486 = vector.load %arg23[%c240_657, %c0_658] : memref<272x128xf32, #tpu.memory_space<vmem>>, vector<16x128xf32>
    %1487 = arith.mulf %1485, %1486 : vector<16x128xf32>
    %cst_659 = arith.constant dense<0.000000e+00> : vector<128xf32>
    %1488 = vector.multi_reduction <add>, %1487, %cst_659 [0] : vector<16x128xf32> to vector<128xf32>
    %1489 = vector.shape_cast %1488 : vector<128xf32> to vector<1x128xf32>
    %1490 = vector.extract_strided_slice %852 {offsets = [15, 0], sizes = [1, 128], strides = [1, 1]} : vector<17x128xf32> to vector<1x128xf32>
    %1491 = arith.addf %1489, %1490 : vector<1x128xf32>
    %1492 = vector.extract_strided_slice %1491 {offsets = [0, 0], sizes = [1, 64], strides = [1, 1]} : vector<1x128xf32> to vector<1x64xf32>
    %c15_660 = arith.constant 15 : index
    %c0_661 = arith.constant 0 : index
    %1493 = vector.load %arg24[%c15_660, %c0_661] : memref<17x128xf32, #tpu.memory_space<vmem>>, vector<1x64xf32>
    tpu.vector_store %arg24[%c15_660, %c0_661], %1492 {strides = array<i32>} : memref<17x128xf32, #tpu.memory_space<vmem>>, vector<1x64xf32>,
    %1494 = vector.extract_strided_slice %1491 {offsets = [0, 64], sizes = [1, 64], strides = [1, 1]} : vector<1x128xf32> to vector<1x64xf32>
    %c1_662 = arith.constant 1 : index
    %c64_663 = arith.constant 64 : index
    %1495 = vector.load %arg24[%c1_662, %c64_663] : memref<17x128xf32, #tpu.memory_space<vmem>>, vector<1x64xf32>
    tpu.vector_store %arg24[%c1_662, %c64_663], %1494 {strides = array<i32>} : memref<17x128xf32, #tpu.memory_space<vmem>>, vector<1x64xf32>,
    %c256_664 = arith.constant 256 : index
    %c0_665 = arith.constant 0 : index
    %1496 = vector.load %arg21[%c256_664, %c0_665] : memref<272x128xf32, #tpu.memory_space<vmem>>, vector<16x128xf32>
    %1497 = arith.mulf %1496, %1485 : vector<16x128xf32>
    %c256_666 = arith.constant 256 : index
    %c0_667 = arith.constant 0 : index
    %1498 = vector.load %arg22[%c256_666, %c0_667] : memref<272x128xf32, #tpu.memory_space<vmem>>, vector<16x128xf32>
    %1499 = arith.addf %1497, %1498 : vector<16x128xf32>
    %c256_668 = arith.constant 256 : index
    %c0_669 = arith.constant 0 : index
    %1500 = vector.load %arg23[%c256_668, %c0_669] : memref<272x128xf32, #tpu.memory_space<vmem>>, vector<16x128xf32>
    %1501 = arith.mulf %1499, %1500 : vector<16x128xf32>
    %cst_670 = arith.constant dense<0.000000e+00> : vector<128xf32>
    %1502 = vector.multi_reduction <add>, %1501, %cst_670 [0] : vector<16x128xf32> to vector<128xf32>
    %1503 = vector.shape_cast %1502 : vector<128xf32> to vector<1x128xf32>
    %1504 = vector.extract_strided_slice %852 {offsets = [16, 0], sizes = [1, 128], strides = [1, 1]} : vector<17x128xf32> to vector<1x128xf32>
    %1505 = arith.addf %1503, %1504 : vector<1x128xf32>
    %1506 = vector.extract_strided_slice %1505 {offsets = [0, 0], sizes = [1, 64], strides = [1, 1]} : vector<1x128xf32> to vector<1x64xf32>
    %c16_671 = arith.constant 16 : index
    %c0_672 = arith.constant 0 : index
    %1507 = vector.load %arg24[%c16_671, %c0_672] : memref<17x128xf32, #tpu.memory_space<vmem>>, vector<1x64xf32>
    tpu.vector_store %arg24[%c16_671, %c0_672], %1506 {strides = array<i32>} : memref<17x128xf32, #tpu.memory_space<vmem>>, vector<1x64xf32>,
    %1508 = vector.extract_strided_slice %1505 {offsets = [0, 64], sizes = [1, 64], strides = [1, 1]} : vector<1x128xf32> to vector<1x64xf32>
    %c0_673 = arith.constant 0 : index
    %c64_674 = arith.constant 64 : index
    %1509 = vector.load %arg24[%c0_673, %c64_674] : memref<17x128xf32, #tpu.memory_space<vmem>>, vector<1x64xf32>
    tpu.vector_store %arg24[%c0_673, %c64_674], %1508 {strides = array<i32>} : memref<17x128xf32, #tpu.memory_space<vmem>>, vector<1x64xf32>,
    %c0_675 = arith.constant 0 : index
    %c0_676 = arith.constant 0 : index
    %1510 = vector.load %arg24[%c0_675, %c0_676] : memref<17x128xf32, #tpu.memory_space<vmem>>, vector<17x128xf32>
    %1511 = vector.extract_strided_slice %1510 {offsets = [0, 0], sizes = [17, 64], strides = [1, 1]} : vector<17x128xf32> to vector<17x64xf32>
    %1512 = vector.extract_strided_slice %1510 {offsets = [0, 64], sizes = [17, 64], strides = [1, 1]} : vector<17x128xf32> to vector<17x64xf32>
    %1513 = arith.addf %1511, %1512 : vector<17x64xf32>
    %1514 = arith.negf %793 : vector<17x64xf32>
    %1515 = math.exp %1514 : vector<17x64xf32>
    %cst_677 = arith.constant 1.000000e+00 : f32
    %1516 = vector.broadcast %cst_677 : f32 to vector<17x64xf32>
    %1517 = arith.addf %1516, %1515 : vector<17x64xf32>
    %1518 = arith.divf %1516, %1517 : vector<17x64xf32>
    %1519 = arith.mulf %793, %1518 : vector<17x64xf32>
    %1520 = arith.mulf %1513, %1519 : vector<17x64xf32>
    %1521 = arith.truncf %1520 : vector<17x64xf32> to vector<17x64xbf16>
    %c1_678 = arith.constant 1 : index
    %c0_679 = arith.constant 0 : index
    %c0_680 = arith.constant 0 : index
    %1522 = vector.load %arg15[%c1_678, %c0_679, %c0_680] : memref<2x64x32xf32, #tpu.memory_space<vmem>>, vector<1x64x32xf32>
    %1523 = vector.shape_cast %1522 : vector<1x64x32xf32> to vector<64x32xf32>
    %1524 = arith.truncf %1523 : vector<64x32xf32> to vector<64x32xbf16>
    %cst_681 = arith.constant dense<0.000000e+00> : vector<17x32xf32>
    %1525 = tpu.matmul %1521, %1524, %cst_681 {dimension_numbers = #tpu.dot_dimension_numbers<[1], [0], [0], [1], [0, 0, 1, 1], [], []>} : vector<17x64xbf16>, vector<64x32xbf16>, vector<17x32xf32> -> vector<17x32xf32>
    %1526 = vector.extract_strided_slice %1525 {offsets = [0, 0], sizes = [1, 32], strides = [1, 1]} : vector<17x32xf32> to vector<1x32xf32>
    %1527 = vector.extract_strided_slice %772 {offsets = [0, 0], sizes = [1, 32], strides = [1, 1]} : vector<17x32xf32> to vector<1x32xf32>
    %1528 = arith.addf %1526, %1527 : vector<1x32xf32>
    %1529 = arith.mulf %1528, %1528 : vector<1x32xf32>
    %cst_682 = arith.constant dense<0.000000e+00> : vector<1xf32>
    %1530 = vector.multi_reduction <add>, %1529, %cst_682 [1] : vector<1x32xf32> to vector<1xf32>
    %1531 = vector.shape_cast %1530 : vector<1xf32> to vector<1x1xf32>
    %cst_683 = arith.constant 3.200000e+01 : f32
    %1532 = vector.broadcast %cst_683 : f32 to vector<1x1xf32>
    %1533 = arith.divf %1531, %1532 : vector<1x1xf32>
    %cst_684 = arith.constant 9.99999974E-6 : f32
    %1534 = vector.broadcast %cst_684 : f32 to vector<1x1xf32>
    %1535 = arith.addf %1533, %1534 : vector<1x1xf32>
    %1536 = math.rsqrt %1535 : vector<1x1xf32>
    %1537 = vector.broadcast %1536 : vector<1x1xf32> to vector<1x32xf32>
    %1538 = arith.mulf %1528, %1537 : vector<1x32xf32>
    %c0_685 = arith.constant 0 : index
    %c0_686 = arith.constant 0 : index
    %1539 = vector.load %arg16[%c0_685, %c0_686] : memref<1x32xf32, #tpu.memory_space<vmem>>, vector<1x32xf32>
    %1540 = arith.mulf %1538, %1539 : vector<1x32xf32>
    %c0_687 = arith.constant 0 : index
    %c0_688 = arith.constant 0 : index
    %1541 = vector.load %arg17[%c0_687, %c0_688] : memref<32x10xf32, #tpu.memory_space<vmem>>, vector<32x10xf32>
    %cst_689 = arith.constant dense<0.000000e+00> : vector<1x10xf32>
    %1542 = tpu.matmul %1540, %1541, %cst_689 {dimension_numbers = #tpu.dot_dimension_numbers<[1], [0], [0], [1], [0, 0, 1, 1], [], []>} : vector<1x32xf32>, vector<32x10xf32>, vector<1x10xf32> -> vector<1x10xf32>
    %c0_690 = arith.constant 0 : index
    %c0_691 = arith.constant 0 : index
    %1543 = vector.load %arg18[%c0_690, %c0_691] : memref<1x10xf32, #tpu.memory_space<vmem>>, vector<1x10xf32>
    %1544 = arith.addf %1542, %1543 : vector<1x10xf32>
    %c0_692 = arith.constant 0 : index
    %c0_693 = arith.constant 0 : index
    %c0_694 = arith.constant 0 : index
    %1545 = vector.load %arg19[%c0_692, %c0_693, %c0_694] : memref<1x1x10xf32, #tpu.memory_space<vmem>>, vector<1x1x10xf32>
    %1546 = vector.shape_cast %1545 : vector<1x1x10xf32> to vector<1x10xf32>
    %1547 = vector.shape_cast %1544 : vector<1x10xf32> to vector<1x1x10xf32>
    tpu.vector_store %arg19[%c0_692, %c0_693, %c0_694], %1547 {strides = array<i32>} : memref<1x1x10xf32, #tpu.memory_space<vmem>>, vector<1x1x10xf32>,
    return
  }
  func.func @transform_0(%arg0: i32) -> (i32, i32, i32) {
    %c0_i32 = arith.constant 0 : i32
    %c0_i32_0 = arith.constant 0 : i32
    %c0_i32_1 = arith.constant 0 : i32
    return %arg0, %c0_i32, %c0_i32_0 : i32, i32, i32
  }
  func.func @transform_1(%arg0: i32) -> (i32, i32) {
    %c0_i32 = arith.constant 0 : i32
    %c0_i32_0 = arith.constant 0 : i32
    %c0_i32_1 = arith.constant 0 : i32
    return %c0_i32, %c0_i32_0 : i32, i32
  }
  func.func @transform_2(%arg0: i32) -> (i32, i32) {
    %c0_i32 = arith.constant 0 : i32
    %c0_i32_0 = arith.constant 0 : i32
    %c0_i32_1 = arith.constant 0 : i32
    return %c0_i32, %c0_i32_0 : i32, i32
  }
  func.func @transform_3(%arg0: i32) -> (i32, i32) {
    %c0_i32 = arith.constant 0 : i32
    %c0_i32_0 = arith.constant 0 : i32
    %c0_i32_1 = arith.constant 0 : i32
    return %c0_i32, %c0_i32_0 : i32, i32
  }
  func.func @transform_4(%arg0: i32) -> (i32, i32) {
    %c0_i32 = arith.constant 0 : i32
    %c0_i32_0 = arith.constant 0 : i32
    %c0_i32_1 = arith.constant 0 : i32
    return %c0_i32, %c0_i32_0 : i32, i32
  }
  func.func @transform_5(%arg0: i32) -> (i32, i32, i32) {
    %c0_i32 = arith.constant 0 : i32
    %c0_i32_0 = arith.constant 0 : i32
    %c0_i32_1 = arith.constant 0 : i32
    %c0_i32_2 = arith.constant 0 : i32
    return %c0_i32, %c0_i32_0, %c0_i32_1 : i32, i32, i32
  }
  func.func @transform_6(%arg0: i32) -> (i32, i32, i32) {
    %c0_i32 = arith.constant 0 : i32
    %c0_i32_0 = arith.constant 0 : i32
    %c0_i32_1 = arith.constant 0 : i32
    %c0_i32_2 = arith.constant 0 : i32
    return %c0_i32, %c0_i32_0, %c0_i32_1 : i32, i32, i32
  }
  func.func @transform_7(%arg0: i32) -> (i32, i32, i32) {
    %c0_i32 = arith.constant 0 : i32
    %c0_i32_0 = arith.constant 0 : i32
    %c0_i32_1 = arith.constant 0 : i32
    %c0_i32_2 = arith.constant 0 : i32
    return %c0_i32, %c0_i32_0, %c0_i32_1 : i32, i32, i32
  }
  func.func @transform_8(%arg0: i32) -> (i32, i32, i32) {
    %c0_i32 = arith.constant 0 : i32
    %c0_i32_0 = arith.constant 0 : i32
    %c0_i32_1 = arith.constant 0 : i32
    %c0_i32_2 = arith.constant 0 : i32
    return %c0_i32, %c0_i32_0, %c0_i32_1 : i32, i32, i32
  }
  func.func @transform_9(%arg0: i32) -> (i32, i32, i32) {
    %c0_i32 = arith.constant 0 : i32
    %c0_i32_0 = arith.constant 0 : i32
    %c0_i32_1 = arith.constant 0 : i32
    %c0_i32_2 = arith.constant 0 : i32
    return %c0_i32, %c0_i32_0, %c0_i32_1 : i32, i32, i32
  }
  func.func @transform_10(%arg0: i32) -> (i32, i32, i32) {
    %c0_i32 = arith.constant 0 : i32
    %c0_i32_0 = arith.constant 0 : i32
    %c0_i32_1 = arith.constant 0 : i32
    %c0_i32_2 = arith.constant 0 : i32
    return %c0_i32, %c0_i32_0, %c0_i32_1 : i32, i32, i32
  }
  func.func @transform_11(%arg0: i32) -> (i32, i32, i32) {
    %c0_i32 = arith.constant 0 : i32
    %c0_i32_0 = arith.constant 0 : i32
    %c0_i32_1 = arith.constant 0 : i32
    %c0_i32_2 = arith.constant 0 : i32
    return %c0_i32, %c0_i32_0, %c0_i32_1 : i32, i32, i32
  }
  func.func @transform_12(%arg0: i32) -> (i32, i32, i32) {
    %c0_i32 = arith.constant 0 : i32
    %c0_i32_0 = arith.constant 0 : i32
    %c0_i32_1 = arith.constant 0 : i32
    %c0_i32_2 = arith.constant 0 : i32
    return %c0_i32, %c0_i32_0, %c0_i32_1 : i32, i32, i32
  }
  func.func @transform_13(%arg0: i32) -> (i32, i32, i32) {
    %c0_i32 = arith.constant 0 : i32
    %c0_i32_0 = arith.constant 0 : i32
    %c0_i32_1 = arith.constant 0 : i32
    %c0_i32_2 = arith.constant 0 : i32
    return %c0_i32, %c0_i32_0, %c0_i32_1 : i32, i32, i32
  }
  func.func @transform_14(%arg0: i32) -> (i32, i32, i32) {
    %c0_i32 = arith.constant 0 : i32
    %c0_i32_0 = arith.constant 0 : i32
    %c0_i32_1 = arith.constant 0 : i32
    %c0_i32_2 = arith.constant 0 : i32
    return %c0_i32, %c0_i32_0, %c0_i32_1 : i32, i32, i32
  }
  func.func @transform_15(%arg0: i32) -> (i32, i32) {
    %c0_i32 = arith.constant 0 : i32
    %c0_i32_0 = arith.constant 0 : i32
    %c0_i32_1 = arith.constant 0 : i32
    return %c0_i32, %c0_i32_0 : i32, i32
  }
  func.func @transform_16(%arg0: i32) -> (i32, i32) {
    %c0_i32 = arith.constant 0 : i32
    %c0_i32_0 = arith.constant 0 : i32
    %c0_i32_1 = arith.constant 0 : i32
    return %c0_i32, %c0_i32_0 : i32, i32
  }
  func.func @transform_17(%arg0: i32) -> (i32, i32) {
    %c0_i32 = arith.constant 0 : i32
    %c0_i32_0 = arith.constant 0 : i32
    %c0_i32_1 = arith.constant 0 : i32
    return %c0_i32, %c0_i32_0 : i32, i32
  }
  func.func @transform_18(%arg0: i32) -> (i32, i32, i32) {
    %c0_i32 = arith.constant 0 : i32
    %c0_i32_0 = arith.constant 0 : i32
    %c0_i32_1 = arith.constant 0 : i32
    return %arg0, %c0_i32, %c0_i32_0 : i32, i32, i32
  }
}

</mosaic_0001>

<llo_original>
// kernel: vision_mamba_forward.1
$region0: #{vision_mamba_forward.1}
  #allocation0 [shape = 'u32[]', space=smem, size = 0x4, offset = 0x4, fixed_abs, tag = 'smem constant byte address 0x4 - core index']
  #allocation1 [shape = 'u32[144,128]{1,0:T(1,128)}', space=vmem, size = 0x12000, scoped, tag = 'internal scratch']
  #allocation2 [shape = 'f32[20,128]{1,0:T(8,128)}', space=vmem, size = 0x3000, scoped, tag = 'scratch operand']
  #allocation3 [shape = 'f32[272,128]{1,0:T(8,128)}', space=vmem, size = 0x22000, scoped, tag = 'scratch operand']
  #allocation4 [shape = 'f32[272,128]{1,0:T(8,128)}', space=vmem, size = 0x22000, scoped, tag = 'scratch operand']
  #allocation5 [shape = 'f32[272,128]{1,0:T(8,128)}', space=vmem, size = 0x22000, scoped, tag = 'scratch operand']
  #allocation6 [shape = 'f32[17,128]{1,0:T(8,128)}', space=vmem, size = 0x3000, scoped, tag = 'scratch operand']
  %s0 = inlined_call_operand.vmem [shape: f32[2,16,192], index: 0, kind: input, shape index: {}]
  %s1 = inlined_call_operand.vmem [shape: f32[192,32], index: 1, kind: input, shape index: {}]
  %s2 = inlined_call_operand.vmem [shape: f32[1,32], index: 2, kind: input, shape index: {}]
  %s3 = inlined_call_operand.vmem [shape: f32[17,32], index: 3, kind: input, shape index: {}]
  %s4 = inlined_call_operand.vmem [shape: f32[17,17], index: 4, kind: input, shape index: {}]
  %s5 = inlined_call_operand.vmem [shape: f32[2,1,32], index: 5, kind: input, shape index: {}]
  %s6 = inlined_call_operand.vmem [shape: f32[2,32,128], index: 6, kind: input, shape index: {}]
  %s7 = inlined_call_operand.vmem [shape: f32[2,4,128], index: 7, kind: input, shape index: {}]
  %s8 = inlined_call_operand.vmem [shape: f32[2,1,128], index: 8, kind: input, shape index: {}]
  %s9 = inlined_call_operand.vmem [shape: f32[2,128,128], index: 9, kind: input, shape index: {}]
  %s10 = inlined_call_operand.vmem [shape: f32[2,1,128], index: 10, kind: input, shape index: {}]
  %s11 = inlined_call_operand.vmem [shape: f32[2,64,128], index: 11, kind: input, shape index: {}]
  %s12 = inlined_call_operand.vmem [shape: f32[2,16,128], index: 12, kind: input, shape index: {}]
  %s13 = inlined_call_operand.vmem [shape: f32[2,1,128], index: 13, kind: input, shape index: {}]
  %s14 = inlined_call_operand.vmem [shape: f32[2,64,32], index: 14, kind: input, shape index: {}]
  %s15 = inlined_call_operand.vmem [shape: f32[1,32], index: 15, kind: input, shape index: {}]
  %s16 = inlined_call_operand.vmem [shape: f32[32,10], index: 16, kind: input, shape index: {}]
  %s17 = inlined_call_operand.vmem [shape: f32[1,10], index: 17, kind: input, shape index: {}]
  %s18 = inlined_call_operand.hbm [shape: f32[2,1,10], index: 18, kind: output, shape index: {}]
  %s19 = sld [smem:[#allocation0]]
  $region105: #{vision_mamba_forward.1} parent=0
    _
  %s21 = ssub.s32 1, %s19
  %s22 = scalar_select 0, %s21, %s19
  $region1: #{vision_mamba_forward.1} parent=0
    #allocation7 [shape = 'u8[1024]{0}', space=vmem, size = 0x400, scoped, tag = 'output window, operand 0']
    #allocation8 [shape = 's32[2]{0}', space=sflag, size = 0x8, scoped, tag = 'scoped memory for vision_mamba_forward.1']
    %23 = vsyncpa [#allocation8], 0
    %s24 = scalar_lea.sflag [#allocation8], 1
    %25 = vsyncpa %s24, 0
    loop: start=0, step=1, limit=4
    $region2: #{vision_mamba_forward.1} parent=1 // loop_pre_header
      _
    $region3: #{vision_mamba_forward.1} parent=1 // loop_header
      %s27 = sphi 0, %s31
      %p28 = scmp.ge.s32.totalorder %s27, 4
      %s37 = sphi 0, %s39
      %s40 = sphi 0, %s37
      %s41 = sphi 0, %s40
      %s57 = sphi 0, %s41
      %s61 = sphi 0, %s61
      %s63 = sphi 0, %s61
      %s64 = sphi 0, %s63
      %s78 = sphi 0, %s64
      %s82 = sphi 0, %s82
      %s84 = sphi 0, %s82
      %s85 = sphi 0, %s84
      %s99 = sphi 0, %s85
      %s103 = sphi 0, %s103
      %s105 = sphi 0, %s103
      %s106 = sphi 0, %s105
      %s120 = sphi 0, %s106
      %s124 = sphi 0, %s124
      %s126 = sphi 0, %s124
      %s127 = sphi 0, %s126
      %s141 = sphi 0, %s127
      %s145 = sphi 0, %s145
      %s147 = sphi 0, %s145
      %s148 = sphi 0, %s147
      %s162 = sphi 0, %s148
      %s166 = sphi 0, %s166
      %s168 = sphi 0, %s166
      %s169 = sphi 0, %s168
      %s183 = sphi 0, %s169
      %s187 = sphi 0, %s187
      %s189 = sphi 0, %s187
      %s190 = sphi 0, %s189
      %s204 = sphi 0, %s190
      %s208 = sphi 0, %s208
      %s210 = sphi 0, %s208
      %s211 = sphi 0, %s210
      %s225 = sphi 0, %s211
      %s229 = sphi 0, %s229
      %s231 = sphi 0, %s229
      %s232 = sphi 0, %s231
      %s246 = sphi 0, %s232
      %s250 = sphi 0, %s250
      %s252 = sphi 0, %s250
      %s253 = sphi 0, %s252
      %s267 = sphi 0, %s253
      %s271 = sphi 0, %s271
      %s273 = sphi 0, %s271
      %s274 = sphi 0, %s273
      %s288 = sphi 0, %s274
      %s292 = sphi 0, %s292
      %s294 = sphi 0, %s292
      %s295 = sphi 0, %s294
      %s309 = sphi 0, %s295
      %s313 = sphi 0, %s313
      %s315 = sphi 0, %s313
      %s316 = sphi 0, %s315
      %s330 = sphi 0, %s316
      %s334 = sphi 0, %s334
      %s336 = sphi 0, %s334
      %s337 = sphi 0, %s336
      %s351 = sphi 0, %s337
      %s355 = sphi 0, %s355
      %s357 = sphi 0, %s355
      %s358 = sphi 0, %s357
      %s372 = sphi 0, %s358
      %s376 = sphi 0, %s376
      %s378 = sphi 0, %s376
      %s379 = sphi 0, %s378
      %s393 = sphi 0, %s379
      %s397 = sphi 0, %s397
      %s399 = sphi 0, %s397
      %s400 = sphi 0, %s399
      %s414 = sphi 0, %s400
      %s420 = sphi 0, %s422
      %s423 = sphi 0, %s420
      %s424 = sphi 0, %s423
      %s440 = sphi 0, %s424
    $region4: #{vision_mamba_forward.1} parent=1 // loop_header_branch
      %30 = sbr.rel (%p28) target = $region8
    $region5: #{vision_mamba_forward.1} parent=1 // loop_body
      %s32 = ssub.s32 %s27, 1
      %s33 = ssub.s32 %s27, 2
      %s34 = sadd.s32 %s27, 1
      %s35 = ssub.s32 %s27, %s34
      %p36 = scmp.eq.s32.totalorder %s35, 0
      %s38 = sadd.s32 %s37, 1
      %s39 = scalar_select %p36, %s37, %s38
      %p42 = pneg %p36
      %p43 = scmp.eq.s32.totalorder %s27, 1
      %p44 = por %p42, %p43
      %p45 = scmp.ne.s32.totalorder %s37, %s40
      %p46 = scmp.eq.s32.totalorder %s27, 0
      %p47 = por %p45, %p46
      %p48 = scmp.ne.s32.totalorder %s37, %s40
      %p49 = scmp.eq.s32.totalorder %s32, 1
      %p50 = por %p48, %p49
      %p51 = scmp.ne.s32.totalorder %s40, %s41
      %p52 = scmp.eq.s32.totalorder %s32, 0
      %p53 = por %p51, %p52
      %p54 = scmp.ne.s32.totalorder %s40, %s41
      %p55 = scmp.eq.s32.totalorder %s33, 1
      %p56 = por %p54, %p55
      %p58 = scmp.ne.s32.totalorder %s41, %s57
      %p59 = scmp.eq.s32.totalorder %s33, 0
      %p60 = por %p58, %p59
      %s62 = sadd.s32 %s61, 1
      %p65 = scmp.eq.s32.totalorder %s27, 1
      %p66 = scmp.ne.s32.totalorder %s61, %s63
      %p67 = scmp.eq.s32.totalorder %s27, 0
      %p68 = por %p66, %p67
      %p69 = scmp.ne.s32.totalorder %s61, %s63
      %p70 = scmp.eq.s32.totalorder %s32, 1
      %p71 = por %p69, %p70
      %p72 = scmp.ne.s32.totalorder %s63, %s64
      %p73 = scmp.eq.s32.totalorder %s32, 0
      %p74 = por %p72, %p73
      %p75 = scmp.ne.s32.totalorder %s63, %s64
      %p76 = scmp.eq.s32.totalorder %s33, 1
      %p77 = por %p75, %p76
      %p79 = scmp.ne.s32.totalorder %s64, %s78
      %p80 = scmp.eq.s32.totalorder %s33, 0
      %p81 = por %p79, %p80
      %s83 = sadd.s32 %s82, 1
      %p86 = scmp.eq.s32.totalorder %s27, 1
      %p87 = scmp.ne.s32.totalorder %s82, %s84
      %p88 = scmp.eq.s32.totalorder %s27, 0
      %p89 = por %p87, %p88
      %p90 = scmp.ne.s32.totalorder %s82, %s84
      %p91 = scmp.eq.s32.totalorder %s32, 1
      %p92 = por %p90, %p91
      %p93 = scmp.ne.s32.totalorder %s84, %s85
      %p94 = scmp.eq.s32.totalorder %s32, 0
      %p95 = por %p93, %p94
      %p96 = scmp.ne.s32.totalorder %s84, %s85
      %p97 = scmp.eq.s32.totalorder %s33, 1
      %p98 = por %p96, %p97
      %p100 = scmp.ne.s32.totalorder %s85, %s99
      %p101 = scmp.eq.s32.totalorder %s33, 0
      %p102 = por %p100, %p101
      %s104 = sadd.s32 %s103, 1
      %p107 = scmp.eq.s32.totalorder %s27, 1
      %p108 = scmp.ne.s32.totalorder %s103, %s105
      %p109 = scmp.eq.s32.totalorder %s27, 0
      %p110 = por %p108, %p109
      %p111 = scmp.ne.s32.totalorder %s103, %s105
      %p112 = scmp.eq.s32.totalorder %s32, 1
      %p113 = por %p111, %p112
      %p114 = scmp.ne.s32.totalorder %s105, %s106
      %p115 = scmp.eq.s32.totalorder %s32, 0
      %p116 = por %p114, %p115
      %p117 = scmp.ne.s32.totalorder %s105, %s106
      %p118 = scmp.eq.s32.totalorder %s33, 1
      %p119 = por %p117, %p118
      %p121 = scmp.ne.s32.totalorder %s106, %s120
      %p122 = scmp.eq.s32.totalorder %s33, 0
      %p123 = por %p121, %p122
      %s125 = sadd.s32 %s124, 1
      %p128 = scmp.eq.s32.totalorder %s27, 1
      %p129 = scmp.ne.s32.totalorder %s124, %s126
      %p130 = scmp.eq.s32.totalorder %s27, 0
      %p131 = por %p129, %p130
      %p132 = scmp.ne.s32.totalorder %s124, %s126
      %p133 = scmp.eq.s32.totalorder %s32, 1
      %p134 = por %p132, %p133
      %p135 = scmp.ne.s32.totalorder %s126, %s127
      %p136 = scmp.eq.s32.totalorder %s32, 0
      %p137 = por %p135, %p136
      %p138 = scmp.ne.s32.totalorder %s126, %s127
      %p139 = scmp.eq.s32.totalorder %s33, 1
      %p140 = por %p138, %p139
      %p142 = scmp.ne.s32.totalorder %s127, %s141
      %p143 = scmp.eq.s32.totalorder %s33, 0
      %p144 = por %p142, %p143
      %s146 = sadd.s32 %s145, 1
      %p149 = scmp.eq.s32.totalorder %s27, 1
      %p150 = scmp.ne.s32.totalorder %s145, %s147
      %p151 = scmp.eq.s32.totalorder %s27, 0
      %p152 = por %p150, %p151
      %p153 = scmp.ne.s32.totalorder %s145, %s147
      %p154 = scmp.eq.s32.totalorder %s32, 1
      %p155 = por %p153, %p154
      %p156 = scmp.ne.s32.totalorder %s147, %s148
      %p157 = scmp.eq.s32.totalorder %s32, 0
      %p158 = por %p156, %p157
      %p159 = scmp.ne.s32.totalorder %s147, %s148
      %p160 = scmp.eq.s32.totalorder %s33, 1
      %p161 = por %p159, %p160
      %p163 = scmp.ne.s32.totalorder %s148, %s162
      %p164 = scmp.eq.s32.totalorder %s33, 0
      %p165 = por %p163, %p164
      %s167 = sadd.s32 %s166, 1
      %p170 = scmp.eq.s32.totalorder %s27, 1
      %p171 = scmp.ne.s32.totalorder %s166, %s168
      %p172 = scmp.eq.s32.totalorder %s27, 0
      %p173 = por %p171, %p172
      %p174 = scmp.ne.s32.totalorder %s166, %s168
      %p175 = scmp.eq.s32.totalorder %s32, 1
      %p176 = por %p174, %p175
      %p177 = scmp.ne.s32.totalorder %s168, %s169
      %p178 = scmp.eq.s32.totalorder %s32, 0
      %p179 = por %p177, %p178
      %p180 = scmp.ne.s32.totalorder %s168, %s169
      %p181 = scmp.eq.s32.totalorder %s33, 1
      %p182 = por %p180, %p181
      %p184 = scmp.ne.s32.totalorder %s169, %s183
      %p185 = scmp.eq.s32.totalorder %s33, 0
      %p186 = por %p184, %p185
      %s188 = sadd.s32 %s187, 1
      %p191 = scmp.eq.s32.totalorder %s27, 1
      %p192 = scmp.ne.s32.totalorder %s187, %s189
      %p193 = scmp.eq.s32.totalorder %s27, 0
      %p194 = por %p192, %p193
      %p195 = scmp.ne.s32.totalorder %s187, %s189
      %p196 = scmp.eq.s32.totalorder %s32, 1
      %p197 = por %p195, %p196
      %p198 = scmp.ne.s32.totalorder %s189, %s190
      %p199 = scmp.eq.s32.totalorder %s32, 0
      %p200 = por %p198, %p199
      %p201 = scmp.ne.s32.totalorder %s189, %s190
      %p202 = scmp.eq.s32.totalorder %s33, 1
      %p203 = por %p201, %p202
      %p205 = scmp.ne.s32.totalorder %s190, %s204
      %p206 = scmp.eq.s32.totalorder %s33, 0
      %p207 = por %p205, %p206
      %s209 = sadd.s32 %s208, 1
      %p212 = scmp.eq.s32.totalorder %s27, 1
      %p213 = scmp.ne.s32.totalorder %s208, %s210
      %p214 = scmp.eq.s32.totalorder %s27, 0
      %p215 = por %p213, %p214
      %p216 = scmp.ne.s32.totalorder %s208, %s210
      %p217 = scmp.eq.s32.totalorder %s32, 1
      %p218 = por %p216, %p217
      %p219 = scmp.ne.s32.totalorder %s210, %s211
      %p220 = scmp.eq.s32.totalorder %s32, 0
      %p221 = por %p219, %p220
      %p222 = scmp.ne.s32.totalorder %s210, %s211
      %p223 = scmp.eq.s32.totalorder %s33, 1
      %p224 = por %p222, %p223
      %p226 = scmp.ne.s32.totalorder %s211, %s225
      %p227 = scmp.eq.s32.totalorder %s33, 0
      %p228 = por %p226, %p227
      %s230 = sadd.s32 %s229, 1
      %p233 = scmp.eq.s32.totalorder %s27, 1
      %p234 = scmp.ne.s32.totalorder %s229, %s231
      %p235 = scmp.eq.s32.totalorder %s27, 0
      %p236 = por %p234, %p235
      %p237 = scmp.ne.s32.totalorder %s229, %s231
      %p238 = scmp.eq.s32.totalorder %s32, 1
      %p239 = por %p237, %p238
      %p240 = scmp.ne.s32.totalorder %s231, %s232
      %p241 = scmp.eq.s32.totalorder %s32, 0
      %p242 = por %p240, %p241
      %p243 = scmp.ne.s32.totalorder %s231, %s232
      %p244 = scmp.eq.s32.totalorder %s33, 1
      %p245 = por %p243, %p244
      %p247 = scmp.ne.s32.totalorder %s232, %s246
      %p248 = scmp.eq.s32.totalorder %s33, 0
      %p249 = por %p247, %p248
      %s251 = sadd.s32 %s250, 1
      %p254 = scmp.eq.s32.totalorder %s27, 1
      %p255 = scmp.ne.s32.totalorder %s250, %s252
      %p256 = scmp.eq.s32.totalorder %s27, 0
      %p257 = por %p255, %p256
      %p258 = scmp.ne.s32.totalorder %s250, %s252
      %p259 = scmp.eq.s32.totalorder %s32, 1
      %p260 = por %p258, %p259
      %p261 = scmp.ne.s32.totalorder %s252, %s253
      %p262 = scmp.eq.s32.totalorder %s32, 0
      %p263 = por %p261, %p262
      %p264 = scmp.ne.s32.totalorder %s252, %s253
      %p265 = scmp.eq.s32.totalorder %s33, 1
      %p266 = por %p264, %p265
      %p268 = scmp.ne.s32.totalorder %s253, %s267
      %p269 = scmp.eq.s32.totalorder %s33, 0
      %p270 = por %p268, %p269
      %s272 = sadd.s32 %s271, 1
      %p275 = scmp.eq.s32.totalorder %s27, 1
      %p276 = scmp.ne.s32.totalorder %s271, %s273
      %p277 = scmp.eq.s32.totalorder %s27, 0
      %p278 = por %p276, %p277
      %p279 = scmp.ne.s32.totalorder %s271, %s273
      %p280 = scmp.eq.s32.totalorder %s32, 1
      %p281 = por %p279, %p280
      %p282 = scmp.ne.s32.totalorder %s273, %s274
      %p283 = scmp.eq.s32.totalorder %s32, 0
      %p284 = por %p282, %p283
      %p285 = scmp.ne.s32.totalorder %s273, %s274
      %p286 = scmp.eq.s32.totalorder %s33, 1
      %p287 = por %p285, %p286
      %p289 = scmp.ne.s32.totalorder %s274, %s288
      %p290 = scmp.eq.s32.totalorder %s33, 0
      %p291 = por %p289, %p290
      %s293 = sadd.s32 %s292, 1
      %p296 = scmp.eq.s32.totalorder %s27, 1
      %p297 = scmp.ne.s32.totalorder %s292, %s294
      %p298 = scmp.eq.s32.totalorder %s27, 0
      %p299 = por %p297, %p298
      %p300 = scmp.ne.s32.totalorder %s292, %s294
      %p301 = scmp.eq.s32.totalorder %s32, 1
      %p302 = por %p300, %p301
      %p303 = scmp.ne.s32.totalorder %s294, %s295
      %p304 = scmp.eq.s32.totalorder %s32, 0
      %p305 = por %p303, %p304
      %p306 = scmp.ne.s32.totalorder %s294, %s295
      %p307 = scmp.eq.s32.totalorder %s33, 1
      %p308 = por %p306, %p307
      %p310 = scmp.ne.s32.totalorder %s295, %s309
      %p311 = scmp.eq.s32.totalorder %s33, 0
      %p312 = por %p310, %p311
      %s314 = sadd.s32 %s313, 1
      %p317 = scmp.eq.s32.totalorder %s27, 1
      %p318 = scmp.ne.s32.totalorder %s313, %s315
      %p319 = scmp.eq.s32.totalorder %s27, 0
      %p320 = por %p318, %p319
      %p321 = scmp.ne.s32.totalorder %s313, %s315
      %p322 = scmp.eq.s32.totalorder %s32, 1
      %p323 = por %p321, %p322
      %p324 = scmp.ne.s32.totalorder %s315, %s316
      %p325 = scmp.eq.s32.totalorder %s32, 0
      %p326 = por %p324, %p325
      %p327 = scmp.ne.s32.totalorder %s315, %s316
      %p328 = scmp.eq.s32.totalorder %s33, 1
      %p329 = por %p327, %p328
      %p331 = scmp.ne.s32.totalorder %s316, %s330
      %p332 = scmp.eq.s32.totalorder %s33, 0
      %p333 = por %p331, %p332
      %s335 = sadd.s32 %s334, 1
      %p338 = scmp.eq.s32.totalorder %s27, 1
      %p339 = scmp.ne.s32.totalorder %s334, %s336
      %p340 = scmp.eq.s32.totalorder %s27, 0
      %p341 = por %p339, %p340
      %p342 = scmp.ne.s32.totalorder %s334, %s336
      %p343 = scmp.eq.s32.totalorder %s32, 1
      %p344 = por %p342, %p343
      %p345 = scmp.ne.s32.totalorder %s336, %s337
      %p346 = scmp.eq.s32.totalorder %s32, 0
      %p347 = por %p345, %p346
      %p348 = scmp.ne.s32.totalorder %s336, %s337
      %p349 = scmp.eq.s32.totalorder %s33, 1
      %p350 = por %p348, %p349
      %p352 = scmp.ne.s32.totalorder %s337, %s351
      %p353 = scmp.eq.s32.totalorder %s33, 0
      %p354 = por %p352, %p353
      %s356 = sadd.s32 %s355, 1
      %p359 = scmp.eq.s32.totalorder %s27, 1
      %p360 = scmp.ne.s32.totalorder %s355, %s357
      %p361 = scmp.eq.s32.totalorder %s27, 0
      %p362 = por %p360, %p361
      %p363 = scmp.ne.s32.totalorder %s355, %s357
      %p364 = scmp.eq.s32.totalorder %s32, 1
      %p365 = por %p363, %p364
      %p366 = scmp.ne.s32.totalorder %s357, %s358
      %p367 = scmp.eq.s32.totalorder %s32, 0
      %p368 = por %p366, %p367
      %p369 = scmp.ne.s32.totalorder %s357, %s358
      %p370 = scmp.eq.s32.totalorder %s33, 1
      %p371 = por %p369, %p370
      %p373 = scmp.ne.s32.totalorder %s358, %s372
      %p374 = scmp.eq.s32.totalorder %s33, 0
      %p375 = por %p373, %p374
      %s377 = sadd.s32 %s376, 1
      %p380 = scmp.eq.s32.totalorder %s27, 1
      %p381 = scmp.ne.s32.totalorder %s376, %s378
      %p382 = scmp.eq.s32.totalorder %s27, 0
      %p383 = por %p381, %p382
      %p384 = scmp.ne.s32.totalorder %s376, %s378
      %p385 = scmp.eq.s32.totalorder %s32, 1
      %p386 = por %p384, %p385
      %p387 = scmp.ne.s32.totalorder %s378, %s379
      %p388 = scmp.eq.s32.totalorder %s32, 0
      %p389 = por %p387, %p388
      %p390 = scmp.ne.s32.totalorder %s378, %s379
      %p391 = scmp.eq.s32.totalorder %s33, 1
      %p392 = por %p390, %p391
      %p394 = scmp.ne.s32.totalorder %s379, %s393
      %p395 = scmp.eq.s32.totalorder %s33, 0
      %p396 = por %p394, %p395
      %s398 = sadd.s32 %s397, 1
      %p401 = scmp.eq.s32.totalorder %s27, 1
      %p402 = scmp.ne.s32.totalorder %s397, %s399
      %p403 = scmp.eq.s32.totalorder %s27, 0
      %p404 = por %p402, %p403
      %p405 = scmp.ne.s32.totalorder %s397, %s399
      %p406 = scmp.eq.s32.totalorder %s32, 1
      %p407 = por %p405, %p406
      %p408 = scmp.ne.s32.totalorder %s399, %s400
      %p409 = scmp.eq.s32.totalorder %s32, 0
      %p410 = por %p408, %p409
      %p411 = scmp.ne.s32.totalorder %s399, %s400
      %p412 = scmp.eq.s32.totalorder %s33, 1
      %p413 = por %p411, %p412
      %p415 = scmp.ne.s32.totalorder %s400, %s414
      %p416 = scmp.eq.s32.totalorder %s33, 0
      %p417 = por %p415, %p416
      %s418 = ssub.s32 %s27, %s34
      %p419 = scmp.eq.s32.totalorder %s418, 0
      %s421 = sadd.s32 %s420, 1
      %s422 = scalar_select %p419, %s420, %s421
      %p425 = pneg %p419
      %p426 = scmp.eq.s32.totalorder %s27, 1
      %p427 = por %p425, %p426
      %p428 = scmp.ne.s32.totalorder %s420, %s423
      %p429 = scmp.eq.s32.totalorder %s27, 0
      %p430 = por %p428, %p429
      %p431 = scmp.ne.s32.totalorder %s420, %s423
      %p432 = scmp.eq.s32.totalorder %s32, 1
      %p433 = por %p431, %p432
      %p434 = scmp.ne.s32.totalorder %s423, %s424
      %p435 = scmp.eq.s32.totalorder %s32, 0
      %p436 = por %p434, %p435
      %p437 = scmp.ne.s32.totalorder %s423, %s424
      %p438 = scmp.eq.s32.totalorder %s33, 1
      %p439 = por %p437, %p438
      %p441 = scmp.ne.s32.totalorder %s424, %s440
      %p442 = scmp.eq.s32.totalorder %s33, 0
      %p443 = por %p441, %p442
      %p444 = scmp.le.s32.totalorder 1, %s27
      %p445 = scmp.lt.s32.totalorder %s27, 3
      %p446 = pnand %p444, %p445
      %p447 = pneg %p446
      // Predicated region
      $region9: #{vision_mamba_forward.1} parent=5 // pred_check
        _
      $region10: #{vision_mamba_forward.1} parent=5 // pred_check_branch
        %449 = sbr.rel (%p446) target = $region12
      $region11: #{vision_mamba_forward.1} parent=5 // pred_region
        %s450 = ssub.s32 %s27, 1
        // Predicated region
        $region13: #{vision_mamba_forward.1} parent=11 // pred_check
          %p451 = pneg %p74
        $region14: #{vision_mamba_forward.1} parent=11 // pred_check_branch
          %453 = sbr.rel (%p451) target = $region16
        $region15: #{vision_mamba_forward.1} parent=11 // pred_region
          _
        $region16: #{vision_mamba_forward.1} parent=11 // pred_fallthru
          _
        // Predicated region
        $region17: #{vision_mamba_forward.1} parent=11 // pred_check
          %p454 = pneg %p95
        $region18: #{vision_mamba_forward.1} parent=11 // pred_check_branch
          %456 = sbr.rel (%p454) target = $region20
        $region19: #{vision_mamba_forward.1} parent=11 // pred_region
          _
        $region20: #{vision_mamba_forward.1} parent=11 // pred_fallthru
          _
        // Predicated region
        $region21: #{vision_mamba_forward.1} parent=11 // pred_check
          %p457 = pneg %p116
        $region22: #{vision_mamba_forward.1} parent=11 // pred_check_branch
          %459 = sbr.rel (%p457) target = $region24
        $region23: #{vision_mamba_forward.1} parent=11 // pred_region
          _
        $region24: #{vision_mamba_forward.1} parent=11 // pred_fallthru
          _
        // Predicated region
        $region25: #{vision_mamba_forward.1} parent=11 // pred_check
          %p460 = pneg %p137
        $region26: #{vision_mamba_forward.1} parent=11 // pred_check_branch
          %462 = sbr.rel (%p460) target = $region28
        $region27: #{vision_mamba_forward.1} parent=11 // pred_region
          _
        $region28: #{vision_mamba_forward.1} parent=11 // pred_fallthru
          _
        // Predicated region
        $region29: #{vision_mamba_forward.1} parent=11 // pred_check
          %p463 = pneg %p158
        $region30: #{vision_mamba_forward.1} parent=11 // pred_check_branch
          %465 = sbr.rel (%p463) target = $region32
        $region31: #{vision_mamba_forward.1} parent=11 // pred_region
          _
        $region32: #{vision_mamba_forward.1} parent=11 // pred_fallthru
          _
        // Predicated region
        $region33: #{vision_mamba_forward.1} parent=11 // pred_check
          %p466 = pneg %p179
        $region34: #{vision_mamba_forward.1} parent=11 // pred_check_branch
          %468 = sbr.rel (%p466) target = $region36
        $region35: #{vision_mamba_forward.1} parent=11 // pred_region
          _
        $region36: #{vision_mamba_forward.1} parent=11 // pred_fallthru
          _
        // Predicated region
        $region37: #{vision_mamba_forward.1} parent=11 // pred_check
          %p469 = pneg %p200
        $region38: #{vision_mamba_forward.1} parent=11 // pred_check_branch
          %471 = sbr.rel (%p469) target = $region40
        $region39: #{vision_mamba_forward.1} parent=11 // pred_region
          _
        $region40: #{vision_mamba_forward.1} parent=11 // pred_fallthru
          _
        // Predicated region
        $region41: #{vision_mamba_forward.1} parent=11 // pred_check
          %p472 = pneg %p221
        $region42: #{vision_mamba_forward.1} parent=11 // pred_check_branch
          %474 = sbr.rel (%p472) target = $region44
        $region43: #{vision_mamba_forward.1} parent=11 // pred_region
          _
        $region44: #{vision_mamba_forward.1} parent=11 // pred_fallthru
          _
        // Predicated region
        $region45: #{vision_mamba_forward.1} parent=11 // pred_check
          %p475 = pneg %p242
        $region46: #{vision_mamba_forward.1} parent=11 // pred_check_branch
          %477 = sbr.rel (%p475) target = $region48
        $region47: #{vision_mamba_forward.1} parent=11 // pred_region
          _
        $region48: #{vision_mamba_forward.1} parent=11 // pred_fallthru
          _
        // Predicated region
        $region49: #{vision_mamba_forward.1} parent=11 // pred_check
          %p478 = pneg %p263
        $region50: #{vision_mamba_forward.1} parent=11 // pred_check_branch
          %480 = sbr.rel (%p478) target = $region52
        $region51: #{vision_mamba_forward.1} parent=11 // pred_region
          _
        $region52: #{vision_mamba_forward.1} parent=11 // pred_fallthru
          _
        // Predicated region
        $region53: #{vision_mamba_forward.1} parent=11 // pred_check
          %p481 = pneg %p284
        $region54: #{vision_mamba_forward.1} parent=11 // pred_check_branch
          %483 = sbr.rel (%p481) target = $region56
        $region55: #{vision_mamba_forward.1} parent=11 // pred_region
          _
        $region56: #{vision_mamba_forward.1} parent=11 // pred_fallthru
          _
        // Predicated region
        $region57: #{vision_mamba_forward.1} parent=11 // pred_check
          %p484 = pneg %p305
        $region58: #{vision_mamba_forward.1} parent=11 // pred_check_branch
          %486 = sbr.rel (%p484) target = $region60
        $region59: #{vision_mamba_forward.1} parent=11 // pred_region
          _
        $region60: #{vision_mamba_forward.1} parent=11 // pred_fallthru
          _
        // Predicated region
        $region61: #{vision_mamba_forward.1} parent=11 // pred_check
          %p487 = pneg %p326
        $region62: #{vision_mamba_forward.1} parent=11 // pred_check_branch
          %489 = sbr.rel (%p487) target = $region64
        $region63: #{vision_mamba_forward.1} parent=11 // pred_region
          _
        $region64: #{vision_mamba_forward.1} parent=11 // pred_fallthru
          _
        // Predicated region
        $region65: #{vision_mamba_forward.1} parent=11 // pred_check
          %p490 = pneg %p347
        $region66: #{vision_mamba_forward.1} parent=11 // pred_check_branch
          %492 = sbr.rel (%p490) target = $region68
        $region67: #{vision_mamba_forward.1} parent=11 // pred_region
          _
        $region68: #{vision_mamba_forward.1} parent=11 // pred_fallthru
          _
        // Predicated region
        $region69: #{vision_mamba_forward.1} parent=11 // pred_check
          %p493 = pneg %p368
        $region70: #{vision_mamba_forward.1} parent=11 // pred_check_branch
          %495 = sbr.rel (%p493) target = $region72
        $region71: #{vision_mamba_forward.1} parent=11 // pred_region
          _
        $region72: #{vision_mamba_forward.1} parent=11 // pred_fallthru
          _
        // Predicated region
        $region73: #{vision_mamba_forward.1} parent=11 // pred_check
          %p496 = pneg %p389
        $region74: #{vision_mamba_forward.1} parent=11 // pred_check_branch
          %498 = sbr.rel (%p496) target = $region76
        $region75: #{vision_mamba_forward.1} parent=11 // pred_region
          _
        $region76: #{vision_mamba_forward.1} parent=11 // pred_fallthru
          _
        // Predicated region
        $region77: #{vision_mamba_forward.1} parent=11 // pred_check
          %p499 = pneg %p410
        $region78: #{vision_mamba_forward.1} parent=11 // pred_check_branch
          %501 = sbr.rel (%p499) target = $region80
        $region79: #{vision_mamba_forward.1} parent=11 // pred_region
          _
        $region80: #{vision_mamba_forward.1} parent=11 // pred_fallthru
          _
      $region12: #{vision_mamba_forward.1} parent=5 // pred_fallthru
        _
      %p502 = scmp.lt.s32.totalorder %s27, 2
      // Predicated region
      $region81: #{vision_mamba_forward.1} parent=5 // pred_check
        %p503 = pneg %p502
      $region82: #{vision_mamba_forward.1} parent=5 // pred_check_branch
        %505 = sbr.rel (%p503) target = $region84
      $region83: #{vision_mamba_forward.1} parent=5 // pred_region
        // Predicated region
        $region85: #{vision_mamba_forward.1} parent=83 // pred_check
          %p506 = pneg %p47
        $region86: #{vision_mamba_forward.1} parent=83 // pred_check_branch
          %508 = sbr.rel (%p506) target = $region88
        $region87: #{vision_mamba_forward.1} parent=83 // pred_region
          %p509 = scmp.lt.s32.totalorder %s27, 1
          %s510 = scalar_select %p509, %s27, 1
          %s511 = smul.addr %s510, 4
          %s512 = smul.addr %s511, 8
          %s513 = scalar_lea.vmem %s0, %s512
        $region88: #{vision_mamba_forward.1} parent=83 // pred_fallthru
          _
      $region84: #{vision_mamba_forward.1} parent=5 // pred_fallthru
        _
      %p514 = scmp.le.s32.totalorder 1, %s27
      %p515 = scmp.lt.s32.totalorder %s27, 3
      %p516 = pnand %p514, %p515
      %p517 = pneg %p516
      // Predicated region
      $region89: #{vision_mamba_forward.1} parent=5 // pred_check
        _
      $region90: #{vision_mamba_forward.1} parent=5 // pred_check_branch
        %519 = sbr.rel (%p516) target = $region92
      $region91: #{vision_mamba_forward.1} parent=5 // pred_region
        %s520 = ssub.s32 %s27, 1
        %p521 = scmp.lt.s32.totalorder %s32, 1
        %s522 = scalar_select %p521, %s32, 1
        %s523 = smul.addr %s522, 4
        %s524 = smul.addr %s523, 8
        %s525 = scalar_lea.vmem %s0, %s524
        %p526 = pneg %p53
        %p527 = pneg %p50
        %p528 = pneg %p74
        %p529 = pneg %p71
        %p530 = pneg %p95
        %p531 = pneg %p92
        %p532 = pneg %p116
        %p533 = pneg %p113
        %p534 = pneg %p137
        %p535 = pneg %p134
        %p536 = pneg %p158
        %p537 = pneg %p155
        %p538 = pneg %p179
        %p539 = pneg %p176
        %p540 = pneg %p200
        %p541 = pneg %p197
        %p542 = pneg %p221
        %p543 = pneg %p218
        %p544 = pneg %p242
        %p545 = pneg %p239
        %p546 = pneg %p263
        %p547 = pneg %p260
        %p548 = pneg %p284
        %p549 = pneg %p281
        %p550 = pneg %p305
        %p551 = pneg %p302
        %p552 = pneg %p326
        %p553 = pneg %p323
        %p554 = pneg %p347
        %p555 = pneg %p344
        %p556 = pneg %p368
        %p557 = pneg %p365
        %p558 = pneg %p389
        %p559 = pneg %p386
        %p560 = pneg %p410
        %p561 = pneg %p407
        %p562 = pneg %p436
        %p563 = pneg %p433
        %s564 = sand.u32 %s423, 1
        %s565 = scalar_lea.sflag [#allocation8], %s564
        %s566 = sand.u32 %s423, 1
        %s567 = scalar_lea.vmem [#allocation7], %s566
        %p568 = scmp.lt.s32.totalorder %s32, 1
        %s569 = scalar_select %p568, %s32, 1
        %s570 = smul.addr %s569, 4
        %s571 = smul.addr %s570, 8
        %s572 = scalar_lea.vmem %s0, %s571
        %v574 = vlaneseq
        %v575 = vand.u32 %v574, 127
        %vm576 = vcmp.lt.s32.totalorder %v575, 64
        %v577 = vld [vmem:[%s572] sm:$0xff]
        %v578 = vld [vmem:[%s572 + $0x8] sm:$0xff]
        %v579 = vld [vmem:[%s572 + $0x10] sm:$0xff]
        %v580 = vld [vmem:[%s572 + $0x18] sm:$0xff]
        %v581 = vpack.c.bf16 %v579, %v577
        %v582 = vpack.c.bf16 %v580, %v578
        %v583 = vld [vmem:[%s1] sm:$0xff]
        %v584 = vld [vmem:[%s1 + $0x8] sm:$0xff]
        %v585 = vld [vmem:[%s1 + $0x10] sm:$0xff]
        %v586 = vld [vmem:[%s1 + $0x18] sm:$0xff]
        %v587 = vld [vmem:[%s1 + $0x20] sm:$0xff]
        %v588 = vld [vmem:[%s1 + $0x28] sm:$0xff]
        %v589 = vld [vmem:[%s1 + $0x30] sm:$0xff]
        %v590 = vld [vmem:[%s1 + $0x38] sm:$0xff]
        %v591 = vld [vmem:[%s1 + $0x40] sm:$0xff]
        %v592 = vld [vmem:[%s1 + $0x48] sm:$0xff]
        %v593 = vld [vmem:[%s1 + $0x50] sm:$0xff]
        %v594 = vld [vmem:[%s1 + $0x58] sm:$0xff]
        %v595 = vld [vmem:[%s1 + $0x60] sm:$0xff]
        %v596 = vld [vmem:[%s1 + $0x68] sm:$0xff]
        %v597 = vld [vmem:[%s1 + $0x70] sm:$0xff]
        %v598 = vld [vmem:[%s1 + $0x78] sm:$0xff]
        %v599 = vld [vmem:[%s1 + $0x80] sm:$0xff]
        %v600 = vld [vmem:[%s1 + $0x88] sm:$0xff]
        %v601 = vld [vmem:[%s1 + $0x90] sm:$0xff]
        %v602 = vld [vmem:[%s1 + $0x98] sm:$0xff]
        %v603 = vld [vmem:[%s1 + $0xa0] sm:$0xff]
        %v604 = vld [vmem:[%s1 + $0xa8] sm:$0xff]
        %v605 = vld [vmem:[%s1 + $0xb0] sm:$0xff]
        %v606 = vld [vmem:[%s1 + $0xb8] sm:$0xff]
        %v607 = vpack.c.bf16 %v584, %v583
        %v608 = vpack.c.bf16 %v586, %v585
        %v609 = vpack.c.bf16 %v588, %v587
        %v610 = vpack.c.bf16 %v590, %v589
        %v611 = vpack.c.bf16 %v592, %v591
        %v612 = vpack.c.bf16 %v594, %v593
        %v613 = vpack.c.bf16 %v596, %v595
        %v614 = vpack.c.bf16 %v598, %v597
        %v615 = vpack.c.bf16 %v600, %v599
        %v616 = vpack.c.bf16 %v602, %v601
        %v617 = vpack.c.bf16 %v604, %v603
        %v618 = vpack.c.bf16 %v606, %v605
        %v619 = vld [vmem:[%s2] sm:$0x1]
        %v621 = vlaneseq
        %v622 = vshrl.u32 %v621, 7
        %v623 = vsub.s32 0, %v622
        %v624 = vrot.slane %v619, %v623
        %vm626 = vcmask 523264
        %v628 = vsel %vm626, %v582, 0
        %630 = vmatprep.subr.bf16.mxu0 0
        %631 = vmatpush1.bf16.msra.mxu0 %v607
        %632 = vmatprep.subr.bf16.mxu0 0
        %633 = vmatpush1.bf16.msra.mxu0 %v608
        %634 = vmatprep.subr.bf16.mxu0 0
        %635 = vmatpush1.bf16.msra.mxu0 %v609
        %636 = vmatprep.subr.bf16.mxu0 0
        %637 = vmatpush1.bf16.msra.mxu0 %v610
        %638 = vmatprep.subr.bf16.mxu0 0
        %639 = vmatpush1.bf16.msra.mxu0 %v611
        %640 = vmatprep.subr.bf16.mxu0 0
        %641 = vmatpush1.bf16.msra.mxu0 %v612
        %642 = vmatprep.subr.bf16.mxu0 0
        %643 = vmatpush1.bf16.msra.mxu0 %v613
        %644 = vmatprep.subr.bf16.mxu0 0
        %645 = vmatpush1.bf16.msra.mxu0 %v614
        %646 = vmatprep.subr.bf16.mxu0 0
        %647 = vmatpush1.bf16.msra.mxu0 %v615
        %648 = vmatprep.subr.bf16.mxu0 0
        %649 = vmatpush1.bf16.msra.mxu0 %v616
        %650 = vmatprep.subr.bf16.mxu0 0
        %651 = vmatpush1.bf16.msra.mxu0 %v617
        %652 = vmatprep.subr.bf16.mxu0 0
        %653 = vmatpush1.bf16.msra.mxu0 %v618
        %654 = vmatprep.subr.bf16.mxu0 0
        %655 = vmatpush1.bf16.msra.mxu0 0
        %656 = vmatprep.subr.bf16.mxu0 0
        %657 = vmatpush1.bf16.msra.mxu0 0
        %658 = vmatprep.subr.bf16.mxu0 0
        %659 = vmatpush1.bf16.msra.mxu0 0
        %660 = vmatprep.subr.bf16.mxu0 0
        %661 = vmatpush1.bf16.msra.mxu0 0
        %662 = vmatprep.mubr.bf16.mxu0 %v628
        %663 = vmatmul.mubr.bf16.gmra.mrb[0].mxu0 %v581
        %v664 = vpop.f32.mrb[0].mxu0
        %v665 = vadd.f32 %v624, %v664
        %v666 = vpop.f32.mrb[0].mxu0
        %v667 = vpop.f32.mrb[0].mxu0
        %v668 = vadd.f32 %v624, %v667
        %v669 = vpop.f32.mrb[0].mxu0
        %670 = vdwg.mxu0
        %v671 = vld [vmem:[%s3] sm:$0x1]
        %v672 = vld [vmem:[%s3 + $0x1] sm:$0xff]
        %v673 = vld [vmem:[%s3 + $0x9] sm:$0xff]
        %v674 = vadd.f32 %v665, %v672
        %v675 = vadd.f32 %v668, %v673
        %vm678 = vcmask 1040384
        %v679 = vrot.slane %v674, 7
        %v680 = vrot.slane %v675, 7
        %v681 = vsel %vm678, %v679, %v680
        %v685 = vsel %vm678, %v671, %v679
        %v686 = vld [vmem:[%s4] sm:$0xff]
        %v687 = vld [vmem:[%s4 + $0x8] sm:$0xff]
        %v688 = vld [vmem:[%s4 + $0x10] sm:$0x1]
        %v689 = vadd.f32 %v685, 0.0
        %v690 = vadd.f32 %v681, 0.0
        %v691 = vadd.f32 %v680, 0.0
        %v692 = vmul.f32 %v689, %v689
        %v693 = vmul.f32 %v690, %v690
        %v694 = vmul.f32 %v691, %v691
        %vm695 = vcmask 261120
        %v696 = vsel %vm695, %v692, 0.0
        %697 = vadd.xlane.f32.xlu0 %v696
        %v698 = vpop.xlane.xlu0 %697
        %v699 = vsel %vm695, %v693, 0.0
        %700 = vadd.xlane.f32.xlu0 %v699
        %v701 = vpop.xlane.xlu0 %700
        %vm702 = vcmask 253952
        %v703 = vsel %vm702, %v694, 0.0
        %704 = vadd.xlane.f32.xlu0 %v703
        %v705 = vpop.xlane.xlu0 %704
        %v706 = vrcp.pop 32.0
        %v707 = vmul.f32 %v698, %v706
        %v708 = vmul.f32 %v701, %v706
        %v709 = vmul.f32 %v705, %v706
        %v710 = vadd.f32 %v707, 1e-05
        %v711 = vadd.f32 %v708, 1e-05
        %v712 = vadd.f32 %v709, 1e-05
        %v713 = vrsqrt.pop %v710
        %v714 = vrsqrt.pop %v711
        %v715 = vrsqrt.pop %v712
        %v716 = vmul.f32 %v689, %v713
        %v717 = vmul.f32 %v690, %v714
        %v718 = vmul.f32 %v691, %v715
        %v719 = vld [vmem:[%s5] sm:$0x1]
        %v721 = vlaneseq
        %v722 = vshrl.u32 %v721, 7
        %v723 = vsub.s32 0, %v722
        %v724 = vrot.slane %v719, %v723
        %v726 = vmul.f32 %v716, %v724
        %v727 = vmul.f32 %v717, %v724
        %v728 = vmul.f32 %v718, %v724
        %v729 = vpack.c.bf16 %v727, %v726
        %v730 = vpack.c.bf16 %v728, %v728
        %v731 = vld [vmem:[%s6] sm:$0xff]
        %v732 = vld [vmem:[%s6 + $0x8] sm:$0xff]
        %v733 = vld [vmem:[%s6 + $0x10] sm:$0xff]
        %v734 = vld [vmem:[%s6 + $0x18] sm:$0xff]
        %v735 = vpack.c.bf16 %v732, %v731
        %v736 = vpack.c.bf16 %v734, %v733
        %v738 = vsel %vm695, %v729, 0
        %v741 = vsel %vm695, %v730, 0
        %743 = vmatprep.subr.bf16.mxu0 0
        %744 = vmatpush1.bf16.msra.mxu0 %v735
        %745 = vmatprep.subr.bf16.mxu0 0
        %746 = vmatpush1.bf16.msra.mxu0 %v736
        %747 = vmatprep.subr.bf16.mxu0 0
        %748 = vmatpush1.bf16.msra.mxu0 0
        %749 = vmatprep.subr.bf16.mxu0 0
        %750 = vmatpush1.bf16.msra.mxu0 0
        %751 = vmatprep.subr.bf16.mxu0 0
        %752 = vmatpush1.bf16.msra.mxu0 0
        %753 = vmatprep.subr.bf16.mxu0 0
        %754 = vmatpush1.bf16.msra.mxu0 0
        %755 = vmatprep.subr.bf16.mxu0 0
        %756 = vmatpush1.bf16.msra.mxu0 0
        %757 = vmatprep.subr.bf16.mxu0 0
        %758 = vmatpush1.bf16.msra.mxu0 0
        %759 = vmatprep.subr.bf16.mxu0 0
        %760 = vmatpush1.bf16.msra.mxu0 0
        %761 = vmatprep.subr.bf16.mxu0 0
        %762 = vmatpush1.bf16.msra.mxu0 0
        %763 = vmatprep.subr.bf16.mxu0 0
        %764 = vmatpush1.bf16.msra.mxu0 0
        %765 = vmatprep.subr.bf16.mxu0 0
        %766 = vmatpush1.bf16.msra.mxu0 0
        %767 = vmatprep.subr.bf16.mxu0 0
        %768 = vmatpush1.bf16.msra.mxu0 0
        %769 = vmatprep.subr.bf16.mxu0 0
        %770 = vmatpush1.bf16.msra.mxu0 0
        %771 = vmatprep.subr.bf16.mxu0 0
        %772 = vmatpush1.bf16.msra.mxu0 0
        %773 = vmatprep.subr.bf16.mxu0 0
        %774 = vmatpush1.bf16.msra.mxu0 0
        %775 = vmatprep.mubr.bf16.mxu0 0
        %776 = vmatmul.mubr.bf16.gmra.mrb[0].mxu0 %v738
        %v777 = vpop.f32.mrb[0].mxu0
        %v778 = vadd.f32 0.0, %v777
        %v779 = vpop.f32.mrb[0].mxu0
        %v780 = vpop.f32.mrb[0].mxu0
        %v781 = vadd.f32 0.0, %v780
        %v782 = vpop.f32.mrb[0].mxu0
        %783 = vmatprep.mubr.bf16.mxu0 0
        %784 = vmatmul.mubr.bf16.gmra.mrb[0].mxu0 %v741
        %v785 = vpop.f32.mrb[0].mxu0
        %v786 = vadd.f32 0.0, %v785
        %v787 = vpop.f32.mrb[0].mxu0
        %v788 = vpop.f32.mrb[0].mxu0
        %v789 = vpop.f32.mrb[0].mxu0
        %790 = vdwg.mxu0
        %vm791 = vcmask 138240
        %v793 = vsel %vm791, %v686, 0
        %v796 = vsel %vm791, %v687, 0
        %v799 = vsel %vm791, %v688, 0
        %v802 = vsel %vm678, %v786, 0
        %804 = vmatprep.subr.mxu0 0.0
        %805 = vmatpush1.msra.mxu0 %v778
        %806 = vmatprep.subr.mxu0 0.0
        %807 = vmatpush1.msra.mxu0 %v781
        %808 = vmatprep.subr.mxu0 0.0
        %809 = vmatpush1.msra.mxu0 %v802
        %810 = vmatprep.subr.mxu0 0.0
        %811 = vmatpush1.msra.mxu0 0.0
        %812 = vmatprep.subr.mxu0 0.0
        %813 = vmatpush1.msra.mxu0 0.0
        %814 = vmatprep.subr.mxu0 0.0
        %815 = vmatpush1.msra.mxu0 0.0
        %816 = vmatprep.subr.mxu0 0.0
        %817 = vmatpush1.msra.mxu0 0.0
        %818 = vmatprep.subr.mxu0 0.0
        %819 = vmatpush1.msra.mxu0 0.0
        %820 = vmatprep.subr.mxu0 0.0
        %821 = vmatpush1.msra.mxu0 0.0
        %822 = vmatprep.subr.mxu0 0.0
        %823 = vmatpush1.msra.mxu0 0.0
        %824 = vmatprep.subr.mxu0 0.0
        %825 = vmatpush1.msra.mxu0 0.0
        %826 = vmatprep.subr.mxu0 0.0
        %827 = vmatpush1.msra.mxu0 0.0
        %828 = vmatprep.subr.mxu0 0.0
        %829 = vmatpush1.msra.mxu0 0.0
        %830 = vmatprep.subr.mxu0 0.0
        %831 = vmatpush1.msra.mxu0 0.0
        %832 = vmatprep.subr.mxu0 0.0
        %833 = vmatpush1.msra.mxu0 0.0
        %834 = vmatprep.subr.mxu0 0.0
        %835 = vmatpush1.msra.mxu0 0.0
        %836 = vmatprep.subr.mxu0 0.0
        %837 = vmatpush1.msra.mxu0 0.0
        %838 = vmatprep.subr.mxu0 0.0
        %839 = vmatpush1.msra.mxu0 0.0
        %840 = vmatprep.subr.mxu0 0.0
        %841 = vmatpush1.msra.mxu0 0.0
        %842 = vmatprep.subr.mxu0 0.0
        %843 = vmatpush1.msra.mxu0 0.0
        %844 = vmatprep.subr.mxu0 0.0
        %845 = vmatpush1.msra.mxu0 0.0
        %846 = vmatprep.subr.mxu0 0.0
        %847 = vmatpush1.msra.mxu0 0.0
        %848 = vmatprep.subr.mxu0 0.0
        %849 = vmatpush1.msra.mxu0 0.0
        %850 = vmatprep.subr.mxu0 0.0
        %851 = vmatpush1.msra.mxu0 0.0
        %852 = vmatprep.subr.mxu0 0.0
        %853 = vmatpush1.msra.mxu0 0.0
        %854 = vmatprep.subr.mxu0 0.0
        %855 = vmatpush1.msra.mxu0 0.0
        %856 = vmatprep.subr.mxu0 0.0
        %857 = vmatpush1.msra.mxu0 0.0
        %858 = vmatprep.subr.mxu0 0.0
        %859 = vmatpush1.msra.mxu0 0.0
        %860 = vmatprep.subr.mxu0 0.0
        %861 = vmatpush1.msra.mxu0 0.0
        %862 = vmatprep.subr.mxu0 0.0
        %863 = vmatpush1.msra.mxu0 0.0
        %864 = vmatprep.subr.mxu0 0.0
        %865 = vmatpush1.msra.mxu0 0.0
        %866 = vmatprep.subr.mxu0 0.0
        %867 = vmatpush1.msra.mxu0 0.0
        %868 = vmatprep.mubr.f32.mxu0 0.0
        %869 = vmatmul.mubr.f32.gmra.mrb[0].mxu0 %v793
        %v870 = vpop.f32.mrb[0].mxu0
        %v871 = vadd.f32 0.0, %v870
        %v872 = vpop.f32.mrb[0].mxu0
        %873 = vmatprep.mubr.f32.mxu0 0.0
        %874 = vmatmul.mubr.f32.gmra.mrb[0].mxu0 %v796
        %v875 = vpop.f32.mrb[0].mxu0
        %v876 = vadd.f32 0.0, %v875
        %v877 = vpop.f32.mrb[0].mxu0
        %878 = vmatprep.mubr.f32.mxu0 0.0
        %879 = vmatmul.mubr.f32.gmra.mrb[0].mxu0 %v799
        %v880 = vpop.f32.mrb[0].mxu0
        %v881 = vadd.f32 0.0, %v880
        %v882 = vpop.f32.mrb[0].mxu0
        %883 = vdwg.mxu0
        %v884 = vld [vmem:[%s7] sm:$0xf]
        %885 = vst [vmem:[#allocation2] sm:$0x7] 0.0
        %886 = vst.msk [vmem:[#allocation2 + $0x3] sm:$0xff] %vm626, %v778
        %887 = vst.msk [vmem:[#allocation2 + $0xb] sm:$0xff] %vm626, %v781
        %vm888 = vcmask 516096
        %889 = vst.msk [vmem:[#allocation2 + $0x13] sm:$0x1] %vm888, %v786
        %893 = vrot.lane.b32.xlu0 %v871, 64
        %v894 = vpop.permute.xlu0 %893
        %895 = vrot.lane.b32.xlu0 %v876, 64
        %v896 = vpop.permute.xlu0 %895
        %897 = vrot.lane.b32.xlu0 %v881, 64
        %v898 = vpop.permute.xlu0 %897
        %vm902 = vcmask 1048064
        %903 = vst.msk [vmem:[#allocation2 + $0x3] sm:$0xff] %vm902, %v894
        %904 = vst.msk [vmem:[#allocation2 + $0xb] sm:$0xff] %vm902, %v896
        %vm905 = vcmask 1040896
        %906 = vst.msk [vmem:[#allocation2 + $0x13] sm:$0x1] %vm905, %v898
        %v907 = vld [vmem:[#allocation2] sm:$0xff]
        %v908 = vld [vmem:[#allocation2 + $0x8] sm:$0xff]
        %v909 = vld [vmem:[#allocation2 + $0x10] sm:$0x1]
        %v910 = vlaneseq
        %v911 = vshrl.u32 %v910, 7
        %v912 = vsub.s32 0, %v911
        %v913 = vrot.slane %v884, %v912
        %v914 = vmul.f32 %v907, %v913
        %v915 = vmul.f32 %v908, %v913
        %v916 = vmul.f32 %v909, %v913
        %v917 = vadd.f32 %v914, 0.0
        %v918 = vadd.f32 %v915, 0.0
        %v919 = vadd.f32 %v916, 0.0
        %v920 = vld [vmem:[#allocation2 + $0x1] sm:$0xff]
        %v921 = vld [vmem:[#allocation2 + $0x9] sm:$0xff]
        %v922 = vld [vmem:[#allocation2 + $0x11] sm:$0x1]
        %v923 = vlaneseq
        %v924 = vshrl.u32 %v923, 7
        %v925 = vsub.s32 1, %v924
        %v926 = vrot.slane %v884, %v925
        %v927 = vmul.f32 %v920, %v926
        %v928 = vmul.f32 %v921, %v926
        %v929 = vmul.f32 %v922, %v926
        %v930 = vadd.f32 %v917, %v927
        %v931 = vadd.f32 %v918, %v928
        %v932 = vadd.f32 %v919, %v929
        %v933 = vld [vmem:[#allocation2 + $0x2] sm:$0xff]
        %v934 = vld [vmem:[#allocation2 + $0xa] sm:$0xff]
        %v935 = vld [vmem:[#allocation2 + $0x12] sm:$0x1]
        %v936 = vlaneseq
        %v937 = vshrl.u32 %v936, 7
        %v938 = vsub.s32 2, %v937
        %v939 = vrot.slane %v884, %v938
        %v940 = vmul.f32 %v933, %v939
        %v941 = vmul.f32 %v934, %v939
        %v942 = vmul.f32 %v935, %v939
        %v943 = vadd.f32 %v930, %v940
        %v944 = vadd.f32 %v931, %v941
        %v945 = vadd.f32 %v932, %v942
        %v946 = vld [vmem:[#allocation2 + $0x3] sm:$0xff]
        %v947 = vld [vmem:[#allocation2 + $0xb] sm:$0xff]
        %v948 = vld [vmem:[#allocation2 + $0x13] sm:$0x1]
        %v949 = vlaneseq
        %v950 = vshrl.u32 %v949, 7
        %v951 = vsub.s32 3, %v950
        %v952 = vrot.slane %v884, %v951
        %v953 = vmul.f32 %v946, %v952
        %v954 = vmul.f32 %v947, %v952
        %v955 = vmul.f32 %v948, %v952
        %v956 = vadd.f32 %v943, %v953
        %v957 = vadd.f32 %v944, %v954
        %v958 = vadd.f32 %v945, %v955
        %v959 = vld [vmem:[%s8] sm:$0x1]
        %v961 = vlaneseq
        %v962 = vshrl.u32 %v961, 7
        %v963 = vsub.s32 0, %v962
        %v964 = vrot.slane %v959, %v963
        %v966 = vadd.f32 %v956, %v964
        %v967 = vadd.f32 %v957, %v964
        %v968 = vadd.f32 %v958, %v964
        %v969 = vxor.u32 %v966, 2147483648
        %v970 = vxor.u32 %v967, 2147483648
        %v971 = vxor.u32 %v968, 2147483648
        %v972 = vmul.f32 %v969, 1.442695
        %v973 = vpow.pop %v972
        %v974 = vmul.f32 %v970, 1.442695
        %v975 = vpow.pop %v974
        %v976 = vmul.f32 %v971, 1.442695
        %v977 = vpow.pop %v976
        %v978 = vadd.f32 %v973, 1.0
        %v979 = vadd.f32 %v975, 1.0
        %v980 = vadd.f32 %v977, 1.0
        %v981 = vrcp.pop %v978
        %v982 = vmul.f32 1.0, %v981
        %v983 = vrcp.pop %v979
        %v984 = vmul.f32 1.0, %v983
        %v985 = vrcp.pop %v980
        %v986 = vmul.f32 1.0, %v985
        %v987 = vmul.f32 %v966, %v982
        %v988 = vmul.f32 %v967, %v984
        %v989 = vmul.f32 %v968, %v986
        %v990 = vpack.c.bf16 %v988, %v987
        %v991 = vpack.c.bf16 %v989, %v989
        %v992 = vld [vmem:[%s9] sm:$0xff]
        %v993 = vld [vmem:[%s9 + $0x8] sm:$0xff]
        %v994 = vld [vmem:[%s9 + $0x10] sm:$0xff]
        %v995 = vld [vmem:[%s9 + $0x18] sm:$0xff]
        %v996 = vld [vmem:[%s9 + $0x20] sm:$0xff]
        %v997 = vld [vmem:[%s9 + $0x28] sm:$0xff]
        %v998 = vld [vmem:[%s9 + $0x30] sm:$0xff]
        %v999 = vld [vmem:[%s9 + $0x38] sm:$0xff]
        %v1000 = vld [vmem:[%s9 + $0x40] sm:$0xff]
        %v1001 = vld [vmem:[%s9 + $0x48] sm:$0xff]
        %v1002 = vld [vmem:[%s9 + $0x50] sm:$0xff]
        %v1003 = vld [vmem:[%s9 + $0x58] sm:$0xff]
        %v1004 = vld [vmem:[%s9 + $0x60] sm:$0xff]
        %v1005 = vld [vmem:[%s9 + $0x68] sm:$0xff]
        %v1006 = vld [vmem:[%s9 + $0x70] sm:$0xff]
        %v1007 = vld [vmem:[%s9 + $0x78] sm:$0xff]
        %v1008 = vpack.c.bf16 %v993, %v992
        %v1009 = vpack.c.bf16 %v995, %v994
        %v1010 = vpack.c.bf16 %v997, %v996
        %v1011 = vpack.c.bf16 %v999, %v998
        %v1012 = vpack.c.bf16 %v1001, %v1000
        %v1013 = vpack.c.bf16 %v1003, %v1002
        %v1014 = vpack.c.bf16 %v1005, %v1004
        %v1015 = vpack.c.bf16 %v1007, %v1006
        %v1016 = vld [vmem:[%s10] sm:$0x1]
        %v1018 = vlaneseq
        %v1019 = vshrl.u32 %v1018, 7
        %v1020 = vsub.s32 0, %v1019
        %v1021 = vrot.slane %v1016, %v1020
        %1023 = vmatprep.subr.bf16.mxu0 0
        %1024 = vmatpush1.bf16.msra.mxu0 %v1008
        %1025 = vmatprep.subr.bf16.mxu0 0
        %1026 = vmatpush1.bf16.msra.mxu0 %v1009
        %1027 = vmatprep.subr.bf16.mxu0 0
        %1028 = vmatpush1.bf16.msra.mxu0 %v1010
        %1029 = vmatprep.subr.bf16.mxu0 0
        %1030 = vmatpush1.bf16.msra.mxu0 %v1011
        %1031 = vmatprep.subr.bf16.mxu0 0
        %1032 = vmatpush1.bf16.msra.mxu0 %v1012
        %1033 = vmatprep.subr.bf16.mxu0 0
        %1034 = vmatpush1.bf16.msra.mxu0 %v1013
        %1035 = vmatprep.subr.bf16.mxu0 0
        %1036 = vmatpush1.bf16.msra.mxu0 %v1014
        %1037 = vmatprep.subr.bf16.mxu0 0
        %1038 = vmatpush1.bf16.msra.mxu0 %v1015
        %1039 = vmatprep.subr.bf16.mxu0 0
        %1040 = vmatpush1.bf16.msra.mxu0 0
        %1041 = vmatprep.subr.bf16.mxu0 0
        %1042 = vmatpush1.bf16.msra.mxu0 0
        %1043 = vmatprep.subr.bf16.mxu0 0
        %1044 = vmatpush1.bf16.msra.mxu0 0
        %1045 = vmatprep.subr.bf16.mxu0 0
        %1046 = vmatpush1.bf16.msra.mxu0 0
        %1047 = vmatprep.subr.bf16.mxu0 0
        %1048 = vmatpush1.bf16.msra.mxu0 0
        %1049 = vmatprep.subr.bf16.mxu0 0
        %1050 = vmatpush1.bf16.msra.mxu0 0
        %1051 = vmatprep.subr.bf16.mxu0 0
        %1052 = vmatpush1.bf16.msra.mxu0 0
        %1053 = vmatprep.subr.bf16.mxu0 0
        %1054 = vmatpush1.bf16.msra.mxu0 0
        %1055 = vmatprep.mubr.bf16.mxu0 0
        %1056 = vmatmul.mubr.bf16.gmra.mrb[0].mxu0 %v990
        %v1057 = vpop.f32.mrb[0].mxu0
        %v1058 = vadd.f32 %v1021, %v1057
        %v1059 = vpop.f32.mrb[0].mxu0
        %v1060 = vpop.f32.mrb[0].mxu0
        %v1061 = vadd.f32 %v1021, %v1060
        %v1062 = vpop.f32.mrb[0].mxu0
        %1063 = vmatprep.mubr.bf16.mxu0 0
        %1064 = vmatmul.mubr.bf16.gmra.mrb[0].mxu0 %v991
        %v1065 = vpop.f32.mrb[0].mxu0
        %v1066 = vadd.f32 %v1021, %v1065
        %v1067 = vpop.f32.mrb[0].mxu0
        %v1068 = vpop.f32.mrb[0].mxu0
        %v1069 = vpop.f32.mrb[0].mxu0
        %1070 = vdwg.mxu0
        %vm1071 = vcmp.gt.f32.partialorder %v1058, 20.0
        %vm1072 = vcmp.gt.f32.partialorder %v1061, 20.0
        %vm1073 = vcmp.gt.f32.partialorder %v1066, 20.0
        %v1074 = vmin.f32 %v1058, 20.0
        %v1075 = vmin.f32 %v1061, 20.0
        %v1076 = vmin.f32 %v1066, 20.0
        %v1077 = vmul.f32 %v1074, 1.442695
        %v1078 = vpow.pop %v1077
        %v1079 = vmul.f32 %v1075, 1.442695
        %v1080 = vpow.pop %v1079
        %v1081 = vmul.f32 %v1076, 1.442695
        %v1082 = vpow.pop %v1081
        %v1083 = vadd.f32 %v1078, 1.0
        %v1084 = vlog2.pop %v1083
        %v1085 = vmul.f32 %v1084, 0.6931472
        %v1086 = vmul.f32 -0.5, %v1078
        %v1087 = vadd.f32 %v1086, 1.0
        %v1088 = vmul.f32 %v1087, %v1078
        %v1089 = vand.u32 2147483647, %v1078
        %vm1090 = vcmp.lt.f32.partialorder %v1089, 0.0004427343
        %v1091 = vsel %vm1090, %v1088, %v1085
        %v1092 = vadd.f32 %v1080, 1.0
        %v1093 = vlog2.pop %v1092
        %v1094 = vmul.f32 %v1093, 0.6931472
        %v1095 = vmul.f32 -0.5, %v1080
        %v1096 = vadd.f32 %v1095, 1.0
        %v1097 = vmul.f32 %v1096, %v1080
        %v1098 = vand.u32 2147483647, %v1080
        %vm1099 = vcmp.lt.f32.partialorder %v1098, 0.0004427343
        %v1100 = vsel %vm1099, %v1097, %v1094
        %v1101 = vadd.f32 %v1082, 1.0
        %v1102 = vlog2.pop %v1101
        %v1103 = vmul.f32 %v1102, 0.6931472
        %v1104 = vmul.f32 -0.5, %v1082
        %v1105 = vadd.f32 %v1104, 1.0
        %v1106 = vmul.f32 %v1105, %v1082
        %v1107 = vand.u32 2147483647, %v1082
        %vm1108 = vcmp.lt.f32.partialorder %v1107, 0.0004427343
        %v1109 = vsel %vm1108, %v1106, %v1103
        %v1110 = vsel %vm1071, %v1058, %v1091
        %v1111 = vsel %vm1072, %v1061, %v1100
        %v1112 = vsel %vm1073, %v1066, %v1109
        %v1113 = vmul.f32 %v1110, %v987
        %v1114 = vmul.f32 %v1111, %v988
        %v1115 = vmul.f32 %v1112, %v989
        %v1116 = vld [vmem:[%s13] sm:$0x1]
        %v1118 = vlaneseq
        %v1119 = vshrl.u32 %v1118, 7
        %v1120 = vsub.s32 0, %v1119
        %v1121 = vrot.slane %v1116, %v1120
        %v1123 = vmul.f32 %v987, %v1121
        %v1124 = vmul.f32 %v988, %v1121
        %v1125 = vmul.f32 %v989, %v1121
        %v1126 = vld [vmem:[%s11] sm:$0xff]
        %v1127 = vld [vmem:[%s11 + $0x8] sm:$0xff]
        %v1128 = vld [vmem:[%s11 + $0x10] sm:$0xff]
        %v1129 = vld [vmem:[%s11 + $0x18] sm:$0xff]
        %v1130 = vld [vmem:[%s11 + $0x20] sm:$0xff]
        %v1131 = vld [vmem:[%s11 + $0x28] sm:$0xff]
        %v1132 = vld [vmem:[%s11 + $0x30] sm:$0xff]
        %v1133 = vld [vmem:[%s11 + $0x38] sm:$0xff]
        %v1134 = vpack.c.bf16 %v1127, %v1126
        %v1135 = vpack.c.bf16 %v1129, %v1128
        %v1136 = vpack.c.bf16 %v1131, %v1130
        %v1137 = vpack.c.bf16 %v1133, %v1132
        %1138 = vmatprep.subr.bf16.mxu0 0
        %1139 = vmatpush1.bf16.xpose.msra.mxu0 %v990
        %1140 = vmatprep.subr.bf16.mxu0 0
        %1141 = vmatpush1.bf16.xpose.msra.mxu0 %v991
        %1142 = vmatprep.subr.bf16.mxu0 0
        %1143 = vmatpush1.bf16.xpose.msra.mxu0 0
        %1144 = vmatprep.subr.bf16.mxu0 0
        %1145 = vmatpush1.bf16.xpose.msra.mxu0 0
        %1146 = vmatprep.subr.bf16.mxu0 0
        %1147 = vmatpush1.bf16.xpose.msra.mxu0 0
        %1148 = vmatprep.subr.bf16.mxu0 0
        %1149 = vmatpush1.bf16.xpose.msra.mxu0 0
        %1150 = vmatprep.subr.bf16.mxu0 0
        %1151 = vmatpush1.bf16.xpose.msra.mxu0 0
        %1152 = vmatprep.subr.bf16.mxu0 0
        %1153 = vmatpush1.bf16.xpose.msra.mxu0 0
        %1154 = vmatprep.subr.bf16.mxu0 0
        %1155 = vmatpush1.bf16.xpose.msra.mxu0 0
        %1156 = vmatprep.subr.bf16.mxu0 0
        %1157 = vmatpush1.bf16.xpose.msra.mxu0 0
        %1158 = vmatprep.subr.bf16.mxu0 0
        %1159 = vmatpush1.bf16.xpose.msra.mxu0 0
        %1160 = vmatprep.subr.bf16.mxu0 0
        %1161 = vmatpush1.bf16.xpose.msra.mxu0 0
        %1162 = vmatprep.subr.bf16.mxu0 0
        %1163 = vmatpush1.bf16.xpose.msra.mxu0 0
        %1164 = vmatprep.subr.bf16.mxu0 0
        %1165 = vmatpush1.bf16.xpose.msra.mxu0 0
        %1166 = vmatprep.subr.bf16.mxu0 0
        %1167 = vmatpush1.bf16.xpose.msra.mxu0 0
        %1168 = vmatprep.subr.bf16.mxu0 0
        %1169 = vmatpush1.bf16.xpose.msra.mxu0 0
        %1170 = vmatprep.mubr.bf16.mxu0 0
        %1171 = vmatmul.mubr.bf16.gmra.mrb[0].mxu0 %v1134
        %v1172 = vpop.f32.mrb[0].mxu0
        %v1173 = vadd.f32 0.0, %v1172
        %v1174 = vpop.f32.mrb[0].mxu0
        %v1175 = vpop.f32.mrb[0].mxu0
        %v1176 = vadd.f32 0.0, %v1175
        %v1177 = vpop.f32.mrb[0].mxu0
        %1178 = vmatprep.mubr.bf16.mxu0 0
        %1179 = vmatmul.mubr.bf16.gmra.mrb[0].mxu0 %v1135
        %v1180 = vpop.f32.mrb[0].mxu0
        %v1181 = vadd.f32 0.0, %v1180
        %v1182 = vpop.f32.mrb[0].mxu0
        %v1183 = vpop.f32.mrb[0].mxu0
        %v1184 = vadd.f32 0.0, %v1183
        %v1185 = vpop.f32.mrb[0].mxu0
        %1186 = vmatprep.mubr.bf16.mxu0 0
        %1187 = vmatmul.mubr.bf16.gmra.mrb[0].mxu0 %v1136
        %v1188 = vpop.f32.mrb[0].mxu0
        %v1189 = vadd.f32 0.0, %v1188
        %v1190 = vpop.f32.mrb[0].mxu0
        %v1191 = vpop.f32.mrb[0].mxu0
        %v1192 = vadd.f32 0.0, %v1191
        %v1193 = vpop.f32.mrb[0].mxu0
        %1194 = vmatprep.mubr.bf16.mxu0 0
        %1195 = vmatmul.mubr.bf16.gmra.mrb[0].mxu0 %v1137
        %v1196 = vpop.f32.mrb[0].mxu0
        %v1197 = vadd.f32 0.0, %v1196
        %v1198 = vpop.f32.mrb[0].mxu0
        %v1199 = vpop.f32.mrb[0].mxu0
        %v1200 = vadd.f32 0.0, %v1199
        %v1201 = vpop.f32.mrb[0].mxu0
        %1202 = vdwg.mxu0
        %v1203 = vld [vmem:[%s12] sm:$0xff]
        %v1204 = vld [vmem:[%s12 + $0x8] sm:$0xff]
        %v1205 = vlaneseq
        %v1206 = vshrl.u32 %v1205, 7
        %v1207 = vsub.s32 0, %v1206
        %v1208 = vrot.slane %v1110, %v1207
        %v1209 = vmul.f32 %v1208, %v1203
        %v1210 = vmul.f32 %v1208, %v1204
        %v1211 = vmul.f32 %v1209, 1.442695
        %v1212 = vpow.pop %v1211
        %v1213 = vmul.f32 %v1210, 1.442695
        %v1214 = vpow.pop %v1213
        %1215 = vst [vmem:[#allocation3] sm:$0xff] %v1212
        %1216 = vst [vmem:[#allocation3 + $0x8] sm:$0xff] %v1214
        %1218 = vset.pattern.permute.xlu0 0
        %1219 = vperm.xlu0 %1218, %v1173
        %v1220 = vpop.permute.xlu0 %1219
        %1223 = vset.pattern.permute.xlu0 0
        %1224 = vperm.xlu0 %1223, %v1176
        %v1225 = vpop.permute.xlu0 %1224
        %1228 = vset.pattern.permute.xlu0 0
        %1229 = vperm.xlu0 %1228, %v1189
        %v1230 = vpop.permute.xlu0 %1229
        %1233 = vset.pattern.permute.xlu0 0
        %1234 = vperm.xlu0 %1233, %v1192
        %v1235 = vpop.permute.xlu0 %1234
        %v1237 = vsel %vm576, %v1220, %v1230
        %v1238 = vsel %vm576, %v1225, %v1235
        %v1239 = vlaneseq
        %v1240 = vshrl.u32 %v1239, 7
        %v1241 = vsub.s32 0, %v1240
        %v1242 = vrot.slane %v1113, %v1241
        %v1243 = vmul.f32 %v1237, %v1242
        %v1244 = vmul.f32 %v1238, %v1242
        %1245 = vst [vmem:[#allocation4] sm:$0xff] %v1243
        %1246 = vst [vmem:[#allocation4 + $0x8] sm:$0xff] %v1244
        %1248 = vset.pattern.permute.xlu0 0
        %1249 = vperm.xlu0 %1248, %v1181
        %v1250 = vpop.permute.xlu0 %1249
        %1253 = vset.pattern.permute.xlu0 0
        %1254 = vperm.xlu0 %1253, %v1184
        %v1255 = vpop.permute.xlu0 %1254
        %1258 = vset.pattern.permute.xlu0 0
        %1259 = vperm.xlu0 %1258, %v1197
        %v1260 = vpop.permute.xlu0 %1259
        %1263 = vset.pattern.permute.xlu0 0
        %1264 = vperm.xlu0 %1263, %v1200
        %v1265 = vpop.permute.xlu0 %1264
        %v1267 = vsel %vm576, %v1250, %v1260
        %v1268 = vsel %vm576, %v1255, %v1265
        %1269 = vst [vmem:[#allocation5] sm:$0xff] %v1267
        %1270 = vst [vmem:[#allocation5 + $0x8] sm:$0xff] %v1268
        %v1271 = vlaneseq
        %v1272 = vshrl.u32 %v1271, 7
        %v1273 = vsub.s32 1, %v1272
        %v1274 = vrot.slane %v1110, %v1273
        %v1275 = vmul.f32 %v1274, %v1203
        %v1276 = vmul.f32 %v1274, %v1204
        %v1277 = vmul.f32 %v1275, 1.442695
        %v1278 = vpow.pop %v1277
        %v1279 = vmul.f32 %v1276, 1.442695
        %v1280 = vpow.pop %v1279
        %1281 = vst [vmem:[#allocation3 + $0x10] sm:$0xff] %v1278
        %1282 = vst [vmem:[#allocation3 + $0x18] sm:$0xff] %v1280
        %1283 = vset.pattern.permute.xlu0 1
        %1284 = vperm.xlu0 %1283, %v1173
        %v1285 = vpop.permute.xlu0 %1284
        %1287 = vset.pattern.permute.xlu0 1
        %1288 = vperm.xlu0 %1287, %v1176
        %v1289 = vpop.permute.xlu0 %1288
        %1291 = vset.pattern.permute.xlu0 1
        %1292 = vperm.xlu0 %1291, %v1189
        %v1293 = vpop.permute.xlu0 %1292
        %1295 = vset.pattern.permute.xlu0 1
        %1296 = vperm.xlu0 %1295, %v1192
        %v1297 = vpop.permute.xlu0 %1296
        %v1299 = vsel %vm576, %v1285, %v1293
        %v1300 = vsel %vm576, %v1289, %v1297
        %v1301 = vlaneseq
        %v1302 = vshrl.u32 %v1301, 7
        %v1303 = vsub.s32 1, %v1302
        %v1304 = vrot.slane %v1113, %v1303
        %v1305 = vmul.f32 %v1299, %v1304
        %v1306 = vmul.f32 %v1300, %v1304
        %1307 = vst [vmem:[#allocation4 + $0x10] sm:$0xff] %v1305
        %1308 = vst [vmem:[#allocation4 + $0x18] sm:$0xff] %v1306
        %1309 = vset.pattern.permute.xlu0 1
        %1310 = vperm.xlu0 %1309, %v1181
        %v1311 = vpop.permute.xlu0 %1310
        %1313 = vset.pattern.permute.xlu0 1
        %1314 = vperm.xlu0 %1313, %v1184
        %v1315 = vpop.permute.xlu0 %1314
        %1317 = vset.pattern.permute.xlu0 1
        %1318 = vperm.xlu0 %1317, %v1197
        %v1319 = vpop.permute.xlu0 %1318
        %1321 = vset.pattern.permute.xlu0 1
        %1322 = vperm.xlu0 %1321, %v1200
        %v1323 = vpop.permute.xlu0 %1322
        %v1325 = vsel %vm576, %v1311, %v1319
        %v1326 = vsel %vm576, %v1315, %v1323
        %1327 = vst [vmem:[#allocation5 + $0x10] sm:$0xff] %v1325
        %1328 = vst [vmem:[#allocation5 + $0x18] sm:$0xff] %v1326
        %v1329 = vlaneseq
        %v1330 = vshrl.u32 %v1329, 7
        %v1331 = vsub.s32 2, %v1330
        %v1332 = vrot.slane %v1110, %v1331
        %v1333 = vmul.f32 %v1332, %v1203
        %v1334 = vmul.f32 %v1332, %v1204
        %v1335 = vmul.f32 %v1333, 1.442695
        %v1336 = vpow.pop %v1335
        %v1337 = vmul.f32 %v1334, 1.442695
        %v1338 = vpow.pop %v1337
        %1339 = vst [vmem:[#allocation3 + $0x20] sm:$0xff] %v1336
        %1340 = vst [vmem:[#allocation3 + $0x28] sm:$0xff] %v1338
        %1341 = vset.pattern.permute.xlu0 2
        %1342 = vperm.xlu0 %1341, %v1173
        %v1343 = vpop.permute.xlu0 %1342
        %1345 = vset.pattern.permute.xlu0 2
        %1346 = vperm.xlu0 %1345, %v1176
        %v1347 = vpop.permute.xlu0 %1346
        %1349 = vset.pattern.permute.xlu0 2
        %1350 = vperm.xlu0 %1349, %v1189
        %v1351 = vpop.permute.xlu0 %1350
        %1353 = vset.pattern.permute.xlu0 2
        %1354 = vperm.xlu0 %1353, %v1192
        %v1355 = vpop.permute.xlu0 %1354
        %v1357 = vsel %vm576, %v1343, %v1351
        %v1358 = vsel %vm576, %v1347, %v1355
        %v1359 = vlaneseq
        %v1360 = vshrl.u32 %v1359, 7
        %v1361 = vsub.s32 2, %v1360
        %v1362 = vrot.slane %v1113, %v1361
        %v1363 = vmul.f32 %v1357, %v1362
        %v1364 = vmul.f32 %v1358, %v1362
        %1365 = vst [vmem:[#allocation4 + $0x20] sm:$0xff] %v1363
        %1366 = vst [vmem:[#allocation4 + $0x28] sm:$0xff] %v1364
        %1367 = vset.pattern.permute.xlu0 2
        %1368 = vperm.xlu0 %1367, %v1181
        %v1369 = vpop.permute.xlu0 %1368
        %1371 = vset.pattern.permute.xlu0 2
        %1372 = vperm.xlu0 %1371, %v1184
        %v1373 = vpop.permute.xlu0 %1372
        %1375 = vset.pattern.permute.xlu0 2
        %1376 = vperm.xlu0 %1375, %v1197
        %v1377 = vpop.permute.xlu0 %1376
        %1379 = vset.pattern.permute.xlu0 2
        %1380 = vperm.xlu0 %1379, %v1200
        %v1381 = vpop.permute.xlu0 %1380
        %v1383 = vsel %vm576, %v1369, %v1377
        %v1384 = vsel %vm576, %v1373, %v1381
        %1385 = vst [vmem:[#allocation5 + $0x20] sm:$0xff] %v1383
        %1386 = vst [vmem:[#allocation5 + $0x28] sm:$0xff] %v1384
        %v1387 = vlaneseq
        %v1388 = vshrl.u32 %v1387, 7
        %v1389 = vsub.s32 3, %v1388
        %v1390 = vrot.slane %v1110, %v1389
        %v1391 = vmul.f32 %v1390, %v1203
        %v1392 = vmul.f32 %v1390, %v1204
        %v1393 = vmul.f32 %v1391, 1.442695
        %v1394 = vpow.pop %v1393
        %v1395 = vmul.f32 %v1392, 1.442695
        %v1396 = vpow.pop %v1395
        %1397 = vst [vmem:[#allocation3 + $0x30] sm:$0xff] %v1394
        %1398 = vst [vmem:[#allocation3 + $0x38] sm:$0xff] %v1396
        %1399 = vset.pattern.permute.xlu0 3
        %1400 = vperm.xlu0 %1399, %v1173
        %v1401 = vpop.permute.xlu0 %1400
        %1403 = vset.pattern.permute.xlu0 3
        %1404 = vperm.xlu0 %1403, %v1176
        %v1405 = vpop.permute.xlu0 %1404
        %1407 = vset.pattern.permute.xlu0 3
        %1408 = vperm.xlu0 %1407, %v1189
        %v1409 = vpop.permute.xlu0 %1408
        %1411 = vset.pattern.permute.xlu0 3
        %1412 = vperm.xlu0 %1411, %v1192
        %v1413 = vpop.permute.xlu0 %1412
        %v1415 = vsel %vm576, %v1401, %v1409
        %v1416 = vsel %vm576, %v1405, %v1413
        %v1417 = vlaneseq
        %v1418 = vshrl.u32 %v1417, 7
        %v1419 = vsub.s32 3, %v1418
        %v1420 = vrot.slane %v1113, %v1419
        %v1421 = vmul.f32 %v1415, %v1420
        %v1422 = vmul.f32 %v1416, %v1420
        %1423 = vst [vmem:[#allocation4 + $0x30] sm:$0xff] %v1421
        %1424 = vst [vmem:[#allocation4 + $0x38] sm:$0xff] %v1422
        %1425 = vset.pattern.permute.xlu0 3
        %1426 = vperm.xlu0 %1425, %v1181
        %v1427 = vpop.permute.xlu0 %1426
        %1429 = vset.pattern.permute.xlu0 3
        %1430 = vperm.xlu0 %1429, %v1184
        %v1431 = vpop.permute.xlu0 %1430
        %1433 = vset.pattern.permute.xlu0 3
        %1434 = vperm.xlu0 %1433, %v1197
        %v1435 = vpop.permute.xlu0 %1434
        %1437 = vset.pattern.permute.xlu0 3
        %1438 = vperm.xlu0 %1437, %v1200
        %v1439 = vpop.permute.xlu0 %1438
        %v1441 = vsel %vm576, %v1427, %v1435
        %v1442 = vsel %vm576, %v1431, %v1439
        %1443 = vst [vmem:[#allocation5 + $0x30] sm:$0xff] %v1441
        %1444 = vst [vmem:[#allocation5 + $0x38] sm:$0xff] %v1442
        %v1445 = vlaneseq
        %v1446 = vshrl.u32 %v1445, 7
        %v1447 = vsub.s32 4, %v1446
        %v1448 = vrot.slane %v1110, %v1447
        %v1449 = vmul.f32 %v1448, %v1203
        %v1450 = vmul.f32 %v1448, %v1204
        %v1451 = vmul.f32 %v1449, 1.442695
        %v1452 = vpow.pop %v1451
        %v1453 = vmul.f32 %v1450, 1.442695
        %v1454 = vpow.pop %v1453
        %1455 = vst [vmem:[#allocation3 + $0x40] sm:$0xff] %v1452
        %1456 = vst [vmem:[#allocation3 + $0x48] sm:$0xff] %v1454
        %1457 = vset.pattern.permute.xlu0 4
        %1458 = vperm.xlu0 %1457, %v1173
        %v1459 = vpop.permute.xlu0 %1458
        %1461 = vset.pattern.permute.xlu0 4
        %1462 = vperm.xlu0 %1461, %v1176
        %v1463 = vpop.permute.xlu0 %1462
        %1465 = vset.pattern.permute.xlu0 4
        %1466 = vperm.xlu0 %1465, %v1189
        %v1467 = vpop.permute.xlu0 %1466
        %1469 = vset.pattern.permute.xlu0 4
        %1470 = vperm.xlu0 %1469, %v1192
        %v1471 = vpop.permute.xlu0 %1470
        %v1473 = vsel %vm576, %v1459, %v1467
        %v1474 = vsel %vm576, %v1463, %v1471
        %v1475 = vlaneseq
        %v1476 = vshrl.u32 %v1475, 7
        %v1477 = vsub.s32 4, %v1476
        %v1478 = vrot.slane %v1113, %v1477
        %v1479 = vmul.f32 %v1473, %v1478
        %v1480 = vmul.f32 %v1474, %v1478
        %1481 = vst [vmem:[#allocation4 + $0x40] sm:$0xff] %v1479
        %1482 = vst [vmem:[#allocation4 + $0x48] sm:$0xff] %v1480
        %1483 = vset.pattern.permute.xlu0 4
        %1484 = vperm.xlu0 %1483, %v1181
        %v1485 = vpop.permute.xlu0 %1484
        %1487 = vset.pattern.permute.xlu0 4
        %1488 = vperm.xlu0 %1487, %v1184
        %v1489 = vpop.permute.xlu0 %1488
        %1491 = vset.pattern.permute.xlu0 4
        %1492 = vperm.xlu0 %1491, %v1197
        %v1493 = vpop.permute.xlu0 %1492
        %1495 = vset.pattern.permute.xlu0 4
        %1496 = vperm.xlu0 %1495, %v1200
        %v1497 = vpop.permute.xlu0 %1496
        %v1499 = vsel %vm576, %v1485, %v1493
        %v1500 = vsel %vm576, %v1489, %v1497
        %1501 = vst [vmem:[#allocation5 + $0x40] sm:$0xff] %v1499
        %1502 = vst [vmem:[#allocation5 + $0x48] sm:$0xff] %v1500
        %v1503 = vlaneseq
        %v1504 = vshrl.u32 %v1503, 7
        %v1505 = vsub.s32 5, %v1504
        %v1506 = vrot.slane %v1110, %v1505
        %v1507 = vmul.f32 %v1506, %v1203
        %v1508 = vmul.f32 %v1506, %v1204
        %v1509 = vmul.f32 %v1507, 1.442695
        %v1510 = vpow.pop %v1509
        %v1511 = vmul.f32 %v1508, 1.442695
        %v1512 = vpow.pop %v1511
        %1513 = vst [vmem:[#allocation3 + $0x50] sm:$0xff] %v1510
        %1514 = vst [vmem:[#allocation3 + $0x58] sm:$0xff] %v1512
        %1515 = vset.pattern.permute.xlu0 5
        %1516 = vperm.xlu0 %1515, %v1173
        %v1517 = vpop.permute.xlu0 %1516
        %1519 = vset.pattern.permute.xlu0 5
        %1520 = vperm.xlu0 %1519, %v1176
        %v1521 = vpop.permute.xlu0 %1520
        %1523 = vset.pattern.permute.xlu0 5
        %1524 = vperm.xlu0 %1523, %v1189
        %v1525 = vpop.permute.xlu0 %1524
        %1527 = vset.pattern.permute.xlu0 5
        %1528 = vperm.xlu0 %1527, %v1192
        %v1529 = vpop.permute.xlu0 %1528
        %v1531 = vsel %vm576, %v1517, %v1525
        %v1532 = vsel %vm576, %v1521, %v1529
        %v1533 = vlaneseq
        %v1534 = vshrl.u32 %v1533, 7
        %v1535 = vsub.s32 5, %v1534
        %v1536 = vrot.slane %v1113, %v1535
        %v1537 = vmul.f32 %v1531, %v1536
        %v1538 = vmul.f32 %v1532, %v1536
        %1539 = vst [vmem:[#allocation4 + $0x50] sm:$0xff] %v1537
        %1540 = vst [vmem:[#allocation4 + $0x58] sm:$0xff] %v1538
        %1541 = vset.pattern.permute.xlu0 5
        %1542 = vperm.xlu0 %1541, %v1181
        %v1543 = vpop.permute.xlu0 %1542
        %1545 = vset.pattern.permute.xlu0 5
        %1546 = vperm.xlu0 %1545, %v1184
        %v1547 = vpop.permute.xlu0 %1546
        %1549 = vset.pattern.permute.xlu0 5
        %1550 = vperm.xlu0 %1549, %v1197
        %v1551 = vpop.permute.xlu0 %1550
        %1553 = vset.pattern.permute.xlu0 5
        %1554 = vperm.xlu0 %1553, %v1200
        %v1555 = vpop.permute.xlu0 %1554
        %v1557 = vsel %vm576, %v1543, %v1551
        %v1558 = vsel %vm576, %v1547, %v1555
        %1559 = vst [vmem:[#allocation5 + $0x50] sm:$0xff] %v1557
        %1560 = vst [vmem:[#allocation5 + $0x58] sm:$0xff] %v1558
        %v1561 = vlaneseq
        %v1562 = vshrl.u32 %v1561, 7
        %v1563 = vsub.s32 6, %v1562
        %v1564 = vrot.slane %v1110, %v1563
        %v1565 = vmul.f32 %v1564, %v1203
        %v1566 = vmul.f32 %v1564, %v1204
        %v1567 = vmul.f32 %v1565, 1.442695
        %v1568 = vpow.pop %v1567
        %v1569 = vmul.f32 %v1566, 1.442695
        %v1570 = vpow.pop %v1569
        %1571 = vst [vmem:[#allocation3 + $0x60] sm:$0xff] %v1568
        %1572 = vst [vmem:[#allocation3 + $0x68] sm:$0xff] %v1570
        %1573 = vset.pattern.permute.xlu0 6
        %1574 = vperm.xlu0 %1573, %v1173
        %v1575 = vpop.permute.xlu0 %1574
        %1577 = vset.pattern.permute.xlu0 6
        %1578 = vperm.xlu0 %1577, %v1176
        %v1579 = vpop.permute.xlu0 %1578
        %1581 = vset.pattern.permute.xlu0 6
        %1582 = vperm.xlu0 %1581, %v1189
        %v1583 = vpop.permute.xlu0 %1582
        %1585 = vset.pattern.permute.xlu0 6
        %1586 = vperm.xlu0 %1585, %v1192
        %v1587 = vpop.permute.xlu0 %1586
        %v1589 = vsel %vm576, %v1575, %v1583
        %v1590 = vsel %vm576, %v1579, %v1587
        %v1591 = vlaneseq
        %v1592 = vshrl.u32 %v1591, 7
        %v1593 = vsub.s32 6, %v1592
        %v1594 = vrot.slane %v1113, %v1593
        %v1595 = vmul.f32 %v1589, %v1594
        %v1596 = vmul.f32 %v1590, %v1594
        %1597 = vst [vmem:[#allocation4 + $0x60] sm:$0xff] %v1595
        %1598 = vst [vmem:[#allocation4 + $0x68] sm:$0xff] %v1596
        %1599 = vset.pattern.permute.xlu0 6
        %1600 = vperm.xlu0 %1599, %v1181
        %v1601 = vpop.permute.xlu0 %1600
        %1603 = vset.pattern.permute.xlu0 6
        %1604 = vperm.xlu0 %1603, %v1184
        %v1605 = vpop.permute.xlu0 %1604
        %1607 = vset.pattern.permute.xlu0 6
        %1608 = vperm.xlu0 %1607, %v1197
        %v1609 = vpop.permute.xlu0 %1608
        %1611 = vset.pattern.permute.xlu0 6
        %1612 = vperm.xlu0 %1611, %v1200
        %v1613 = vpop.permute.xlu0 %1612
        %v1615 = vsel %vm576, %v1601, %v1609
        %v1616 = vsel %vm576, %v1605, %v1613
        %1617 = vst [vmem:[#allocation5 + $0x60] sm:$0xff] %v1615
        %1618 = vst [vmem:[#allocation5 + $0x68] sm:$0xff] %v1616
        %v1619 = vlaneseq
        %v1620 = vshrl.u32 %v1619, 7
        %v1621 = vsub.s32 7, %v1620
        %v1622 = vrot.slane %v1110, %v1621
        %v1623 = vmul.f32 %v1622, %v1203
        %v1624 = vmul.f32 %v1622, %v1204
        %v1625 = vmul.f32 %v1623, 1.442695
        %v1626 = vpow.pop %v1625
        %v1627 = vmul.f32 %v1624, 1.442695
        %v1628 = vpow.pop %v1627
        %1629 = vst [vmem:[#allocation3 + $0x70] sm:$0xff] %v1626
        %1630 = vst [vmem:[#allocation3 + $0x78] sm:$0xff] %v1628
        %1631 = vset.pattern.permute.xlu0 7
        %1632 = vperm.xlu0 %1631, %v1173
        %v1633 = vpop.permute.xlu0 %1632
        %1635 = vset.pattern.permute.xlu0 7
        %1636 = vperm.xlu0 %1635, %v1176
        %v1637 = vpop.permute.xlu0 %1636
        %1639 = vset.pattern.permute.xlu0 7
        %1640 = vperm.xlu0 %1639, %v1189
        %v1641 = vpop.permute.xlu0 %1640
        %1643 = vset.pattern.permute.xlu0 7
        %1644 = vperm.xlu0 %1643, %v1192
        %v1645 = vpop.permute.xlu0 %1644
        %v1647 = vsel %vm576, %v1633, %v1641
        %v1648 = vsel %vm576, %v1637, %v1645
        %v1649 = vlaneseq
        %v1650 = vshrl.u32 %v1649, 7
        %v1651 = vsub.s32 7, %v1650
        %v1652 = vrot.slane %v1113, %v1651
        %v1653 = vmul.f32 %v1647, %v1652
        %v1654 = vmul.f32 %v1648, %v1652
        %1655 = vst [vmem:[#allocation4 + $0x70] sm:$0xff] %v1653
        %1656 = vst [vmem:[#allocation4 + $0x78] sm:$0xff] %v1654
        %1657 = vset.pattern.permute.xlu0 7
        %1658 = vperm.xlu0 %1657, %v1181
        %v1659 = vpop.permute.xlu0 %1658
        %1661 = vset.pattern.permute.xlu0 7
        %1662 = vperm.xlu0 %1661, %v1184
        %v1663 = vpop.permute.xlu0 %1662
        %1665 = vset.pattern.permute.xlu0 7
        %1666 = vperm.xlu0 %1665, %v1197
        %v1667 = vpop.permute.xlu0 %1666
        %1669 = vset.pattern.permute.xlu0 7
        %1670 = vperm.xlu0 %1669, %v1200
        %v1671 = vpop.permute.xlu0 %1670
        %v1673 = vsel %vm576, %v1659, %v1667
        %v1674 = vsel %vm576, %v1663, %v1671
        %1675 = vst [vmem:[#allocation5 + $0x70] sm:$0xff] %v1673
        %1676 = vst [vmem:[#allocation5 + $0x78] sm:$0xff] %v1674
        %v1677 = vlaneseq
        %v1678 = vshrl.u32 %v1677, 7
        %v1679 = vsub.s32 0, %v1678
        %v1680 = vrot.slane %v1111, %v1679
        %v1681 = vmul.f32 %v1680, %v1203
        %v1682 = vmul.f32 %v1680, %v1204
        %v1683 = vmul.f32 %v1681, 1.442695
        %v1684 = vpow.pop %v1683
        %v1685 = vmul.f32 %v1682, 1.442695
        %v1686 = vpow.pop %v1685
        %1687 = vst [vmem:[#allocation3 + $0x80] sm:$0xff] %v1684
        %1688 = vst [vmem:[#allocation3 + $0x88] sm:$0xff] %v1686
        %1689 = vset.pattern.permute.xlu0 8
        %1690 = vperm.xlu0 %1689, %v1173
        %v1691 = vpop.permute.xlu0 %1690
        %1693 = vset.pattern.permute.xlu0 8
        %1694 = vperm.xlu0 %1693, %v1176
        %v1695 = vpop.permute.xlu0 %1694
        %1697 = vset.pattern.permute.xlu0 8
        %1698 = vperm.xlu0 %1697, %v1189
        %v1699 = vpop.permute.xlu0 %1698
        %1701 = vset.pattern.permute.xlu0 8
        %1702 = vperm.xlu0 %1701, %v1192
        %v1703 = vpop.permute.xlu0 %1702
        %v1705 = vsel %vm576, %v1691, %v1699
        %v1706 = vsel %vm576, %v1695, %v1703
        %v1707 = vlaneseq
        %v1708 = vshrl.u32 %v1707, 7
        %v1709 = vsub.s32 0, %v1708
        %v1710 = vrot.slane %v1114, %v1709
        %v1711 = vmul.f32 %v1705, %v1710
        %v1712 = vmul.f32 %v1706, %v1710
        %1713 = vst [vmem:[#allocation4 + $0x80] sm:$0xff] %v1711
        %1714 = vst [vmem:[#allocation4 + $0x88] sm:$0xff] %v1712
        %1715 = vset.pattern.permute.xlu0 8
        %1716 = vperm.xlu0 %1715, %v1181
        %v1717 = vpop.permute.xlu0 %1716
        %1719 = vset.pattern.permute.xlu0 8
        %1720 = vperm.xlu0 %1719, %v1184
        %v1721 = vpop.permute.xlu0 %1720
        %1723 = vset.pattern.permute.xlu0 8
        %1724 = vperm.xlu0 %1723, %v1197
        %v1725 = vpop.permute.xlu0 %1724
        %1727 = vset.pattern.permute.xlu0 8
        %1728 = vperm.xlu0 %1727, %v1200
        %v1729 = vpop.permute.xlu0 %1728
        %v1731 = vsel %vm576, %v1717, %v1725
        %v1732 = vsel %vm576, %v1721, %v1729
        %1733 = vst [vmem:[#allocation5 + $0x80] sm:$0xff] %v1731
        %1734 = vst [vmem:[#allocation5 + $0x88] sm:$0xff] %v1732
        %v1735 = vlaneseq
        %v1736 = vshrl.u32 %v1735, 7
        %v1737 = vsub.s32 1, %v1736
        %v1738 = vrot.slane %v1111, %v1737
        %v1739 = vmul.f32 %v1738, %v1203
        %v1740 = vmul.f32 %v1738, %v1204
        %v1741 = vmul.f32 %v1739, 1.442695
        %v1742 = vpow.pop %v1741
        %v1743 = vmul.f32 %v1740, 1.442695
        %v1744 = vpow.pop %v1743
        %1745 = vst [vmem:[#allocation3 + $0x90] sm:$0xff] %v1742
        %1746 = vst [vmem:[#allocation3 + $0x98] sm:$0xff] %v1744
        %1747 = vset.pattern.permute.xlu0 9
        %1748 = vperm.xlu0 %1747, %v1173
        %v1749 = vpop.permute.xlu0 %1748
        %1751 = vset.pattern.permute.xlu0 9
        %1752 = vperm.xlu0 %1751, %v1176
        %v1753 = vpop.permute.xlu0 %1752
        %1755 = vset.pattern.permute.xlu0 9
        %1756 = vperm.xlu0 %1755, %v1189
        %v1757 = vpop.permute.xlu0 %1756
        %1759 = vset.pattern.permute.xlu0 9
        %1760 = vperm.xlu0 %1759, %v1192
        %v1761 = vpop.permute.xlu0 %1760
        %v1763 = vsel %vm576, %v1749, %v1757
        %v1764 = vsel %vm576, %v1753, %v1761
        %v1765 = vlaneseq
        %v1766 = vshrl.u32 %v1765, 7
        %v1767 = vsub.s32 1, %v1766
        %v1768 = vrot.slane %v1114, %v1767
        %v1769 = vmul.f32 %v1763, %v1768
        %v1770 = vmul.f32 %v1764, %v1768
        %1771 = vst [vmem:[#allocation4 + $0x90] sm:$0xff] %v1769
        %1772 = vst [vmem:[#allocation4 + $0x98] sm:$0xff] %v1770
        %1773 = vset.pattern.permute.xlu0 9
        %1774 = vperm.xlu0 %1773, %v1181
        %v1775 = vpop.permute.xlu0 %1774
        %1777 = vset.pattern.permute.xlu0 9
        %1778 = vperm.xlu0 %1777, %v1184
        %v1779 = vpop.permute.xlu0 %1778
        %1781 = vset.pattern.permute.xlu0 9
        %1782 = vperm.xlu0 %1781, %v1197
        %v1783 = vpop.permute.xlu0 %1782
        %1785 = vset.pattern.permute.xlu0 9
        %1786 = vperm.xlu0 %1785, %v1200
        %v1787 = vpop.permute.xlu0 %1786
        %v1789 = vsel %vm576, %v1775, %v1783
        %v1790 = vsel %vm576, %v1779, %v1787
        %1791 = vst [vmem:[#allocation5 + $0x90] sm:$0xff] %v1789
        %1792 = vst [vmem:[#allocation5 + $0x98] sm:$0xff] %v1790
        %v1793 = vlaneseq
        %v1794 = vshrl.u32 %v1793, 7
        %v1795 = vsub.s32 2, %v1794
        %v1796 = vrot.slane %v1111, %v1795
        %v1797 = vmul.f32 %v1796, %v1203
        %v1798 = vmul.f32 %v1796, %v1204
        %v1799 = vmul.f32 %v1797, 1.442695
        %v1800 = vpow.pop %v1799
        %v1801 = vmul.f32 %v1798, 1.442695
        %v1802 = vpow.pop %v1801
        %1803 = vst [vmem:[#allocation3 + $0xa0] sm:$0xff] %v1800
        %1804 = vst [vmem:[#allocation3 + $0xa8] sm:$0xff] %v1802
        %1805 = vset.pattern.permute.xlu0 10
        %1806 = vperm.xlu0 %1805, %v1173
        %v1807 = vpop.permute.xlu0 %1806
        %1809 = vset.pattern.permute.xlu0 10
        %1810 = vperm.xlu0 %1809, %v1176
        %v1811 = vpop.permute.xlu0 %1810
        %1813 = vset.pattern.permute.xlu0 10
        %1814 = vperm.xlu0 %1813, %v1189
        %v1815 = vpop.permute.xlu0 %1814
        %1817 = vset.pattern.permute.xlu0 10
        %1818 = vperm.xlu0 %1817, %v1192
        %v1819 = vpop.permute.xlu0 %1818
        %v1821 = vsel %vm576, %v1807, %v1815
        %v1822 = vsel %vm576, %v1811, %v1819
        %v1823 = vlaneseq
        %v1824 = vshrl.u32 %v1823, 7
        %v1825 = vsub.s32 2, %v1824
        %v1826 = vrot.slane %v1114, %v1825
        %v1827 = vmul.f32 %v1821, %v1826
        %v1828 = vmul.f32 %v1822, %v1826
        %1829 = vst [vmem:[#allocation4 + $0xa0] sm:$0xff] %v1827
        %1830 = vst [vmem:[#allocation4 + $0xa8] sm:$0xff] %v1828
        %1831 = vset.pattern.permute.xlu0 10
        %1832 = vperm.xlu0 %1831, %v1181
        %v1833 = vpop.permute.xlu0 %1832
        %1835 = vset.pattern.permute.xlu0 10
        %1836 = vperm.xlu0 %1835, %v1184
        %v1837 = vpop.permute.xlu0 %1836
        %1839 = vset.pattern.permute.xlu0 10
        %1840 = vperm.xlu0 %1839, %v1197
        %v1841 = vpop.permute.xlu0 %1840
        %1843 = vset.pattern.permute.xlu0 10
        %1844 = vperm.xlu0 %1843, %v1200
        %v1845 = vpop.permute.xlu0 %1844
        %v1847 = vsel %vm576, %v1833, %v1841
        %v1848 = vsel %vm576, %v1837, %v1845
        %1849 = vst [vmem:[#allocation5 + $0xa0] sm:$0xff] %v1847
        %1850 = vst [vmem:[#allocation5 + $0xa8] sm:$0xff] %v1848
        %v1851 = vlaneseq
        %v1852 = vshrl.u32 %v1851, 7
        %v1853 = vsub.s32 3, %v1852
        %v1854 = vrot.slane %v1111, %v1853
        %v1855 = vmul.f32 %v1854, %v1203
        %v1856 = vmul.f32 %v1854, %v1204
        %v1857 = vmul.f32 %v1855, 1.442695
        %v1858 = vpow.pop %v1857
        %v1859 = vmul.f32 %v1856, 1.442695
        %v1860 = vpow.pop %v1859
        %1861 = vst [vmem:[#allocation3 + $0xb0] sm:$0xff] %v1858
        %1862 = vst [vmem:[#allocation3 + $0xb8] sm:$0xff] %v1860
        %1863 = vset.pattern.permute.xlu0 11
        %1864 = vperm.xlu0 %1863, %v1173
        %v1865 = vpop.permute.xlu0 %1864
        %1867 = vset.pattern.permute.xlu0 11
        %1868 = vperm.xlu0 %1867, %v1176
        %v1869 = vpop.permute.xlu0 %1868
        %1871 = vset.pattern.permute.xlu0 11
        %1872 = vperm.xlu0 %1871, %v1189
        %v1873 = vpop.permute.xlu0 %1872
        %1875 = vset.pattern.permute.xlu0 11
        %1876 = vperm.xlu0 %1875, %v1192
        %v1877 = vpop.permute.xlu0 %1876
        %v1879 = vsel %vm576, %v1865, %v1873
        %v1880 = vsel %vm576, %v1869, %v1877
        %v1881 = vlaneseq
        %v1882 = vshrl.u32 %v1881, 7
        %v1883 = vsub.s32 3, %v1882
        %v1884 = vrot.slane %v1114, %v1883
        %v1885 = vmul.f32 %v1879, %v1884
        %v1886 = vmul.f32 %v1880, %v1884
        %1887 = vst [vmem:[#allocation4 + $0xb0] sm:$0xff] %v1885
        %1888 = vst [vmem:[#allocation4 + $0xb8] sm:$0xff] %v1886
        %1889 = vset.pattern.permute.xlu0 11
        %1890 = vperm.xlu0 %1889, %v1181
        %v1891 = vpop.permute.xlu0 %1890
        %1893 = vset.pattern.permute.xlu0 11
        %1894 = vperm.xlu0 %1893, %v1184
        %v1895 = vpop.permute.xlu0 %1894
        %1897 = vset.pattern.permute.xlu0 11
        %1898 = vperm.xlu0 %1897, %v1197
        %v1899 = vpop.permute.xlu0 %1898
        %1901 = vset.pattern.permute.xlu0 11
        %1902 = vperm.xlu0 %1901, %v1200
        %v1903 = vpop.permute.xlu0 %1902
        %v1905 = vsel %vm576, %v1891, %v1899
        %v1906 = vsel %vm576, %v1895, %v1903
        %1907 = vst [vmem:[#allocation5 + $0xb0] sm:$0xff] %v1905
        %1908 = vst [vmem:[#allocation5 + $0xb8] sm:$0xff] %v1906
        %v1909 = vlaneseq
        %v1910 = vshrl.u32 %v1909, 7
        %v1911 = vsub.s32 4, %v1910
        %v1912 = vrot.slane %v1111, %v1911
        %v1913 = vmul.f32 %v1912, %v1203
        %v1914 = vmul.f32 %v1912, %v1204
        %v1915 = vmul.f32 %v1913, 1.442695
        %v1916 = vpow.pop %v1915
        %v1917 = vmul.f32 %v1914, 1.442695
        %v1918 = vpow.pop %v1917
        %1919 = vst [vmem:[#allocation3 + $0xc0] sm:$0xff] %v1916
        %1920 = vst [vmem:[#allocation3 + $0xc8] sm:$0xff] %v1918
        %1921 = vset.pattern.permute.xlu0 12
        %1922 = vperm.xlu0 %1921, %v1173
        %v1923 = vpop.permute.xlu0 %1922
        %1925 = vset.pattern.permute.xlu0 12
        %1926 = vperm.xlu0 %1925, %v1176
        %v1927 = vpop.permute.xlu0 %1926
        %1929 = vset.pattern.permute.xlu0 12
        %1930 = vperm.xlu0 %1929, %v1189
        %v1931 = vpop.permute.xlu0 %1930
        %1933 = vset.pattern.permute.xlu0 12
        %1934 = vperm.xlu0 %1933, %v1192
        %v1935 = vpop.permute.xlu0 %1934
        %v1937 = vsel %vm576, %v1923, %v1931
        %v1938 = vsel %vm576, %v1927, %v1935
        %v1939 = vlaneseq
        %v1940 = vshrl.u32 %v1939, 7
        %v1941 = vsub.s32 4, %v1940
        %v1942 = vrot.slane %v1114, %v1941
        %v1943 = vmul.f32 %v1937, %v1942
        %v1944 = vmul.f32 %v1938, %v1942
        %1945 = vst [vmem:[#allocation4 + $0xc0] sm:$0xff] %v1943
        %1946 = vst [vmem:[#allocation4 + $0xc8] sm:$0xff] %v1944
        %1947 = vset.pattern.permute.xlu0 12
        %1948 = vperm.xlu0 %1947, %v1181
        %v1949 = vpop.permute.xlu0 %1948
        %1951 = vset.pattern.permute.xlu0 12
        %1952 = vperm.xlu0 %1951, %v1184
        %v1953 = vpop.permute.xlu0 %1952
        %1955 = vset.pattern.permute.xlu0 12
        %1956 = vperm.xlu0 %1955, %v1197
        %v1957 = vpop.permute.xlu0 %1956
        %1959 = vset.pattern.permute.xlu0 12
        %1960 = vperm.xlu0 %1959, %v1200
        %v1961 = vpop.permute.xlu0 %1960
        %v1963 = vsel %vm576, %v1949, %v1957
        %v1964 = vsel %vm576, %v1953, %v1961
        %1965 = vst [vmem:[#allocation5 + $0xc0] sm:$0xff] %v1963
        %1966 = vst [vmem:[#allocation5 + $0xc8] sm:$0xff] %v1964
        %v1967 = vlaneseq
        %v1968 = vshrl.u32 %v1967, 7
        %v1969 = vsub.s32 5, %v1968
        %v1970 = vrot.slane %v1111, %v1969
        %v1971 = vmul.f32 %v1970, %v1203
        %v1972 = vmul.f32 %v1970, %v1204
        %v1973 = vmul.f32 %v1971, 1.442695
        %v1974 = vpow.pop %v1973
        %v1975 = vmul.f32 %v1972, 1.442695
        %v1976 = vpow.pop %v1975
        %1977 = vst [vmem:[#allocation3 + $0xd0] sm:$0xff] %v1974
        %1978 = vst [vmem:[#allocation3 + $0xd8] sm:$0xff] %v1976
        %1979 = vset.pattern.permute.xlu0 13
        %1980 = vperm.xlu0 %1979, %v1173
        %v1981 = vpop.permute.xlu0 %1980
        %1983 = vset.pattern.permute.xlu0 13
        %1984 = vperm.xlu0 %1983, %v1176
        %v1985 = vpop.permute.xlu0 %1984
        %1987 = vset.pattern.permute.xlu0 13
        %1988 = vperm.xlu0 %1987, %v1189
        %v1989 = vpop.permute.xlu0 %1988
        %1991 = vset.pattern.permute.xlu0 13
        %1992 = vperm.xlu0 %1991, %v1192
        %v1993 = vpop.permute.xlu0 %1992
        %v1995 = vsel %vm576, %v1981, %v1989
        %v1996 = vsel %vm576, %v1985, %v1993
        %v1997 = vlaneseq
        %v1998 = vshrl.u32 %v1997, 7
        %v1999 = vsub.s32 5, %v1998
        %v2000 = vrot.slane %v1114, %v1999
        %v2001 = vmul.f32 %v1995, %v2000
        %v2002 = vmul.f32 %v1996, %v2000
        %2003 = vst [vmem:[#allocation4 + $0xd0] sm:$0xff] %v2001
        %2004 = vst [vmem:[#allocation4 + $0xd8] sm:$0xff] %v2002
        %2005 = vset.pattern.permute.xlu0 13
        %2006 = vperm.xlu0 %2005, %v1181
        %v2007 = vpop.permute.xlu0 %2006
        %2009 = vset.pattern.permute.xlu0 13
        %2010 = vperm.xlu0 %2009, %v1184
        %v2011 = vpop.permute.xlu0 %2010
        %2013 = vset.pattern.permute.xlu0 13
        %2014 = vperm.xlu0 %2013, %v1197
        %v2015 = vpop.permute.xlu0 %2014
        %2017 = vset.pattern.permute.xlu0 13
        %2018 = vperm.xlu0 %2017, %v1200
        %v2019 = vpop.permute.xlu0 %2018
        %v2021 = vsel %vm576, %v2007, %v2015
        %v2022 = vsel %vm576, %v2011, %v2019
        %2023 = vst [vmem:[#allocation5 + $0xd0] sm:$0xff] %v2021
        %2024 = vst [vmem:[#allocation5 + $0xd8] sm:$0xff] %v2022
        %v2025 = vlaneseq
        %v2026 = vshrl.u32 %v2025, 7
        %v2027 = vsub.s32 6, %v2026
        %v2028 = vrot.slane %v1111, %v2027
        %v2029 = vmul.f32 %v2028, %v1203
        %v2030 = vmul.f32 %v2028, %v1204
        %v2031 = vmul.f32 %v2029, 1.442695
        %v2032 = vpow.pop %v2031
        %v2033 = vmul.f32 %v2030, 1.442695
        %v2034 = vpow.pop %v2033
        %2035 = vst [vmem:[#allocation3 + $0xe0] sm:$0xff] %v2032
        %2036 = vst [vmem:[#allocation3 + $0xe8] sm:$0xff] %v2034
        %2037 = vset.pattern.permute.xlu0 14
        %2038 = vperm.xlu0 %2037, %v1173
        %v2039 = vpop.permute.xlu0 %2038
        %2041 = vset.pattern.permute.xlu0 14
        %2042 = vperm.xlu0 %2041, %v1176
        %v2043 = vpop.permute.xlu0 %2042
        %2045 = vset.pattern.permute.xlu0 14
        %2046 = vperm.xlu0 %2045, %v1189
        %v2047 = vpop.permute.xlu0 %2046
        %2049 = vset.pattern.permute.xlu0 14
        %2050 = vperm.xlu0 %2049, %v1192
        %v2051 = vpop.permute.xlu0 %2050
        %v2053 = vsel %vm576, %v2039, %v2047
        %v2054 = vsel %vm576, %v2043, %v2051
        %v2055 = vlaneseq
        %v2056 = vshrl.u32 %v2055, 7
        %v2057 = vsub.s32 6, %v2056
        %v2058 = vrot.slane %v1114, %v2057
        %v2059 = vmul.f32 %v2053, %v2058
        %v2060 = vmul.f32 %v2054, %v2058
        %2061 = vst [vmem:[#allocation4 + $0xe0] sm:$0xff] %v2059
        %2062 = vst [vmem:[#allocation4 + $0xe8] sm:$0xff] %v2060
        %2063 = vset.pattern.permute.xlu0 14
        %2064 = vperm.xlu0 %2063, %v1181
        %v2065 = vpop.permute.xlu0 %2064
        %2067 = vset.pattern.permute.xlu0 14
        %2068 = vperm.xlu0 %2067, %v1184
        %v2069 = vpop.permute.xlu0 %2068
        %2071 = vset.pattern.permute.xlu0 14
        %2072 = vperm.xlu0 %2071, %v1197
        %v2073 = vpop.permute.xlu0 %2072
        %2075 = vset.pattern.permute.xlu0 14
        %2076 = vperm.xlu0 %2075, %v1200
        %v2077 = vpop.permute.xlu0 %2076
        %v2079 = vsel %vm576, %v2065, %v2073
        %v2080 = vsel %vm576, %v2069, %v2077
        %2081 = vst [vmem:[#allocation5 + $0xe0] sm:$0xff] %v2079
        %2082 = vst [vmem:[#allocation5 + $0xe8] sm:$0xff] %v2080
        %v2083 = vlaneseq
        %v2084 = vshrl.u32 %v2083, 7
        %v2085 = vsub.s32 7, %v2084
        %v2086 = vrot.slane %v1111, %v2085
        %v2087 = vmul.f32 %v2086, %v1203
        %v2088 = vmul.f32 %v2086, %v1204
        %v2089 = vmul.f32 %v2087, 1.442695
        %v2090 = vpow.pop %v2089
        %v2091 = vmul.f32 %v2088, 1.442695
        %v2092 = vpow.pop %v2091
        %2093 = vst [vmem:[#allocation3 + $0xf0] sm:$0xff] %v2090
        %2094 = vst [vmem:[#allocation3 + $0xf8] sm:$0xff] %v2092
        %2095 = vset.pattern.permute.xlu0 15
        %2096 = vperm.xlu0 %2095, %v1173
        %v2097 = vpop.permute.xlu0 %2096
        %2099 = vset.pattern.permute.xlu0 15
        %2100 = vperm.xlu0 %2099, %v1176
        %v2101 = vpop.permute.xlu0 %2100
        %2103 = vset.pattern.permute.xlu0 15
        %2104 = vperm.xlu0 %2103, %v1189
        %v2105 = vpop.permute.xlu0 %2104
        %2107 = vset.pattern.permute.xlu0 15
        %2108 = vperm.xlu0 %2107, %v1192
        %v2109 = vpop.permute.xlu0 %2108
        %v2111 = vsel %vm576, %v2097, %v2105
        %v2112 = vsel %vm576, %v2101, %v2109
        %v2113 = vlaneseq
        %v2114 = vshrl.u32 %v2113, 7
        %v2115 = vsub.s32 7, %v2114
        %v2116 = vrot.slane %v1114, %v2115
        %v2117 = vmul.f32 %v2111, %v2116
        %v2118 = vmul.f32 %v2112, %v2116
        %2119 = vst [vmem:[#allocation4 + $0xf0] sm:$0xff] %v2117
        %2120 = vst [vmem:[#allocation4 + $0xf8] sm:$0xff] %v2118
        %2121 = vset.pattern.permute.xlu0 15
        %2122 = vperm.xlu0 %2121, %v1181
        %v2123 = vpop.permute.xlu0 %2122
        %2125 = vset.pattern.permute.xlu0 15
        %2126 = vperm.xlu0 %2125, %v1184
        %v2127 = vpop.permute.xlu0 %2126
        %2129 = vset.pattern.permute.xlu0 15
        %2130 = vperm.xlu0 %2129, %v1197
        %v2131 = vpop.permute.xlu0 %2130
        %2133 = vset.pattern.permute.xlu0 15
        %2134 = vperm.xlu0 %2133, %v1200
        %v2135 = vpop.permute.xlu0 %2134
        %v2137 = vsel %vm576, %v2123, %v2131
        %v2138 = vsel %vm576, %v2127, %v2135
        %2139 = vst [vmem:[#allocation5 + $0xf0] sm:$0xff] %v2137
        %2140 = vst [vmem:[#allocation5 + $0xf8] sm:$0xff] %v2138
        %v2141 = vlaneseq
        %v2142 = vshrl.u32 %v2141, 7
        %v2143 = vsub.s32 0, %v2142
        %v2144 = vrot.slane %v1112, %v2143
        %v2145 = vmul.f32 %v2144, %v1203
        %v2146 = vmul.f32 %v2144, %v1204
        %v2147 = vmul.f32 %v2145, 1.442695
        %v2148 = vpow.pop %v2147
        %v2149 = vmul.f32 %v2146, 1.442695
        %v2150 = vpow.pop %v2149
        %2151 = vst [vmem:[#allocation3 + $0x100] sm:$0xff] %v2148
        %2152 = vst [vmem:[#allocation3 + $0x108] sm:$0xff] %v2150
        %2153 = vset.pattern.permute.xlu0 16
        %2154 = vperm.xlu0 %2153, %v1173
        %v2155 = vpop.permute.xlu0 %2154
        %2157 = vset.pattern.permute.xlu0 16
        %2158 = vperm.xlu0 %2157, %v1176
        %v2159 = vpop.permute.xlu0 %2158
        %2161 = vset.pattern.permute.xlu0 16
        %2162 = vperm.xlu0 %2161, %v1189
        %v2163 = vpop.permute.xlu0 %2162
        %2165 = vset.pattern.permute.xlu0 16
        %2166 = vperm.xlu0 %2165, %v1192
        %v2167 = vpop.permute.xlu0 %2166
        %v2169 = vsel %vm576, %v2155, %v2163
        %v2170 = vsel %vm576, %v2159, %v2167
        %v2171 = vlaneseq
        %v2172 = vshrl.u32 %v2171, 7
        %v2173 = vsub.s32 0, %v2172
        %v2174 = vrot.slane %v1115, %v2173
        %v2175 = vmul.f32 %v2169, %v2174
        %v2176 = vmul.f32 %v2170, %v2174
        %2177 = vst [vmem:[#allocation4 + $0x100] sm:$0xff] %v2175
        %2178 = vst [vmem:[#allocation4 + $0x108] sm:$0xff] %v2176
        %2179 = vset.pattern.permute.xlu0 16
        %2180 = vperm.xlu0 %2179, %v1181
        %v2181 = vpop.permute.xlu0 %2180
        %2183 = vset.pattern.permute.xlu0 16
        %2184 = vperm.xlu0 %2183, %v1184
        %v2185 = vpop.permute.xlu0 %2184
        %2187 = vset.pattern.permute.xlu0 16
        %2188 = vperm.xlu0 %2187, %v1197
        %v2189 = vpop.permute.xlu0 %2188
        %2191 = vset.pattern.permute.xlu0 16
        %2192 = vperm.xlu0 %2191, %v1200
        %v2193 = vpop.permute.xlu0 %2192
        %v2195 = vsel %vm576, %v2181, %v2189
        %v2196 = vsel %vm576, %v2185, %v2193
        %2197 = vst [vmem:[#allocation5 + $0x100] sm:$0xff] %v2195
        %2198 = vst [vmem:[#allocation5 + $0x108] sm:$0xff] %v2196
        %v2199 = vld [vmem:[#allocation3] sm:$0xff]
        %v2200 = vld [vmem:[#allocation3 + $0x8] sm:$0xff]
        %v2201 = vmul.f32 %v2199, 0.0
        %v2202 = vmul.f32 %v2200, 0.0
        %v2203 = vld [vmem:[#allocation4] sm:$0xff]
        %v2204 = vld [vmem:[#allocation4 + $0x8] sm:$0xff]
        %v2205 = vadd.f32 %v2201, %v2203
        %v2206 = vadd.f32 %v2202, %v2204
        %v2207 = vld [vmem:[#allocation5] sm:$0xff]
        %v2208 = vld [vmem:[#allocation5 + $0x8] sm:$0xff]
        %v2209 = vmul.f32 %v2205, %v2207
        %v2210 = vmul.f32 %v2206, %v2208
        %v2211 = vadd.f32 %v2209, %v2210
        %v2212 = vrot.slane %v2211, 4
        %v2213 = vadd.f32 %v2211, %v2212
        %v2214 = vrot.slane %v2213, 2
        %v2215 = vadd.f32 %v2213, %v2214
        %v2216 = vrot.slane %v2215, 1
        %v2217 = vadd.f32 %v2215, %v2216
        %v2218 = vadd.f32 %v2217, %v1123
        %2219 = vst.msk [vmem:[#allocation6] sm:$0x1] %vm888, %v2218
        %2220 = vst.msk [vmem:[#allocation6 + $0x10] sm:$0x1] %vm905, %v2218
        %v2221 = vld [vmem:[#allocation3 + $0x10] sm:$0xff]
        %v2222 = vld [vmem:[#allocation3 + $0x18] sm:$0xff]
        %v2223 = vmul.f32 %v2221, %v2205
        %v2224 = vmul.f32 %v2222, %v2206
        %v2225 = vld [vmem:[#allocation4 + $0x10] sm:$0xff]
        %v2226 = vld [vmem:[#allocation4 + $0x18] sm:$0xff]
        %v2227 = vadd.f32 %v2223, %v2225
        %v2228 = vadd.f32 %v2224, %v2226
        %v2229 = vld [vmem:[#allocation5 + $0x10] sm:$0xff]
        %v2230 = vld [vmem:[#allocation5 + $0x18] sm:$0xff]
        %v2231 = vmul.f32 %v2227, %v2229
        %v2232 = vmul.f32 %v2228, %v2230
        %v2233 = vadd.f32 %v2231, %v2232
        %v2234 = vrot.slane %v2233, 4
        %v2235 = vadd.f32 %v2233, %v2234
        %v2236 = vrot.slane %v2235, 2
        %v2237 = vadd.f32 %v2235, %v2236
        %v2238 = vrot.slane %v2237, 1
        %v2239 = vadd.f32 %v2237, %v2238
        %v2240 = vadd.f32 %v2239, %v1123
        %vm2241 = vcmask 517121
        %2242 = vst.msk [vmem:[#allocation6] sm:$0x2] %vm2241, %v2240
        %vm2243 = vcmask 1041921
        %2244 = vst.msk [vmem:[#allocation6 + $0xe] sm:$0x2] %vm2243, %v2240
        %v2245 = vld [vmem:[#allocation3 + $0x20] sm:$0xff]
        %v2246 = vld [vmem:[#allocation3 + $0x28] sm:$0xff]
        %v2247 = vmul.f32 %v2245, %v2227
        %v2248 = vmul.f32 %v2246, %v2228
        %v2249 = vld [vmem:[#allocation4 + $0x20] sm:$0xff]
        %v2250 = vld [vmem:[#allocation4 + $0x28] sm:$0xff]
        %v2251 = vadd.f32 %v2247, %v2249
        %v2252 = vadd.f32 %v2248, %v2250
        %v2253 = vld [vmem:[#allocation5 + $0x20] sm:$0xff]
        %v2254 = vld [vmem:[#allocation5 + $0x28] sm:$0xff]
        %v2255 = vmul.f32 %v2251, %v2253
        %v2256 = vmul.f32 %v2252, %v2254
        %v2257 = vadd.f32 %v2255, %v2256
        %v2258 = vrot.slane %v2257, 4
        %v2259 = vadd.f32 %v2257, %v2258
        %v2260 = vrot.slane %v2259, 2
        %v2261 = vadd.f32 %v2259, %v2260
        %v2262 = vrot.slane %v2261, 1
        %v2263 = vadd.f32 %v2261, %v2262
        %v2264 = vadd.f32 %v2263, %v1123
        %vm2265 = vcmask 518146
        %2266 = vst.msk [vmem:[#allocation6] sm:$0x4] %vm2265, %v2264
        %vm2267 = vcmask 1042946
        %2268 = vst.msk [vmem:[#allocation6 + $0xc] sm:$0x4] %vm2267, %v2264
        %v2269 = vld [vmem:[#allocation3 + $0x30] sm:$0xff]
        %v2270 = vld [vmem:[#allocation3 + $0x38] sm:$0xff]
        %v2271 = vmul.f32 %v2269, %v2251
        %v2272 = vmul.f32 %v2270, %v2252
        %v2273 = vld [vmem:[#allocation4 + $0x30] sm:$0xff]
        %v2274 = vld [vmem:[#allocation4 + $0x38] sm:$0xff]
        %v2275 = vadd.f32 %v2271, %v2273
        %v2276 = vadd.f32 %v2272, %v2274
        %v2277 = vld [vmem:[#allocation5 + $0x30] sm:$0xff]
        %v2278 = vld [vmem:[#allocation5 + $0x38] sm:$0xff]
        %v2279 = vmul.f32 %v2275, %v2277
        %v2280 = vmul.f32 %v2276, %v2278
        %v2281 = vadd.f32 %v2279, %v2280
        %v2282 = vrot.slane %v2281, 4
        %v2283 = vadd.f32 %v2281, %v2282
        %v2284 = vrot.slane %v2283, 2
        %v2285 = vadd.f32 %v2283, %v2284
        %v2286 = vrot.slane %v2285, 1
        %v2287 = vadd.f32 %v2285, %v2286
        %v2288 = vadd.f32 %v2287, %v1123
        %vm2289 = vcmask 519171
        %2290 = vst.msk [vmem:[#allocation6] sm:$0x8] %vm2289, %v2288
        %vm2291 = vcmask 1043971
        %2292 = vst.msk [vmem:[#allocation6 + $0xa] sm:$0x8] %vm2291, %v2288
        %v2293 = vld [vmem:[#allocation3 + $0x40] sm:$0xff]
        %v2294 = vld [vmem:[#allocation3 + $0x48] sm:$0xff]
        %v2295 = vmul.f32 %v2293, %v2275
        %v2296 = vmul.f32 %v2294, %v2276
        %v2297 = vld [vmem:[#allocation4 + $0x40] sm:$0xff]
        %v2298 = vld [vmem:[#allocation4 + $0x48] sm:$0xff]
        %v2299 = vadd.f32 %v2295, %v2297
        %v2300 = vadd.f32 %v2296, %v2298
        %v2301 = vld [vmem:[#allocation5 + $0x40] sm:$0xff]
        %v2302 = vld [vmem:[#allocation5 + $0x48] sm:$0xff]
        %v2303 = vmul.f32 %v2299, %v2301
        %v2304 = vmul.f32 %v2300, %v2302
        %v2305 = vadd.f32 %v2303, %v2304
        %v2306 = vrot.slane %v2305, 4
        %v2307 = vadd.f32 %v2305, %v2306
        %v2308 = vrot.slane %v2307, 2
        %v2309 = vadd.f32 %v2307, %v2308
        %v2310 = vrot.slane %v2309, 1
        %v2311 = vadd.f32 %v2309, %v2310
        %v2312 = vadd.f32 %v2311, %v1123
        %vm2313 = vcmask 520196
        %2314 = vst.msk [vmem:[#allocation6] sm:$0x10] %vm2313, %v2312
        %vm2315 = vcmask 1044996
        %2316 = vst.msk [vmem:[#allocation6 + $0x8] sm:$0x10] %vm2315, %v2312
        %v2317 = vld [vmem:[#allocation3 + $0x50] sm:$0xff]
        %v2318 = vld [vmem:[#allocation3 + $0x58] sm:$0xff]
        %v2319 = vmul.f32 %v2317, %v2299
        %v2320 = vmul.f32 %v2318, %v2300
        %v2321 = vld [vmem:[#allocation4 + $0x50] sm:$0xff]
        %v2322 = vld [vmem:[#allocation4 + $0x58] sm:$0xff]
        %v2323 = vadd.f32 %v2319, %v2321
        %v2324 = vadd.f32 %v2320, %v2322
        %v2325 = vld [vmem:[#allocation5 + $0x50] sm:$0xff]
        %v2326 = vld [vmem:[#allocation5 + $0x58] sm:$0xff]
        %v2327 = vmul.f32 %v2323, %v2325
        %v2328 = vmul.f32 %v2324, %v2326
        %v2329 = vadd.f32 %v2327, %v2328
        %v2330 = vrot.slane %v2329, 4
        %v2331 = vadd.f32 %v2329, %v2330
        %v2332 = vrot.slane %v2331, 2
        %v2333 = vadd.f32 %v2331, %v2332
        %v2334 = vrot.slane %v2333, 1
        %v2335 = vadd.f32 %v2333, %v2334
        %v2336 = vadd.f32 %v2335, %v1123
        %vm2337 = vcmask 521221
        %2338 = vst.msk [vmem:[#allocation6] sm:$0x20] %vm2337, %v2336
        %vm2339 = vcmask 1046021
        %2340 = vst.msk [vmem:[#allocation6 + $0x6] sm:$0x20] %vm2339, %v2336
        %v2341 = vld [vmem:[#allocation3 + $0x60] sm:$0xff]
        %v2342 = vld [vmem:[#allocation3 + $0x68] sm:$0xff]
        %v2343 = vmul.f32 %v2341, %v2323
        %v2344 = vmul.f32 %v2342, %v2324
        %v2345 = vld [vmem:[#allocation4 + $0x60] sm:$0xff]
        %v2346 = vld [vmem:[#allocation4 + $0x68] sm:$0xff]
        %v2347 = vadd.f32 %v2343, %v2345
        %v2348 = vadd.f32 %v2344, %v2346
        %v2349 = vld [vmem:[#allocation5 + $0x60] sm:$0xff]
        %v2350 = vld [vmem:[#allocation5 + $0x68] sm:$0xff]
        %v2351 = vmul.f32 %v2347, %v2349
        %v2352 = vmul.f32 %v2348, %v2350
        %v2353 = vadd.f32 %v2351, %v2352
        %v2354 = vrot.slane %v2353, 4
        %v2355 = vadd.f32 %v2353, %v2354
        %v2356 = vrot.slane %v2355, 2
        %v2357 = vadd.f32 %v2355, %v2356
        %v2358 = vrot.slane %v2357, 1
        %v2359 = vadd.f32 %v2357, %v2358
        %v2360 = vadd.f32 %v2359, %v1123
        %vm2361 = vcmask 522246
        %2362 = vst.msk [vmem:[#allocation6] sm:$0x40] %vm2361, %v2360
        %vm2363 = vcmask 1047046
        %2364 = vst.msk [vmem:[#allocation6 + $0x4] sm:$0x40] %vm2363, %v2360
        %v2365 = vld [vmem:[#allocation3 + $0x70] sm:$0xff]
        %v2366 = vld [vmem:[#allocation3 + $0x78] sm:$0xff]
        %v2367 = vmul.f32 %v2365, %v2347
        %v2368 = vmul.f32 %v2366, %v2348
        %v2369 = vld [vmem:[#allocation4 + $0x70] sm:$0xff]
        %v2370 = vld [vmem:[#allocation4 + $0x78] sm:$0xff]
        %v2371 = vadd.f32 %v2367, %v2369
        %v2372 = vadd.f32 %v2368, %v2370
        %v2373 = vld [vmem:[#allocation5 + $0x70] sm:$0xff]
        %v2374 = vld [vmem:[#allocation5 + $0x78] sm:$0xff]
        %v2375 = vmul.f32 %v2371, %v2373
        %v2376 = vmul.f32 %v2372, %v2374
        %v2377 = vadd.f32 %v2375, %v2376
        %v2378 = vrot.slane %v2377, 4
        %v2379 = vadd.f32 %v2377, %v2378
        %v2380 = vrot.slane %v2379, 2
        %v2381 = vadd.f32 %v2379, %v2380
        %v2382 = vrot.slane %v2381, 1
        %v2383 = vadd.f32 %v2381, %v2382
        %v2384 = vadd.f32 %v2383, %v1123
        %vm2385 = vcmask 523271
        %2386 = vst.msk [vmem:[#allocation6] sm:$0x80] %vm2385, %v2384
        %vm2387 = vcmask 1048071
        %2388 = vst.msk [vmem:[#allocation6 + $0x2] sm:$0x80] %vm2387, %v2384
        %v2389 = vld [vmem:[#allocation3 + $0x80] sm:$0xff]
        %v2390 = vld [vmem:[#allocation3 + $0x88] sm:$0xff]
        %v2391 = vmul.f32 %v2389, %v2371
        %v2392 = vmul.f32 %v2390, %v2372
        %v2393 = vld [vmem:[#allocation4 + $0x80] sm:$0xff]
        %v2394 = vld [vmem:[#allocation4 + $0x88] sm:$0xff]
        %v2395 = vadd.f32 %v2391, %v2393
        %v2396 = vadd.f32 %v2392, %v2394
        %v2397 = vld [vmem:[#allocation5 + $0x80] sm:$0xff]
        %v2398 = vld [vmem:[#allocation5 + $0x88] sm:$0xff]
        %v2399 = vmul.f32 %v2395, %v2397
        %v2400 = vmul.f32 %v2396, %v2398
        %v2401 = vadd.f32 %v2399, %v2400
        %v2402 = vrot.slane %v2401, 4
        %v2403 = vadd.f32 %v2401, %v2402
        %v2404 = vrot.slane %v2403, 2
        %v2405 = vadd.f32 %v2403, %v2404
        %v2406 = vrot.slane %v2405, 1
        %v2407 = vadd.f32 %v2405, %v2406
        %v2408 = vadd.f32 %v2407, %v1124
        %2409 = vst.msk [vmem:[#allocation6 + $0x8] sm:$0x1] %vm888, %v2408
        %2410 = vst.msk [vmem:[#allocation6 + $0x8] sm:$0x1] %vm905, %v2408
        %v2411 = vld [vmem:[#allocation3 + $0x90] sm:$0xff]
        %v2412 = vld [vmem:[#allocation3 + $0x98] sm:$0xff]
        %v2413 = vmul.f32 %v2411, %v2395
        %v2414 = vmul.f32 %v2412, %v2396
        %v2415 = vld [vmem:[#allocation4 + $0x90] sm:$0xff]
        %v2416 = vld [vmem:[#allocation4 + $0x98] sm:$0xff]
        %v2417 = vadd.f32 %v2413, %v2415
        %v2418 = vadd.f32 %v2414, %v2416
        %v2419 = vld [vmem:[#allocation5 + $0x90] sm:$0xff]
        %v2420 = vld [vmem:[#allocation5 + $0x98] sm:$0xff]
        %v2421 = vmul.f32 %v2417, %v2419
        %v2422 = vmul.f32 %v2418, %v2420
        %v2423 = vadd.f32 %v2421, %v2422
        %v2424 = vrot.slane %v2423, 4
        %v2425 = vadd.f32 %v2423, %v2424
        %v2426 = vrot.slane %v2425, 2
        %v2427 = vadd.f32 %v2425, %v2426
        %v2428 = vrot.slane %v2427, 1
        %v2429 = vadd.f32 %v2427, %v2428
        %v2430 = vadd.f32 %v2429, %v1124
        %2431 = vst.msk [vmem:[#allocation6 + $0x8] sm:$0x2] %vm2241, %v2430
        %2432 = vst.msk [vmem:[#allocation6 + $0x6] sm:$0x2] %vm2243, %v2430
        %v2433 = vld [vmem:[#allocation3 + $0xa0] sm:$0xff]
        %v2434 = vld [vmem:[#allocation3 + $0xa8] sm:$0xff]
        %v2435 = vmul.f32 %v2433, %v2417
        %v2436 = vmul.f32 %v2434, %v2418
        %v2437 = vld [vmem:[#allocation4 + $0xa0] sm:$0xff]
        %v2438 = vld [vmem:[#allocation4 + $0xa8] sm:$0xff]
        %v2439 = vadd.f32 %v2435, %v2437
        %v2440 = vadd.f32 %v2436, %v2438
        %v2441 = vld [vmem:[#allocation5 + $0xa0] sm:$0xff]
        %v2442 = vld [vmem:[#allocation5 + $0xa8] sm:$0xff]
        %v2443 = vmul.f32 %v2439, %v2441
        %v2444 = vmul.f32 %v2440, %v2442
        %v2445 = vadd.f32 %v2443, %v2444
        %v2446 = vrot.slane %v2445, 4
        %v2447 = vadd.f32 %v2445, %v2446
        %v2448 = vrot.slane %v2447, 2
        %v2449 = vadd.f32 %v2447, %v2448
        %v2450 = vrot.slane %v2449, 1
        %v2451 = vadd.f32 %v2449, %v2450
        %v2452 = vadd.f32 %v2451, %v1124
        %2453 = vst.msk [vmem:[#allocation6 + $0x8] sm:$0x4] %vm2265, %v2452
        %2454 = vst.msk [vmem:[#allocation6 + $0x4] sm:$0x4] %vm2267, %v2452
        %v2455 = vld [vmem:[#allocation3 + $0xb0] sm:$0xff]
        %v2456 = vld [vmem:[#allocation3 + $0xb8] sm:$0xff]
        %v2457 = vmul.f32 %v2455, %v2439
        %v2458 = vmul.f32 %v2456, %v2440
        %v2459 = vld [vmem:[#allocation4 + $0xb0] sm:$0xff]
        %v2460 = vld [vmem:[#allocation4 + $0xb8] sm:$0xff]
        %v2461 = vadd.f32 %v2457, %v2459
        %v2462 = vadd.f32 %v2458, %v2460
        %v2463 = vld [vmem:[#allocation5 + $0xb0] sm:$0xff]
        %v2464 = vld [vmem:[#allocation5 + $0xb8] sm:$0xff]
        %v2465 = vmul.f32 %v2461, %v2463
        %v2466 = vmul.f32 %v2462, %v2464
        %v2467 = vadd.f32 %v2465, %v2466
        %v2468 = vrot.slane %v2467, 4
        %v2469 = vadd.f32 %v2467, %v2468
        %v2470 = vrot.slane %v2469, 2
        %v2471 = vadd.f32 %v2469, %v2470
        %v2472 = vrot.slane %v2471, 1
        %v2473 = vadd.f32 %v2471, %v2472
        %v2474 = vadd.f32 %v2473, %v1124
        %2475 = vst.msk [vmem:[#allocation6 + $0x8] sm:$0x8] %vm2289, %v2474
        %2476 = vst.msk [vmem:[#allocation6 + $0x2] sm:$0x8] %vm2291, %v2474
        %v2477 = vld [vmem:[#allocation3 + $0xc0] sm:$0xff]
        %v2478 = vld [vmem:[#allocation3 + $0xc8] sm:$0xff]
        %v2479 = vmul.f32 %v2477, %v2461
        %v2480 = vmul.f32 %v2478, %v2462
        %v2481 = vld [vmem:[#allocation4 + $0xc0] sm:$0xff]
        %v2482 = vld [vmem:[#allocation4 + $0xc8] sm:$0xff]
        %v2483 = vadd.f32 %v2479, %v2481
        %v2484 = vadd.f32 %v2480, %v2482
        %v2485 = vld [vmem:[#allocation5 + $0xc0] sm:$0xff]
        %v2486 = vld [vmem:[#allocation5 + $0xc8] sm:$0xff]
        %v2487 = vmul.f32 %v2483, %v2485
        %v2488 = vmul.f32 %v2484, %v2486
        %v2489 = vadd.f32 %v2487, %v2488
        %v2490 = vrot.slane %v2489, 4
        %v2491 = vadd.f32 %v2489, %v2490
        %v2492 = vrot.slane %v2491, 2
        %v2493 = vadd.f32 %v2491, %v2492
        %v2494 = vrot.slane %v2493, 1
        %v2495 = vadd.f32 %v2493, %v2494
        %v2496 = vadd.f32 %v2495, %v1124
        %2497 = vst.msk [vmem:[#allocation6 + $0x8] sm:$0x10] %vm2313, %v2496
        %2498 = vst.msk [vmem:[#allocation6] sm:$0x10] %vm2315, %v2496
        %v2499 = vld [vmem:[#allocation3 + $0xd0] sm:$0xff]
        %v2500 = vld [vmem:[#allocation3 + $0xd8] sm:$0xff]
        %v2501 = vmul.f32 %v2499, %v2483
        %v2502 = vmul.f32 %v2500, %v2484
        %v2503 = vld [vmem:[#allocation4 + $0xd0] sm:$0xff]
        %v2504 = vld [vmem:[#allocation4 + $0xd8] sm:$0xff]
        %v2505 = vadd.f32 %v2501, %v2503
        %v2506 = vadd.f32 %v2502, %v2504
        %v2507 = vld [vmem:[#allocation5 + $0xd0] sm:$0xff]
        %v2508 = vld [vmem:[#allocation5 + $0xd8] sm:$0xff]
        %v2509 = vmul.f32 %v2505, %v2507
        %v2510 = vmul.f32 %v2506, %v2508
        %v2511 = vadd.f32 %v2509, %v2510
        %v2512 = vrot.slane %v2511, 4
        %v2513 = vadd.f32 %v2511, %v2512
        %v2514 = vrot.slane %v2513, 2
        %v2515 = vadd.f32 %v2513, %v2514
        %v2516 = vrot.slane %v2515, 1
        %v2517 = vadd.f32 %v2515, %v2516
        %v2518 = vadd.f32 %v2517, %v1124
        %2519 = vst.msk [vmem:[#allocation6 + $0x8] sm:$0x20] %vm2337, %v2518
        %2520 = vst.msk [vmem:[#allocation6 - $0x2] sm:$0x20] %vm2339, %v2518
        %v2521 = vld [vmem:[#allocation3 + $0xe0] sm:$0xff]
        %v2522 = vld [vmem:[#allocation3 + $0xe8] sm:$0xff]
        %v2523 = vmul.f32 %v2521, %v2505
        %v2524 = vmul.f32 %v2522, %v2506
        %v2525 = vld [vmem:[#allocation4 + $0xe0] sm:$0xff]
        %v2526 = vld [vmem:[#allocation4 + $0xe8] sm:$0xff]
        %v2527 = vadd.f32 %v2523, %v2525
        %v2528 = vadd.f32 %v2524, %v2526
        %v2529 = vld [vmem:[#allocation5 + $0xe0] sm:$0xff]
        %v2530 = vld [vmem:[#allocation5 + $0xe8] sm:$0xff]
        %v2531 = vmul.f32 %v2527, %v2529
        %v2532 = vmul.f32 %v2528, %v2530
        %v2533 = vadd.f32 %v2531, %v2532
        %v2534 = vrot.slane %v2533, 4
        %v2535 = vadd.f32 %v2533, %v2534
        %v2536 = vrot.slane %v2535, 2
        %v2537 = vadd.f32 %v2535, %v2536
        %v2538 = vrot.slane %v2537, 1
        %v2539 = vadd.f32 %v2537, %v2538
        %v2540 = vadd.f32 %v2539, %v1124
        %2541 = vst.msk [vmem:[#allocation6 + $0x8] sm:$0x40] %vm2361, %v2540
        %2542 = vst.msk [vmem:[#allocation6 - $0x4] sm:$0x40] %vm2363, %v2540
        %v2543 = vld [vmem:[#allocation3 + $0xf0] sm:$0xff]
        %v2544 = vld [vmem:[#allocation3 + $0xf8] sm:$0xff]
        %v2545 = vmul.f32 %v2543, %v2527
        %v2546 = vmul.f32 %v2544, %v2528
        %v2547 = vld [vmem:[#allocation4 + $0xf0] sm:$0xff]
        %v2548 = vld [vmem:[#allocation4 + $0xf8] sm:$0xff]
        %v2549 = vadd.f32 %v2545, %v2547
        %v2550 = vadd.f32 %v2546, %v2548
        %v2551 = vld [vmem:[#allocation5 + $0xf0] sm:$0xff]
        %v2552 = vld [vmem:[#allocation5 + $0xf8] sm:$0xff]
        %v2553 = vmul.f32 %v2549, %v2551
        %v2554 = vmul.f32 %v2550, %v2552
        %v2555 = vadd.f32 %v2553, %v2554
        %v2556 = vrot.slane %v2555, 4
        %v2557 = vadd.f32 %v2555, %v2556
        %v2558 = vrot.slane %v2557, 2
        %v2559 = vadd.f32 %v2557, %v2558
        %v2560 = vrot.slane %v2559, 1
        %v2561 = vadd.f32 %v2559, %v2560
        %v2562 = vadd.f32 %v2561, %v1124
        %2563 = vst.msk [vmem:[#allocation6 + $0x8] sm:$0x80] %vm2385, %v2562
        %2564 = vst.msk [vmem:[#allocation6 - $0x6] sm:$0x80] %vm2387, %v2562
        %v2565 = vld [vmem:[#allocation3 + $0x100] sm:$0xff]
        %v2566 = vld [vmem:[#allocation3 + $0x108] sm:$0xff]
        %v2567 = vmul.f32 %v2565, %v2549
        %v2568 = vmul.f32 %v2566, %v2550
        %v2569 = vld [vmem:[#allocation4 + $0x100] sm:$0xff]
        %v2570 = vld [vmem:[#allocation4 + $0x108] sm:$0xff]
        %v2571 = vadd.f32 %v2567, %v2569
        %v2572 = vadd.f32 %v2568, %v2570
        %v2573 = vld [vmem:[#allocation5 + $0x100] sm:$0xff]
        %v2574 = vld [vmem:[#allocation5 + $0x108] sm:$0xff]
        %v2575 = vmul.f32 %v2571, %v2573
        %v2576 = vmul.f32 %v2572, %v2574
        %v2577 = vadd.f32 %v2575, %v2576
        %v2578 = vrot.slane %v2577, 4
        %v2579 = vadd.f32 %v2577, %v2578
        %v2580 = vrot.slane %v2579, 2
        %v2581 = vadd.f32 %v2579, %v2580
        %v2582 = vrot.slane %v2581, 1
        %v2583 = vadd.f32 %v2581, %v2582
        %v2584 = vadd.f32 %v2583, %v1125
        %2585 = vst.msk [vmem:[#allocation6 + $0x10] sm:$0x1] %vm888, %v2584
        %2586 = vst.msk [vmem:[#allocation6] sm:$0x1] %vm905, %v2584
        %v2587 = vld [vmem:[#allocation6] sm:$0xff]
        %v2588 = vld [vmem:[#allocation6 + $0x8] sm:$0xff]
        %v2589 = vld [vmem:[#allocation6 + $0x10] sm:$0x1]
        %2593 = vrot.lane.b32.xlu0 %v2587, 64
        %v2594 = vpop.permute.xlu0 %2593
        %2595 = vrot.lane.b32.xlu0 %v2588, 64
        %v2596 = vpop.permute.xlu0 %2595
        %2597 = vrot.lane.b32.xlu0 %v2589, 64
        %v2598 = vpop.permute.xlu0 %2597
        %v2602 = vadd.f32 %v2587, %v2594
        %v2603 = vadd.f32 %v2588, %v2596
        %v2604 = vadd.f32 %v2589, %v2598
        %v2605 = vxor.u32 %v778, 2147483648
        %v2606 = vxor.u32 %v781, 2147483648
        %v2607 = vxor.u32 %v786, 2147483648
        %v2608 = vmul.f32 %v2605, 1.442695
        %v2609 = vpow.pop %v2608
        %v2610 = vmul.f32 %v2606, 1.442695
        %v2611 = vpow.pop %v2610
        %v2612 = vmul.f32 %v2607, 1.442695
        %v2613 = vpow.pop %v2612
        %v2614 = vadd.f32 %v2609, 1.0
        %v2615 = vadd.f32 %v2611, 1.0
        %v2616 = vadd.f32 %v2613, 1.0
        %v2617 = vrcp.pop %v2614
        %v2618 = vmul.f32 1.0, %v2617
        %v2619 = vrcp.pop %v2615
        %v2620 = vmul.f32 1.0, %v2619
        %v2621 = vrcp.pop %v2616
        %v2622 = vmul.f32 1.0, %v2621
        %v2623 = vmul.f32 %v778, %v2618
        %v2624 = vmul.f32 %v781, %v2620
        %v2625 = vmul.f32 %v786, %v2622
        %2629 = vrot.lane.b32.xlu0 %v2623, 64
        %v2630 = vpop.permute.xlu0 %2629
        %2631 = vrot.lane.b32.xlu0 %v2624, 64
        %v2632 = vpop.permute.xlu0 %2631
        %2633 = vrot.lane.b32.xlu0 %v2625, 64
        %v2634 = vpop.permute.xlu0 %2633
        %v2638 = vmul.f32 %v2602, %v2630
        %v2639 = vmul.f32 %v2603, %v2632
        %v2640 = vmul.f32 %v2604, %v2634
        %v2641 = vpack.c.bf16 %v2639, %v2638
        %v2642 = vpack.c.bf16 %v2640, %v2640
        %v2643 = vld [vmem:[%s14] sm:$0xff]
        %v2644 = vld [vmem:[%s14 + $0x8] sm:$0xff]
        %v2645 = vld [vmem:[%s14 + $0x10] sm:$0xff]
        %v2646 = vld [vmem:[%s14 + $0x18] sm:$0xff]
        %v2647 = vld [vmem:[%s14 + $0x20] sm:$0xff]
        %v2648 = vld [vmem:[%s14 + $0x28] sm:$0xff]
        %v2649 = vld [vmem:[%s14 + $0x30] sm:$0xff]
        %v2650 = vld [vmem:[%s14 + $0x38] sm:$0xff]
        %v2651 = vpack.c.bf16 %v2644, %v2643
        %v2652 = vpack.c.bf16 %v2646, %v2645
        %v2653 = vpack.c.bf16 %v2648, %v2647
        %v2654 = vpack.c.bf16 %v2650, %v2649
        %v2656 = vsel %vm626, %v2641, 0
        %v2659 = vsel %vm626, %v2642, 0
        %2661 = vmatprep.subr.bf16.mxu0 0
        %2662 = vmatpush1.bf16.msra.mxu0 %v2651
        %2663 = vmatprep.subr.bf16.mxu0 0
        %2664 = vmatpush1.bf16.msra.mxu0 %v2652
        %2665 = vmatprep.subr.bf16.mxu0 0
        %2666 = vmatpush1.bf16.msra.mxu0 %v2653
        %2667 = vmatprep.subr.bf16.mxu0 0
        %2668 = vmatpush1.bf16.msra.mxu0 %v2654
        %2669 = vmatprep.subr.bf16.mxu0 0
        %2670 = vmatpush1.bf16.msra.mxu0 0
        %2671 = vmatprep.subr.bf16.mxu0 0
        %2672 = vmatpush1.bf16.msra.mxu0 0
        %2673 = vmatprep.subr.bf16.mxu0 0
        %2674 = vmatpush1.bf16.msra.mxu0 0
        %2675 = vmatprep.subr.bf16.mxu0 0
        %2676 = vmatpush1.bf16.msra.mxu0 0
        %2677 = vmatprep.subr.bf16.mxu0 0
        %2678 = vmatpush1.bf16.msra.mxu0 0
        %2679 = vmatprep.subr.bf16.mxu0 0
        %2680 = vmatpush1.bf16.msra.mxu0 0
        %2681 = vmatprep.subr.bf16.mxu0 0
        %2682 = vmatpush1.bf16.msra.mxu0 0
        %2683 = vmatprep.subr.bf16.mxu0 0
        %2684 = vmatpush1.bf16.msra.mxu0 0
        %2685 = vmatprep.subr.bf16.mxu0 0
        %2686 = vmatpush1.bf16.msra.mxu0 0
        %2687 = vmatprep.subr.bf16.mxu0 0
        %2688 = vmatpush1.bf16.msra.mxu0 0
        %2689 = vmatprep.subr.bf16.mxu0 0
        %2690 = vmatpush1.bf16.msra.mxu0 0
        %2691 = vmatprep.subr.bf16.mxu0 0
        %2692 = vmatpush1.bf16.msra.mxu0 0
        %2693 = vmatprep.mubr.bf16.mxu0 0
        %2694 = vmatmul.mubr.bf16.gmra.mrb[0].mxu0 %v2656
        %v2695 = vpop.f32.mrb[0].mxu0
        %v2696 = vadd.f32 %v689, %v2695
        %v2697 = vpop.f32.mrb[0].mxu0
        %v2698 = vpop.f32.mrb[0].mxu0
        %v2699 = vadd.f32 %v690, %v2698
        %v2700 = vpop.f32.mrb[0].mxu0
        %2701 = vmatprep.mubr.bf16.mxu0 0
        %2702 = vmatmul.mubr.bf16.gmra.mrb[0].mxu0 %v2659
        %v2703 = vpop.f32.mrb[0].mxu0
        %v2704 = vadd.f32 %v691, %v2703
        %v2705 = vpop.f32.mrb[0].mxu0
        %v2706 = vpop.f32.mrb[0].mxu0
        %v2707 = vpop.f32.mrb[0].mxu0
        %2708 = vdwg.mxu0
        %v2709 = vmul.f32 %v2696, %v2696
        %v2710 = vmul.f32 %v2699, %v2699
        %v2711 = vmul.f32 %v2704, %v2704
        %v2712 = vsel %vm695, %v2709, 0.0
        %2713 = vadd.xlane.f32.xlu0 %v2712
        %v2714 = vpop.xlane.xlu0 %2713
        %v2715 = vsel %vm695, %v2710, 0.0
        %2716 = vadd.xlane.f32.xlu0 %v2715
        %v2717 = vpop.xlane.xlu0 %2716
        %v2718 = vsel %vm702, %v2711, 0.0
        %2719 = vadd.xlane.f32.xlu0 %v2718
        %v2720 = vpop.xlane.xlu0 %2719
        %v2721 = vmul.f32 %v2714, %v706
        %v2722 = vmul.f32 %v2717, %v706
        %v2723 = vmul.f32 %v2720, %v706
        %v2724 = vadd.f32 %v2721, 1e-05
        %v2725 = vadd.f32 %v2722, 1e-05
        %v2726 = vadd.f32 %v2723, 1e-05
        %v2727 = vrsqrt.pop %v2724
        %v2728 = vrsqrt.pop %v2725
        %v2729 = vrsqrt.pop %v2726
        %v2730 = vmul.f32 %v2696, %v2727
        %v2731 = vmul.f32 %v2699, %v2728
        %v2732 = vmul.f32 %v2704, %v2729
        %s2733 = scalar_lea.vmem %s5, 1
        %v2734 = vld [vmem:[%s2733] sm:$0x1]
        %v2736 = vlaneseq
        %v2737 = vshrl.u32 %v2736, 7
        %v2738 = vsub.s32 0, %v2737
        %v2739 = vrot.slane %v2734, %v2738
        %v2741 = vmul.f32 %v2730, %v2739
        %v2742 = vmul.f32 %v2731, %v2739
        %v2743 = vmul.f32 %v2732, %v2739
        %v2744 = vpack.c.bf16 %v2742, %v2741
        %v2745 = vpack.c.bf16 %v2743, %v2743
        %s2746 = scalar_lea.vmem %s6, 32
        %v2747 = vld [vmem:[%s2746] sm:$0xff]
        %v2748 = vld [vmem:[%s2746 + $0x8] sm:$0xff]
        %v2749 = vld [vmem:[%s2746 + $0x10] sm:$0xff]
        %v2750 = vld [vmem:[%s2746 + $0x18] sm:$0xff]
        %v2751 = vpack.c.bf16 %v2748, %v2747
        %v2752 = vpack.c.bf16 %v2750, %v2749
        %v2754 = vsel %vm695, %v2744, 0
        %v2757 = vsel %vm695, %v2745, 0
        %2759 = vmatprep.subr.bf16.mxu0 0
        %2760 = vmatpush1.bf16.msra.mxu0 %v2751
        %2761 = vmatprep.subr.bf16.mxu0 0
        %2762 = vmatpush1.bf16.msra.mxu0 %v2752
        %2763 = vmatprep.subr.bf16.mxu0 0
        %2764 = vmatpush1.bf16.msra.mxu0 0
        %2765 = vmatprep.subr.bf16.mxu0 0
        %2766 = vmatpush1.bf16.msra.mxu0 0
        %2767 = vmatprep.subr.bf16.mxu0 0
        %2768 = vmatpush1.bf16.msra.mxu0 0
        %2769 = vmatprep.subr.bf16.mxu0 0
        %2770 = vmatpush1.bf16.msra.mxu0 0
        %2771 = vmatprep.subr.bf16.mxu0 0
        %2772 = vmatpush1.bf16.msra.mxu0 0
        %2773 = vmatprep.subr.bf16.mxu0 0
        %2774 = vmatpush1.bf16.msra.mxu0 0
        %2775 = vmatprep.subr.bf16.mxu0 0
        %2776 = vmatpush1.bf16.msra.mxu0 0
        %2777 = vmatprep.subr.bf16.mxu0 0
        %2778 = vmatpush1.bf16.msra.mxu0 0
        %2779 = vmatprep.subr.bf16.mxu0 0
        %2780 = vmatpush1.bf16.msra.mxu0 0
        %2781 = vmatprep.subr.bf16.mxu0 0
        %2782 = vmatpush1.bf16.msra.mxu0 0
        %2783 = vmatprep.subr.bf16.mxu0 0
        %2784 = vmatpush1.bf16.msra.mxu0 0
        %2785 = vmatprep.subr.bf16.mxu0 0
        %2786 = vmatpush1.bf16.msra.mxu0 0
        %2787 = vmatprep.subr.bf16.mxu0 0
        %2788 = vmatpush1.bf16.msra.mxu0 0
        %2789 = vmatprep.subr.bf16.mxu0 0
        %2790 = vmatpush1.bf16.msra.mxu0 0
        %2791 = vmatprep.mubr.bf16.mxu0 0
        %2792 = vmatmul.mubr.bf16.gmra.mrb[0].mxu0 %v2754
        %v2793 = vpop.f32.mrb[0].mxu0
        %v2794 = vadd.f32 0.0, %v2793
        %v2795 = vpop.f32.mrb[0].mxu0
        %v2796 = vpop.f32.mrb[0].mxu0
        %v2797 = vadd.f32 0.0, %v2796
        %v2798 = vpop.f32.mrb[0].mxu0
        %2799 = vmatprep.mubr.bf16.mxu0 0
        %2800 = vmatmul.mubr.bf16.gmra.mrb[0].mxu0 %v2757
        %v2801 = vpop.f32.mrb[0].mxu0
        %v2802 = vadd.f32 0.0, %v2801
        %v2803 = vpop.f32.mrb[0].mxu0
        %v2804 = vpop.f32.mrb[0].mxu0
        %v2805 = vpop.f32.mrb[0].mxu0
        %2806 = vdwg.mxu0
        %v2808 = vsel %vm678, %v2802, 0
        %2810 = vmatprep.subr.mxu0 0.0
        %2811 = vmatpush1.msra.mxu0 %v2794
        %2812 = vmatprep.subr.mxu0 0.0
        %2813 = vmatpush1.msra.mxu0 %v2797
        %2814 = vmatprep.subr.mxu0 0.0
        %2815 = vmatpush1.msra.mxu0 %v2808
        %2816 = vmatprep.subr.mxu0 0.0
        %2817 = vmatpush1.msra.mxu0 0.0
        %2818 = vmatprep.subr.mxu0 0.0
        %2819 = vmatpush1.msra.mxu0 0.0
        %2820 = vmatprep.subr.mxu0 0.0
        %2821 = vmatpush1.msra.mxu0 0.0
        %2822 = vmatprep.subr.mxu0 0.0
        %2823 = vmatpush1.msra.mxu0 0.0
        %2824 = vmatprep.subr.mxu0 0.0
        %2825 = vmatpush1.msra.mxu0 0.0
        %2826 = vmatprep.subr.mxu0 0.0
        %2827 = vmatpush1.msra.mxu0 0.0
        %2828 = vmatprep.subr.mxu0 0.0
        %2829 = vmatpush1.msra.mxu0 0.0
        %2830 = vmatprep.subr.mxu0 0.0
        %2831 = vmatpush1.msra.mxu0 0.0
        %2832 = vmatprep.subr.mxu0 0.0
        %2833 = vmatpush1.msra.mxu0 0.0
        %2834 = vmatprep.subr.mxu0 0.0
        %2835 = vmatpush1.msra.mxu0 0.0
        %2836 = vmatprep.subr.mxu0 0.0
        %2837 = vmatpush1.msra.mxu0 0.0
        %2838 = vmatprep.subr.mxu0 0.0
        %2839 = vmatpush1.msra.mxu0 0.0
        %2840 = vmatprep.subr.mxu0 0.0
        %2841 = vmatpush1.msra.mxu0 0.0
        %2842 = vmatprep.subr.mxu0 0.0
        %2843 = vmatpush1.msra.mxu0 0.0
        %2844 = vmatprep.subr.mxu0 0.0
        %2845 = vmatpush1.msra.mxu0 0.0
        %2846 = vmatprep.subr.mxu0 0.0
        %2847 = vmatpush1.msra.mxu0 0.0
        %2848 = vmatprep.subr.mxu0 0.0
        %2849 = vmatpush1.msra.mxu0 0.0
        %2850 = vmatprep.subr.mxu0 0.0
        %2851 = vmatpush1.msra.mxu0 0.0
        %2852 = vmatprep.subr.mxu0 0.0
        %2853 = vmatpush1.msra.mxu0 0.0
        %2854 = vmatprep.subr.mxu0 0.0
        %2855 = vmatpush1.msra.mxu0 0.0
        %2856 = vmatprep.subr.mxu0 0.0
        %2857 = vmatpush1.msra.mxu0 0.0
        %2858 = vmatprep.subr.mxu0 0.0
        %2859 = vmatpush1.msra.mxu0 0.0
        %2860 = vmatprep.subr.mxu0 0.0
        %2861 = vmatpush1.msra.mxu0 0.0
        %2862 = vmatprep.subr.mxu0 0.0
        %2863 = vmatpush1.msra.mxu0 0.0
        %2864 = vmatprep.subr.mxu0 0.0
        %2865 = vmatpush1.msra.mxu0 0.0
        %2866 = vmatprep.subr.mxu0 0.0
        %2867 = vmatpush1.msra.mxu0 0.0
        %2868 = vmatprep.subr.mxu0 0.0
        %2869 = vmatpush1.msra.mxu0 0.0
        %2870 = vmatprep.subr.mxu0 0.0
        %2871 = vmatpush1.msra.mxu0 0.0
        %2872 = vmatprep.subr.mxu0 0.0
        %2873 = vmatpush1.msra.mxu0 0.0
        %2874 = vmatprep.mubr.f32.mxu0 0.0
        %2875 = vmatmul.mubr.f32.gmra.mrb[0].mxu0 %v793
        %v2876 = vpop.f32.mrb[0].mxu0
        %v2877 = vadd.f32 0.0, %v2876
        %v2878 = vpop.f32.mrb[0].mxu0
        %2879 = vmatprep.mubr.f32.mxu0 0.0
        %2880 = vmatmul.mubr.f32.gmra.mrb[0].mxu0 %v796
        %v2881 = vpop.f32.mrb[0].mxu0
        %v2882 = vadd.f32 0.0, %v2881
        %v2883 = vpop.f32.mrb[0].mxu0
        %2884 = vmatprep.mubr.f32.mxu0 0.0
        %2885 = vmatmul.mubr.f32.gmra.mrb[0].mxu0 %v799
        %v2886 = vpop.f32.mrb[0].mxu0
        %v2887 = vadd.f32 0.0, %v2886
        %v2888 = vpop.f32.mrb[0].mxu0
        %2889 = vdwg.mxu0
        %s2890 = scalar_lea.vmem %s7, 4
        %v2891 = vld [vmem:[%s2890] sm:$0xf]
        %2892 = vst [vmem:[#allocation2] sm:$0x7] 0.0
        %2893 = vst.msk [vmem:[#allocation2 + $0x3] sm:$0xff] %vm626, %v2794
        %2894 = vst.msk [vmem:[#allocation2 + $0xb] sm:$0xff] %vm626, %v2797
        %2895 = vst.msk [vmem:[#allocation2 + $0x13] sm:$0x1] %vm888, %v2802
        %2899 = vrot.lane.b32.xlu0 %v2877, 64
        %v2900 = vpop.permute.xlu0 %2899
        %2901 = vrot.lane.b32.xlu0 %v2882, 64
        %v2902 = vpop.permute.xlu0 %2901
        %2903 = vrot.lane.b32.xlu0 %v2887, 64
        %v2904 = vpop.permute.xlu0 %2903
        %2908 = vst.msk [vmem:[#allocation2 + $0x3] sm:$0xff] %vm902, %v2900
        %2909 = vst.msk [vmem:[#allocation2 + $0xb] sm:$0xff] %vm902, %v2902
        %2910 = vst.msk [vmem:[#allocation2 + $0x13] sm:$0x1] %vm905, %v2904
        %v2911 = vld [vmem:[#allocation2] sm:$0xff]
        %v2912 = vld [vmem:[#allocation2 + $0x8] sm:$0xff]
        %v2913 = vld [vmem:[#allocation2 + $0x10] sm:$0x1]
        %v2914 = vlaneseq
        %v2915 = vshrl.u32 %v2914, 7
        %v2916 = vsub.s32 0, %v2915
        %v2917 = vrot.slane %v2891, %v2916
        %v2918 = vmul.f32 %v2911, %v2917
        %v2919 = vmul.f32 %v2912, %v2917
        %v2920 = vmul.f32 %v2913, %v2917
        %v2921 = vadd.f32 %v2918, 0.0
        %v2922 = vadd.f32 %v2919, 0.0
        %v2923 = vadd.f32 %v2920, 0.0
        %v2924 = vld [vmem:[#allocation2 + $0x1] sm:$0xff]
        %v2925 = vld [vmem:[#allocation2 + $0x9] sm:$0xff]
        %v2926 = vld [vmem:[#allocation2 + $0x11] sm:$0x1]
        %v2927 = vlaneseq
        %v2928 = vshrl.u32 %v2927, 7
        %v2929 = vsub.s32 1, %v2928
        %v2930 = vrot.slane %v2891, %v2929
        %v2931 = vmul.f32 %v2924, %v2930
        %v2932 = vmul.f32 %v2925, %v2930
        %v2933 = vmul.f32 %v2926, %v2930
        %v2934 = vadd.f32 %v2921, %v2931
        %v2935 = vadd.f32 %v2922, %v2932
        %v2936 = vadd.f32 %v2923, %v2933
        %v2937 = vld [vmem:[#allocation2 + $0x2] sm:$0xff]
        %v2938 = vld [vmem:[#allocation2 + $0xa] sm:$0xff]
        %v2939 = vld [vmem:[#allocation2 + $0x12] sm:$0x1]
        %v2940 = vlaneseq
        %v2941 = vshrl.u32 %v2940, 7
        %v2942 = vsub.s32 2, %v2941
        %v2943 = vrot.slane %v2891, %v2942
        %v2944 = vmul.f32 %v2937, %v2943
        %v2945 = vmul.f32 %v2938, %v2943
        %v2946 = vmul.f32 %v2939, %v2943
        %v2947 = vadd.f32 %v2934, %v2944
        %v2948 = vadd.f32 %v2935, %v2945
        %v2949 = vadd.f32 %v2936, %v2946
        %v2950 = vld [vmem:[#allocation2 + $0x3] sm:$0xff]
        %v2951 = vld [vmem:[#allocation2 + $0xb] sm:$0xff]
        %v2952 = vld [vmem:[#allocation2 + $0x13] sm:$0x1]
        %v2953 = vlaneseq
        %v2954 = vshrl.u32 %v2953, 7
        %v2955 = vsub.s32 3, %v2954
        %v2956 = vrot.slane %v2891, %v2955
        %v2957 = vmul.f32 %v2950, %v2956
        %v2958 = vmul.f32 %v2951, %v2956
        %v2959 = vmul.f32 %v2952, %v2956
        %v2960 = vadd.f32 %v2947, %v2957
        %v2961 = vadd.f32 %v2948, %v2958
        %v2962 = vadd.f32 %v2949, %v2959
        %s2963 = scalar_lea.vmem %s8, 1
        %v2964 = vld [vmem:[%s2963] sm:$0x1]
        %v2966 = vlaneseq
        %v2967 = vshrl.u32 %v2966, 7
        %v2968 = vsub.s32 0, %v2967
        %v2969 = vrot.slane %v2964, %v2968
        %v2971 = vadd.f32 %v2960, %v2969
        %v2972 = vadd.f32 %v2961, %v2969
        %v2973 = vadd.f32 %v2962, %v2969
        %v2974 = vxor.u32 %v2971, 2147483648
        %v2975 = vxor.u32 %v2972, 2147483648
        %v2976 = vxor.u32 %v2973, 2147483648
        %v2977 = vmul.f32 %v2974, 1.442695
        %v2978 = vpow.pop %v2977
        %v2979 = vmul.f32 %v2975, 1.442695
        %v2980 = vpow.pop %v2979
        %v2981 = vmul.f32 %v2976, 1.442695
        %v2982 = vpow.pop %v2981
        %v2983 = vadd.f32 %v2978, 1.0
        %v2984 = vadd.f32 %v2980, 1.0
        %v2985 = vadd.f32 %v2982, 1.0
        %v2986 = vrcp.pop %v2983
        %v2987 = vmul.f32 1.0, %v2986
        %v2988 = vrcp.pop %v2984
        %v2989 = vmul.f32 1.0, %v2988
        %v2990 = vrcp.pop %v2985
        %v2991 = vmul.f32 1.0, %v2990
        %v2992 = vmul.f32 %v2971, %v2987
        %v2993 = vmul.f32 %v2972, %v2989
        %v2994 = vmul.f32 %v2973, %v2991
        %v2995 = vpack.c.bf16 %v2993, %v2992
        %v2996 = vpack.c.bf16 %v2994, %v2994
        %s2997 = scalar_lea.vmem %s9, 128
        %v2998 = vld [vmem:[%s2997] sm:$0xff]
        %v2999 = vld [vmem:[%s2997 + $0x8] sm:$0xff]
        %v3000 = vld [vmem:[%s2997 + $0x10] sm:$0xff]
        %v3001 = vld [vmem:[%s2997 + $0x18] sm:$0xff]
        %v3002 = vld [vmem:[%s2997 + $0x20] sm:$0xff]
        %v3003 = vld [vmem:[%s2997 + $0x28] sm:$0xff]
        %v3004 = vld [vmem:[%s2997 + $0x30] sm:$0xff]
        %v3005 = vld [vmem:[%s2997 + $0x38] sm:$0xff]
        %v3006 = vld [vmem:[%s2997 + $0x40] sm:$0xff]
        %v3007 = vld [vmem:[%s2997 + $0x48] sm:$0xff]
        %v3008 = vld [vmem:[%s2997 + $0x50] sm:$0xff]
        %v3009 = vld [vmem:[%s2997 + $0x58] sm:$0xff]
        %v3010 = vld [vmem:[%s2997 + $0x60] sm:$0xff]
        %v3011 = vld [vmem:[%s2997 + $0x68] sm:$0xff]
        %v3012 = vld [vmem:[%s2997 + $0x70] sm:$0xff]
        %v3013 = vld [vmem:[%s2997 + $0x78] sm:$0xff]
        %v3014 = vpack.c.bf16 %v2999, %v2998
        %v3015 = vpack.c.bf16 %v3001, %v3000
        %v3016 = vpack.c.bf16 %v3003, %v3002
        %v3017 = vpack.c.bf16 %v3005, %v3004
        %v3018 = vpack.c.bf16 %v3007, %v3006
        %v3019 = vpack.c.bf16 %v3009, %v3008
        %v3020 = vpack.c.bf16 %v3011, %v3010
        %v3021 = vpack.c.bf16 %v3013, %v3012
        %s3022 = scalar_lea.vmem %s10, 1
        %v3023 = vld [vmem:[%s3022] sm:$0x1]
        %v3025 = vlaneseq
        %v3026 = vshrl.u32 %v3025, 7
        %v3027 = vsub.s32 0, %v3026
        %v3028 = vrot.slane %v3023, %v3027
        %3030 = vmatprep.subr.bf16.mxu0 0
        %3031 = vmatpush1.bf16.msra.mxu0 %v3014
        %3032 = vmatprep.subr.bf16.mxu0 0
        %3033 = vmatpush1.bf16.msra.mxu0 %v3015
        %3034 = vmatprep.subr.bf16.mxu0 0
        %3035 = vmatpush1.bf16.msra.mxu0 %v3016
        %3036 = vmatprep.subr.bf16.mxu0 0
        %3037 = vmatpush1.bf16.msra.mxu0 %v3017
        %3038 = vmatprep.subr.bf16.mxu0 0
        %3039 = vmatpush1.bf16.msra.mxu0 %v3018
        %3040 = vmatprep.subr.bf16.mxu0 0
        %3041 = vmatpush1.bf16.msra.mxu0 %v3019
        %3042 = vmatprep.subr.bf16.mxu0 0
        %3043 = vmatpush1.bf16.msra.mxu0 %v3020
        %3044 = vmatprep.subr.bf16.mxu0 0
        %3045 = vmatpush1.bf16.msra.mxu0 %v3021
        %3046 = vmatprep.subr.bf16.mxu0 0
        %3047 = vmatpush1.bf16.msra.mxu0 0
        %3048 = vmatprep.subr.bf16.mxu0 0
        %3049 = vmatpush1.bf16.msra.mxu0 0
        %3050 = vmatprep.subr.bf16.mxu0 0
        %3051 = vmatpush1.bf16.msra.mxu0 0
        %3052 = vmatprep.subr.bf16.mxu0 0
        %3053 = vmatpush1.bf16.msra.mxu0 0
        %3054 = vmatprep.subr.bf16.mxu0 0
        %3055 = vmatpush1.bf16.msra.mxu0 0
        %3056 = vmatprep.subr.bf16.mxu0 0
        %3057 = vmatpush1.bf16.msra.mxu0 0
        %3058 = vmatprep.subr.bf16.mxu0 0
        %3059 = vmatpush1.bf16.msra.mxu0 0
        %3060 = vmatprep.subr.bf16.mxu0 0
        %3061 = vmatpush1.bf16.msra.mxu0 0
        %3062 = vmatprep.mubr.bf16.mxu0 0
        %3063 = vmatmul.mubr.bf16.gmra.mrb[0].mxu0 %v2995
        %v3064 = vpop.f32.mrb[0].mxu0
        %v3065 = vadd.f32 %v3028, %v3064
        %v3066 = vpop.f32.mrb[0].mxu0
        %v3067 = vpop.f32.mrb[0].mxu0
        %v3068 = vadd.f32 %v3028, %v3067
        %v3069 = vpop.f32.mrb[0].mxu0
        %3070 = vmatprep.mubr.bf16.mxu0 0
        %3071 = vmatmul.mubr.bf16.gmra.mrb[0].mxu0 %v2996
        %v3072 = vpop.f32.mrb[0].mxu0
        %v3073 = vadd.f32 %v3028, %v3072
        %v3074 = vpop.f32.mrb[0].mxu0
        %v3075 = vpop.f32.mrb[0].mxu0
        %v3076 = vpop.f32.mrb[0].mxu0
        %3077 = vdwg.mxu0
        %vm3078 = vcmp.gt.f32.partialorder %v3065, 20.0
        %vm3079 = vcmp.gt.f32.partialorder %v3068, 20.0
        %vm3080 = vcmp.gt.f32.partialorder %v3073, 20.0
        %v3081 = vmin.f32 %v3065, 20.0
        %v3082 = vmin.f32 %v3068, 20.0
        %v3083 = vmin.f32 %v3073, 20.0
        %v3084 = vmul.f32 %v3081, 1.442695
        %v3085 = vpow.pop %v3084
        %v3086 = vmul.f32 %v3082, 1.442695
        %v3087 = vpow.pop %v3086
        %v3088 = vmul.f32 %v3083, 1.442695
        %v3089 = vpow.pop %v3088
        %v3090 = vadd.f32 %v3085, 1.0
        %v3091 = vlog2.pop %v3090
        %v3092 = vmul.f32 %v3091, 0.6931472
        %v3093 = vmul.f32 -0.5, %v3085
        %v3094 = vadd.f32 %v3093, 1.0
        %v3095 = vmul.f32 %v3094, %v3085
        %v3096 = vand.u32 2147483647, %v3085
        %vm3097 = vcmp.lt.f32.partialorder %v3096, 0.0004427343
        %v3098 = vsel %vm3097, %v3095, %v3092
        %v3099 = vadd.f32 %v3087, 1.0
        %v3100 = vlog2.pop %v3099
        %v3101 = vmul.f32 %v3100, 0.6931472
        %v3102 = vmul.f32 -0.5, %v3087
        %v3103 = vadd.f32 %v3102, 1.0
        %v3104 = vmul.f32 %v3103, %v3087
        %v3105 = vand.u32 2147483647, %v3087
        %vm3106 = vcmp.lt.f32.partialorder %v3105, 0.0004427343
        %v3107 = vsel %vm3106, %v3104, %v3101
        %v3108 = vadd.f32 %v3089, 1.0
        %v3109 = vlog2.pop %v3108
        %v3110 = vmul.f32 %v3109, 0.6931472
        %v3111 = vmul.f32 -0.5, %v3089
        %v3112 = vadd.f32 %v3111, 1.0
        %v3113 = vmul.f32 %v3112, %v3089
        %v3114 = vand.u32 2147483647, %v3089
        %vm3115 = vcmp.lt.f32.partialorder %v3114, 0.0004427343
        %v3116 = vsel %vm3115, %v3113, %v3110
        %v3117 = vsel %vm3078, %v3065, %v3098
        %v3118 = vsel %vm3079, %v3068, %v3107
        %v3119 = vsel %vm3080, %v3073, %v3116
        %v3120 = vmul.f32 %v3117, %v2992
        %v3121 = vmul.f32 %v3118, %v2993
        %v3122 = vmul.f32 %v3119, %v2994
        %s3123 = scalar_lea.vmem %s13, 1
        %v3124 = vld [vmem:[%s3123] sm:$0x1]
        %v3126 = vlaneseq
        %v3127 = vshrl.u32 %v3126, 7
        %v3128 = vsub.s32 0, %v3127
        %v3129 = vrot.slane %v3124, %v3128
        %v3131 = vmul.f32 %v2992, %v3129
        %v3132 = vmul.f32 %v2993, %v3129
        %v3133 = vmul.f32 %v2994, %v3129
        %s3134 = scalar_lea.vmem %s11, 64
        %v3135 = vld [vmem:[%s3134] sm:$0xff]
        %v3136 = vld [vmem:[%s3134 + $0x8] sm:$0xff]
        %v3137 = vld [vmem:[%s3134 + $0x10] sm:$0xff]
        %v3138 = vld [vmem:[%s3134 + $0x18] sm:$0xff]
        %v3139 = vld [vmem:[%s3134 + $0x20] sm:$0xff]
        %v3140 = vld [vmem:[%s3134 + $0x28] sm:$0xff]
        %v3141 = vld [vmem:[%s3134 + $0x30] sm:$0xff]
        %v3142 = vld [vmem:[%s3134 + $0x38] sm:$0xff]
        %v3143 = vpack.c.bf16 %v3136, %v3135
        %v3144 = vpack.c.bf16 %v3138, %v3137
        %v3145 = vpack.c.bf16 %v3140, %v3139
        %v3146 = vpack.c.bf16 %v3142, %v3141
        %3147 = vmatprep.subr.bf16.mxu0 0
        %3148 = vmatpush1.bf16.xpose.msra.mxu0 %v2995
        %3149 = vmatprep.subr.bf16.mxu0 0
        %3150 = vmatpush1.bf16.xpose.msra.mxu0 %v2996
        %3151 = vmatprep.subr.bf16.mxu0 0
        %3152 = vmatpush1.bf16.xpose.msra.mxu0 0
        %3153 = vmatprep.subr.bf16.mxu0 0
        %3154 = vmatpush1.bf16.xpose.msra.mxu0 0
        %3155 = vmatprep.subr.bf16.mxu0 0
        %3156 = vmatpush1.bf16.xpose.msra.mxu0 0
        %3157 = vmatprep.subr.bf16.mxu0 0
        %3158 = vmatpush1.bf16.xpose.msra.mxu0 0
        %3159 = vmatprep.subr.bf16.mxu0 0
        %3160 = vmatpush1.bf16.xpose.msra.mxu0 0
        %3161 = vmatprep.subr.bf16.mxu0 0
        %3162 = vmatpush1.bf16.xpose.msra.mxu0 0
        %3163 = vmatprep.subr.bf16.mxu0 0
        %3164 = vmatpush1.bf16.xpose.msra.mxu0 0
        %3165 = vmatprep.subr.bf16.mxu0 0
        %3166 = vmatpush1.bf16.xpose.msra.mxu0 0
        %3167 = vmatprep.subr.bf16.mxu0 0
        %3168 = vmatpush1.bf16.xpose.msra.mxu0 0
        %3169 = vmatprep.subr.bf16.mxu0 0
        %3170 = vmatpush1.bf16.xpose.msra.mxu0 0
        %3171 = vmatprep.subr.bf16.mxu0 0
        %3172 = vmatpush1.bf16.xpose.msra.mxu0 0
        %3173 = vmatprep.subr.bf16.mxu0 0
        %3174 = vmatpush1.bf16.xpose.msra.mxu0 0
        %3175 = vmatprep.subr.bf16.mxu0 0
        %3176 = vmatpush1.bf16.xpose.msra.mxu0 0
        %3177 = vmatprep.subr.bf16.mxu0 0
        %3178 = vmatpush1.bf16.xpose.msra.mxu0 0
        %3179 = vmatprep.mubr.bf16.mxu0 0
        %3180 = vmatmul.mubr.bf16.gmra.mrb[0].mxu0 %v3143
        %v3181 = vpop.f32.mrb[0].mxu0
        %v3182 = vadd.f32 0.0, %v3181
        %v3183 = vpop.f32.mrb[0].mxu0
        %v3184 = vpop.f32.mrb[0].mxu0
        %v3185 = vadd.f32 0.0, %v3184
        %v3186 = vpop.f32.mrb[0].mxu0
        %3187 = vmatprep.mubr.bf16.mxu0 0
        %3188 = vmatmul.mubr.bf16.gmra.mrb[0].mxu0 %v3144
        %v3189 = vpop.f32.mrb[0].mxu0
        %v3190 = vadd.f32 0.0, %v3189
        %v3191 = vpop.f32.mrb[0].mxu0
        %v3192 = vpop.f32.mrb[0].mxu0
        %v3193 = vadd.f32 0.0, %v3192
        %v3194 = vpop.f32.mrb[0].mxu0
        %3195 = vmatprep.mubr.bf16.mxu0 0
        %3196 = vmatmul.mubr.bf16.gmra.mrb[0].mxu0 %v3145
        %v3197 = vpop.f32.mrb[0].mxu0
        %v3198 = vadd.f32 0.0, %v3197
        %v3199 = vpop.f32.mrb[0].mxu0
        %v3200 = vpop.f32.mrb[0].mxu0
        %v3201 = vadd.f32 0.0, %v3200
        %v3202 = vpop.f32.mrb[0].mxu0
        %3203 = vmatprep.mubr.bf16.mxu0 0
        %3204 = vmatmul.mubr.bf16.gmra.mrb[0].mxu0 %v3146
        %v3205 = vpop.f32.mrb[0].mxu0
        %v3206 = vadd.f32 0.0, %v3205
        %v3207 = vpop.f32.mrb[0].mxu0
        %v3208 = vpop.f32.mrb[0].mxu0
        %v3209 = vadd.f32 0.0, %v3208
        %v3210 = vpop.f32.mrb[0].mxu0
        %3211 = vdwg.mxu0
        %s3212 = scalar_lea.vmem %s12, 16
        %v3213 = vld [vmem:[%s3212] sm:$0xff]
        %v3214 = vld [vmem:[%s3212 + $0x8] sm:$0xff]
        %v3215 = vlaneseq
        %v3216 = vshrl.u32 %v3215, 7
        %v3217 = vsub.s32 0, %v3216
        %v3218 = vrot.slane %v3117, %v3217
        %v3219 = vmul.f32 %v3218, %v3213
        %v3220 = vmul.f32 %v3218, %v3214
        %v3221 = vmul.f32 %v3219, 1.442695
        %v3222 = vpow.pop %v3221
        %v3223 = vmul.f32 %v3220, 1.442695
        %v3224 = vpow.pop %v3223
        %3225 = vst [vmem:[#allocation3] sm:$0xff] %v3222
        %3226 = vst [vmem:[#allocation3 + $0x8] sm:$0xff] %v3224
        %3228 = vset.pattern.permute.xlu0 0
        %3229 = vperm.xlu0 %3228, %v3182
        %v3230 = vpop.permute.xlu0 %3229
        %3233 = vset.pattern.permute.xlu0 0
        %3234 = vperm.xlu0 %3233, %v3185
        %v3235 = vpop.permute.xlu0 %3234
        %3238 = vset.pattern.permute.xlu0 0
        %3239 = vperm.xlu0 %3238, %v3198
        %v3240 = vpop.permute.xlu0 %3239
        %3243 = vset.pattern.permute.xlu0 0
        %3244 = vperm.xlu0 %3243, %v3201
        %v3245 = vpop.permute.xlu0 %3244
        %v3247 = vsel %vm576, %v3230, %v3240
        %v3248 = vsel %vm576, %v3235, %v3245
        %v3249 = vlaneseq
        %v3250 = vshrl.u32 %v3249, 7
        %v3251 = vsub.s32 0, %v3250
        %v3252 = vrot.slane %v3120, %v3251
        %v3253 = vmul.f32 %v3247, %v3252
        %v3254 = vmul.f32 %v3248, %v3252
        %3255 = vst [vmem:[#allocation4] sm:$0xff] %v3253
        %3256 = vst [vmem:[#allocation4 + $0x8] sm:$0xff] %v3254
        %3258 = vset.pattern.permute.xlu0 0
        %3259 = vperm.xlu0 %3258, %v3190
        %v3260 = vpop.permute.xlu0 %3259
        %3263 = vset.pattern.permute.xlu0 0
        %3264 = vperm.xlu0 %3263, %v3193
        %v3265 = vpop.permute.xlu0 %3264
        %3268 = vset.pattern.permute.xlu0 0
        %3269 = vperm.xlu0 %3268, %v3206
        %v3270 = vpop.permute.xlu0 %3269
        %3273 = vset.pattern.permute.xlu0 0
        %3274 = vperm.xlu0 %3273, %v3209
        %v3275 = vpop.permute.xlu0 %3274
        %v3277 = vsel %vm576, %v3260, %v3270
        %v3278 = vsel %vm576, %v3265, %v3275
        %3279 = vst [vmem:[#allocation5] sm:$0xff] %v3277
        %3280 = vst [vmem:[#allocation5 + $0x8] sm:$0xff] %v3278
        %v3281 = vlaneseq
        %v3282 = vshrl.u32 %v3281, 7
        %v3283 = vsub.s32 1, %v3282
        %v3284 = vrot.slane %v3117, %v3283
        %v3285 = vmul.f32 %v3284, %v3213
        %v3286 = vmul.f32 %v3284, %v3214
        %v3287 = vmul.f32 %v3285, 1.442695
        %v3288 = vpow.pop %v3287
        %v3289 = vmul.f32 %v3286, 1.442695
        %v3290 = vpow.pop %v3289
        %3291 = vst [vmem:[#allocation3 + $0x10] sm:$0xff] %v3288
        %3292 = vst [vmem:[#allocation3 + $0x18] sm:$0xff] %v3290
        %3293 = vset.pattern.permute.xlu0 1
        %3294 = vperm.xlu0 %3293, %v3182
        %v3295 = vpop.permute.xlu0 %3294
        %3297 = vset.pattern.permute.xlu0 1
        %3298 = vperm.xlu0 %3297, %v3185
        %v3299 = vpop.permute.xlu0 %3298
        %3301 = vset.pattern.permute.xlu0 1
        %3302 = vperm.xlu0 %3301, %v3198
        %v3303 = vpop.permute.xlu0 %3302
        %3305 = vset.pattern.permute.xlu0 1
        %3306 = vperm.xlu0 %3305, %v3201
        %v3307 = vpop.permute.xlu0 %3306
        %v3309 = vsel %vm576, %v3295, %v3303
        %v3310 = vsel %vm576, %v3299, %v3307
        %v3311 = vlaneseq
        %v3312 = vshrl.u32 %v3311, 7
        %v3313 = vsub.s32 1, %v3312
        %v3314 = vrot.slane %v3120, %v3313
        %v3315 = vmul.f32 %v3309, %v3314
        %v3316 = vmul.f32 %v3310, %v3314
        %3317 = vst [vmem:[#allocation4 + $0x10] sm:$0xff] %v3315
        %3318 = vst [vmem:[#allocation4 + $0x18] sm:$0xff] %v3316
        %3319 = vset.pattern.permute.xlu0 1
        %3320 = vperm.xlu0 %3319, %v3190
        %v3321 = vpop.permute.xlu0 %3320
        %3323 = vset.pattern.permute.xlu0 1
        %3324 = vperm.xlu0 %3323, %v3193
        %v3325 = vpop.permute.xlu0 %3324
        %3327 = vset.pattern.permute.xlu0 1
        %3328 = vperm.xlu0 %3327, %v3206
        %v3329 = vpop.permute.xlu0 %3328
        %3331 = vset.pattern.permute.xlu0 1
        %3332 = vperm.xlu0 %3331, %v3209
        %v3333 = vpop.permute.xlu0 %3332
        %v3335 = vsel %vm576, %v3321, %v3329
        %v3336 = vsel %vm576, %v3325, %v3333
        %3337 = vst [vmem:[#allocation5 + $0x10] sm:$0xff] %v3335
        %3338 = vst [vmem:[#allocation5 + $0x18] sm:$0xff] %v3336
        %v3339 = vlaneseq
        %v3340 = vshrl.u32 %v3339, 7
        %v3341 = vsub.s32 2, %v3340
        %v3342 = vrot.slane %v3117, %v3341
        %v3343 = vmul.f32 %v3342, %v3213
        %v3344 = vmul.f32 %v3342, %v3214
        %v3345 = vmul.f32 %v3343, 1.442695
        %v3346 = vpow.pop %v3345
        %v3347 = vmul.f32 %v3344, 1.442695
        %v3348 = vpow.pop %v3347
        %3349 = vst [vmem:[#allocation3 + $0x20] sm:$0xff] %v3346
        %3350 = vst [vmem:[#allocation3 + $0x28] sm:$0xff] %v3348
        %3351 = vset.pattern.permute.xlu0 2
        %3352 = vperm.xlu0 %3351, %v3182
        %v3353 = vpop.permute.xlu0 %3352
        %3355 = vset.pattern.permute.xlu0 2
        %3356 = vperm.xlu0 %3355, %v3185
        %v3357 = vpop.permute.xlu0 %3356
        %3359 = vset.pattern.permute.xlu0 2
        %3360 = vperm.xlu0 %3359, %v3198
        %v3361 = vpop.permute.xlu0 %3360
        %3363 = vset.pattern.permute.xlu0 2
        %3364 = vperm.xlu0 %3363, %v3201
        %v3365 = vpop.permute.xlu0 %3364
        %v3367 = vsel %vm576, %v3353, %v3361
        %v3368 = vsel %vm576, %v3357, %v3365
        %v3369 = vlaneseq
        %v3370 = vshrl.u32 %v3369, 7
        %v3371 = vsub.s32 2, %v3370
        %v3372 = vrot.slane %v3120, %v3371
        %v3373 = vmul.f32 %v3367, %v3372
        %v3374 = vmul.f32 %v3368, %v3372
        %3375 = vst [vmem:[#allocation4 + $0x20] sm:$0xff] %v3373
        %3376 = vst [vmem:[#allocation4 + $0x28] sm:$0xff] %v3374
        %3377 = vset.pattern.permute.xlu0 2
        %3378 = vperm.xlu0 %3377, %v3190
        %v3379 = vpop.permute.xlu0 %3378
        %3381 = vset.pattern.permute.xlu0 2
        %3382 = vperm.xlu0 %3381, %v3193
        %v3383 = vpop.permute.xlu0 %3382
        %3385 = vset.pattern.permute.xlu0 2
        %3386 = vperm.xlu0 %3385, %v3206
        %v3387 = vpop.permute.xlu0 %3386
        %3389 = vset.pattern.permute.xlu0 2
        %3390 = vperm.xlu0 %3389, %v3209
        %v3391 = vpop.permute.xlu0 %3390
        %v3393 = vsel %vm576, %v3379, %v3387
        %v3394 = vsel %vm576, %v3383, %v3391
        %3395 = vst [vmem:[#allocation5 + $0x20] sm:$0xff] %v3393
        %3396 = vst [vmem:[#allocation5 + $0x28] sm:$0xff] %v3394
        %v3397 = vlaneseq
        %v3398 = vshrl.u32 %v3397, 7
        %v3399 = vsub.s32 3, %v3398
        %v3400 = vrot.slane %v3117, %v3399
        %v3401 = vmul.f32 %v3400, %v3213
        %v3402 = vmul.f32 %v3400, %v3214
        %v3403 = vmul.f32 %v3401, 1.442695
        %v3404 = vpow.pop %v3403
        %v3405 = vmul.f32 %v3402, 1.442695
        %v3406 = vpow.pop %v3405
        %3407 = vst [vmem:[#allocation3 + $0x30] sm:$0xff] %v3404
        %3408 = vst [vmem:[#allocation3 + $0x38] sm:$0xff] %v3406
        %3409 = vset.pattern.permute.xlu0 3
        %3410 = vperm.xlu0 %3409, %v3182
        %v3411 = vpop.permute.xlu0 %3410
        %3413 = vset.pattern.permute.xlu0 3
        %3414 = vperm.xlu0 %3413, %v3185
        %v3415 = vpop.permute.xlu0 %3414
        %3417 = vset.pattern.permute.xlu0 3
        %3418 = vperm.xlu0 %3417, %v3198
        %v3419 = vpop.permute.xlu0 %3418
        %3421 = vset.pattern.permute.xlu0 3
        %3422 = vperm.xlu0 %3421, %v3201
        %v3423 = vpop.permute.xlu0 %3422
        %v3425 = vsel %vm576, %v3411, %v3419
        %v3426 = vsel %vm576, %v3415, %v3423
        %v3427 = vlaneseq
        %v3428 = vshrl.u32 %v3427, 7
        %v3429 = vsub.s32 3, %v3428
        %v3430 = vrot.slane %v3120, %v3429
        %v3431 = vmul.f32 %v3425, %v3430
        %v3432 = vmul.f32 %v3426, %v3430
        %3433 = vst [vmem:[#allocation4 + $0x30] sm:$0xff] %v3431
        %3434 = vst [vmem:[#allocation4 + $0x38] sm:$0xff] %v3432
        %3435 = vset.pattern.permute.xlu0 3
        %3436 = vperm.xlu0 %3435, %v3190
        %v3437 = vpop.permute.xlu0 %3436
        %3439 = vset.pattern.permute.xlu0 3
        %3440 = vperm.xlu0 %3439, %v3193
        %v3441 = vpop.permute.xlu0 %3440
        %3443 = vset.pattern.permute.xlu0 3
        %3444 = vperm.xlu0 %3443, %v3206
        %v3445 = vpop.permute.xlu0 %3444
        %3447 = vset.pattern.permute.xlu0 3
        %3448 = vperm.xlu0 %3447, %v3209
        %v3449 = vpop.permute.xlu0 %3448
        %v3451 = vsel %vm576, %v3437, %v3445
        %v3452 = vsel %vm576, %v3441, %v3449
        %3453 = vst [vmem:[#allocation5 + $0x30] sm:$0xff] %v3451
        %3454 = vst [vmem:[#allocation5 + $0x38] sm:$0xff] %v3452
        %v3455 = vlaneseq
        %v3456 = vshrl.u32 %v3455, 7
        %v3457 = vsub.s32 4, %v3456
        %v3458 = vrot.slane %v3117, %v3457
        %v3459 = vmul.f32 %v3458, %v3213
        %v3460 = vmul.f32 %v3458, %v3214
        %v3461 = vmul.f32 %v3459, 1.442695
        %v3462 = vpow.pop %v3461
        %v3463 = vmul.f32 %v3460, 1.442695
        %v3464 = vpow.pop %v3463
        %3465 = vst [vmem:[#allocation3 + $0x40] sm:$0xff] %v3462
        %3466 = vst [vmem:[#allocation3 + $0x48] sm:$0xff] %v3464
        %3467 = vset.pattern.permute.xlu0 4
        %3468 = vperm.xlu0 %3467, %v3182
        %v3469 = vpop.permute.xlu0 %3468
        %3471 = vset.pattern.permute.xlu0 4
        %3472 = vperm.xlu0 %3471, %v3185
        %v3473 = vpop.permute.xlu0 %3472
        %3475 = vset.pattern.permute.xlu0 4
        %3476 = vperm.xlu0 %3475, %v3198
        %v3477 = vpop.permute.xlu0 %3476
        %3479 = vset.pattern.permute.xlu0 4
        %3480 = vperm.xlu0 %3479, %v3201
        %v3481 = vpop.permute.xlu0 %3480
        %v3483 = vsel %vm576, %v3469, %v3477
        %v3484 = vsel %vm576, %v3473, %v3481
        %v3485 = vlaneseq
        %v3486 = vshrl.u32 %v3485, 7
        %v3487 = vsub.s32 4, %v3486
        %v3488 = vrot.slane %v3120, %v3487
        %v3489 = vmul.f32 %v3483, %v3488
        %v3490 = vmul.f32 %v3484, %v3488
        %3491 = vst [vmem:[#allocation4 + $0x40] sm:$0xff] %v3489
        %3492 = vst [vmem:[#allocation4 + $0x48] sm:$0xff] %v3490
        %3493 = vset.pattern.permute.xlu0 4
        %3494 = vperm.xlu0 %3493, %v3190
        %v3495 = vpop.permute.xlu0 %3494
        %3497 = vset.pattern.permute.xlu0 4
        %3498 = vperm.xlu0 %3497, %v3193
        %v3499 = vpop.permute.xlu0 %3498
        %3501 = vset.pattern.permute.xlu0 4
        %3502 = vperm.xlu0 %3501, %v3206
        %v3503 = vpop.permute.xlu0 %3502
        %3505 = vset.pattern.permute.xlu0 4
        %3506 = vperm.xlu0 %3505, %v3209
        %v3507 = vpop.permute.xlu0 %3506
        %v3509 = vsel %vm576, %v3495, %v3503
        %v3510 = vsel %vm576, %v3499, %v3507
        %3511 = vst [vmem:[#allocation5 + $0x40] sm:$0xff] %v3509
        %3512 = vst [vmem:[#allocation5 + $0x48] sm:$0xff] %v3510
        %v3513 = vlaneseq
        %v3514 = vshrl.u32 %v3513, 7
        %v3515 = vsub.s32 5, %v3514
        %v3516 = vrot.slane %v3117, %v3515
        %v3517 = vmul.f32 %v3516, %v3213
        %v3518 = vmul.f32 %v3516, %v3214
        %v3519 = vmul.f32 %v3517, 1.442695
        %v3520 = vpow.pop %v3519
        %v3521 = vmul.f32 %v3518, 1.442695
        %v3522 = vpow.pop %v3521
        %3523 = vst [vmem:[#allocation3 + $0x50] sm:$0xff] %v3520
        %3524 = vst [vmem:[#allocation3 + $0x58] sm:$0xff] %v3522
        %3525 = vset.pattern.permute.xlu0 5
        %3526 = vperm.xlu0 %3525, %v3182
        %v3527 = vpop.permute.xlu0 %3526
        %3529 = vset.pattern.permute.xlu0 5
        %3530 = vperm.xlu0 %3529, %v3185
        %v3531 = vpop.permute.xlu0 %3530
        %3533 = vset.pattern.permute.xlu0 5
        %3534 = vperm.xlu0 %3533, %v3198
        %v3535 = vpop.permute.xlu0 %3534
        %3537 = vset.pattern.permute.xlu0 5
        %3538 = vperm.xlu0 %3537, %v3201
        %v3539 = vpop.permute.xlu0 %3538
        %v3541 = vsel %vm576, %v3527, %v3535
        %v3542 = vsel %vm576, %v3531, %v3539
        %v3543 = vlaneseq
        %v3544 = vshrl.u32 %v3543, 7
        %v3545 = vsub.s32 5, %v3544
        %v3546 = vrot.slane %v3120, %v3545
        %v3547 = vmul.f32 %v3541, %v3546
        %v3548 = vmul.f32 %v3542, %v3546
        %3549 = vst [vmem:[#allocation4 + $0x50] sm:$0xff] %v3547
        %3550 = vst [vmem:[#allocation4 + $0x58] sm:$0xff] %v3548
        %3551 = vset.pattern.permute.xlu0 5
        %3552 = vperm.xlu0 %3551, %v3190
        %v3553 = vpop.permute.xlu0 %3552
        %3555 = vset.pattern.permute.xlu0 5
        %3556 = vperm.xlu0 %3555, %v3193
        %v3557 = vpop.permute.xlu0 %3556
        %3559 = vset.pattern.permute.xlu0 5
        %3560 = vperm.xlu0 %3559, %v3206
        %v3561 = vpop.permute.xlu0 %3560
        %3563 = vset.pattern.permute.xlu0 5
        %3564 = vperm.xlu0 %3563, %v3209
        %v3565 = vpop.permute.xlu0 %3564
        %v3567 = vsel %vm576, %v3553, %v3561
        %v3568 = vsel %vm576, %v3557, %v3565
        %3569 = vst [vmem:[#allocation5 + $0x50] sm:$0xff] %v3567
        %3570 = vst [vmem:[#allocation5 + $0x58] sm:$0xff] %v3568
        %v3571 = vlaneseq
        %v3572 = vshrl.u32 %v3571, 7
        %v3573 = vsub.s32 6, %v3572
        %v3574 = vrot.slane %v3117, %v3573
        %v3575 = vmul.f32 %v3574, %v3213
        %v3576 = vmul.f32 %v3574, %v3214
        %v3577 = vmul.f32 %v3575, 1.442695
        %v3578 = vpow.pop %v3577
        %v3579 = vmul.f32 %v3576, 1.442695
        %v3580 = vpow.pop %v3579
        %3581 = vst [vmem:[#allocation3 + $0x60] sm:$0xff] %v3578
        %3582 = vst [vmem:[#allocation3 + $0x68] sm:$0xff] %v3580
        %3583 = vset.pattern.permute.xlu0 6
        %3584 = vperm.xlu0 %3583, %v3182
        %v3585 = vpop.permute.xlu0 %3584
        %3587 = vset.pattern.permute.xlu0 6
        %3588 = vperm.xlu0 %3587, %v3185
        %v3589 = vpop.permute.xlu0 %3588
        %3591 = vset.pattern.permute.xlu0 6
        %3592 = vperm.xlu0 %3591, %v3198
        %v3593 = vpop.permute.xlu0 %3592
        %3595 = vset.pattern.permute.xlu0 6
        %3596 = vperm.xlu0 %3595, %v3201
        %v3597 = vpop.permute.xlu0 %3596
        %v3599 = vsel %vm576, %v3585, %v3593
        %v3600 = vsel %vm576, %v3589, %v3597
        %v3601 = vlaneseq
        %v3602 = vshrl.u32 %v3601, 7
        %v3603 = vsub.s32 6, %v3602
        %v3604 = vrot.slane %v3120, %v3603
        %v3605 = vmul.f32 %v3599, %v3604
        %v3606 = vmul.f32 %v3600, %v3604
        %3607 = vst [vmem:[#allocation4 + $0x60] sm:$0xff] %v3605
        %3608 = vst [vmem:[#allocation4 + $0x68] sm:$0xff] %v3606
        %3609 = vset.pattern.permute.xlu0 6
        %3610 = vperm.xlu0 %3609, %v3190
        %v3611 = vpop.permute.xlu0 %3610
        %3613 = vset.pattern.permute.xlu0 6
        %3614 = vperm.xlu0 %3613, %v3193
        %v3615 = vpop.permute.xlu0 %3614
        %3617 = vset.pattern.permute.xlu0 6
        %3618 = vperm.xlu0 %3617, %v3206
        %v3619 = vpop.permute.xlu0 %3618
        %3621 = vset.pattern.permute.xlu0 6
        %3622 = vperm.xlu0 %3621, %v3209
        %v3623 = vpop.permute.xlu0 %3622
        %v3625 = vsel %vm576, %v3611, %v3619
        %v3626 = vsel %vm576, %v3615, %v3623
        %3627 = vst [vmem:[#allocation5 + $0x60] sm:$0xff] %v3625
        %3628 = vst [vmem:[#allocation5 + $0x68] sm:$0xff] %v3626
        %v3629 = vlaneseq
        %v3630 = vshrl.u32 %v3629, 7
        %v3631 = vsub.s32 7, %v3630
        %v3632 = vrot.slane %v3117, %v3631
        %v3633 = vmul.f32 %v3632, %v3213
        %v3634 = vmul.f32 %v3632, %v3214
        %v3635 = vmul.f32 %v3633, 1.442695
        %v3636 = vpow.pop %v3635
        %v3637 = vmul.f32 %v3634, 1.442695
        %v3638 = vpow.pop %v3637
        %3639 = vst [vmem:[#allocation3 + $0x70] sm:$0xff] %v3636
        %3640 = vst [vmem:[#allocation3 + $0x78] sm:$0xff] %v3638
        %3641 = vset.pattern.permute.xlu0 7
        %3642 = vperm.xlu0 %3641, %v3182
        %v3643 = vpop.permute.xlu0 %3642
        %3645 = vset.pattern.permute.xlu0 7
        %3646 = vperm.xlu0 %3645, %v3185
        %v3647 = vpop.permute.xlu0 %3646
        %3649 = vset.pattern.permute.xlu0 7
        %3650 = vperm.xlu0 %3649, %v3198
        %v3651 = vpop.permute.xlu0 %3650
        %3653 = vset.pattern.permute.xlu0 7
        %3654 = vperm.xlu0 %3653, %v3201
        %v3655 = vpop.permute.xlu0 %3654
        %v3657 = vsel %vm576, %v3643, %v3651
        %v3658 = vsel %vm576, %v3647, %v3655
        %v3659 = vlaneseq
        %v3660 = vshrl.u32 %v3659, 7
        %v3661 = vsub.s32 7, %v3660
        %v3662 = vrot.slane %v3120, %v3661
        %v3663 = vmul.f32 %v3657, %v3662
        %v3664 = vmul.f32 %v3658, %v3662
        %3665 = vst [vmem:[#allocation4 + $0x70] sm:$0xff] %v3663
        %3666 = vst [vmem:[#allocation4 + $0x78] sm:$0xff] %v3664
        %3667 = vset.pattern.permute.xlu0 7
        %3668 = vperm.xlu0 %3667, %v3190
        %v3669 = vpop.permute.xlu0 %3668
        %3671 = vset.pattern.permute.xlu0 7
        %3672 = vperm.xlu0 %3671, %v3193
        %v3673 = vpop.permute.xlu0 %3672
        %3675 = vset.pattern.permute.xlu0 7
        %3676 = vperm.xlu0 %3675, %v3206
        %v3677 = vpop.permute.xlu0 %3676
        %3679 = vset.pattern.permute.xlu0 7
        %3680 = vperm.xlu0 %3679, %v3209
        %v3681 = vpop.permute.xlu0 %3680
        %v3683 = vsel %vm576, %v3669, %v3677
        %v3684 = vsel %vm576, %v3673, %v3681
        %3685 = vst [vmem:[#allocation5 + $0x70] sm:$0xff] %v3683
        %3686 = vst [vmem:[#allocation5 + $0x78] sm:$0xff] %v3684
        %v3687 = vlaneseq
        %v3688 = vshrl.u32 %v3687, 7
        %v3689 = vsub.s32 0, %v3688
        %v3690 = vrot.slane %v3118, %v3689
        %v3691 = vmul.f32 %v3690, %v3213
        %v3692 = vmul.f32 %v3690, %v3214
        %v3693 = vmul.f32 %v3691, 1.442695
        %v3694 = vpow.pop %v3693
        %v3695 = vmul.f32 %v3692, 1.442695
        %v3696 = vpow.pop %v3695
        %3697 = vst [vmem:[#allocation3 + $0x80] sm:$0xff] %v3694
        %3698 = vst [vmem:[#allocation3 + $0x88] sm:$0xff] %v3696
        %3699 = vset.pattern.permute.xlu0 8
        %3700 = vperm.xlu0 %3699, %v3182
        %v3701 = vpop.permute.xlu0 %3700
        %3703 = vset.pattern.permute.xlu0 8
        %3704 = vperm.xlu0 %3703, %v3185
        %v3705 = vpop.permute.xlu0 %3704
        %3707 = vset.pattern.permute.xlu0 8
        %3708 = vperm.xlu0 %3707, %v3198
        %v3709 = vpop.permute.xlu0 %3708
        %3711 = vset.pattern.permute.xlu0 8
        %3712 = vperm.xlu0 %3711, %v3201
        %v3713 = vpop.permute.xlu0 %3712
        %v3715 = vsel %vm576, %v3701, %v3709
        %v3716 = vsel %vm576, %v3705, %v3713
        %v3717 = vlaneseq
        %v3718 = vshrl.u32 %v3717, 7
        %v3719 = vsub.s32 0, %v3718
        %v3720 = vrot.slane %v3121, %v3719
        %v3721 = vmul.f32 %v3715, %v3720
        %v3722 = vmul.f32 %v3716, %v3720
        %3723 = vst [vmem:[#allocation4 + $0x80] sm:$0xff] %v3721
        %3724 = vst [vmem:[#allocation4 + $0x88] sm:$0xff] %v3722
        %3725 = vset.pattern.permute.xlu0 8
        %3726 = vperm.xlu0 %3725, %v3190
        %v3727 = vpop.permute.xlu0 %3726
        %3729 = vset.pattern.permute.xlu0 8
        %3730 = vperm.xlu0 %3729, %v3193
        %v3731 = vpop.permute.xlu0 %3730
        %3733 = vset.pattern.permute.xlu0 8
        %3734 = vperm.xlu0 %3733, %v3206
        %v3735 = vpop.permute.xlu0 %3734
        %3737 = vset.pattern.permute.xlu0 8
        %3738 = vperm.xlu0 %3737, %v3209
        %v3739 = vpop.permute.xlu0 %3738
        %v3741 = vsel %vm576, %v3727, %v3735
        %v3742 = vsel %vm576, %v3731, %v3739
        %3743 = vst [vmem:[#allocation5 + $0x80] sm:$0xff] %v3741
        %3744 = vst [vmem:[#allocation5 + $0x88] sm:$0xff] %v3742
        %v3745 = vlaneseq
        %v3746 = vshrl.u32 %v3745, 7
        %v3747 = vsub.s32 1, %v3746
        %v3748 = vrot.slane %v3118, %v3747
        %v3749 = vmul.f32 %v3748, %v3213
        %v3750 = vmul.f32 %v3748, %v3214
        %v3751 = vmul.f32 %v3749, 1.442695
        %v3752 = vpow.pop %v3751
        %v3753 = vmul.f32 %v3750, 1.442695
        %v3754 = vpow.pop %v3753
        %3755 = vst [vmem:[#allocation3 + $0x90] sm:$0xff] %v3752
        %3756 = vst [vmem:[#allocation3 + $0x98] sm:$0xff] %v3754
        %3757 = vset.pattern.permute.xlu0 9
        %3758 = vperm.xlu0 %3757, %v3182
        %v3759 = vpop.permute.xlu0 %3758
        %3761 = vset.pattern.permute.xlu0 9
        %3762 = vperm.xlu0 %3761, %v3185
        %v3763 = vpop.permute.xlu0 %3762
        %3765 = vset.pattern.permute.xlu0 9
        %3766 = vperm.xlu0 %3765, %v3198
        %v3767 = vpop.permute.xlu0 %3766
        %3769 = vset.pattern.permute.xlu0 9
        %3770 = vperm.xlu0 %3769, %v3201
        %v3771 = vpop.permute.xlu0 %3770
        %v3773 = vsel %vm576, %v3759, %v3767
        %v3774 = vsel %vm576, %v3763, %v3771
        %v3775 = vlaneseq
        %v3776 = vshrl.u32 %v3775, 7
        %v3777 = vsub.s32 1, %v3776
        %v3778 = vrot.slane %v3121, %v3777
        %v3779 = vmul.f32 %v3773, %v3778
        %v3780 = vmul.f32 %v3774, %v3778
        %3781 = vst [vmem:[#allocation4 + $0x90] sm:$0xff] %v3779
        %3782 = vst [vmem:[#allocation4 + $0x98] sm:$0xff] %v3780
        %3783 = vset.pattern.permute.xlu0 9
        %3784 = vperm.xlu0 %3783, %v3190
        %v3785 = vpop.permute.xlu0 %3784
        %3787 = vset.pattern.permute.xlu0 9
        %3788 = vperm.xlu0 %3787, %v3193
        %v3789 = vpop.permute.xlu0 %3788
        %3791 = vset.pattern.permute.xlu0 9
        %3792 = vperm.xlu0 %3791, %v3206
        %v3793 = vpop.permute.xlu0 %3792
        %3795 = vset.pattern.permute.xlu0 9
        %3796 = vperm.xlu0 %3795, %v3209
        %v3797 = vpop.permute.xlu0 %3796
        %v3799 = vsel %vm576, %v3785, %v3793
        %v3800 = vsel %vm576, %v3789, %v3797
        %3801 = vst [vmem:[#allocation5 + $0x90] sm:$0xff] %v3799
        %3802 = vst [vmem:[#allocation5 + $0x98] sm:$0xff] %v3800
        %v3803 = vlaneseq
        %v3804 = vshrl.u32 %v3803, 7
        %v3805 = vsub.s32 2, %v3804
        %v3806 = vrot.slane %v3118, %v3805
        %v3807 = vmul.f32 %v3806, %v3213
        %v3808 = vmul.f32 %v3806, %v3214
        %v3809 = vmul.f32 %v3807, 1.442695
        %v3810 = vpow.pop %v3809
        %v3811 = vmul.f32 %v3808, 1.442695
        %v3812 = vpow.pop %v3811
        %3813 = vst [vmem:[#allocation3 + $0xa0] sm:$0xff] %v3810
        %3814 = vst [vmem:[#allocation3 + $0xa8] sm:$0xff] %v3812
        %3815 = vset.pattern.permute.xlu0 10
        %3816 = vperm.xlu0 %3815, %v3182
        %v3817 = vpop.permute.xlu0 %3816
        %3819 = vset.pattern.permute.xlu0 10
        %3820 = vperm.xlu0 %3819, %v3185
        %v3821 = vpop.permute.xlu0 %3820
        %3823 = vset.pattern.permute.xlu0 10
        %3824 = vperm.xlu0 %3823, %v3198
        %v3825 = vpop.permute.xlu0 %3824
        %3827 = vset.pattern.permute.xlu0 10
        %3828 = vperm.xlu0 %3827, %v3201
        %v3829 = vpop.permute.xlu0 %3828
        %v3831 = vsel %vm576, %v3817, %v3825
        %v3832 = vsel %vm576, %v3821, %v3829
        %v3833 = vlaneseq
        %v3834 = vshrl.u32 %v3833, 7
        %v3835 = vsub.s32 2, %v3834
        %v3836 = vrot.slane %v3121, %v3835
        %v3837 = vmul.f32 %v3831, %v3836
        %v3838 = vmul.f32 %v3832, %v3836
        %3839 = vst [vmem:[#allocation4 + $0xa0] sm:$0xff] %v3837
        %3840 = vst [vmem:[#allocation4 + $0xa8] sm:$0xff] %v3838
        %3841 = vset.pattern.permute.xlu0 10
        %3842 = vperm.xlu0 %3841, %v3190
        %v3843 = vpop.permute.xlu0 %3842
        %3845 = vset.pattern.permute.xlu0 10
        %3846 = vperm.xlu0 %3845, %v3193
        %v3847 = vpop.permute.xlu0 %3846
        %3849 = vset.pattern.permute.xlu0 10
        %3850 = vperm.xlu0 %3849, %v3206
        %v3851 = vpop.permute.xlu0 %3850
        %3853 = vset.pattern.permute.xlu0 10
        %3854 = vperm.xlu0 %3853, %v3209
        %v3855 = vpop.permute.xlu0 %3854
        %v3857 = vsel %vm576, %v3843, %v3851
        %v3858 = vsel %vm576, %v3847, %v3855
        %3859 = vst [vmem:[#allocation5 + $0xa0] sm:$0xff] %v3857
        %3860 = vst [vmem:[#allocation5 + $0xa8] sm:$0xff] %v3858
        %v3861 = vlaneseq
        %v3862 = vshrl.u32 %v3861, 7
        %v3863 = vsub.s32 3, %v3862
        %v3864 = vrot.slane %v3118, %v3863
        %v3865 = vmul.f32 %v3864, %v3213
        %v3866 = vmul.f32 %v3864, %v3214
        %v3867 = vmul.f32 %v3865, 1.442695
        %v3868 = vpow.pop %v3867
        %v3869 = vmul.f32 %v3866, 1.442695
        %v3870 = vpow.pop %v3869
        %3871 = vst [vmem:[#allocation3 + $0xb0] sm:$0xff] %v3868
        %3872 = vst [vmem:[#allocation3 + $0xb8] sm:$0xff] %v3870
        %3873 = vset.pattern.permute.xlu0 11
        %3874 = vperm.xlu0 %3873, %v3182
        %v3875 = vpop.permute.xlu0 %3874
        %3877 = vset.pattern.permute.xlu0 11
        %3878 = vperm.xlu0 %3877, %v3185
        %v3879 = vpop.permute.xlu0 %3878
        %3881 = vset.pattern.permute.xlu0 11
        %3882 = vperm.xlu0 %3881, %v3198
        %v3883 = vpop.permute.xlu0 %3882
        %3885 = vset.pattern.permute.xlu0 11
        %3886 = vperm.xlu0 %3885, %v3201
        %v3887 = vpop.permute.xlu0 %3886
        %v3889 = vsel %vm576, %v3875, %v3883
        %v3890 = vsel %vm576, %v3879, %v3887
        %v3891 = vlaneseq
        %v3892 = vshrl.u32 %v3891, 7
        %v3893 = vsub.s32 3, %v3892
        %v3894 = vrot.slane %v3121, %v3893
        %v3895 = vmul.f32 %v3889, %v3894
        %v3896 = vmul.f32 %v3890, %v3894
        %3897 = vst [vmem:[#allocation4 + $0xb0] sm:$0xff] %v3895
        %3898 = vst [vmem:[#allocation4 + $0xb8] sm:$0xff] %v3896
        %3899 = vset.pattern.permute.xlu0 11
        %3900 = vperm.xlu0 %3899, %v3190
        %v3901 = vpop.permute.xlu0 %3900
        %3903 = vset.pattern.permute.xlu0 11
        %3904 = vperm.xlu0 %3903, %v3193
        %v3905 = vpop.permute.xlu0 %3904
        %3907 = vset.pattern.permute.xlu0 11
        %3908 = vperm.xlu0 %3907, %v3206
        %v3909 = vpop.permute.xlu0 %3908
        %3911 = vset.pattern.permute.xlu0 11
        %3912 = vperm.xlu0 %3911, %v3209
        %v3913 = vpop.permute.xlu0 %3912
        %v3915 = vsel %vm576, %v3901, %v3909
        %v3916 = vsel %vm576, %v3905, %v3913
        %3917 = vst [vmem:[#allocation5 + $0xb0] sm:$0xff] %v3915
        %3918 = vst [vmem:[#allocation5 + $0xb8] sm:$0xff] %v3916
        %v3919 = vlaneseq
        %v3920 = vshrl.u32 %v3919, 7
        %v3921 = vsub.s32 4, %v3920
        %v3922 = vrot.slane %v3118, %v3921
        %v3923 = vmul.f32 %v3922, %v3213
        %v3924 = vmul.f32 %v3922, %v3214
        %v3925 = vmul.f32 %v3923, 1.442695
        %v3926 = vpow.pop %v3925
        %v3927 = vmul.f32 %v3924, 1.442695
        %v3928 = vpow.pop %v3927
        %3929 = vst [vmem:[#allocation3 + $0xc0] sm:$0xff] %v3926
        %3930 = vst [vmem:[#allocation3 + $0xc8] sm:$0xff] %v3928
        %3931 = vset.pattern.permute.xlu0 12
        %3932 = vperm.xlu0 %3931, %v3182
        %v3933 = vpop.permute.xlu0 %3932
        %3935 = vset.pattern.permute.xlu0 12
        %3936 = vperm.xlu0 %3935, %v3185
        %v3937 = vpop.permute.xlu0 %3936
        %3939 = vset.pattern.permute.xlu0 12
        %3940 = vperm.xlu0 %3939, %v3198
        %v3941 = vpop.permute.xlu0 %3940
        %3943 = vset.pattern.permute.xlu0 12
        %3944 = vperm.xlu0 %3943, %v3201
        %v3945 = vpop.permute.xlu0 %3944
        %v3947 = vsel %vm576, %v3933, %v3941
        %v3948 = vsel %vm576, %v3937, %v3945
        %v3949 = vlaneseq
        %v3950 = vshrl.u32 %v3949, 7
        %v3951 = vsub.s32 4, %v3950
        %v3952 = vrot.slane %v3121, %v3951
        %v3953 = vmul.f32 %v3947, %v3952
        %v3954 = vmul.f32 %v3948, %v3952
        %3955 = vst [vmem:[#allocation4 + $0xc0] sm:$0xff] %v3953
        %3956 = vst [vmem:[#allocation4 + $0xc8] sm:$0xff] %v3954
        %3957 = vset.pattern.permute.xlu0 12
        %3958 = vperm.xlu0 %3957, %v3190
        %v3959 = vpop.permute.xlu0 %3958
        %3961 = vset.pattern.permute.xlu0 12
        %3962 = vperm.xlu0 %3961, %v3193
        %v3963 = vpop.permute.xlu0 %3962
        %3965 = vset.pattern.permute.xlu0 12
        %3966 = vperm.xlu0 %3965, %v3206
        %v3967 = vpop.permute.xlu0 %3966
        %3969 = vset.pattern.permute.xlu0 12
        %3970 = vperm.xlu0 %3969, %v3209
        %v3971 = vpop.permute.xlu0 %3970
        %v3973 = vsel %vm576, %v3959, %v3967
        %v3974 = vsel %vm576, %v3963, %v3971
        %3975 = vst [vmem:[#allocation5 + $0xc0] sm:$0xff] %v3973
        %3976 = vst [vmem:[#allocation5 + $0xc8] sm:$0xff] %v3974
        %v3977 = vlaneseq
        %v3978 = vshrl.u32 %v3977, 7
        %v3979 = vsub.s32 5, %v3978
        %v3980 = vrot.slane %v3118, %v3979
        %v3981 = vmul.f32 %v3980, %v3213
        %v3982 = vmul.f32 %v3980, %v3214
        %v3983 = vmul.f32 %v3981, 1.442695
        %v3984 = vpow.pop %v3983
        %v3985 = vmul.f32 %v3982, 1.442695
        %v3986 = vpow.pop %v3985
        %3987 = vst [vmem:[#allocation3 + $0xd0] sm:$0xff] %v3984
        %3988 = vst [vmem:[#allocation3 + $0xd8] sm:$0xff] %v3986
        %3989 = vset.pattern.permute.xlu0 13
        %3990 = vperm.xlu0 %3989, %v3182
        %v3991 = vpop.permute.xlu0 %3990
        %3993 = vset.pattern.permute.xlu0 13
        %3994 = vperm.xlu0 %3993, %v3185
        %v3995 = vpop.permute.xlu0 %3994
        %3997 = vset.pattern.permute.xlu0 13
        %3998 = vperm.xlu0 %3997, %v3198
        %v3999 = vpop.permute.xlu0 %3998
        %4001 = vset.pattern.permute.xlu0 13
        %4002 = vperm.xlu0 %4001, %v3201
        %v4003 = vpop.permute.xlu0 %4002
        %v4005 = vsel %vm576, %v3991, %v3999
        %v4006 = vsel %vm576, %v3995, %v4003
        %v4007 = vlaneseq
        %v4008 = vshrl.u32 %v4007, 7
        %v4009 = vsub.s32 5, %v4008
        %v4010 = vrot.slane %v3121, %v4009
        %v4011 = vmul.f32 %v4005, %v4010
        %v4012 = vmul.f32 %v4006, %v4010
        %4013 = vst [vmem:[#allocation4 + $0xd0] sm:$0xff] %v4011
        %4014 = vst [vmem:[#allocation4 + $0xd8] sm:$0xff] %v4012
        %4015 = vset.pattern.permute.xlu0 13
        %4016 = vperm.xlu0 %4015, %v3190
        %v4017 = vpop.permute.xlu0 %4016
        %4019 = vset.pattern.permute.xlu0 13
        %4020 = vperm.xlu0 %4019, %v3193
        %v4021 = vpop.permute.xlu0 %4020
        %4023 = vset.pattern.permute.xlu0 13
        %4024 = vperm.xlu0 %4023, %v3206
        %v4025 = vpop.permute.xlu0 %4024
        %4027 = vset.pattern.permute.xlu0 13
        %4028 = vperm.xlu0 %4027, %v3209
        %v4029 = vpop.permute.xlu0 %4028
        %v4031 = vsel %vm576, %v4017, %v4025
        %v4032 = vsel %vm576, %v4021, %v4029
        %4033 = vst [vmem:[#allocation5 + $0xd0] sm:$0xff] %v4031
        %4034 = vst [vmem:[#allocation5 + $0xd8] sm:$0xff] %v4032
        %v4035 = vlaneseq
        %v4036 = vshrl.u32 %v4035, 7
        %v4037 = vsub.s32 6, %v4036
        %v4038 = vrot.slane %v3118, %v4037
        %v4039 = vmul.f32 %v4038, %v3213
        %v4040 = vmul.f32 %v4038, %v3214
        %v4041 = vmul.f32 %v4039, 1.442695
        %v4042 = vpow.pop %v4041
        %v4043 = vmul.f32 %v4040, 1.442695
        %v4044 = vpow.pop %v4043
        %4045 = vst [vmem:[#allocation3 + $0xe0] sm:$0xff] %v4042
        %4046 = vst [vmem:[#allocation3 + $0xe8] sm:$0xff] %v4044
        %4047 = vset.pattern.permute.xlu0 14
        %4048 = vperm.xlu0 %4047, %v3182
        %v4049 = vpop.permute.xlu0 %4048
        %4051 = vset.pattern.permute.xlu0 14
        %4052 = vperm.xlu0 %4051, %v3185
        %v4053 = vpop.permute.xlu0 %4052
        %4055 = vset.pattern.permute.xlu0 14
        %4056 = vperm.xlu0 %4055, %v3198
        %v4057 = vpop.permute.xlu0 %4056
        %4059 = vset.pattern.permute.xlu0 14
        %4060 = vperm.xlu0 %4059, %v3201
        %v4061 = vpop.permute.xlu0 %4060
        %v4063 = vsel %vm576, %v4049, %v4057
        %v4064 = vsel %vm576, %v4053, %v4061
        %v4065 = vlaneseq
        %v4066 = vshrl.u32 %v4065, 7
        %v4067 = vsub.s32 6, %v4066
        %v4068 = vrot.slane %v3121, %v4067
        %v4069 = vmul.f32 %v4063, %v4068
        %v4070 = vmul.f32 %v4064, %v4068
        %4071 = vst [vmem:[#allocation4 + $0xe0] sm:$0xff] %v4069
        %4072 = vst [vmem:[#allocation4 + $0xe8] sm:$0xff] %v4070
        %4073 = vset.pattern.permute.xlu0 14
        %4074 = vperm.xlu0 %4073, %v3190
        %v4075 = vpop.permute.xlu0 %4074
        %4077 = vset.pattern.permute.xlu0 14
        %4078 = vperm.xlu0 %4077, %v3193
        %v4079 = vpop.permute.xlu0 %4078
        %4081 = vset.pattern.permute.xlu0 14
        %4082 = vperm.xlu0 %4081, %v3206
        %v4083 = vpop.permute.xlu0 %4082
        %4085 = vset.pattern.permute.xlu0 14
        %4086 = vperm.xlu0 %4085, %v3209
        %v4087 = vpop.permute.xlu0 %4086
        %v4089 = vsel %vm576, %v4075, %v4083
        %v4090 = vsel %vm576, %v4079, %v4087
        %4091 = vst [vmem:[#allocation5 + $0xe0] sm:$0xff] %v4089
        %4092 = vst [vmem:[#allocation5 + $0xe8] sm:$0xff] %v4090
        %v4093 = vlaneseq
        %v4094 = vshrl.u32 %v4093, 7
        %v4095 = vsub.s32 7, %v4094
        %v4096 = vrot.slane %v3118, %v4095
        %v4097 = vmul.f32 %v4096, %v3213
        %v4098 = vmul.f32 %v4096, %v3214
        %v4099 = vmul.f32 %v4097, 1.442695
        %v4100 = vpow.pop %v4099
        %v4101 = vmul.f32 %v4098, 1.442695
        %v4102 = vpow.pop %v4101
        %4103 = vst [vmem:[#allocation3 + $0xf0] sm:$0xff] %v4100
        %4104 = vst [vmem:[#allocation3 + $0xf8] sm:$0xff] %v4102
        %4105 = vset.pattern.permute.xlu0 15
        %4106 = vperm.xlu0 %4105, %v3182
        %v4107 = vpop.permute.xlu0 %4106
        %4109 = vset.pattern.permute.xlu0 15
        %4110 = vperm.xlu0 %4109, %v3185
        %v4111 = vpop.permute.xlu0 %4110
        %4113 = vset.pattern.permute.xlu0 15
        %4114 = vperm.xlu0 %4113, %v3198
        %v4115 = vpop.permute.xlu0 %4114
        %4117 = vset.pattern.permute.xlu0 15
        %4118 = vperm.xlu0 %4117, %v3201
        %v4119 = vpop.permute.xlu0 %4118
        %v4121 = vsel %vm576, %v4107, %v4115
        %v4122 = vsel %vm576, %v4111, %v4119
        %v4123 = vlaneseq
        %v4124 = vshrl.u32 %v4123, 7
        %v4125 = vsub.s32 7, %v4124
        %v4126 = vrot.slane %v3121, %v4125
        %v4127 = vmul.f32 %v4121, %v4126
        %v4128 = vmul.f32 %v4122, %v4126
        %4129 = vst [vmem:[#allocation4 + $0xf0] sm:$0xff] %v4127
        %4130 = vst [vmem:[#allocation4 + $0xf8] sm:$0xff] %v4128
        %4131 = vset.pattern.permute.xlu0 15
        %4132 = vperm.xlu0 %4131, %v3190
        %v4133 = vpop.permute.xlu0 %4132
        %4135 = vset.pattern.permute.xlu0 15
        %4136 = vperm.xlu0 %4135, %v3193
        %v4137 = vpop.permute.xlu0 %4136
        %4139 = vset.pattern.permute.xlu0 15
        %4140 = vperm.xlu0 %4139, %v3206
        %v4141 = vpop.permute.xlu0 %4140
        %4143 = vset.pattern.permute.xlu0 15
        %4144 = vperm.xlu0 %4143, %v3209
        %v4145 = vpop.permute.xlu0 %4144
        %v4147 = vsel %vm576, %v4133, %v4141
        %v4148 = vsel %vm576, %v4137, %v4145
        %4149 = vst [vmem:[#allocation5 + $0xf0] sm:$0xff] %v4147
        %4150 = vst [vmem:[#allocation5 + $0xf8] sm:$0xff] %v4148
        %v4151 = vlaneseq
        %v4152 = vshrl.u32 %v4151, 7
        %v4153 = vsub.s32 0, %v4152
        %v4154 = vrot.slane %v3119, %v4153
        %v4155 = vmul.f32 %v4154, %v3213
        %v4156 = vmul.f32 %v4154, %v3214
        %v4157 = vmul.f32 %v4155, 1.442695
        %v4158 = vpow.pop %v4157
        %v4159 = vmul.f32 %v4156, 1.442695
        %v4160 = vpow.pop %v4159
        %4161 = vst [vmem:[#allocation3 + $0x100] sm:$0xff] %v4158
        %4162 = vst [vmem:[#allocation3 + $0x108] sm:$0xff] %v4160
        %4163 = vset.pattern.permute.xlu0 16
        %4164 = vperm.xlu0 %4163, %v3182
        %v4165 = vpop.permute.xlu0 %4164
        %4167 = vset.pattern.permute.xlu0 16
        %4168 = vperm.xlu0 %4167, %v3185
        %v4169 = vpop.permute.xlu0 %4168
        %4171 = vset.pattern.permute.xlu0 16
        %4172 = vperm.xlu0 %4171, %v3198
        %v4173 = vpop.permute.xlu0 %4172
        %4175 = vset.pattern.permute.xlu0 16
        %4176 = vperm.xlu0 %4175, %v3201
        %v4177 = vpop.permute.xlu0 %4176
        %v4179 = vsel %vm576, %v4165, %v4173
        %v4180 = vsel %vm576, %v4169, %v4177
        %v4181 = vlaneseq
        %v4182 = vshrl.u32 %v4181, 7
        %v4183 = vsub.s32 0, %v4182
        %v4184 = vrot.slane %v3122, %v4183
        %v4185 = vmul.f32 %v4179, %v4184
        %v4186 = vmul.f32 %v4180, %v4184
        %4187 = vst [vmem:[#allocation4 + $0x100] sm:$0xff] %v4185
        %4188 = vst [vmem:[#allocation4 + $0x108] sm:$0xff] %v4186
        %4189 = vset.pattern.permute.xlu0 16
        %4190 = vperm.xlu0 %4189, %v3190
        %v4191 = vpop.permute.xlu0 %4190
        %4193 = vset.pattern.permute.xlu0 16
        %4194 = vperm.xlu0 %4193, %v3193
        %v4195 = vpop.permute.xlu0 %4194
        %4197 = vset.pattern.permute.xlu0 16
        %4198 = vperm.xlu0 %4197, %v3206
        %v4199 = vpop.permute.xlu0 %4198
        %4201 = vset.pattern.permute.xlu0 16
        %4202 = vperm.xlu0 %4201, %v3209
        %v4203 = vpop.permute.xlu0 %4202
        %v4205 = vsel %vm576, %v4191, %v4199
        %v4206 = vsel %vm576, %v4195, %v4203
        %4207 = vst [vmem:[#allocation5 + $0x100] sm:$0xff] %v4205
        %4208 = vst [vmem:[#allocation5 + $0x108] sm:$0xff] %v4206
        %v4209 = vld [vmem:[#allocation3] sm:$0xff]
        %v4210 = vld [vmem:[#allocation3 + $0x8] sm:$0xff]
        %v4211 = vmul.f32 %v4209, 0.0
        %v4212 = vmul.f32 %v4210, 0.0
        %v4213 = vld [vmem:[#allocation4] sm:$0xff]
        %v4214 = vld [vmem:[#allocation4 + $0x8] sm:$0xff]
        %v4215 = vadd.f32 %v4211, %v4213
        %v4216 = vadd.f32 %v4212, %v4214
        %v4217 = vld [vmem:[#allocation5] sm:$0xff]
        %v4218 = vld [vmem:[#allocation5 + $0x8] sm:$0xff]
        %v4219 = vmul.f32 %v4215, %v4217
        %v4220 = vmul.f32 %v4216, %v4218
        %v4221 = vadd.f32 %v4219, %v4220
        %v4222 = vrot.slane %v4221, 4
        %v4223 = vadd.f32 %v4221, %v4222
        %v4224 = vrot.slane %v4223, 2
        %v4225 = vadd.f32 %v4223, %v4224
        %v4226 = vrot.slane %v4225, 1
        %v4227 = vadd.f32 %v4225, %v4226
        %v4228 = vadd.f32 %v4227, %v3131
        %4229 = vst.msk [vmem:[#allocation6] sm:$0x1] %vm888, %v4228
        %4230 = vst.msk [vmem:[#allocation6 + $0x10] sm:$0x1] %vm905, %v4228
        %v4231 = vld [vmem:[#allocation3 + $0x10] sm:$0xff]
        %v4232 = vld [vmem:[#allocation3 + $0x18] sm:$0xff]
        %v4233 = vmul.f32 %v4231, %v4215
        %v4234 = vmul.f32 %v4232, %v4216
        %v4235 = vld [vmem:[#allocation4 + $0x10] sm:$0xff]
        %v4236 = vld [vmem:[#allocation4 + $0x18] sm:$0xff]
        %v4237 = vadd.f32 %v4233, %v4235
        %v4238 = vadd.f32 %v4234, %v4236
        %v4239 = vld [vmem:[#allocation5 + $0x10] sm:$0xff]
        %v4240 = vld [vmem:[#allocation5 + $0x18] sm:$0xff]
        %v4241 = vmul.f32 %v4237, %v4239
        %v4242 = vmul.f32 %v4238, %v4240
        %v4243 = vadd.f32 %v4241, %v4242
        %v4244 = vrot.slane %v4243, 4
        %v4245 = vadd.f32 %v4243, %v4244
        %v4246 = vrot.slane %v4245, 2
        %v4247 = vadd.f32 %v4245, %v4246
        %v4248 = vrot.slane %v4247, 1
        %v4249 = vadd.f32 %v4247, %v4248
        %v4250 = vadd.f32 %v4249, %v3131
        %4251 = vst.msk [vmem:[#allocation6] sm:$0x2] %vm2241, %v4250
        %4252 = vst.msk [vmem:[#allocation6 + $0xe] sm:$0x2] %vm2243, %v4250
        %v4253 = vld [vmem:[#allocation3 + $0x20] sm:$0xff]
        %v4254 = vld [vmem:[#allocation3 + $0x28] sm:$0xff]
        %v4255 = vmul.f32 %v4253, %v4237
        %v4256 = vmul.f32 %v4254, %v4238
        %v4257 = vld [vmem:[#allocation4 + $0x20] sm:$0xff]
        %v4258 = vld [vmem:[#allocation4 + $0x28] sm:$0xff]
        %v4259 = vadd.f32 %v4255, %v4257
        %v4260 = vadd.f32 %v4256, %v4258
        %v4261 = vld [vmem:[#allocation5 + $0x20] sm:$0xff]
        %v4262 = vld [vmem:[#allocation5 + $0x28] sm:$0xff]
        %v4263 = vmul.f32 %v4259, %v4261
        %v4264 = vmul.f32 %v4260, %v4262
        %v4265 = vadd.f32 %v4263, %v4264
        %v4266 = vrot.slane %v4265, 4
        %v4267 = vadd.f32 %v4265, %v4266
        %v4268 = vrot.slane %v4267, 2
        %v4269 = vadd.f32 %v4267, %v4268
        %v4270 = vrot.slane %v4269, 1
        %v4271 = vadd.f32 %v4269, %v4270
        %v4272 = vadd.f32 %v4271, %v3131
        %4273 = vst.msk [vmem:[#allocation6] sm:$0x4] %vm2265, %v4272
        %4274 = vst.msk [vmem:[#allocation6 + $0xc] sm:$0x4] %vm2267, %v4272
        %v4275 = vld [vmem:[#allocation3 + $0x30] sm:$0xff]
        %v4276 = vld [vmem:[#allocation3 + $0x38] sm:$0xff]
        %v4277 = vmul.f32 %v4275, %v4259
        %v4278 = vmul.f32 %v4276, %v4260
        %v4279 = vld [vmem:[#allocation4 + $0x30] sm:$0xff]
        %v4280 = vld [vmem:[#allocation4 + $0x38] sm:$0xff]
        %v4281 = vadd.f32 %v4277, %v4279
        %v4282 = vadd.f32 %v4278, %v4280
        %v4283 = vld [vmem:[#allocation5 + $0x30] sm:$0xff]
        %v4284 = vld [vmem:[#allocation5 + $0x38] sm:$0xff]
        %v4285 = vmul.f32 %v4281, %v4283
        %v4286 = vmul.f32 %v4282, %v4284
        %v4287 = vadd.f32 %v4285, %v4286
        %v4288 = vrot.slane %v4287, 4
        %v4289 = vadd.f32 %v4287, %v4288
        %v4290 = vrot.slane %v4289, 2
        %v4291 = vadd.f32 %v4289, %v4290
        %v4292 = vrot.slane %v4291, 1
        %v4293 = vadd.f32 %v4291, %v4292
        %v4294 = vadd.f32 %v4293, %v3131
        %4295 = vst.msk [vmem:[#allocation6] sm:$0x8] %vm2289, %v4294
        %4296 = vst.msk [vmem:[#allocation6 + $0xa] sm:$0x8] %vm2291, %v4294
        %v4297 = vld [vmem:[#allocation3 + $0x40] sm:$0xff]
        %v4298 = vld [vmem:[#allocation3 + $0x48] sm:$0xff]
        %v4299 = vmul.f32 %v4297, %v4281
        %v4300 = vmul.f32 %v4298, %v4282
        %v4301 = vld [vmem:[#allocation4 + $0x40] sm:$0xff]
        %v4302 = vld [vmem:[#allocation4 + $0x48] sm:$0xff]
        %v4303 = vadd.f32 %v4299, %v4301
        %v4304 = vadd.f32 %v4300, %v4302
        %v4305 = vld [vmem:[#allocation5 + $0x40] sm:$0xff]
        %v4306 = vld [vmem:[#allocation5 + $0x48] sm:$0xff]
        %v4307 = vmul.f32 %v4303, %v4305
        %v4308 = vmul.f32 %v4304, %v4306
        %v4309 = vadd.f32 %v4307, %v4308
        %v4310 = vrot.slane %v4309, 4
        %v4311 = vadd.f32 %v4309, %v4310
        %v4312 = vrot.slane %v4311, 2
        %v4313 = vadd.f32 %v4311, %v4312
        %v4314 = vrot.slane %v4313, 1
        %v4315 = vadd.f32 %v4313, %v4314
        %v4316 = vadd.f32 %v4315, %v3131
        %4317 = vst.msk [vmem:[#allocation6] sm:$0x10] %vm2313, %v4316
        %4318 = vst.msk [vmem:[#allocation6 + $0x8] sm:$0x10] %vm2315, %v4316
        %v4319 = vld [vmem:[#allocation3 + $0x50] sm:$0xff]
        %v4320 = vld [vmem:[#allocation3 + $0x58] sm:$0xff]
        %v4321 = vmul.f32 %v4319, %v4303
        %v4322 = vmul.f32 %v4320, %v4304
        %v4323 = vld [vmem:[#allocation4 + $0x50] sm:$0xff]
        %v4324 = vld [vmem:[#allocation4 + $0x58] sm:$0xff]
        %v4325 = vadd.f32 %v4321, %v4323
        %v4326 = vadd.f32 %v4322, %v4324
        %v4327 = vld [vmem:[#allocation5 + $0x50] sm:$0xff]
        %v4328 = vld [vmem:[#allocation5 + $0x58] sm:$0xff]
        %v4329 = vmul.f32 %v4325, %v4327
        %v4330 = vmul.f32 %v4326, %v4328
        %v4331 = vadd.f32 %v4329, %v4330
        %v4332 = vrot.slane %v4331, 4
        %v4333 = vadd.f32 %v4331, %v4332
        %v4334 = vrot.slane %v4333, 2
        %v4335 = vadd.f32 %v4333, %v4334
        %v4336 = vrot.slane %v4335, 1
        %v4337 = vadd.f32 %v4335, %v4336
        %v4338 = vadd.f32 %v4337, %v3131
        %4339 = vst.msk [vmem:[#allocation6] sm:$0x20] %vm2337, %v4338
        %4340 = vst.msk [vmem:[#allocation6 + $0x6] sm:$0x20] %vm2339, %v4338
        %v4341 = vld [vmem:[#allocation3 + $0x60] sm:$0xff]
        %v4342 = vld [vmem:[#allocation3 + $0x68] sm:$0xff]
        %v4343 = vmul.f32 %v4341, %v4325
        %v4344 = vmul.f32 %v4342, %v4326
        %v4345 = vld [vmem:[#allocation4 + $0x60] sm:$0xff]
        %v4346 = vld [vmem:[#allocation4 + $0x68] sm:$0xff]
        %v4347 = vadd.f32 %v4343, %v4345
        %v4348 = vadd.f32 %v4344, %v4346
        %v4349 = vld [vmem:[#allocation5 + $0x60] sm:$0xff]
        %v4350 = vld [vmem:[#allocation5 + $0x68] sm:$0xff]
        %v4351 = vmul.f32 %v4347, %v4349
        %v4352 = vmul.f32 %v4348, %v4350
        %v4353 = vadd.f32 %v4351, %v4352
        %v4354 = vrot.slane %v4353, 4
        %v4355 = vadd.f32 %v4353, %v4354
        %v4356 = vrot.slane %v4355, 2
        %v4357 = vadd.f32 %v4355, %v4356
        %v4358 = vrot.slane %v4357, 1
        %v4359 = vadd.f32 %v4357, %v4358
        %v4360 = vadd.f32 %v4359, %v3131
        %4361 = vst.msk [vmem:[#allocation6] sm:$0x40] %vm2361, %v4360
        %4362 = vst.msk [vmem:[#allocation6 + $0x4] sm:$0x40] %vm2363, %v4360
        %v4363 = vld [vmem:[#allocation3 + $0x70] sm:$0xff]
        %v4364 = vld [vmem:[#allocation3 + $0x78] sm:$0xff]
        %v4365 = vmul.f32 %v4363, %v4347
        %v4366 = vmul.f32 %v4364, %v4348
        %v4367 = vld [vmem:[#allocation4 + $0x70] sm:$0xff]
        %v4368 = vld [vmem:[#allocation4 + $0x78] sm:$0xff]
        %v4369 = vadd.f32 %v4365, %v4367
        %v4370 = vadd.f32 %v4366, %v4368
        %v4371 = vld [vmem:[#allocation5 + $0x70] sm:$0xff]
        %v4372 = vld [vmem:[#allocation5 + $0x78] sm:$0xff]
        %v4373 = vmul.f32 %v4369, %v4371
        %v4374 = vmul.f32 %v4370, %v4372
        %v4375 = vadd.f32 %v4373, %v4374
        %v4376 = vrot.slane %v4375, 4
        %v4377 = vadd.f32 %v4375, %v4376
        %v4378 = vrot.slane %v4377, 2
        %v4379 = vadd.f32 %v4377, %v4378
        %v4380 = vrot.slane %v4379, 1
        %v4381 = vadd.f32 %v4379, %v4380
        %v4382 = vadd.f32 %v4381, %v3131
        %4383 = vst.msk [vmem:[#allocation6] sm:$0x80] %vm2385, %v4382
        %4384 = vst.msk [vmem:[#allocation6 + $0x2] sm:$0x80] %vm2387, %v4382
        %v4385 = vld [vmem:[#allocation3 + $0x80] sm:$0xff]
        %v4386 = vld [vmem:[#allocation3 + $0x88] sm:$0xff]
        %v4387 = vmul.f32 %v4385, %v4369
        %v4388 = vmul.f32 %v4386, %v4370
        %v4389 = vld [vmem:[#allocation4 + $0x80] sm:$0xff]
        %v4390 = vld [vmem:[#allocation4 + $0x88] sm:$0xff]
        %v4391 = vadd.f32 %v4387, %v4389
        %v4392 = vadd.f32 %v4388, %v4390
        %v4393 = vld [vmem:[#allocation5 + $0x80] sm:$0xff]
        %v4394 = vld [vmem:[#allocation5 + $0x88] sm:$0xff]
        %v4395 = vmul.f32 %v4391, %v4393
        %v4396 = vmul.f32 %v4392, %v4394
        %v4397 = vadd.f32 %v4395, %v4396
        %v4398 = vrot.slane %v4397, 4
        %v4399 = vadd.f32 %v4397, %v4398
        %v4400 = vrot.slane %v4399, 2
        %v4401 = vadd.f32 %v4399, %v4400
        %v4402 = vrot.slane %v4401, 1
        %v4403 = vadd.f32 %v4401, %v4402
        %v4404 = vadd.f32 %v4403, %v3132
        %4405 = vst.msk [vmem:[#allocation6 + $0x8] sm:$0x1] %vm888, %v4404
        %4406 = vst.msk [vmem:[#allocation6 + $0x8] sm:$0x1] %vm905, %v4404
        %v4407 = vld [vmem:[#allocation3 + $0x90] sm:$0xff]
        %v4408 = vld [vmem:[#allocation3 + $0x98] sm:$0xff]
        %v4409 = vmul.f32 %v4407, %v4391
        %v4410 = vmul.f32 %v4408, %v4392
        %v4411 = vld [vmem:[#allocation4 + $0x90] sm:$0xff]
        %v4412 = vld [vmem:[#allocation4 + $0x98] sm:$0xff]
        %v4413 = vadd.f32 %v4409, %v4411
        %v4414 = vadd.f32 %v4410, %v4412
        %v4415 = vld [vmem:[#allocation5 + $0x90] sm:$0xff]
        %v4416 = vld [vmem:[#allocation5 + $0x98] sm:$0xff]
        %v4417 = vmul.f32 %v4413, %v4415
        %v4418 = vmul.f32 %v4414, %v4416
        %v4419 = vadd.f32 %v4417, %v4418
        %v4420 = vrot.slane %v4419, 4
        %v4421 = vadd.f32 %v4419, %v4420
        %v4422 = vrot.slane %v4421, 2
        %v4423 = vadd.f32 %v4421, %v4422
        %v4424 = vrot.slane %v4423, 1
        %v4425 = vadd.f32 %v4423, %v4424
        %v4426 = vadd.f32 %v4425, %v3132
        %4427 = vst.msk [vmem:[#allocation6 + $0x8] sm:$0x2] %vm2241, %v4426
        %4428 = vst.msk [vmem:[#allocation6 + $0x6] sm:$0x2] %vm2243, %v4426
        %v4429 = vld [vmem:[#allocation3 + $0xa0] sm:$0xff]
        %v4430 = vld [vmem:[#allocation3 + $0xa8] sm:$0xff]
        %v4431 = vmul.f32 %v4429, %v4413
        %v4432 = vmul.f32 %v4430, %v4414
        %v4433 = vld [vmem:[#allocation4 + $0xa0] sm:$0xff]
        %v4434 = vld [vmem:[#allocation4 + $0xa8] sm:$0xff]
        %v4435 = vadd.f32 %v4431, %v4433
        %v4436 = vadd.f32 %v4432, %v4434
        %v4437 = vld [vmem:[#allocation5 + $0xa0] sm:$0xff]
        %v4438 = vld [vmem:[#allocation5 + $0xa8] sm:$0xff]
        %v4439 = vmul.f32 %v4435, %v4437
        %v4440 = vmul.f32 %v4436, %v4438
        %v4441 = vadd.f32 %v4439, %v4440
        %v4442 = vrot.slane %v4441, 4
        %v4443 = vadd.f32 %v4441, %v4442
        %v4444 = vrot.slane %v4443, 2
        %v4445 = vadd.f32 %v4443, %v4444
        %v4446 = vrot.slane %v4445, 1
        %v4447 = vadd.f32 %v4445, %v4446
        %v4448 = vadd.f32 %v4447, %v3132
        %4449 = vst.msk [vmem:[#allocation6 + $0x8] sm:$0x4] %vm2265, %v4448
        %4450 = vst.msk [vmem:[#allocation6 + $0x4] sm:$0x4] %vm2267, %v4448
        %v4451 = vld [vmem:[#allocation3 + $0xb0] sm:$0xff]
        %v4452 = vld [vmem:[#allocation3 + $0xb8] sm:$0xff]
        %v4453 = vmul.f32 %v4451, %v4435
        %v4454 = vmul.f32 %v4452, %v4436
        %v4455 = vld [vmem:[#allocation4 + $0xb0] sm:$0xff]
        %v4456 = vld [vmem:[#allocation4 + $0xb8] sm:$0xff]
        %v4457 = vadd.f32 %v4453, %v4455
        %v4458 = vadd.f32 %v4454, %v4456
        %v4459 = vld [vmem:[#allocation5 + $0xb0] sm:$0xff]
        %v4460 = vld [vmem:[#allocation5 + $0xb8] sm:$0xff]
        %v4461 = vmul.f32 %v4457, %v4459
        %v4462 = vmul.f32 %v4458, %v4460
        %v4463 = vadd.f32 %v4461, %v4462
        %v4464 = vrot.slane %v4463, 4
        %v4465 = vadd.f32 %v4463, %v4464
        %v4466 = vrot.slane %v4465, 2
        %v4467 = vadd.f32 %v4465, %v4466
        %v4468 = vrot.slane %v4467, 1
        %v4469 = vadd.f32 %v4467, %v4468
        %v4470 = vadd.f32 %v4469, %v3132
        %4471 = vst.msk [vmem:[#allocation6 + $0x8] sm:$0x8] %vm2289, %v4470
        %4472 = vst.msk [vmem:[#allocation6 + $0x2] sm:$0x8] %vm2291, %v4470
        %v4473 = vld [vmem:[#allocation3 + $0xc0] sm:$0xff]
        %v4474 = vld [vmem:[#allocation3 + $0xc8] sm:$0xff]
        %v4475 = vmul.f32 %v4473, %v4457
        %v4476 = vmul.f32 %v4474, %v4458
        %v4477 = vld [vmem:[#allocation4 + $0xc0] sm:$0xff]
        %v4478 = vld [vmem:[#allocation4 + $0xc8] sm:$0xff]
        %v4479 = vadd.f32 %v4475, %v4477
        %v4480 = vadd.f32 %v4476, %v4478
        %v4481 = vld [vmem:[#allocation5 + $0xc0] sm:$0xff]
        %v4482 = vld [vmem:[#allocation5 + $0xc8] sm:$0xff]
        %v4483 = vmul.f32 %v4479, %v4481
        %v4484 = vmul.f32 %v4480, %v4482
        %v4485 = vadd.f32 %v4483, %v4484
        %v4486 = vrot.slane %v4485, 4
        %v4487 = vadd.f32 %v4485, %v4486
        %v4488 = vrot.slane %v4487, 2
        %v4489 = vadd.f32 %v4487, %v4488
        %v4490 = vrot.slane %v4489, 1
        %v4491 = vadd.f32 %v4489, %v4490
        %v4492 = vadd.f32 %v4491, %v3132
        %4493 = vst.msk [vmem:[#allocation6 + $0x8] sm:$0x10] %vm2313, %v4492
        %4494 = vst.msk [vmem:[#allocation6] sm:$0x10] %vm2315, %v4492
        %v4495 = vld [vmem:[#allocation3 + $0xd0] sm:$0xff]
        %v4496 = vld [vmem:[#allocation3 + $0xd8] sm:$0xff]
        %v4497 = vmul.f32 %v4495, %v4479
        %v4498 = vmul.f32 %v4496, %v4480
        %v4499 = vld [vmem:[#allocation4 + $0xd0] sm:$0xff]
        %v4500 = vld [vmem:[#allocation4 + $0xd8] sm:$0xff]
        %v4501 = vadd.f32 %v4497, %v4499
        %v4502 = vadd.f32 %v4498, %v4500
        %v4503 = vld [vmem:[#allocation5 + $0xd0] sm:$0xff]
        %v4504 = vld [vmem:[#allocation5 + $0xd8] sm:$0xff]
        %v4505 = vmul.f32 %v4501, %v4503
        %v4506 = vmul.f32 %v4502, %v4504
        %v4507 = vadd.f32 %v4505, %v4506
        %v4508 = vrot.slane %v4507, 4
        %v4509 = vadd.f32 %v4507, %v4508
        %v4510 = vrot.slane %v4509, 2
        %v4511 = vadd.f32 %v4509, %v4510
        %v4512 = vrot.slane %v4511, 1
        %v4513 = vadd.f32 %v4511, %v4512
        %v4514 = vadd.f32 %v4513, %v3132
        %4515 = vst.msk [vmem:[#allocation6 + $0x8] sm:$0x20] %vm2337, %v4514
        %4516 = vst.msk [vmem:[#allocation6 - $0x2] sm:$0x20] %vm2339, %v4514
        %v4517 = vld [vmem:[#allocation3 + $0xe0] sm:$0xff]
        %v4518 = vld [vmem:[#allocation3 + $0xe8] sm:$0xff]
        %v4519 = vmul.f32 %v4517, %v4501
        %v4520 = vmul.f32 %v4518, %v4502
        %v4521 = vld [vmem:[#allocation4 + $0xe0] sm:$0xff]
        %v4522 = vld [vmem:[#allocation4 + $0xe8] sm:$0xff]
        %v4523 = vadd.f32 %v4519, %v4521
        %v4524 = vadd.f32 %v4520, %v4522
        %v4525 = vld [vmem:[#allocation5 + $0xe0] sm:$0xff]
        %v4526 = vld [vmem:[#allocation5 + $0xe8] sm:$0xff]
        %v4527 = vmul.f32 %v4523, %v4525
        %v4528 = vmul.f32 %v4524, %v4526
        %v4529 = vadd.f32 %v4527, %v4528
        %v4530 = vrot.slane %v4529, 4
        %v4531 = vadd.f32 %v4529, %v4530
        %v4532 = vrot.slane %v4531, 2
        %v4533 = vadd.f32 %v4531, %v4532
        %v4534 = vrot.slane %v4533, 1
        %v4535 = vadd.f32 %v4533, %v4534
        %v4536 = vadd.f32 %v4535, %v3132
        %4537 = vst.msk [vmem:[#allocation6 + $0x8] sm:$0x40] %vm2361, %v4536
        %4538 = vst.msk [vmem:[#allocation6 - $0x4] sm:$0x40] %vm2363, %v4536
        %v4539 = vld [vmem:[#allocation3 + $0xf0] sm:$0xff]
        %v4540 = vld [vmem:[#allocation3 + $0xf8] sm:$0xff]
        %v4541 = vmul.f32 %v4539, %v4523
        %v4542 = vmul.f32 %v4540, %v4524
        %v4543 = vld [vmem:[#allocation4 + $0xf0] sm:$0xff]
        %v4544 = vld [vmem:[#allocation4 + $0xf8] sm:$0xff]
        %v4545 = vadd.f32 %v4541, %v4543
        %v4546 = vadd.f32 %v4542, %v4544
        %v4547 = vld [vmem:[#allocation5 + $0xf0] sm:$0xff]
        %v4548 = vld [vmem:[#allocation5 + $0xf8] sm:$0xff]
        %v4549 = vmul.f32 %v4545, %v4547
        %v4550 = vmul.f32 %v4546, %v4548
        %v4551 = vadd.f32 %v4549, %v4550
        %v4552 = vrot.slane %v4551, 4
        %v4553 = vadd.f32 %v4551, %v4552
        %v4554 = vrot.slane %v4553, 2
        %v4555 = vadd.f32 %v4553, %v4554
        %v4556 = vrot.slane %v4555, 1
        %v4557 = vadd.f32 %v4555, %v4556
        %v4558 = vadd.f32 %v4557, %v3132
        %4559 = vst.msk [vmem:[#allocation6 + $0x8] sm:$0x80] %vm2385, %v4558
        %4560 = vst.msk [vmem:[#allocation6 - $0x6] sm:$0x80] %vm2387, %v4558
        %v4561 = vld [vmem:[#allocation3 + $0x100] sm:$0xff]
        %v4562 = vld [vmem:[#allocation3 + $0x108] sm:$0xff]
        %v4563 = vmul.f32 %v4561, %v4545
        %v4564 = vmul.f32 %v4562, %v4546
        %v4565 = vld [vmem:[#allocation4 + $0x100] sm:$0xff]
        %v4566 = vld [vmem:[#allocation4 + $0x108] sm:$0xff]
        %v4567 = vadd.f32 %v4563, %v4565
        %v4568 = vadd.f32 %v4564, %v4566
        %v4569 = vld [vmem:[#allocation5 + $0x100] sm:$0xff]
        %v4570 = vld [vmem:[#allocation5 + $0x108] sm:$0xff]
        %v4571 = vmul.f32 %v4567, %v4569
        %v4572 = vmul.f32 %v4568, %v4570
        %v4573 = vadd.f32 %v4571, %v4572
        %v4574 = vrot.slane %v4573, 4
        %v4575 = vadd.f32 %v4573, %v4574
        %v4576 = vrot.slane %v4575, 2
        %v4577 = vadd.f32 %v4575, %v4576
        %v4578 = vrot.slane %v4577, 1
        %v4579 = vadd.f32 %v4577, %v4578
        %v4580 = vadd.f32 %v4579, %v3133
        %4581 = vst.msk [vmem:[#allocation6 + $0x10] sm:$0x1] %vm888, %v4580
        %4582 = vst.msk [vmem:[#allocation6] sm:$0x1] %vm905, %v4580
        %v4583 = vld [vmem:[#allocation6] sm:$0xff]
        %v4584 = vld [vmem:[#allocation6 + $0x8] sm:$0xff]
        %v4585 = vld [vmem:[#allocation6 + $0x10] sm:$0x1]
        %4589 = vrot.lane.b32.xlu0 %v4583, 64
        %v4590 = vpop.permute.xlu0 %4589
        %4591 = vrot.lane.b32.xlu0 %v4584, 64
        %v4592 = vpop.permute.xlu0 %4591
        %4593 = vrot.lane.b32.xlu0 %v4585, 64
        %v4594 = vpop.permute.xlu0 %4593
        %v4598 = vadd.f32 %v4583, %v4590
        %v4599 = vadd.f32 %v4584, %v4592
        %v4600 = vadd.f32 %v4585, %v4594
        %v4601 = vxor.u32 %v2794, 2147483648
        %v4602 = vxor.u32 %v2797, 2147483648
        %v4603 = vxor.u32 %v2802, 2147483648
        %v4604 = vmul.f32 %v4601, 1.442695
        %v4605 = vpow.pop %v4604
        %v4606 = vmul.f32 %v4602, 1.442695
        %v4607 = vpow.pop %v4606
        %v4608 = vmul.f32 %v4603, 1.442695
        %v4609 = vpow.pop %v4608
        %v4610 = vadd.f32 %v4605, 1.0
        %v4611 = vadd.f32 %v4607, 1.0
        %v4612 = vadd.f32 %v4609, 1.0
        %v4613 = vrcp.pop %v4610
        %v4614 = vmul.f32 1.0, %v4613
        %v4615 = vrcp.pop %v4611
        %v4616 = vmul.f32 1.0, %v4615
        %v4617 = vrcp.pop %v4612
        %v4618 = vmul.f32 1.0, %v4617
        %v4619 = vmul.f32 %v2794, %v4614
        %v4620 = vmul.f32 %v2797, %v4616
        %v4621 = vmul.f32 %v2802, %v4618
        %4625 = vrot.lane.b32.xlu0 %v4619, 64
        %v4626 = vpop.permute.xlu0 %4625
        %4627 = vrot.lane.b32.xlu0 %v4620, 64
        %v4628 = vpop.permute.xlu0 %4627
        %4629 = vrot.lane.b32.xlu0 %v4621, 64
        %v4630 = vpop.permute.xlu0 %4629
        %v4634 = vmul.f32 %v4598, %v4626
        %v4635 = vmul.f32 %v4599, %v4628
        %v4636 = vmul.f32 %v4600, %v4630
        %v4637 = vpack.c.bf16 %v4635, %v4634
        %v4638 = vpack.c.bf16 %v4636, %v4636
        %s4639 = scalar_lea.vmem %s14, 64
        %v4640 = vld [vmem:[%s4639] sm:$0xff]
        %v4641 = vld [vmem:[%s4639 + $0x8] sm:$0xff]
        %v4642 = vld [vmem:[%s4639 + $0x10] sm:$0xff]
        %v4643 = vld [vmem:[%s4639 + $0x18] sm:$0xff]
        %v4644 = vld [vmem:[%s4639 + $0x20] sm:$0xff]
        %v4645 = vld [vmem:[%s4639 + $0x28] sm:$0xff]
        %v4646 = vld [vmem:[%s4639 + $0x30] sm:$0xff]
        %v4647 = vld [vmem:[%s4639 + $0x38] sm:$0xff]
        %v4648 = vpack.c.bf16 %v4641, %v4640
        %v4649 = vpack.c.bf16 %v4643, %v4642
        %v4650 = vpack.c.bf16 %v4645, %v4644
        %v4651 = vpack.c.bf16 %v4647, %v4646
        %v4653 = vsel %vm626, %v4637, 0
        %v4656 = vsel %vm626, %v4638, 0
        %4658 = vmatprep.subr.bf16.mxu0 0
        %4659 = vmatpush1.bf16.msra.mxu0 %v4648
        %4660 = vmatprep.subr.bf16.mxu0 0
        %4661 = vmatpush1.bf16.msra.mxu0 %v4649
        %4662 = vmatprep.subr.bf16.mxu0 0
        %4663 = vmatpush1.bf16.msra.mxu0 %v4650
        %4664 = vmatprep.subr.bf16.mxu0 0
        %4665 = vmatpush1.bf16.msra.mxu0 %v4651
        %4666 = vmatprep.subr.bf16.mxu0 0
        %4667 = vmatpush1.bf16.msra.mxu0 0
        %4668 = vmatprep.subr.bf16.mxu0 0
        %4669 = vmatpush1.bf16.msra.mxu0 0
        %4670 = vmatprep.subr.bf16.mxu0 0
        %4671 = vmatpush1.bf16.msra.mxu0 0
        %4672 = vmatprep.subr.bf16.mxu0 0
        %4673 = vmatpush1.bf16.msra.mxu0 0
        %4674 = vmatprep.subr.bf16.mxu0 0
        %4675 = vmatpush1.bf16.msra.mxu0 0
        %4676 = vmatprep.subr.bf16.mxu0 0
        %4677 = vmatpush1.bf16.msra.mxu0 0
        %4678 = vmatprep.subr.bf16.mxu0 0
        %4679 = vmatpush1.bf16.msra.mxu0 0
        %4680 = vmatprep.subr.bf16.mxu0 0
        %4681 = vmatpush1.bf16.msra.mxu0 0
        %4682 = vmatprep.subr.bf16.mxu0 0
        %4683 = vmatpush1.bf16.msra.mxu0 0
        %4684 = vmatprep.subr.bf16.mxu0 0
        %4685 = vmatpush1.bf16.msra.mxu0 0
        %4686 = vmatprep.subr.bf16.mxu0 0
        %4687 = vmatpush1.bf16.msra.mxu0 0
        %4688 = vmatprep.subr.bf16.mxu0 0
        %4689 = vmatpush1.bf16.msra.mxu0 0
        %4690 = vmatprep.mubr.bf16.mxu0 0
        %4691 = vmatmul.mubr.bf16.gmra.mrb[0].mxu0 %v4653
        %v4692 = vpop.f32.mrb[0].mxu0
        %v4693 = vadd.f32 0.0, %v4692
        %v4694 = vpop.f32.mrb[0].mxu0
        %v4695 = vpop.f32.mrb[0].mxu0
        %v4696 = vpop.f32.mrb[0].mxu0
        %4697 = vmatprep.mubr.bf16.mxu0 0
        %4698 = vmatmul.mubr.bf16.gmra.mrb[0].mxu0 %v4656
        %v4699 = vpop.f32.mrb[0].mxu0
        %v4700 = vpop.f32.mrb[0].mxu0
        %v4701 = vpop.f32.mrb[0].mxu0
        %v4702 = vpop.f32.mrb[0].mxu0
        %4703 = vdwg.mxu0
        %v4704 = vadd.f32 %v4693, %v2696
        %v4705 = vmul.f32 %v4704, %v4704
        %v4706 = vsel %vm702, %v4705, 0.0
        %4707 = vadd.xlane.f32.xlu0 %v4706
        %v4708 = vpop.xlane.xlu0 %4707
        %v4709 = vmul.f32 %v4708, %v706
        %v4710 = vadd.f32 %v4709, 1e-05
        %v4711 = vrsqrt.pop %v4710
        %v4712 = vmul.f32 %v4704, %v4711
        %v4713 = vld [vmem:[%s15] sm:$0x1]
        %v4714 = vmul.f32 %v4712, %v4713
        %v4715 = vld [vmem:[%s16] sm:$0xff]
        %v4716 = vld [vmem:[%s16 + $0x8] sm:$0xff]
        %v4717 = vld [vmem:[%s16 + $0x10] sm:$0xff]
        %v4718 = vld [vmem:[%s16 + $0x18] sm:$0xff]
        %v4719 = vld [vmem:[%s17] sm:$0x1]
        %v4721 = vsel %vm695, %v4714, 0
        %4723 = vmatprep.subr.mxu0 0.0
        %4724 = vmatpush1.msra.mxu0 %v4715
        %4725 = vmatprep.subr.mxu0 0.0
        %4726 = vmatpush1.msra.mxu0 %v4716
        %4727 = vmatprep.subr.mxu0 0.0
        %4728 = vmatpush1.msra.mxu0 %v4717
        %4729 = vmatprep.subr.mxu0 0.0
        %4730 = vmatpush1.msra.mxu0 %v4718
        %4731 = vmatprep.subr.mxu0 0.0
        %4732 = vmatpush1.msra.mxu0 0.0
        %4733 = vmatprep.subr.mxu0 0.0
        %4734 = vmatpush1.msra.mxu0 0.0
        %4735 = vmatprep.subr.mxu0 0.0
        %4736 = vmatpush1.msra.mxu0 0.0
        %4737 = vmatprep.subr.mxu0 0.0
        %4738 = vmatpush1.msra.mxu0 0.0
        %4739 = vmatprep.subr.mxu0 0.0
        %4740 = vmatpush1.msra.mxu0 0.0
        %4741 = vmatprep.subr.mxu0 0.0
        %4742 = vmatpush1.msra.mxu0 0.0
        %4743 = vmatprep.subr.mxu0 0.0
        %4744 = vmatpush1.msra.mxu0 0.0
        %4745 = vmatprep.subr.mxu0 0.0
        %4746 = vmatpush1.msra.mxu0 0.0
        %4747 = vmatprep.subr.mxu0 0.0
        %4748 = vmatpush1.msra.mxu0 0.0
        %4749 = vmatprep.subr.mxu0 0.0
        %4750 = vmatpush1.msra.mxu0 0.0
        %4751 = vmatprep.subr.mxu0 0.0
        %4752 = vmatpush1.msra.mxu0 0.0
        %4753 = vmatprep.subr.mxu0 0.0
        %4754 = vmatpush1.msra.mxu0 0.0
        %4755 = vmatprep.subr.mxu0 0.0
        %4756 = vmatpush1.msra.mxu0 0.0
        %4757 = vmatprep.subr.mxu0 0.0
        %4758 = vmatpush1.msra.mxu0 0.0
        %4759 = vmatprep.subr.mxu0 0.0
        %4760 = vmatpush1.msra.mxu0 0.0
        %4761 = vmatprep.subr.mxu0 0.0
        %4762 = vmatpush1.msra.mxu0 0.0
        %4763 = vmatprep.subr.mxu0 0.0
        %4764 = vmatpush1.msra.mxu0 0.0
        %4765 = vmatprep.subr.mxu0 0.0
        %4766 = vmatpush1.msra.mxu0 0.0
        %4767 = vmatprep.subr.mxu0 0.0
        %4768 = vmatpush1.msra.mxu0 0.0
        %4769 = vmatprep.subr.mxu0 0.0
        %4770 = vmatpush1.msra.mxu0 0.0
        %4771 = vmatprep.subr.mxu0 0.0
        %4772 = vmatpush1.msra.mxu0 0.0
        %4773 = vmatprep.subr.mxu0 0.0
        %4774 = vmatpush1.msra.mxu0 0.0
        %4775 = vmatprep.subr.mxu0 0.0
        %4776 = vmatpush1.msra.mxu0 0.0
        %4777 = vmatprep.subr.mxu0 0.0
        %4778 = vmatpush1.msra.mxu0 0.0
        %4779 = vmatprep.subr.mxu0 0.0
        %4780 = vmatpush1.msra.mxu0 0.0
        %4781 = vmatprep.subr.mxu0 0.0
        %4782 = vmatpush1.msra.mxu0 0.0
        %4783 = vmatprep.subr.mxu0 0.0
        %4784 = vmatpush1.msra.mxu0 0.0
        %4785 = vmatprep.subr.mxu0 0.0
        %4786 = vmatpush1.msra.mxu0 0.0
        %4787 = vmatprep.mubr.f32.mxu0 0.0
        %4788 = vmatmul.mubr.f32.gmra.mrb[0].mxu0 %v4721
        %v4789 = vpop.f32.mrb[0].mxu0
        %v4790 = vadd.f32 %v4719, %v4789
        %v4791 = vpop.f32.mrb[0].mxu0
        %4792 = vdwg.mxu0
        %vm4793 = vcmask 73728
        %4794 = vst.msk [vmem:[%s567] sm:$0x1] %vm4793, %v4790
        %s4795 = sand.u32 %s423, 1
        %s4796 = scalar_lea.sflag [#allocation8], %s4795
        %s4797 = sand.u32 %s423, 1
        %s4798 = scalar_lea.vmem [#allocation7], %s4797
        // Predicated region
        $region93: #{vision_mamba_forward.1} parent=91 // pred_check
          %p4799 = pneg %p433
        $region94: #{vision_mamba_forward.1} parent=91 // pred_check_branch
          %4801 = sbr.rel (%p4799) target = $region96
        $region95: #{vision_mamba_forward.1} parent=91 // pred_region
          %s4803 = ssub.s32 16, 16
          %4804 = vsyncadd %s4796, %s4803
          %s4805 = smul.addr %s32, 16
          %s4806 = scalar_lea.hbm %s18, %s4805
          %s4808 = sshll.u32 %s4798, 4
          %s4809 = int_to_ptr.vmem [resolvable:$true] %s4808
          %4811 = dma.vmem_to_hbm [thread:$0]  %s4809, 16, %s4806, %s4796
        $region96: #{vision_mamba_forward.1} parent=91 // pred_fallthru
          _
      $region92: #{vision_mamba_forward.1} parent=5 // pred_fallthru
        _
      %p4812 = scmp.le.s32.totalorder 2, %s27
      // Predicated region
      $region97: #{vision_mamba_forward.1} parent=5 // pred_check
        %p4813 = pneg %p4812
      $region98: #{vision_mamba_forward.1} parent=5 // pred_check_branch
        %4815 = sbr.rel (%p4813) target = $region100
      $region99: #{vision_mamba_forward.1} parent=5 // pred_region
        %s4816 = ssub.s32 %s27, 2
        // Predicated region
        $region101: #{vision_mamba_forward.1} parent=99 // pred_check
          %p4817 = pneg %p439
        $region102: #{vision_mamba_forward.1} parent=99 // pred_check_branch
          %4819 = sbr.rel (%p4817) target = $region104
        $region103: #{vision_mamba_forward.1} parent=99 // pred_region
          %s4820 = sand.u32 %s424, 1
          %s4821 = scalar_lea.sflag [#allocation8], %s4820
          %s4822 = sand.u32 %s424, 1
          %s4823 = scalar_lea.vmem [#allocation7], %s4822
          %4824 = dma.done %s4821, 16
        $region104: #{vision_mamba_forward.1} parent=99 // pred_fallthru
          _
      $region100: #{vision_mamba_forward.1} parent=5 // pred_fallthru
        _
    $region6: #{vision_mamba_forward.1} parent=1 // loop_footer
      %s31 = sadd.s32 1, %s27
    $region7: #{vision_mamba_forward.1} parent=1 // loop_footer_branch
      %26 = sbr.rel target = $region3
    $region8: #{vision_mamba_forward.1} parent=1 // loop_exit
      _
    %4825 = vsyncpa [#allocation8], 1
    %s4826 = scalar_lea.sflag [#allocation8], 1
    %4827 = vsyncpa %s4826, 1

</llo_original>
